<compile_context>
chip_gen: v6e
topology: v6e:2x2x1
jax: 0.10.0
libtpu: 0.0.40
codegen_flags: <defaults>
</compile_context>

<pallas_src>
import jax
import jax.numpy as jnp
from jax import lax
from jax.experimental import pallas as pl
from jax.experimental.pallas import tpu as pltpu

# ---- hyper-parameters (small, consistent with the module structure) ----
IN_PLANES_NUM = 4
FILTER_NUM = 16
RESIDUAL_BLOCK_NUM = 2
BOARD_H = 8
BOARD_W = 8
BOARD_POSITION_NUM = BOARD_H * BOARD_W          # 64
ACTION_DIM = 32
BN_EPS = 1e-5
BATCH = 2

# flat padded-image layout constants (per image)
HP = BOARD_H + 2                                # 10
WP = BOARD_W + 2                                # 10
IMG = HP * WP                                   # 100 padded positions per image
LEAD = 16                                       # zero-row margin before the data (mult of 8)
TRAIL = 20                                      # zero-row margin after the data
RBUF = LEAD + IMG + TRAIL                       # 136
TAP_BASE = LEAD - WP - 1                        # buffer row of tap (0,0) for output row 0
N_CONV = 1 + 2 * RESIDUAL_BLOCK_NUM             # 5 conv3x3 layers total
K8 = 8 * FILTER_NUM                             # 128 (first 8 im2col taps)


# --------------------------------------------------------------------------- #
# Fused Pallas kernel: one grid step == one image
# --------------------------------------------------------------------------- #
def _agent_fused_kernel(
    x_ref,       # (1, 8, 8, 4)       this image's raw NHWC board planes
    mask_ref,    # (IMG, 1)           1.0 at interior board positions, 0.0 on the pad ring
    wca_ref,     # (N_CONV, 128, 16)  conv3x3 weights, taps 0..7 (im2col, BN scale folded)
    wcb_ref,     # (N_CONV, 16, 16)   conv3x3 weights, tap 8
    sconv_ref,   # (N_CONV, 16)       BN shifts
    whead_ref,   # (16, 8)            1x1-conv head weights, cols = [value, pol0, pol1, 0...]
    bhead_ref,   # (1, 8)             folded 1x1-conv biases + BN shifts
    w1t_ref,     # (256, IMG)         value fc1, transposed & expanded to the padded grid
    b1_ref,      # (256, 1)
    w2_ref,      # (256, 1)           value fc2 as a column
    b2_ref,      # (1, 1)
    wp0_ref,     # (32, IMG)          policy fc (channel 0), transposed & expanded
    wp1_ref,     # (32, IMG)          policy fc (channel 1), transposed & expanded
    pfb_ref,     # (32, 1)
    prob_ref,    # OUT (1, ACTION_DIM, 1)
    val_ref,     # OUT (1, 1, 1)
    act_a,       # scratch (RBUF, 16)
    act_b,       # scratch (RBUF, 16)  (also serves as the padded-input buffer)
):
  mask = mask_ref[...]                            # (IMG, 1)
  data = pl.ds(LEAD, IMG)

  # ---- scatter the raw input into the zero-margined padded layout (into act_b) ----
  act_b[...] = jnp.zeros_like(act_b)              # pad ring, channel padding, margins -> 0
  for r in range(BOARD_H):                        # 8 static row-block stores per image
    act_b[pl.ds(LEAD + (r + 1) * WP + 1, BOARD_W), pl.ds(0, IN_PLANES_NUM)] = x_ref[0, r]
  # act_a: only the margins need zeroing; every conv rewrites the interior in full
  act_a[pl.ds(0, LEAD), :] = jnp.zeros((LEAD, FILTER_NUM), jnp.float32)
  act_a[pl.ds(LEAD + IMG, TRAIL), :] = jnp.zeros((TRAIL, FILTER_NUM), jnp.float32)

  def conv3x3(src, k, residual=None):
    # im2col as 8+1 taps -> K=128 matmul + K=16 matmul (no mostly-empty second lane tile)
    taps = [src[pl.ds(TAP_BASE + ti * WP + tj, IMG), :]
            for ti in range(3) for tj in range(3)]
    x8 = jnp.concatenate(taps[:8], axis=-1)                       # (IMG, 128)
    y = jnp.dot(x8, wca_ref[k], preferred_element_type=jnp.float32)
    y = y + jnp.dot(taps[8], wcb_ref[k], preferred_element_type=jnp.float32)
    y = (y + sconv_ref[pl.ds(k, 1), :]) * mask                    # BN shift, re-zero pad ring
    if residual is not None:
      y = y + residual
    return jnp.maximum(y, 0.0)

  # ---- stem conv3x3 + BN + ReLU, then the residual tower ----
  act_a[data, :] = conv3x3(act_b, 0)
  for b in range(RESIDUAL_BLOCK_NUM):
    k1, k2 = 1 + 2 * b, 2 + 2 * b
    act_b[data, :] = conv3x3(act_a, k1)
    act_a[data, :] = conv3x3(act_b, k2, residual=act_a[data, :])

  feat = act_a[data, :]                           # (IMG, 16), zero on the pad ring

  # ---- heads: the three 1x1-conv reductions fused into one MXU matmul ----
  hvp = jnp.dot(feat, whead_ref[...], preferred_element_type=jnp.float32) + bhead_ref[...]
  hvp = jnp.maximum(hvp, 0.0) * mask              # (IMG, 8); kill relu(bias) on the pad ring

  hv = hvp[:, 0:1]                                # (IMG, 1)  value-head channel
  hp0 = hvp[:, 1:2]                               # (IMG, 1)  policy channel 0
  hp1 = hvp[:, 2:3]                               # (IMG, 1)  policy channel 1

  # value head: fc1 + ReLU, fc2 + tanh (pre-transposed weights -> plain matvecs)
  h1 = jnp.maximum(
      jnp.dot(w1t_ref[...], hv, preferred_element_type=jnp.float32) + b1_ref[...], 0.0)
  val = jnp.tanh(jnp.sum(h1 * w2_ref[...], axis=0, keepdims=True) + b2_ref[...])   # (1, 1)

  # policy head: fc + softmax (exact normalization)
  logits = (jnp.dot(wp0_ref[...], hp0, preferred_element_type=jnp.float32)
            + jnp.dot(wp1_ref[...], hp1, preferred_element_type=jnp.float32)
            + pfb_ref[...])                                                        # (32, 1)
  m = jnp.max(logits, axis=0, keepdims=True)
  e = jnp.exp(logits - m)
  probs = e / jnp.sum(e, axis=0, keepdims=True)

  prob_ref[...] = probs.reshape(1, ACTION_DIM, 1)
  val_ref[...] = val.reshape(1, 1, 1)


# --------------------------------------------------------------------------- #
# Wrapper: single pallas_call, grid split over the batch
# --------------------------------------------------------------------------- #
def _const_spec(shape):
  nd = len(shape)
  return pl.BlockSpec(tuple(shape), lambda b: (0,) * nd)


def agent_forward(state_nhwc, prep):
  assert state_nhwc.shape == (BATCH, BOARD_H, BOARD_W, IN_PLANES_NUM)
  x = state_nhwc.astype(jnp.float32)
  weights = (prep['mask'], prep['wc_a'], prep['wc_b'], prep['sconv'],
             prep['whead'], prep['bhead'], prep['w1t'], prep['b1'],
             prep['w2'], prep['b2'], prep['wp0t'], prep['wp1t'], prep['pfb'])

  prob3, val3 = pl.pallas_call(
      _agent_fused_kernel,
      out_shape=(jax.ShapeDtypeStruct((BATCH, ACTION_DIM, 1), jnp.float32),
                 jax.ShapeDtypeStruct((BATCH, 1, 1), jnp.float32)),
      grid=(BATCH,),
      in_specs=[pl.BlockSpec((1, BOARD_H, BOARD_W, IN_PLANES_NUM),
                             lambda b: (b, 0, 0, 0))]
               + [_const_spec(w.shape) for w in weights],
      out_specs=(pl.BlockSpec((1, ACTION_DIM, 1), lambda b: (b, 0, 0)),
                 pl.BlockSpec((1, 1, 1), lambda b: (b, 0, 0))),
      scratch_shapes=[pltpu.VMEM((RBUF, FILTER_NUM), jnp.float32),
                      pltpu.VMEM((RBUF, FILTER_NUM), jnp.float32)],
      compiler_params=pltpu.CompilerParams(dimension_semantics=("parallel",)),
  )(x, *weights)
  # free metadata reshapes (contiguous) back to the module's output shapes
  return prob3.reshape(BATCH, ACTION_DIM), val3.reshape(BATCH, 1)


# --------------------------------------------------------------------------- #
# Host-side (one-time) parameter folding / expansion
# --------------------------------------------------------------------------- #
def prepare_params(params):
  pe, vn, pn = params['pe'], params['vn'], params['pn']

  def fold3x3(w_oihw, scale):
    # fold BN scale into weights; OIHW -> (9, Cin, Cout) -> zero-pad Cin to 16 -> (144, Cout)
    w = w_oihw * scale[:, None, None, None]
    cout, cin = w.shape[0], w.shape[1]
    w = jnp.transpose(w, (2, 3, 1, 0)).reshape(9, cin, cout)
    if cin < FILTER_NUM:
      w = jnp.pad(w, ((0, 0), (0, FILTER_NUM - cin), (0, 0)))
    return w.reshape(9 * FILTER_NUM, cout)

  wconv = [fold3x3(pe['conv1_w'], pe['bn1'][0])]
  sconv = [pe['bn1'][1]]
  for blk in pe['blocks']:
    wconv.append(fold3x3(blk['conv1_w'], blk['bn1'][0])); sconv.append(blk['bn1'][1])
    wconv.append(fold3x3(blk['conv2_w'], blk['bn2'][0])); sconv.append(blk['bn2'][1])
  wconv = jnp.stack(wconv)                                    # (5, 144, 16)
  wc_a, wc_b = wconv[:, :K8, :], wconv[:, K8:, :]             # (5, 128, 16), (5, 16, 16)
  sconv = jnp.stack(sconv)                                    # (5, 16)

  # padded-grid geometry: validity mask, interior -> board-position index
  pidx = jnp.arange(IMG)
  pi, pj = pidx // WP, pidx % WP
  valid = (pi >= 1) & (pi <= BOARD_H) & (pj >= 1) & (pj <= BOARD_W)
  mask = valid.astype(jnp.float32).reshape(IMG, 1)
  q = jnp.clip((pi - 1) * BOARD_W + (pj - 1), 0, BOARD_POSITION_NUM - 1)

  # fold 1x1-conv bias + BN into one affine; pack the 3 head channels as matmul columns
  vscale, vshift = vn['bn']
  vw = vn['conv_w'].reshape(1, FILTER_NUM) * vscale[:, None]
  vb = vscale * vn['conv_b'] + vshift
  pscale, pshift = pn['bn']
  pw = pn['conv_w'].reshape(2, FILTER_NUM) * pscale[:, None]
  pb = pscale * pn['conv_b'] + pshift
  whead = jnp.zeros((FILTER_NUM, 8), jnp.float32)
  whead = whead.at[:, 0].set(vw[0]).at[:, 1].set(pw[0]).at[:, 2].set(pw[1])
  bhead = jnp.zeros((1, 8), jnp.float32)
  bhead = bhead.at[0, 0].set(vb[0]).at[0, 1].set(pb[0]).at[0, 2].set(pb[1])

  # head FC weights: transpose host-side, expand onto the padded grid (zeros on pad ring)
  w1t = jnp.where(valid[None, :], vn['fc1_w'][:, q], 0.0)     # (256, 100)
  b1 = vn['fc1_b'].reshape(256, 1)
  w2 = vn['fc2_w'].reshape(256, 1)
  b2 = vn['fc2_b'].reshape(1, 1)
  wp0t = jnp.where(valid[None, :], pn['fc_w'][:, :BOARD_POSITION_NUM][:, q], 0.0)   # (32,100)
  wp1t = jnp.where(valid[None, :], pn['fc_w'][:, BOARD_POSITION_NUM:][:, q], 0.0)   # (32,100)
  pfb = pn['fc_b'].reshape(ACTION_DIM, 1)

  return dict(mask=mask, wc_a=wc_a, wc_b=wc_b, sconv=sconv,
              whead=whead, bhead=bhead, w1t=w1t, b1=b1, w2=w2, b2=b2,
              wp0t=wp0t, wp1t=wp1t, pfb=pfb)


# --------------------------------------------------------------------------- #
# Deterministic parameter init (shapes follow the PyTorch module)
# --------------------------------------------------------------------------- #
def _bn_fold(key, c):
  k1, k2, k3, k4 = jax.random.split(key, 4)
  gamma = jax.random.uniform(k1, (c,), jnp.float32, 0.8, 1.2)
  beta = 0.1 * jax.random.normal(k2, (c,), jnp.float32)
  mean = 0.1 * jax.random.normal(k3, (c,), jnp.float32)
  var = jax.random.uniform(k4, (c,), jnp.float32, 0.5, 1.5)
  scale = gamma / jnp.sqrt(var + BN_EPS)
  shift = beta - mean * scale
  return scale, shift


def init_params(key):
  keys = iter(jax.random.split(key, 64))

  def nrm(shape):
    return 0.1 * jax.random.normal(next(keys), shape, jnp.float32)

  pe = {
      'conv1_w': nrm((FILTER_NUM, IN_PLANES_NUM, 3, 3)),   # OIHW like torch
      'bn1': _bn_fold(next(keys), FILTER_NUM),
      'blocks': [],
  }
  for _ in range(RESIDUAL_BLOCK_NUM):
    pe['blocks'].append({
        'conv1_w': nrm((FILTER_NUM, FILTER_NUM, 3, 3)),
        'bn1': _bn_fold(next(keys), FILTER_NUM),
        'conv2_w': nrm((FILTER_NUM, FILTER_NUM, 3, 3)),
        'bn2': _bn_fold(next(keys), FILTER_NUM),
    })

  vn = {
      'conv_w': nrm((1, FILTER_NUM, 1, 1)),
      'conv_b': nrm((1,)),
      'bn': _bn_fold(next(keys), 1),
      'fc1_w': nrm((256, BOARD_POSITION_NUM)),
      'fc1_b': nrm((256,)),
      'fc2_w': nrm((1, 256)),
      'fc2_b': nrm((1,)),
  }
  pn = {
      'conv_w': nrm((2, FILTER_NUM, 1, 1)),
      'conv_b': nrm((2,)),
      'bn': _bn_fold(next(keys), 2),
      'fc_w': nrm((ACTION_DIM, 2 * BOARD_POSITION_NUM)),
      'fc_b': nrm((ACTION_DIM,)),
  }
  return {'pe': pe, 'vn': vn, 'pn': pn}


# --------------------------------------------------------------------------- #
# Pure-JAX reference (for correctness check)
# --------------------------------------------------------------------------- #
def ref_forward(state_nhwc, params):
  def conv3(x, w_oihw):
    return lax.conv_general_dilated(
        x, jnp.transpose(w_oihw, (2, 3, 1, 0)), (1, 1), 'SAME',
        dimension_numbers=('NHWC', 'HWIO', 'NHWC'))

  def bn(x, sc_sh):
    sc, sh = sc_sh
    return x * sc + sh

  pe = params['pe']
  x = jax.nn.relu(bn(conv3(state_nhwc, pe['conv1_w']), pe['bn1']))
  for blk in pe['blocks']:
    r = x
    o = jax.nn.relu(bn(conv3(x, blk['conv1_w']), blk['bn1']))
    o = bn(conv3(o, blk['conv2_w']), blk['bn2'])
    x = jax.nn.relu(o + r)

  n = x.shape[0]
  vn = params['vn']
  v = jax.nn.relu(bn(jnp.einsum('nhwc,oc->nhwo', x, vn['conv_w'].reshape(1, FILTER_NUM))
                     + vn['conv_b'], vn['bn']))
  v = v.reshape(n, -1)
  v = jax.nn.relu(v @ vn['fc1_w'].T + vn['fc1_b'])
  win = jnp.tanh(v @ vn['fc2_w'].T + vn['fc2_b'])

  pn = params['pn']
  p = jax.nn.relu(bn(jnp.einsum('nhwc,oc->nhwo', x, pn['conv_w'].reshape(2, FILTER_NUM))
                     + pn['conv_b'], pn['bn']))
  p = jnp.transpose(p, (0, 3, 1, 2)).reshape(n, -1)
  probs = jax.nn.softmax(p @ pn['fc_w'].T + pn['fc_b'], axis=1)
  return probs, win


# --------------------------------------------------------------------------- #
if __name__ == "__main__":
  key = jax.random.PRNGKey(0)
  pkey, xkey = jax.random.split(key)
  params = init_params(pkey)
  prep = prepare_params(params)           # one-time host-side folding/expansion

  # NHWC input; equivalent PyTorch NCHW shape is (2, 4, 8, 8)
  state = jax.random.normal(xkey, (BATCH, BOARD_H, BOARD_W, IN_PLANES_NUM), jnp.float32)

  fwd = jax.jit(agent_forward)
  prob, win_value = jax.block_until_ready(fwd(state, prep))

  assert prob.shape == (BATCH, ACTION_DIM)
  assert win_value.shape == (BATCH, 1)

  ref_prob, ref_win = ref_forward(state, params)
  assert jnp.allclose(prob, ref_prob, atol=1e-2, rtol=1e-2)
  assert jnp.allclose(win_value, ref_win, atol=1e-2, rtol=1e-2)
  assert bool(jnp.all(jnp.isfinite(prob))) and bool(jnp.all(jnp.isfinite(win_value)))
  assert jnp.allclose(jnp.sum(prob, axis=-1), 1.0, atol=2e-3)

  print("KERNEL_OK")
</pallas_src>

<mosaic_0001>
module attributes {stable_mosaic.version = 11 : i64} {
  func.func @_agent_fused_kernel(%arg0: i32, %arg1: memref<1x8x8x4xf32, #tpu.memory_space<vmem>>, %arg2: memref<100x1xf32, #tpu.memory_space<vmem>>, %arg3: memref<5x128x16xf32, #tpu.memory_space<vmem>>, %arg4: memref<5x16x16xf32, #tpu.memory_space<vmem>>, %arg5: memref<5x16xf32, #tpu.memory_space<vmem>>, %arg6: memref<16x8xf32, #tpu.memory_space<vmem>>, %arg7: memref<1x8xf32, #tpu.memory_space<vmem>>, %arg8: memref<256x100xf32, #tpu.memory_space<vmem>>, %arg9: memref<256x1xf32, #tpu.memory_space<vmem>>, %arg10: memref<256x1xf32, #tpu.memory_space<vmem>>, %arg11: memref<1x1xf32, #tpu.memory_space<vmem>>, %arg12: memref<32x100xf32, #tpu.memory_space<vmem>>, %arg13: memref<32x100xf32, #tpu.memory_space<vmem>>, %arg14: memref<32x1xf32, #tpu.memory_space<vmem>>, %arg15: memref<1x32x1xf32, #tpu.memory_space<vmem>>, %arg16: memref<1x1x1xf32, #tpu.memory_space<vmem>>, %arg17: memref<136x16xf32, #tpu.memory_space<vmem>>, %arg18: memref<136x16xf32, #tpu.memory_space<vmem>>) attributes {dimension_semantics = [#tpu.dimension_semantics<parallel>], iteration_bounds = array<i64: 2>, scalar_prefetch = 0 : i64, scratch_operands = 2 : i64, tpu.core_type = #tpu.core_type<tc>, window_params = [{transform_indices = @transform_0, window_bounds = array<i64: 1, 8, 8, 4>}, {pipeline_mode = #tpu.pipeline_mode<synchronous>, transform_indices = @transform_1, window_bounds = array<i64: 100, 1>}, {pipeline_mode = #tpu.pipeline_mode<synchronous>, transform_indices = @transform_2, window_bounds = array<i64: 5, 128, 16>}, {pipeline_mode = #tpu.pipeline_mode<synchronous>, transform_indices = @transform_3, window_bounds = array<i64: 5, 16, 16>}, {pipeline_mode = #tpu.pipeline_mode<synchronous>, transform_indices = @transform_4, window_bounds = array<i64: 5, 16>}, {pipeline_mode = #tpu.pipeline_mode<synchronous>, transform_indices = @transform_5, window_bounds = array<i64: 16, 8>}, {pipeline_mode = #tpu.pipeline_mode<synchronous>, transform_indices = @transform_6, window_bounds = array<i64: 1, 8>}, {pipeline_mode = #tpu.pipeline_mode<synchronous>, transform_indices = @transform_7, window_bounds = array<i64: 256, 100>}, {pipeline_mode = #tpu.pipeline_mode<synchronous>, transform_indices = @transform_8, window_bounds = array<i64: 256, 1>}, {pipeline_mode = #tpu.pipeline_mode<synchronous>, transform_indices = @transform_9, window_bounds = array<i64: 256, 1>}, {pipeline_mode = #tpu.pipeline_mode<synchronous>, transform_indices = @transform_10, window_bounds = array<i64: 1, 1>}, {pipeline_mode = #tpu.pipeline_mode<synchronous>, transform_indices = @transform_11, window_bounds = array<i64: 32, 100>}, {pipeline_mode = #tpu.pipeline_mode<synchronous>, transform_indices = @transform_12, window_bounds = array<i64: 32, 100>}, {pipeline_mode = #tpu.pipeline_mode<synchronous>, transform_indices = @transform_13, window_bounds = array<i64: 32, 1>}, {transform_indices = @transform_14, window_bounds = array<i64: 1, 32, 1>}, {transform_indices = @transform_15, window_bounds = array<i64: 1, 1, 1>}]} {
    %c0 = arith.constant 0 : index
    %c0_0 = arith.constant 0 : index
    %0 = vector.load %arg2[%c0, %c0_0] : memref<100x1xf32, #tpu.memory_space<vmem>>, vector<100x1xf32>
    %cst = arith.constant 0.000000e+00 : f32
    %1 = vector.broadcast %cst : f32 to vector<136x16xf32>
    %c0_1 = arith.constant 0 : index
    %c0_2 = arith.constant 0 : index
    %2 = vector.load %arg18[%c0_1, %c0_2] : memref<136x16xf32, #tpu.memory_space<vmem>>, vector<136x16xf32>
    tpu.vector_store %arg18[%c0_1, %c0_2], %1 {strides = array<i32>} : memref<136x16xf32, #tpu.memory_space<vmem>>, vector<136x16xf32>,
    %c0_3 = arith.constant 0 : index
    %c0_4 = arith.constant 0 : index
    %c0_5 = arith.constant 0 : index
    %c0_6 = arith.constant 0 : index
    %3 = vector.load %arg1[%c0_3, %c0_4, %c0_5, %c0_6] : memref<1x8x8x4xf32, #tpu.memory_space<vmem>>, vector<1x1x8x4xf32>
    %4 = vector.shape_cast %3 : vector<1x1x8x4xf32> to vector<8x4xf32>
    %c27 = arith.constant 27 : index
    %c0_7 = arith.constant 0 : index
    %5 = vector.load %arg18[%c27, %c0_7] : memref<136x16xf32, #tpu.memory_space<vmem>>, vector<8x4xf32>
    tpu.vector_store %arg18[%c27, %c0_7], %4 {strides = array<i32>} : memref<136x16xf32, #tpu.memory_space<vmem>>, vector<8x4xf32>,
    %c0_8 = arith.constant 0 : index
    %c1 = arith.constant 1 : index
    %c0_9 = arith.constant 0 : index
    %c0_10 = arith.constant 0 : index
    %6 = vector.load %arg1[%c0_8, %c1, %c0_9, %c0_10] : memref<1x8x8x4xf32, #tpu.memory_space<vmem>>, vector<1x1x8x4xf32>
    %7 = vector.shape_cast %6 : vector<1x1x8x4xf32> to vector<8x4xf32>
    %c37 = arith.constant 37 : index
    %c0_11 = arith.constant 0 : index
    %8 = vector.load %arg18[%c37, %c0_11] : memref<136x16xf32, #tpu.memory_space<vmem>>, vector<8x4xf32>
    tpu.vector_store %arg18[%c37, %c0_11], %7 {strides = array<i32>} : memref<136x16xf32, #tpu.memory_space<vmem>>, vector<8x4xf32>,
    %c0_12 = arith.constant 0 : index
    %c2 = arith.constant 2 : index
    %c0_13 = arith.constant 0 : index
    %c0_14 = arith.constant 0 : index
    %9 = vector.load %arg1[%c0_12, %c2, %c0_13, %c0_14] : memref<1x8x8x4xf32, #tpu.memory_space<vmem>>, vector<1x1x8x4xf32>
    %10 = vector.shape_cast %9 : vector<1x1x8x4xf32> to vector<8x4xf32>
    %c47 = arith.constant 47 : index
    %c0_15 = arith.constant 0 : index
    %11 = vector.load %arg18[%c47, %c0_15] : memref<136x16xf32, #tpu.memory_space<vmem>>, vector<8x4xf32>
    tpu.vector_store %arg18[%c47, %c0_15], %10 {strides = array<i32>} : memref<136x16xf32, #tpu.memory_space<vmem>>, vector<8x4xf32>,
    %c0_16 = arith.constant 0 : index
    %c3 = arith.constant 3 : index
    %c0_17 = arith.constant 0 : index
    %c0_18 = arith.constant 0 : index
    %12 = vector.load %arg1[%c0_16, %c3, %c0_17, %c0_18] : memref<1x8x8x4xf32, #tpu.memory_space<vmem>>, vector<1x1x8x4xf32>
    %13 = vector.shape_cast %12 : vector<1x1x8x4xf32> to vector<8x4xf32>
    %c57 = arith.constant 57 : index
    %c0_19 = arith.constant 0 : index
    %14 = vector.load %arg18[%c57, %c0_19] : memref<136x16xf32, #tpu.memory_space<vmem>>, vector<8x4xf32>
    tpu.vector_store %arg18[%c57, %c0_19], %13 {strides = array<i32>} : memref<136x16xf32, #tpu.memory_space<vmem>>, vector<8x4xf32>,
    %c0_20 = arith.constant 0 : index
    %c4 = arith.constant 4 : index
    %c0_21 = arith.constant 0 : index
    %c0_22 = arith.constant 0 : index
    %15 = vector.load %arg1[%c0_20, %c4, %c0_21, %c0_22] : memref<1x8x8x4xf32, #tpu.memory_space<vmem>>, vector<1x1x8x4xf32>
    %16 = vector.shape_cast %15 : vector<1x1x8x4xf32> to vector<8x4xf32>
    %c67 = arith.constant 67 : index
    %c0_23 = arith.constant 0 : index
    %17 = vector.load %arg18[%c67, %c0_23] : memref<136x16xf32, #tpu.memory_space<vmem>>, vector<8x4xf32>
    tpu.vector_store %arg18[%c67, %c0_23], %16 {strides = array<i32>} : memref<136x16xf32, #tpu.memory_space<vmem>>, vector<8x4xf32>,
    %c0_24 = arith.constant 0 : index
    %c5 = arith.constant 5 : index
    %c0_25 = arith.constant 0 : index
    %c0_26 = arith.constant 0 : index
    %18 = vector.load %arg1[%c0_24, %c5, %c0_25, %c0_26] : memref<1x8x8x4xf32, #tpu.memory_space<vmem>>, vector<1x1x8x4xf32>
    %19 = vector.shape_cast %18 : vector<1x1x8x4xf32> to vector<8x4xf32>
    %c77 = arith.constant 77 : index
    %c0_27 = arith.constant 0 : index
    %20 = vector.load %arg18[%c77, %c0_27] : memref<136x16xf32, #tpu.memory_space<vmem>>, vector<8x4xf32>
    tpu.vector_store %arg18[%c77, %c0_27], %19 {strides = array<i32>} : memref<136x16xf32, #tpu.memory_space<vmem>>, vector<8x4xf32>,
    %c0_28 = arith.constant 0 : index
    %c6 = arith.constant 6 : index
    %c0_29 = arith.constant 0 : index
    %c0_30 = arith.constant 0 : index
    %21 = vector.load %arg1[%c0_28, %c6, %c0_29, %c0_30] : memref<1x8x8x4xf32, #tpu.memory_space<vmem>>, vector<1x1x8x4xf32>
    %22 = vector.shape_cast %21 : vector<1x1x8x4xf32> to vector<8x4xf32>
    %c87 = arith.constant 87 : index
    %c0_31 = arith.constant 0 : index
    %23 = vector.load %arg18[%c87, %c0_31] : memref<136x16xf32, #tpu.memory_space<vmem>>, vector<8x4xf32>
    tpu.vector_store %arg18[%c87, %c0_31], %22 {strides = array<i32>} : memref<136x16xf32, #tpu.memory_space<vmem>>, vector<8x4xf32>,
    %c0_32 = arith.constant 0 : index
    %c7 = arith.constant 7 : index
    %c0_33 = arith.constant 0 : index
    %c0_34 = arith.constant 0 : index
    %24 = vector.load %arg1[%c0_32, %c7, %c0_33, %c0_34] : memref<1x8x8x4xf32, #tpu.memory_space<vmem>>, vector<1x1x8x4xf32>
    %25 = vector.shape_cast %24 : vector<1x1x8x4xf32> to vector<8x4xf32>
    %c97 = arith.constant 97 : index
    %c0_35 = arith.constant 0 : index
    %26 = vector.load %arg18[%c97, %c0_35] : memref<136x16xf32, #tpu.memory_space<vmem>>, vector<8x4xf32>
    tpu.vector_store %arg18[%c97, %c0_35], %25 {strides = array<i32>} : memref<136x16xf32, #tpu.memory_space<vmem>>, vector<8x4xf32>,
    %cst_36 = arith.constant 0.000000e+00 : f32
    %27 = vector.broadcast %cst_36 : f32 to vector<16x16xf32>
    %c0_37 = arith.constant 0 : index
    %c0_38 = arith.constant 0 : index
    %28 = vector.load %arg17[%c0_37, %c0_38] : memref<136x16xf32, #tpu.memory_space<vmem>>, vector<16x16xf32>
    tpu.vector_store %arg17[%c0_37, %c0_38], %27 {strides = array<i32>} : memref<136x16xf32, #tpu.memory_space<vmem>>, vector<16x16xf32>,
    %cst_39 = arith.constant 0.000000e+00 : f32
    %29 = vector.broadcast %cst_39 : f32 to vector<20x16xf32>
    %c116 = arith.constant 116 : index
    %c0_40 = arith.constant 0 : index
    %30 = vector.load %arg17[%c116, %c0_40] : memref<136x16xf32, #tpu.memory_space<vmem>>, vector<20x16xf32>
    tpu.vector_store %arg17[%c116, %c0_40], %29 {strides = array<i32>} : memref<136x16xf32, #tpu.memory_space<vmem>>, vector<20x16xf32>,
    %c5_41 = arith.constant 5 : index
    %c0_42 = arith.constant 0 : index
    %31 = vector.load %arg18[%c5_41, %c0_42] : memref<136x16xf32, #tpu.memory_space<vmem>>, vector<100x16xf32>
    %c6_43 = arith.constant 6 : index
    %c0_44 = arith.constant 0 : index
    %32 = vector.load %arg18[%c6_43, %c0_44] : memref<136x16xf32, #tpu.memory_space<vmem>>, vector<100x16xf32>
    %c7_45 = arith.constant 7 : index
    %c0_46 = arith.constant 0 : index
    %33 = vector.load %arg18[%c7_45, %c0_46] : memref<136x16xf32, #tpu.memory_space<vmem>>, vector<100x16xf32>
    %c15 = arith.constant 15 : index
    %c0_47 = arith.constant 0 : index
    %34 = vector.load %arg18[%c15, %c0_47] : memref<136x16xf32, #tpu.memory_space<vmem>>, vector<100x16xf32>
    %c16 = arith.constant 16 : index
    %c0_48 = arith.constant 0 : index
    %35 = vector.load %arg18[%c16, %c0_48] : memref<136x16xf32, #tpu.memory_space<vmem>>, vector<100x16xf32>
    %c17 = arith.constant 17 : index
    %c0_49 = arith.constant 0 : index
    %36 = vector.load %arg18[%c17, %c0_49] : memref<136x16xf32, #tpu.memory_space<vmem>>, vector<100x16xf32>
    %c25 = arith.constant 25 : index
    %c0_50 = arith.constant 0 : index
    %37 = vector.load %arg18[%c25, %c0_50] : memref<136x16xf32, #tpu.memory_space<vmem>>, vector<100x16xf32>
    %c26 = arith.constant 26 : index
    %c0_51 = arith.constant 0 : index
    %38 = vector.load %arg18[%c26, %c0_51] : memref<136x16xf32, #tpu.memory_space<vmem>>, vector<100x16xf32>
    %c27_52 = arith.constant 27 : index
    %c0_53 = arith.constant 0 : index
    %39 = vector.load %arg18[%c27_52, %c0_53] : memref<136x16xf32, #tpu.memory_space<vmem>>, vector<100x16xf32>
    %40 = tpu.concatenate %31, %32, %33, %34, %35, %36, %37, %38 in 1 : vector<100x16xf32>, vector<100x16xf32>, vector<100x16xf32>, vector<100x16xf32>, vector<100x16xf32>, vector<100x16xf32>, vector<100x16xf32>, vector<100x16xf32> -> vector<100x128xf32>
    %c0_54 = arith.constant 0 : index
    %c0_55 = arith.constant 0 : index
    %c0_56 = arith.constant 0 : index
    %41 = vector.load %arg3[%c0_54, %c0_55, %c0_56] : memref<5x128x16xf32, #tpu.memory_space<vmem>>, vector<1x128x16xf32>
    %42 = vector.shape_cast %41 : vector<1x128x16xf32> to vector<128x16xf32>
    %cst_57 = arith.constant dense<0.000000e+00> : vector<100x16xf32>
    %43 = tpu.matmul %40, %42, %cst_57 {dimension_numbers = #tpu.dot_dimension_numbers<[1], [0], [0], [1], [0, 0, 1, 1], [], []>} : vector<100x128xf32>, vector<128x16xf32>, vector<100x16xf32> -> vector<100x16xf32>
    %c0_58 = arith.constant 0 : index
    %c0_59 = arith.constant 0 : index
    %c0_60 = arith.constant 0 : index
    %44 = vector.load %arg4[%c0_58, %c0_59, %c0_60] : memref<5x16x16xf32, #tpu.memory_space<vmem>>, vector<1x16x16xf32>
    %45 = vector.shape_cast %44 : vector<1x16x16xf32> to vector<16x16xf32>
    %cst_61 = arith.constant dense<0.000000e+00> : vector<100x16xf32>
    %46 = tpu.matmul %39, %45, %cst_61 {dimension_numbers = #tpu.dot_dimension_numbers<[1], [0], [0], [1], [0, 0, 1, 1], [], []>} : vector<100x16xf32>, vector<16x16xf32>, vector<100x16xf32> -> vector<100x16xf32>
    %47 = arith.addf %43, %46 : vector<100x16xf32>
    %c0_62 = arith.constant 0 : index
    %c0_63 = arith.constant 0 : index
    %48 = vector.load %arg5[%c0_62, %c0_63] : memref<5x16xf32, #tpu.memory_space<vmem>>, vector<1x16xf32>
    %49 = vector.broadcast %48 : vector<1x16xf32> to vector<100x16xf32>
    %50 = arith.addf %47, %49 : vector<100x16xf32>
    %51 = vector.broadcast %0 : vector<100x1xf32> to vector<100x16xf32>
    %52 = arith.mulf %50, %51 : vector<100x16xf32>
    %cst_64 = arith.constant 0.000000e+00 : f32
    %53 = vector.broadcast %cst_64 : f32 to vector<100x16xf32>
    %54 = arith.maximumf %52, %53 : vector<100x16xf32>
    %c16_65 = arith.constant 16 : index
    %c0_66 = arith.constant 0 : index
    %55 = vector.load %arg17[%c16_65, %c0_66] : memref<136x16xf32, #tpu.memory_space<vmem>>, vector<100x16xf32>
    tpu.vector_store %arg17[%c16_65, %c0_66], %54 {strides = array<i32>} : memref<136x16xf32, #tpu.memory_space<vmem>>, vector<100x16xf32>,
    %c5_67 = arith.constant 5 : index
    %c0_68 = arith.constant 0 : index
    %56 = vector.load %arg17[%c5_67, %c0_68] : memref<136x16xf32, #tpu.memory_space<vmem>>, vector<100x16xf32>
    %c6_69 = arith.constant 6 : index
    %c0_70 = arith.constant 0 : index
    %57 = vector.load %arg17[%c6_69, %c0_70] : memref<136x16xf32, #tpu.memory_space<vmem>>, vector<100x16xf32>
    %c7_71 = arith.constant 7 : index
    %c0_72 = arith.constant 0 : index
    %58 = vector.load %arg17[%c7_71, %c0_72] : memref<136x16xf32, #tpu.memory_space<vmem>>, vector<100x16xf32>
    %c15_73 = arith.constant 15 : index
    %c0_74 = arith.constant 0 : index
    %59 = vector.load %arg17[%c15_73, %c0_74] : memref<136x16xf32, #tpu.memory_space<vmem>>, vector<100x16xf32>
    %c16_75 = arith.constant 16 : index
    %c0_76 = arith.constant 0 : index
    %60 = vector.load %arg17[%c16_75, %c0_76] : memref<136x16xf32, #tpu.memory_space<vmem>>, vector<100x16xf32>
    %c17_77 = arith.constant 17 : index
    %c0_78 = arith.constant 0 : index
    %61 = vector.load %arg17[%c17_77, %c0_78] : memref<136x16xf32, #tpu.memory_space<vmem>>, vector<100x16xf32>
    %c25_79 = arith.constant 25 : index
    %c0_80 = arith.constant 0 : index
    %62 = vector.load %arg17[%c25_79, %c0_80] : memref<136x16xf32, #tpu.memory_space<vmem>>, vector<100x16xf32>
    %c26_81 = arith.constant 26 : index
    %c0_82 = arith.constant 0 : index
    %63 = vector.load %arg17[%c26_81, %c0_82] : memref<136x16xf32, #tpu.memory_space<vmem>>, vector<100x16xf32>
    %c27_83 = arith.constant 27 : index
    %c0_84 = arith.constant 0 : index
    %64 = vector.load %arg17[%c27_83, %c0_84] : memref<136x16xf32, #tpu.memory_space<vmem>>, vector<100x16xf32>
    %65 = tpu.concatenate %56, %57, %58, %59, %60, %61, %62, %63 in 1 : vector<100x16xf32>, vector<100x16xf32>, vector<100x16xf32>, vector<100x16xf32>, vector<100x16xf32>, vector<100x16xf32>, vector<100x16xf32>, vector<100x16xf32> -> vector<100x128xf32>
    %c1_85 = arith.constant 1 : index
    %c0_86 = arith.constant 0 : index
    %c0_87 = arith.constant 0 : index
    %66 = vector.load %arg3[%c1_85, %c0_86, %c0_87] : memref<5x128x16xf32, #tpu.memory_space<vmem>>, vector<1x128x16xf32>
    %67 = vector.shape_cast %66 : vector<1x128x16xf32> to vector<128x16xf32>
    %cst_88 = arith.constant dense<0.000000e+00> : vector<100x16xf32>
    %68 = tpu.matmul %65, %67, %cst_88 {dimension_numbers = #tpu.dot_dimension_numbers<[1], [0], [0], [1], [0, 0, 1, 1], [], []>} : vector<100x128xf32>, vector<128x16xf32>, vector<100x16xf32> -> vector<100x16xf32>
    %c1_89 = arith.constant 1 : index
    %c0_90 = arith.constant 0 : index
    %c0_91 = arith.constant 0 : index
    %69 = vector.load %arg4[%c1_89, %c0_90, %c0_91] : memref<5x16x16xf32, #tpu.memory_space<vmem>>, vector<1x16x16xf32>
    %70 = vector.shape_cast %69 : vector<1x16x16xf32> to vector<16x16xf32>
    %cst_92 = arith.constant dense<0.000000e+00> : vector<100x16xf32>
    %71 = tpu.matmul %64, %70, %cst_92 {dimension_numbers = #tpu.dot_dimension_numbers<[1], [0], [0], [1], [0, 0, 1, 1], [], []>} : vector<100x16xf32>, vector<16x16xf32>, vector<100x16xf32> -> vector<100x16xf32>
    %72 = arith.addf %68, %71 : vector<100x16xf32>
    %c1_93 = arith.constant 1 : index
    %c0_94 = arith.constant 0 : index
    %73 = vector.load %arg5[%c1_93, %c0_94] : memref<5x16xf32, #tpu.memory_space<vmem>>, vector<1x16xf32>
    %74 = vector.broadcast %73 : vector<1x16xf32> to vector<100x16xf32>
    %75 = arith.addf %72, %74 : vector<100x16xf32>
    %76 = vector.broadcast %0 : vector<100x1xf32> to vector<100x16xf32>
    %77 = arith.mulf %75, %76 : vector<100x16xf32>
    %cst_95 = arith.constant 0.000000e+00 : f32
    %78 = vector.broadcast %cst_95 : f32 to vector<100x16xf32>
    %79 = arith.maximumf %77, %78 : vector<100x16xf32>
    %c16_96 = arith.constant 16 : index
    %c0_97 = arith.constant 0 : index
    %80 = vector.load %arg18[%c16_96, %c0_97] : memref<136x16xf32, #tpu.memory_space<vmem>>, vector<100x16xf32>
    tpu.vector_store %arg18[%c16_96, %c0_97], %79 {strides = array<i32>} : memref<136x16xf32, #tpu.memory_space<vmem>>, vector<100x16xf32>,
    %c16_98 = arith.constant 16 : index
    %c0_99 = arith.constant 0 : index
    %81 = vector.load %arg17[%c16_98, %c0_99] : memref<136x16xf32, #tpu.memory_space<vmem>>, vector<100x16xf32>
    %c5_100 = arith.constant 5 : index
    %c0_101 = arith.constant 0 : index
    %82 = vector.load %arg18[%c5_100, %c0_101] : memref<136x16xf32, #tpu.memory_space<vmem>>, vector<100x16xf32>
    %c6_102 = arith.constant 6 : index
    %c0_103 = arith.constant 0 : index
    %83 = vector.load %arg18[%c6_102, %c0_103] : memref<136x16xf32, #tpu.memory_space<vmem>>, vector<100x16xf32>
    %c7_104 = arith.constant 7 : index
    %c0_105 = arith.constant 0 : index
    %84 = vector.load %arg18[%c7_104, %c0_105] : memref<136x16xf32, #tpu.memory_space<vmem>>, vector<100x16xf32>
    %c15_106 = arith.constant 15 : index
    %c0_107 = arith.constant 0 : index
    %85 = vector.load %arg18[%c15_106, %c0_107] : memref<136x16xf32, #tpu.memory_space<vmem>>, vector<100x16xf32>
    %c16_108 = arith.constant 16 : index
    %c0_109 = arith.constant 0 : index
    %86 = vector.load %arg18[%c16_108, %c0_109] : memref<136x16xf32, #tpu.memory_space<vmem>>, vector<100x16xf32>
    %c17_110 = arith.constant 17 : index
    %c0_111 = arith.constant 0 : index
    %87 = vector.load %arg18[%c17_110, %c0_111] : memref<136x16xf32, #tpu.memory_space<vmem>>, vector<100x16xf32>
    %c25_112 = arith.constant 25 : index
    %c0_113 = arith.constant 0 : index
    %88 = vector.load %arg18[%c25_112, %c0_113] : memref<136x16xf32, #tpu.memory_space<vmem>>, vector<100x16xf32>
    %c26_114 = arith.constant 26 : index
    %c0_115 = arith.constant 0 : index
    %89 = vector.load %arg18[%c26_114, %c0_115] : memref<136x16xf32, #tpu.memory_space<vmem>>, vector<100x16xf32>
    %c27_116 = arith.constant 27 : index
    %c0_117 = arith.constant 0 : index
    %90 = vector.load %arg18[%c27_116, %c0_117] : memref<136x16xf32, #tpu.memory_space<vmem>>, vector<100x16xf32>
    %91 = tpu.concatenate %82, %83, %84, %85, %86, %87, %88, %89 in 1 : vector<100x16xf32>, vector<100x16xf32>, vector<100x16xf32>, vector<100x16xf32>, vector<100x16xf32>, vector<100x16xf32>, vector<100x16xf32>, vector<100x16xf32> -> vector<100x128xf32>
    %c2_118 = arith.constant 2 : index
    %c0_119 = arith.constant 0 : index
    %c0_120 = arith.constant 0 : index
    %92 = vector.load %arg3[%c2_118, %c0_119, %c0_120] : memref<5x128x16xf32, #tpu.memory_space<vmem>>, vector<1x128x16xf32>
    %93 = vector.shape_cast %92 : vector<1x128x16xf32> to vector<128x16xf32>
    %cst_121 = arith.constant dense<0.000000e+00> : vector<100x16xf32>
    %94 = tpu.matmul %91, %93, %cst_121 {dimension_numbers = #tpu.dot_dimension_numbers<[1], [0], [0], [1], [0, 0, 1, 1], [], []>} : vector<100x128xf32>, vector<128x16xf32>, vector<100x16xf32> -> vector<100x16xf32>
    %c2_122 = arith.constant 2 : index
    %c0_123 = arith.constant 0 : index
    %c0_124 = arith.constant 0 : index
    %95 = vector.load %arg4[%c2_122, %c0_123, %c0_124] : memref<5x16x16xf32, #tpu.memory_space<vmem>>, vector<1x16x16xf32>
    %96 = vector.shape_cast %95 : vector<1x16x16xf32> to vector<16x16xf32>
    %cst_125 = arith.constant dense<0.000000e+00> : vector<100x16xf32>
    %97 = tpu.matmul %90, %96, %cst_125 {dimension_numbers = #tpu.dot_dimension_numbers<[1], [0], [0], [1], [0, 0, 1, 1], [], []>} : vector<100x16xf32>, vector<16x16xf32>, vector<100x16xf32> -> vector<100x16xf32>
    %98 = arith.addf %94, %97 : vector<100x16xf32>
    %c2_126 = arith.constant 2 : index
    %c0_127 = arith.constant 0 : index
    %99 = vector.load %arg5[%c2_126, %c0_127] : memref<5x16xf32, #tpu.memory_space<vmem>>, vector<1x16xf32>
    %100 = vector.broadcast %99 : vector<1x16xf32> to vector<100x16xf32>
    %101 = arith.addf %98, %100 : vector<100x16xf32>
    %102 = vector.broadcast %0 : vector<100x1xf32> to vector<100x16xf32>
    %103 = arith.mulf %101, %102 : vector<100x16xf32>
    %104 = arith.addf %103, %81 : vector<100x16xf32>
    %cst_128 = arith.constant 0.000000e+00 : f32
    %105 = vector.broadcast %cst_128 : f32 to vector<100x16xf32>
    %106 = arith.maximumf %104, %105 : vector<100x16xf32>
    %c16_129 = arith.constant 16 : index
    %c0_130 = arith.constant 0 : index
    %107 = vector.load %arg17[%c16_129, %c0_130] : memref<136x16xf32, #tpu.memory_space<vmem>>, vector<100x16xf32>
    tpu.vector_store %arg17[%c16_129, %c0_130], %106 {strides = array<i32>} : memref<136x16xf32, #tpu.memory_space<vmem>>, vector<100x16xf32>,
    %c5_131 = arith.constant 5 : index
    %c0_132 = arith.constant 0 : index
    %108 = vector.load %arg17[%c5_131, %c0_132] : memref<136x16xf32, #tpu.memory_space<vmem>>, vector<100x16xf32>
    %c6_133 = arith.constant 6 : index
    %c0_134 = arith.constant 0 : index
    %109 = vector.load %arg17[%c6_133, %c0_134] : memref<136x16xf32, #tpu.memory_space<vmem>>, vector<100x16xf32>
    %c7_135 = arith.constant 7 : index
    %c0_136 = arith.constant 0 : index
    %110 = vector.load %arg17[%c7_135, %c0_136] : memref<136x16xf32, #tpu.memory_space<vmem>>, vector<100x16xf32>
    %c15_137 = arith.constant 15 : index
    %c0_138 = arith.constant 0 : index
    %111 = vector.load %arg17[%c15_137, %c0_138] : memref<136x16xf32, #tpu.memory_space<vmem>>, vector<100x16xf32>
    %c16_139 = arith.constant 16 : index
    %c0_140 = arith.constant 0 : index
    %112 = vector.load %arg17[%c16_139, %c0_140] : memref<136x16xf32, #tpu.memory_space<vmem>>, vector<100x16xf32>
    %c17_141 = arith.constant 17 : index
    %c0_142 = arith.constant 0 : index
    %113 = vector.load %arg17[%c17_141, %c0_142] : memref<136x16xf32, #tpu.memory_space<vmem>>, vector<100x16xf32>
    %c25_143 = arith.constant 25 : index
    %c0_144 = arith.constant 0 : index
    %114 = vector.load %arg17[%c25_143, %c0_144] : memref<136x16xf32, #tpu.memory_space<vmem>>, vector<100x16xf32>
    %c26_145 = arith.constant 26 : index
    %c0_146 = arith.constant 0 : index
    %115 = vector.load %arg17[%c26_145, %c0_146] : memref<136x16xf32, #tpu.memory_space<vmem>>, vector<100x16xf32>
    %c27_147 = arith.constant 27 : index
    %c0_148 = arith.constant 0 : index
    %116 = vector.load %arg17[%c27_147, %c0_148] : memref<136x16xf32, #tpu.memory_space<vmem>>, vector<100x16xf32>
    %117 = tpu.concatenate %108, %109, %110, %111, %112, %113, %114, %115 in 1 : vector<100x16xf32>, vector<100x16xf32>, vector<100x16xf32>, vector<100x16xf32>, vector<100x16xf32>, vector<100x16xf32>, vector<100x16xf32>, vector<100x16xf32> -> vector<100x128xf32>
    %c3_149 = arith.constant 3 : index
    %c0_150 = arith.constant 0 : index
    %c0_151 = arith.constant 0 : index
    %118 = vector.load %arg3[%c3_149, %c0_150, %c0_151] : memref<5x128x16xf32, #tpu.memory_space<vmem>>, vector<1x128x16xf32>
    %119 = vector.shape_cast %118 : vector<1x128x16xf32> to vector<128x16xf32>
    %cst_152 = arith.constant dense<0.000000e+00> : vector<100x16xf32>
    %120 = tpu.matmul %117, %119, %cst_152 {dimension_numbers = #tpu.dot_dimension_numbers<[1], [0], [0], [1], [0, 0, 1, 1], [], []>} : vector<100x128xf32>, vector<128x16xf32>, vector<100x16xf32> -> vector<100x16xf32>
    %c3_153 = arith.constant 3 : index
    %c0_154 = arith.constant 0 : index
    %c0_155 = arith.constant 0 : index
    %121 = vector.load %arg4[%c3_153, %c0_154, %c0_155] : memref<5x16x16xf32, #tpu.memory_space<vmem>>, vector<1x16x16xf32>
    %122 = vector.shape_cast %121 : vector<1x16x16xf32> to vector<16x16xf32>
    %cst_156 = arith.constant dense<0.000000e+00> : vector<100x16xf32>
    %123 = tpu.matmul %116, %122, %cst_156 {dimension_numbers = #tpu.dot_dimension_numbers<[1], [0], [0], [1], [0, 0, 1, 1], [], []>} : vector<100x16xf32>, vector<16x16xf32>, vector<100x16xf32> -> vector<100x16xf32>
    %124 = arith.addf %120, %123 : vector<100x16xf32>
    %c3_157 = arith.constant 3 : index
    %c0_158 = arith.constant 0 : index
    %125 = vector.load %arg5[%c3_157, %c0_158] : memref<5x16xf32, #tpu.memory_space<vmem>>, vector<1x16xf32>
    %126 = vector.broadcast %125 : vector<1x16xf32> to vector<100x16xf32>
    %127 = arith.addf %124, %126 : vector<100x16xf32>
    %128 = vector.broadcast %0 : vector<100x1xf32> to vector<100x16xf32>
    %129 = arith.mulf %127, %128 : vector<100x16xf32>
    %cst_159 = arith.constant 0.000000e+00 : f32
    %130 = vector.broadcast %cst_159 : f32 to vector<100x16xf32>
    %131 = arith.maximumf %129, %130 : vector<100x16xf32>
    %c16_160 = arith.constant 16 : index
    %c0_161 = arith.constant 0 : index
    %132 = vector.load %arg18[%c16_160, %c0_161] : memref<136x16xf32, #tpu.memory_space<vmem>>, vector<100x16xf32>
    tpu.vector_store %arg18[%c16_160, %c0_161], %131 {strides = array<i32>} : memref<136x16xf32, #tpu.memory_space<vmem>>, vector<100x16xf32>,
    %c16_162 = arith.constant 16 : index
    %c0_163 = arith.constant 0 : index
    %133 = vector.load %arg17[%c16_162, %c0_163] : memref<136x16xf32, #tpu.memory_space<vmem>>, vector<100x16xf32>
    %c5_164 = arith.constant 5 : index
    %c0_165 = arith.constant 0 : index
    %134 = vector.load %arg18[%c5_164, %c0_165] : memref<136x16xf32, #tpu.memory_space<vmem>>, vector<100x16xf32>
    %c6_166 = arith.constant 6 : index
    %c0_167 = arith.constant 0 : index
    %135 = vector.load %arg18[%c6_166, %c0_167] : memref<136x16xf32, #tpu.memory_space<vmem>>, vector<100x16xf32>
    %c7_168 = arith.constant 7 : index
    %c0_169 = arith.constant 0 : index
    %136 = vector.load %arg18[%c7_168, %c0_169] : memref<136x16xf32, #tpu.memory_space<vmem>>, vector<100x16xf32>
    %c15_170 = arith.constant 15 : index
    %c0_171 = arith.constant 0 : index
    %137 = vector.load %arg18[%c15_170, %c0_171] : memref<136x16xf32, #tpu.memory_space<vmem>>, vector<100x16xf32>
    %c16_172 = arith.constant 16 : index
    %c0_173 = arith.constant 0 : index
    %138 = vector.load %arg18[%c16_172, %c0_173] : memref<136x16xf32, #tpu.memory_space<vmem>>, vector<100x16xf32>
    %c17_174 = arith.constant 17 : index
    %c0_175 = arith.constant 0 : index
    %139 = vector.load %arg18[%c17_174, %c0_175] : memref<136x16xf32, #tpu.memory_space<vmem>>, vector<100x16xf32>
    %c25_176 = arith.constant 25 : index
    %c0_177 = arith.constant 0 : index
    %140 = vector.load %arg18[%c25_176, %c0_177] : memref<136x16xf32, #tpu.memory_space<vmem>>, vector<100x16xf32>
    %c26_178 = arith.constant 26 : index
    %c0_179 = arith.constant 0 : index
    %141 = vector.load %arg18[%c26_178, %c0_179] : memref<136x16xf32, #tpu.memory_space<vmem>>, vector<100x16xf32>
    %c27_180 = arith.constant 27 : index
    %c0_181 = arith.constant 0 : index
    %142 = vector.load %arg18[%c27_180, %c0_181] : memref<136x16xf32, #tpu.memory_space<vmem>>, vector<100x16xf32>
    %143 = tpu.concatenate %134, %135, %136, %137, %138, %139, %140, %141 in 1 : vector<100x16xf32>, vector<100x16xf32>, vector<100x16xf32>, vector<100x16xf32>, vector<100x16xf32>, vector<100x16xf32>, vector<100x16xf32>, vector<100x16xf32> -> vector<100x128xf32>
    %c4_182 = arith.constant 4 : index
    %c0_183 = arith.constant 0 : index
    %c0_184 = arith.constant 0 : index
    %144 = vector.load %arg3[%c4_182, %c0_183, %c0_184] : memref<5x128x16xf32, #tpu.memory_space<vmem>>, vector<1x128x16xf32>
    %145 = vector.shape_cast %144 : vector<1x128x16xf32> to vector<128x16xf32>
    %cst_185 = arith.constant dense<0.000000e+00> : vector<100x16xf32>
    %146 = tpu.matmul %143, %145, %cst_185 {dimension_numbers = #tpu.dot_dimension_numbers<[1], [0], [0], [1], [0, 0, 1, 1], [], []>} : vector<100x128xf32>, vector<128x16xf32>, vector<100x16xf32> -> vector<100x16xf32>
    %c4_186 = arith.constant 4 : index
    %c0_187 = arith.constant 0 : index
    %c0_188 = arith.constant 0 : index
    %147 = vector.load %arg4[%c4_186, %c0_187, %c0_188] : memref<5x16x16xf32, #tpu.memory_space<vmem>>, vector<1x16x16xf32>
    %148 = vector.shape_cast %147 : vector<1x16x16xf32> to vector<16x16xf32>
    %cst_189 = arith.constant dense<0.000000e+00> : vector<100x16xf32>
    %149 = tpu.matmul %142, %148, %cst_189 {dimension_numbers = #tpu.dot_dimension_numbers<[1], [0], [0], [1], [0, 0, 1, 1], [], []>} : vector<100x16xf32>, vector<16x16xf32>, vector<100x16xf32> -> vector<100x16xf32>
    %150 = arith.addf %146, %149 : vector<100x16xf32>
    %c4_190 = arith.constant 4 : index
    %c0_191 = arith.constant 0 : index
    %151 = vector.load %arg5[%c4_190, %c0_191] : memref<5x16xf32, #tpu.memory_space<vmem>>, vector<1x16xf32>
    %152 = vector.broadcast %151 : vector<1x16xf32> to vector<100x16xf32>
    %153 = arith.addf %150, %152 : vector<100x16xf32>
    %154 = vector.broadcast %0 : vector<100x1xf32> to vector<100x16xf32>
    %155 = arith.mulf %153, %154 : vector<100x16xf32>
    %156 = arith.addf %155, %133 : vector<100x16xf32>
    %cst_192 = arith.constant 0.000000e+00 : f32
    %157 = vector.broadcast %cst_192 : f32 to vector<100x16xf32>
    %158 = arith.maximumf %156, %157 : vector<100x16xf32>
    %c16_193 = arith.constant 16 : index
    %c0_194 = arith.constant 0 : index
    %159 = vector.load %arg17[%c16_193, %c0_194] : memref<136x16xf32, #tpu.memory_space<vmem>>, vector<100x16xf32>
    tpu.vector_store %arg17[%c16_193, %c0_194], %158 {strides = array<i32>} : memref<136x16xf32, #tpu.memory_space<vmem>>, vector<100x16xf32>,
    %c16_195 = arith.constant 16 : index
    %c0_196 = arith.constant 0 : index
    %160 = vector.load %arg17[%c16_195, %c0_196] : memref<136x16xf32, #tpu.memory_space<vmem>>, vector<100x16xf32>
    %c0_197 = arith.constant 0 : index
    %c0_198 = arith.constant 0 : index
    %161 = vector.load %arg6[%c0_197, %c0_198] : memref<16x8xf32, #tpu.memory_space<vmem>>, vector<16x8xf32>
    %cst_199 = arith.constant dense<0.000000e+00> : vector<100x8xf32>
    %162 = tpu.matmul %160, %161, %cst_199 {dimension_numbers = #tpu.dot_dimension_numbers<[1], [0], [0], [1], [0, 0, 1, 1], [], []>} : vector<100x16xf32>, vector<16x8xf32>, vector<100x8xf32> -> vector<100x8xf32>
    %c0_200 = arith.constant 0 : index
    %c0_201 = arith.constant 0 : index
    %163 = vector.load %arg7[%c0_200, %c0_201] : memref<1x8xf32, #tpu.memory_space<vmem>>, vector<1x8xf32>
    %164 = vector.broadcast %163 : vector<1x8xf32> to vector<100x8xf32>
    %165 = arith.addf %162, %164 : vector<100x8xf32>
    %cst_202 = arith.constant 0.000000e+00 : f32
    %166 = vector.broadcast %cst_202 : f32 to vector<100x8xf32>
    %167 = arith.maximumf %165, %166 : vector<100x8xf32>
    %168 = vector.broadcast %0 : vector<100x1xf32> to vector<100x8xf32>
    %169 = arith.mulf %167, %168 : vector<100x8xf32>
    %170 = vector.extract_strided_slice %169 {offsets = [0, 0], sizes = [100, 1], strides = [1, 1]} : vector<100x8xf32> to vector<100x1xf32>
    %171 = vector.extract_strided_slice %169 {offsets = [0, 1], sizes = [100, 1], strides = [1, 1]} : vector<100x8xf32> to vector<100x1xf32>
    %172 = vector.extract_strided_slice %169 {offsets = [0, 2], sizes = [100, 1], strides = [1, 1]} : vector<100x8xf32> to vector<100x1xf32>
    %c0_203 = arith.constant 0 : index
    %c0_204 = arith.constant 0 : index
    %173 = vector.load %arg8[%c0_203, %c0_204] : memref<256x100xf32, #tpu.memory_space<vmem>>, vector<256x100xf32>
    %cst_205 = arith.constant dense<0.000000e+00> : vector<256x1xf32>
    %174 = tpu.matmul %173, %170, %cst_205 {dimension_numbers = #tpu.dot_dimension_numbers<[1], [0], [0], [1], [0, 0, 1, 1], [], []>} : vector<256x100xf32>, vector<100x1xf32>, vector<256x1xf32> -> vector<256x1xf32>
    %c0_206 = arith.constant 0 : index
    %c0_207 = arith.constant 0 : index
    %175 = vector.load %arg9[%c0_206, %c0_207] : memref<256x1xf32, #tpu.memory_space<vmem>>, vector<256x1xf32>
    %176 = arith.addf %174, %175 : vector<256x1xf32>
    %cst_208 = arith.constant 0.000000e+00 : f32
    %177 = vector.broadcast %cst_208 : f32 to vector<256x1xf32>
    %178 = arith.maximumf %176, %177 : vector<256x1xf32>
    %c0_209 = arith.constant 0 : index
    %c0_210 = arith.constant 0 : index
    %179 = vector.load %arg10[%c0_209, %c0_210] : memref<256x1xf32, #tpu.memory_space<vmem>>, vector<256x1xf32>
    %180 = arith.mulf %178, %179 : vector<256x1xf32>
    %cst_211 = arith.constant dense<0.000000e+00> : vector<1xf32>
    %181 = vector.multi_reduction <add>, %180, %cst_211 [0] : vector<256x1xf32> to vector<1xf32>
    %182 = vector.shape_cast %181 : vector<1xf32> to vector<1x1xf32>
    %c0_212 = arith.constant 0 : index
    %c0_213 = arith.constant 0 : index
    %183 = vector.load %arg11[%c0_212, %c0_213] : memref<1x1xf32, #tpu.memory_space<vmem>>, vector<1x1xf32>
    %184 = arith.addf %182, %183 : vector<1x1xf32>
    %185 = math.tanh %184 : vector<1x1xf32>
    %c0_214 = arith.constant 0 : index
    %c0_215 = arith.constant 0 : index
    %186 = vector.load %arg12[%c0_214, %c0_215] : memref<32x100xf32, #tpu.memory_space<vmem>>, vector<32x100xf32>
    %cst_216 = arith.constant dense<0.000000e+00> : vector<32x1xf32>
    %187 = tpu.matmul %186, %171, %cst_216 {dimension_numbers = #tpu.dot_dimension_numbers<[1], [0], [0], [1], [0, 0, 1, 1], [], []>} : vector<32x100xf32>, vector<100x1xf32>, vector<32x1xf32> -> vector<32x1xf32>
    %c0_217 = arith.constant 0 : index
    %c0_218 = arith.constant 0 : index
    %188 = vector.load %arg13[%c0_217, %c0_218] : memref<32x100xf32, #tpu.memory_space<vmem>>, vector<32x100xf32>
    %cst_219 = arith.constant dense<0.000000e+00> : vector<32x1xf32>
    %189 = tpu.matmul %188, %172, %cst_219 {dimension_numbers = #tpu.dot_dimension_numbers<[1], [0], [0], [1], [0, 0, 1, 1], [], []>} : vector<32x100xf32>, vector<100x1xf32>, vector<32x1xf32> -> vector<32x1xf32>
    %190 = arith.addf %187, %189 : vector<32x1xf32>
    %c0_220 = arith.constant 0 : index
    %c0_221 = arith.constant 0 : index
    %191 = vector.load %arg14[%c0_220, %c0_221] : memref<32x1xf32, #tpu.memory_space<vmem>>, vector<32x1xf32>
    %192 = arith.addf %190, %191 : vector<32x1xf32>
    %cst_222 = arith.constant dense<0xFF800000> : vector<1xf32>
    %193 = vector.multi_reduction <maximumf>, %192, %cst_222 [0] : vector<32x1xf32> to vector<1xf32>
    %194 = vector.shape_cast %193 : vector<1xf32> to vector<1x1xf32>
    %195 = vector.broadcast %194 : vector<1x1xf32> to vector<32x1xf32>
    %196 = arith.subf %192, %195 : vector<32x1xf32>
    %197 = math.exp %196 : vector<32x1xf32>
    %cst_223 = arith.constant dense<0.000000e+00> : vector<1xf32>
    %198 = vector.multi_reduction <add>, %197, %cst_223 [0] : vector<32x1xf32> to vector<1xf32>
    %199 = vector.shape_cast %198 : vector<1xf32> to vector<1x1xf32>
    %200 = vector.broadcast %199 : vector<1x1xf32> to vector<32x1xf32>
    %201 = arith.divf %197, %200 : vector<32x1xf32>
    %202 = vector.shape_cast %201 : vector<32x1xf32> to vector<1x32x1xf32>
    %c0_224 = arith.constant 0 : index
    %c0_225 = arith.constant 0 : index
    %c0_226 = arith.constant 0 : index
    %203 = vector.load %arg15[%c0_224, %c0_225, %c0_226] : memref<1x32x1xf32, #tpu.memory_space<vmem>>, vector<1x32x1xf32>
    tpu.vector_store %arg15[%c0_224, %c0_225, %c0_226], %202 {strides = array<i32>} : memref<1x32x1xf32, #tpu.memory_space<vmem>>, vector<1x32x1xf32>,
    %204 = vector.shape_cast %185 : vector<1x1xf32> to vector<1x1x1xf32>
    %c0_227 = arith.constant 0 : index
    %c0_228 = arith.constant 0 : index
    %c0_229 = arith.constant 0 : index
    %205 = vector.load %arg16[%c0_227, %c0_228, %c0_229] : memref<1x1x1xf32, #tpu.memory_space<vmem>>, vector<1x1x1xf32>
    tpu.vector_store %arg16[%c0_227, %c0_228, %c0_229], %204 {strides = array<i32>} : memref<1x1x1xf32, #tpu.memory_space<vmem>>, vector<1x1x1xf32>,
    return
  }
  func.func @transform_0(%arg0: i32) -> (i32, i32, i32, i32) {
    %c0_i32 = arith.constant 0 : i32
    %c0_i32_0 = arith.constant 0 : i32
    %c0_i32_1 = arith.constant 0 : i32
    %c0_i32_2 = arith.constant 0 : i32
    return %arg0, %c0_i32, %c0_i32_0, %c0_i32_1 : i32, i32, i32, i32
  }
  func.func @transform_1(%arg0: i32) -> (i32, i32) {
    %c0_i32 = arith.constant 0 : i32
    %c0_i32_0 = arith.constant 0 : i32
    %c0_i32_1 = arith.constant 0 : i32
    return %c0_i32, %c0_i32_0 : i32, i32
  }
  func.func @transform_2(%arg0: i32) -> (i32, i32, i32) {
    %c0_i32 = arith.constant 0 : i32
    %c0_i32_0 = arith.constant 0 : i32
    %c0_i32_1 = arith.constant 0 : i32
    %c0_i32_2 = arith.constant 0 : i32
    return %c0_i32, %c0_i32_0, %c0_i32_1 : i32, i32, i32
  }
  func.func @transform_3(%arg0: i32) -> (i32, i32, i32) {
    %c0_i32 = arith.constant 0 : i32
    %c0_i32_0 = arith.constant 0 : i32
    %c0_i32_1 = arith.constant 0 : i32
    %c0_i32_2 = arith.constant 0 : i32
    return %c0_i32, %c0_i32_0, %c0_i32_1 : i32, i32, i32
  }
  func.func @transform_4(%arg0: i32) -> (i32, i32) {
    %c0_i32 = arith.constant 0 : i32
    %c0_i32_0 = arith.constant 0 : i32
    %c0_i32_1 = arith.constant 0 : i32
    return %c0_i32, %c0_i32_0 : i32, i32
  }
  func.func @transform_5(%arg0: i32) -> (i32, i32) {
    %c0_i32 = arith.constant 0 : i32
    %c0_i32_0 = arith.constant 0 : i32
    %c0_i32_1 = arith.constant 0 : i32
    return %c0_i32, %c0_i32_0 : i32, i32
  }
  func.func @transform_6(%arg0: i32) -> (i32, i32) {
    %c0_i32 = arith.constant 0 : i32
    %c0_i32_0 = arith.constant 0 : i32
    %c0_i32_1 = arith.constant 0 : i32
    return %c0_i32, %c0_i32_0 : i32, i32
  }
  func.func @transform_7(%arg0: i32) -> (i32, i32) {
    %c0_i32 = arith.constant 0 : i32
    %c0_i32_0 = arith.constant 0 : i32
    %c0_i32_1 = arith.constant 0 : i32
    return %c0_i32, %c0_i32_0 : i32, i32
  }
  func.func @transform_8(%arg0: i32) -> (i32, i32) {
    %c0_i32 = arith.constant 0 : i32
    %c0_i32_0 = arith.constant 0 : i32
    %c0_i32_1 = arith.constant 0 : i32
    return %c0_i32, %c0_i32_0 : i32, i32
  }
  func.func @transform_9(%arg0: i32) -> (i32, i32) {
    %c0_i32 = arith.constant 0 : i32
    %c0_i32_0 = arith.constant 0 : i32
    %c0_i32_1 = arith.constant 0 : i32
    return %c0_i32, %c0_i32_0 : i32, i32
  }
  func.func @transform_10(%arg0: i32) -> (i32, i32) {
    %c0_i32 = arith.constant 0 : i32
    %c0_i32_0 = arith.constant 0 : i32
    %c0_i32_1 = arith.constant 0 : i32
    return %c0_i32, %c0_i32_0 : i32, i32
  }
  func.func @transform_11(%arg0: i32) -> (i32, i32) {
    %c0_i32 = arith.constant 0 : i32
    %c0_i32_0 = arith.constant 0 : i32
    %c0_i32_1 = arith.constant 0 : i32
    return %c0_i32, %c0_i32_0 : i32, i32
  }
  func.func @transform_12(%arg0: i32) -> (i32, i32) {
    %c0_i32 = arith.constant 0 : i32
    %c0_i32_0 = arith.constant 0 : i32
    %c0_i32_1 = arith.constant 0 : i32
    return %c0_i32, %c0_i32_0 : i32, i32
  }
  func.func @transform_13(%arg0: i32) -> (i32, i32) {
    %c0_i32 = arith.constant 0 : i32
    %c0_i32_0 = arith.constant 0 : i32
    %c0_i32_1 = arith.constant 0 : i32
    return %c0_i32, %c0_i32_0 : i32, i32
  }
  func.func @transform_14(%arg0: i32) -> (i32, i32, i32) {
    %c0_i32 = arith.constant 0 : i32
    %c0_i32_0 = arith.constant 0 : i32
    %c0_i32_1 = arith.constant 0 : i32
    return %arg0, %c0_i32, %c0_i32_0 : i32, i32, i32
  }
  func.func @transform_15(%arg0: i32) -> (i32, i32, i32) {
    %c0_i32 = arith.constant 0 : i32
    %c0_i32_0 = arith.constant 0 : i32
    %c0_i32_1 = arith.constant 0 : i32
    return %arg0, %c0_i32, %c0_i32_0 : i32, i32, i32
  }
}

</mosaic_0001>

<llo_original>
// kernel: agent_forward.1
$region0: #{agent_forward.1}
  #allocation0 [shape = 'u32[]', space=smem, size = 0x4, offset = 0x4, fixed_abs, tag = 'smem constant byte address 0x4 - core index']
  #allocation1 [shape = 'u32[144,128]{1,0:T(1,128)}', space=vmem, size = 0x12000, scoped, tag = 'internal scratch']
  #allocation2 [shape = 'f32[136,16]{1,0:T(8,128)}', space=vmem, size = 0x11000, scoped, tag = 'scratch operand']
  #allocation3 [shape = 'f32[136,16]{1,0:T(8,128)}', space=vmem, size = 0x11000, scoped, tag = 'scratch operand']
  #allocation4 [shape = 'f32[1,1]{1,0:T(1,128)S(1)}', space=vmem, size = 0x200, scoped, tag = 'scoped memory for agent_forward.1']
  %s0 = inlined_call_operand.vmem [shape: f32[2,8,8,4], index: 0, kind: input, shape index: {}]
  %s1 = inlined_call_operand.vmem [shape: f32[100,1], index: 1, kind: input, shape index: {}]
  %s2 = inlined_call_operand.vmem [shape: f32[5,128,16], index: 2, kind: input, shape index: {}]
  %s3 = inlined_call_operand.vmem [shape: f32[5,16,16], index: 3, kind: input, shape index: {}]
  %s4 = inlined_call_operand.vmem [shape: f32[5,16], index: 4, kind: input, shape index: {}]
  %s5 = inlined_call_operand.vmem [shape: f32[16,8], index: 5, kind: input, shape index: {}]
  %s6 = inlined_call_operand.vmem [shape: f32[1,8], index: 6, kind: input, shape index: {}]
  %s7 = inlined_call_operand.vmem [shape: f32[256,100], index: 7, kind: input, shape index: {}]
  %s8 = inlined_call_operand.vmem [shape: f32[256,1], index: 8, kind: input, shape index: {}]
  %s9 = inlined_call_operand.vmem [shape: f32[256,1], index: 9, kind: input, shape index: {}]
  %s10 = inlined_call_operand.<no memory space> [shape: f32[1,1], index: 10, kind: input, shape index: {}]
  %s11 = inlined_call_operand.vmem [shape: f32[32,100], index: 11, kind: input, shape index: {}]
  %s12 = inlined_call_operand.vmem [shape: f32[32,100], index: 12, kind: input, shape index: {}]
  %s13 = inlined_call_operand.vmem [shape: f32[32,1], index: 13, kind: input, shape index: {}]
  %s14 = inlined_call_operand.vmem [shape: f32[2,32,1], index: 14, kind: output, shape index: {0}]
  %s15 = inlined_call_operand.vmem [shape: f32[2,1,1], index: 15, kind: output, shape index: {1}]
  %16 = xla_tuple %s14, %s15
  %s17 = sld [smem:[#allocation0]]
  $region97: #{agent_forward.1} parent=0
    _
  %s19 = ssub.s32 1, %s17
  %s20 = scalar_select 0, %s19, %s17
  %v21 = vstv %s10
  %22 = vst [vmem:[#allocation4] sm:$0x1] %v21
  loop: start=0, step=1, limit=4
  $region2: #{agent_forward.1} parent=0 // loop_pre_header
    _
  $region3: #{agent_forward.1} parent=0 // loop_header
    %s24 = sphi 0, %s28
    %p25 = scmp.ge.s32.totalorder %s24, 4
    %s34 = sphi 0, %s36
    %s37 = sphi 0, %s34
    %s38 = sphi 0, %s37
    %s54 = sphi 0, %s38
    %s58 = sphi 0, %s58
    %s60 = sphi 0, %s58
    %s61 = sphi 0, %s60
    %s75 = sphi 0, %s61
    %s79 = sphi 0, %s79
    %s81 = sphi 0, %s79
    %s82 = sphi 0, %s81
    %s96 = sphi 0, %s82
    %s100 = sphi 0, %s100
    %s102 = sphi 0, %s100
    %s103 = sphi 0, %s102
    %s117 = sphi 0, %s103
    %s121 = sphi 0, %s121
    %s123 = sphi 0, %s121
    %s124 = sphi 0, %s123
    %s138 = sphi 0, %s124
    %s142 = sphi 0, %s142
    %s144 = sphi 0, %s142
    %s145 = sphi 0, %s144
    %s159 = sphi 0, %s145
    %s163 = sphi 0, %s163
    %s165 = sphi 0, %s163
    %s166 = sphi 0, %s165
    %s180 = sphi 0, %s166
    %s184 = sphi 0, %s184
    %s186 = sphi 0, %s184
    %s187 = sphi 0, %s186
    %s201 = sphi 0, %s187
    %s205 = sphi 0, %s205
    %s207 = sphi 0, %s205
    %s208 = sphi 0, %s207
    %s222 = sphi 0, %s208
    %s226 = sphi 0, %s226
    %s228 = sphi 0, %s226
    %s229 = sphi 0, %s228
    %s243 = sphi 0, %s229
    %s247 = sphi 0, %s247
    %s249 = sphi 0, %s247
    %s250 = sphi 0, %s249
    %s264 = sphi 0, %s250
    %s268 = sphi 0, %s268
    %s270 = sphi 0, %s268
    %s271 = sphi 0, %s270
    %s285 = sphi 0, %s271
    %s289 = sphi 0, %s289
    %s291 = sphi 0, %s289
    %s292 = sphi 0, %s291
    %s306 = sphi 0, %s292
    %s310 = sphi 0, %s310
    %s312 = sphi 0, %s310
    %s313 = sphi 0, %s312
    %s327 = sphi 0, %s313
    %s333 = sphi 0, %s335
    %s336 = sphi 0, %s333
    %s337 = sphi 0, %s336
    %s353 = sphi 0, %s337
    %s359 = sphi 0, %s361
    %s362 = sphi 0, %s359
    %s363 = sphi 0, %s362
    %s379 = sphi 0, %s363
  $region4: #{agent_forward.1} parent=0 // loop_header_branch
    %27 = sbr.rel (%p25) target = $region8
  $region5: #{agent_forward.1} parent=0 // loop_body
    %s29 = ssub.s32 %s24, 1
    %s30 = ssub.s32 %s24, 2
    %s31 = sadd.s32 %s24, 1
    %s32 = ssub.s32 %s24, %s31
    %p33 = scmp.eq.s32.totalorder %s32, 0
    %s35 = sadd.s32 %s34, 1
    %s36 = scalar_select %p33, %s34, %s35
    %p39 = pneg %p33
    %p40 = scmp.eq.s32.totalorder %s24, 1
    %p41 = por %p39, %p40
    %p42 = scmp.ne.s32.totalorder %s34, %s37
    %p43 = scmp.eq.s32.totalorder %s24, 0
    %p44 = por %p42, %p43
    %p45 = scmp.ne.s32.totalorder %s34, %s37
    %p46 = scmp.eq.s32.totalorder %s29, 1
    %p47 = por %p45, %p46
    %p48 = scmp.ne.s32.totalorder %s37, %s38
    %p49 = scmp.eq.s32.totalorder %s29, 0
    %p50 = por %p48, %p49
    %p51 = scmp.ne.s32.totalorder %s37, %s38
    %p52 = scmp.eq.s32.totalorder %s30, 1
    %p53 = por %p51, %p52
    %p55 = scmp.ne.s32.totalorder %s38, %s54
    %p56 = scmp.eq.s32.totalorder %s30, 0
    %p57 = por %p55, %p56
    %s59 = sadd.s32 %s58, 1
    %p62 = scmp.eq.s32.totalorder %s24, 1
    %p63 = scmp.ne.s32.totalorder %s58, %s60
    %p64 = scmp.eq.s32.totalorder %s24, 0
    %p65 = por %p63, %p64
    %p66 = scmp.ne.s32.totalorder %s58, %s60
    %p67 = scmp.eq.s32.totalorder %s29, 1
    %p68 = por %p66, %p67
    %p69 = scmp.ne.s32.totalorder %s60, %s61
    %p70 = scmp.eq.s32.totalorder %s29, 0
    %p71 = por %p69, %p70
    %p72 = scmp.ne.s32.totalorder %s60, %s61
    %p73 = scmp.eq.s32.totalorder %s30, 1
    %p74 = por %p72, %p73
    %p76 = scmp.ne.s32.totalorder %s61, %s75
    %p77 = scmp.eq.s32.totalorder %s30, 0
    %p78 = por %p76, %p77
    %s80 = sadd.s32 %s79, 1
    %p83 = scmp.eq.s32.totalorder %s24, 1
    %p84 = scmp.ne.s32.totalorder %s79, %s81
    %p85 = scmp.eq.s32.totalorder %s24, 0
    %p86 = por %p84, %p85
    %p87 = scmp.ne.s32.totalorder %s79, %s81
    %p88 = scmp.eq.s32.totalorder %s29, 1
    %p89 = por %p87, %p88
    %p90 = scmp.ne.s32.totalorder %s81, %s82
    %p91 = scmp.eq.s32.totalorder %s29, 0
    %p92 = por %p90, %p91
    %p93 = scmp.ne.s32.totalorder %s81, %s82
    %p94 = scmp.eq.s32.totalorder %s30, 1
    %p95 = por %p93, %p94
    %p97 = scmp.ne.s32.totalorder %s82, %s96
    %p98 = scmp.eq.s32.totalorder %s30, 0
    %p99 = por %p97, %p98
    %s101 = sadd.s32 %s100, 1
    %p104 = scmp.eq.s32.totalorder %s24, 1
    %p105 = scmp.ne.s32.totalorder %s100, %s102
    %p106 = scmp.eq.s32.totalorder %s24, 0
    %p107 = por %p105, %p106
    %p108 = scmp.ne.s32.totalorder %s100, %s102
    %p109 = scmp.eq.s32.totalorder %s29, 1
    %p110 = por %p108, %p109
    %p111 = scmp.ne.s32.totalorder %s102, %s103
    %p112 = scmp.eq.s32.totalorder %s29, 0
    %p113 = por %p111, %p112
    %p114 = scmp.ne.s32.totalorder %s102, %s103
    %p115 = scmp.eq.s32.totalorder %s30, 1
    %p116 = por %p114, %p115
    %p118 = scmp.ne.s32.totalorder %s103, %s117
    %p119 = scmp.eq.s32.totalorder %s30, 0
    %p120 = por %p118, %p119
    %s122 = sadd.s32 %s121, 1
    %p125 = scmp.eq.s32.totalorder %s24, 1
    %p126 = scmp.ne.s32.totalorder %s121, %s123
    %p127 = scmp.eq.s32.totalorder %s24, 0
    %p128 = por %p126, %p127
    %p129 = scmp.ne.s32.totalorder %s121, %s123
    %p130 = scmp.eq.s32.totalorder %s29, 1
    %p131 = por %p129, %p130
    %p132 = scmp.ne.s32.totalorder %s123, %s124
    %p133 = scmp.eq.s32.totalorder %s29, 0
    %p134 = por %p132, %p133
    %p135 = scmp.ne.s32.totalorder %s123, %s124
    %p136 = scmp.eq.s32.totalorder %s30, 1
    %p137 = por %p135, %p136
    %p139 = scmp.ne.s32.totalorder %s124, %s138
    %p140 = scmp.eq.s32.totalorder %s30, 0
    %p141 = por %p139, %p140
    %s143 = sadd.s32 %s142, 1
    %p146 = scmp.eq.s32.totalorder %s24, 1
    %p147 = scmp.ne.s32.totalorder %s142, %s144
    %p148 = scmp.eq.s32.totalorder %s24, 0
    %p149 = por %p147, %p148
    %p150 = scmp.ne.s32.totalorder %s142, %s144
    %p151 = scmp.eq.s32.totalorder %s29, 1
    %p152 = por %p150, %p151
    %p153 = scmp.ne.s32.totalorder %s144, %s145
    %p154 = scmp.eq.s32.totalorder %s29, 0
    %p155 = por %p153, %p154
    %p156 = scmp.ne.s32.totalorder %s144, %s145
    %p157 = scmp.eq.s32.totalorder %s30, 1
    %p158 = por %p156, %p157
    %p160 = scmp.ne.s32.totalorder %s145, %s159
    %p161 = scmp.eq.s32.totalorder %s30, 0
    %p162 = por %p160, %p161
    %s164 = sadd.s32 %s163, 1
    %p167 = scmp.eq.s32.totalorder %s24, 1
    %p168 = scmp.ne.s32.totalorder %s163, %s165
    %p169 = scmp.eq.s32.totalorder %s24, 0
    %p170 = por %p168, %p169
    %p171 = scmp.ne.s32.totalorder %s163, %s165
    %p172 = scmp.eq.s32.totalorder %s29, 1
    %p173 = por %p171, %p172
    %p174 = scmp.ne.s32.totalorder %s165, %s166
    %p175 = scmp.eq.s32.totalorder %s29, 0
    %p176 = por %p174, %p175
    %p177 = scmp.ne.s32.totalorder %s165, %s166
    %p178 = scmp.eq.s32.totalorder %s30, 1
    %p179 = por %p177, %p178
    %p181 = scmp.ne.s32.totalorder %s166, %s180
    %p182 = scmp.eq.s32.totalorder %s30, 0
    %p183 = por %p181, %p182
    %s185 = sadd.s32 %s184, 1
    %p188 = scmp.eq.s32.totalorder %s24, 1
    %p189 = scmp.ne.s32.totalorder %s184, %s186
    %p190 = scmp.eq.s32.totalorder %s24, 0
    %p191 = por %p189, %p190
    %p192 = scmp.ne.s32.totalorder %s184, %s186
    %p193 = scmp.eq.s32.totalorder %s29, 1
    %p194 = por %p192, %p193
    %p195 = scmp.ne.s32.totalorder %s186, %s187
    %p196 = scmp.eq.s32.totalorder %s29, 0
    %p197 = por %p195, %p196
    %p198 = scmp.ne.s32.totalorder %s186, %s187
    %p199 = scmp.eq.s32.totalorder %s30, 1
    %p200 = por %p198, %p199
    %p202 = scmp.ne.s32.totalorder %s187, %s201
    %p203 = scmp.eq.s32.totalorder %s30, 0
    %p204 = por %p202, %p203
    %s206 = sadd.s32 %s205, 1
    %p209 = scmp.eq.s32.totalorder %s24, 1
    %p210 = scmp.ne.s32.totalorder %s205, %s207
    %p211 = scmp.eq.s32.totalorder %s24, 0
    %p212 = por %p210, %p211
    %p213 = scmp.ne.s32.totalorder %s205, %s207
    %p214 = scmp.eq.s32.totalorder %s29, 1
    %p215 = por %p213, %p214
    %p216 = scmp.ne.s32.totalorder %s207, %s208
    %p217 = scmp.eq.s32.totalorder %s29, 0
    %p218 = por %p216, %p217
    %p219 = scmp.ne.s32.totalorder %s207, %s208
    %p220 = scmp.eq.s32.totalorder %s30, 1
    %p221 = por %p219, %p220
    %p223 = scmp.ne.s32.totalorder %s208, %s222
    %p224 = scmp.eq.s32.totalorder %s30, 0
    %p225 = por %p223, %p224
    %s227 = sadd.s32 %s226, 1
    %p230 = scmp.eq.s32.totalorder %s24, 1
    %p231 = scmp.ne.s32.totalorder %s226, %s228
    %p232 = scmp.eq.s32.totalorder %s24, 0
    %p233 = por %p231, %p232
    %p234 = scmp.ne.s32.totalorder %s226, %s228
    %p235 = scmp.eq.s32.totalorder %s29, 1
    %p236 = por %p234, %p235
    %p237 = scmp.ne.s32.totalorder %s228, %s229
    %p238 = scmp.eq.s32.totalorder %s29, 0
    %p239 = por %p237, %p238
    %p240 = scmp.ne.s32.totalorder %s228, %s229
    %p241 = scmp.eq.s32.totalorder %s30, 1
    %p242 = por %p240, %p241
    %p244 = scmp.ne.s32.totalorder %s229, %s243
    %p245 = scmp.eq.s32.totalorder %s30, 0
    %p246 = por %p244, %p245
    %s248 = sadd.s32 %s247, 1
    %p251 = scmp.eq.s32.totalorder %s24, 1
    %p252 = scmp.ne.s32.totalorder %s247, %s249
    %p253 = scmp.eq.s32.totalorder %s24, 0
    %p254 = por %p252, %p253
    %p255 = scmp.ne.s32.totalorder %s247, %s249
    %p256 = scmp.eq.s32.totalorder %s29, 1
    %p257 = por %p255, %p256
    %p258 = scmp.ne.s32.totalorder %s249, %s250
    %p259 = scmp.eq.s32.totalorder %s29, 0
    %p260 = por %p258, %p259
    %p261 = scmp.ne.s32.totalorder %s249, %s250
    %p262 = scmp.eq.s32.totalorder %s30, 1
    %p263 = por %p261, %p262
    %p265 = scmp.ne.s32.totalorder %s250, %s264
    %p266 = scmp.eq.s32.totalorder %s30, 0
    %p267 = por %p265, %p266
    %s269 = sadd.s32 %s268, 1
    %p272 = scmp.eq.s32.totalorder %s24, 1
    %p273 = scmp.ne.s32.totalorder %s268, %s270
    %p274 = scmp.eq.s32.totalorder %s24, 0
    %p275 = por %p273, %p274
    %p276 = scmp.ne.s32.totalorder %s268, %s270
    %p277 = scmp.eq.s32.totalorder %s29, 1
    %p278 = por %p276, %p277
    %p279 = scmp.ne.s32.totalorder %s270, %s271
    %p280 = scmp.eq.s32.totalorder %s29, 0
    %p281 = por %p279, %p280
    %p282 = scmp.ne.s32.totalorder %s270, %s271
    %p283 = scmp.eq.s32.totalorder %s30, 1
    %p284 = por %p282, %p283
    %p286 = scmp.ne.s32.totalorder %s271, %s285
    %p287 = scmp.eq.s32.totalorder %s30, 0
    %p288 = por %p286, %p287
    %s290 = sadd.s32 %s289, 1
    %p293 = scmp.eq.s32.totalorder %s24, 1
    %p294 = scmp.ne.s32.totalorder %s289, %s291
    %p295 = scmp.eq.s32.totalorder %s24, 0
    %p296 = por %p294, %p295
    %p297 = scmp.ne.s32.totalorder %s289, %s291
    %p298 = scmp.eq.s32.totalorder %s29, 1
    %p299 = por %p297, %p298
    %p300 = scmp.ne.s32.totalorder %s291, %s292
    %p301 = scmp.eq.s32.totalorder %s29, 0
    %p302 = por %p300, %p301
    %p303 = scmp.ne.s32.totalorder %s291, %s292
    %p304 = scmp.eq.s32.totalorder %s30, 1
    %p305 = por %p303, %p304
    %p307 = scmp.ne.s32.totalorder %s292, %s306
    %p308 = scmp.eq.s32.totalorder %s30, 0
    %p309 = por %p307, %p308
    %s311 = sadd.s32 %s310, 1
    %p314 = scmp.eq.s32.totalorder %s24, 1
    %p315 = scmp.ne.s32.totalorder %s310, %s312
    %p316 = scmp.eq.s32.totalorder %s24, 0
    %p317 = por %p315, %p316
    %p318 = scmp.ne.s32.totalorder %s310, %s312
    %p319 = scmp.eq.s32.totalorder %s29, 1
    %p320 = por %p318, %p319
    %p321 = scmp.ne.s32.totalorder %s312, %s313
    %p322 = scmp.eq.s32.totalorder %s29, 0
    %p323 = por %p321, %p322
    %p324 = scmp.ne.s32.totalorder %s312, %s313
    %p325 = scmp.eq.s32.totalorder %s30, 1
    %p326 = por %p324, %p325
    %p328 = scmp.ne.s32.totalorder %s313, %s327
    %p329 = scmp.eq.s32.totalorder %s30, 0
    %p330 = por %p328, %p329
    %s331 = ssub.s32 %s24, %s31
    %p332 = scmp.eq.s32.totalorder %s331, 0
    %s334 = sadd.s32 %s333, 1
    %s335 = scalar_select %p332, %s333, %s334
    %p338 = pneg %p332
    %p339 = scmp.eq.s32.totalorder %s24, 1
    %p340 = por %p338, %p339
    %p341 = scmp.ne.s32.totalorder %s333, %s336
    %p342 = scmp.eq.s32.totalorder %s24, 0
    %p343 = por %p341, %p342
    %p344 = scmp.ne.s32.totalorder %s333, %s336
    %p345 = scmp.eq.s32.totalorder %s29, 1
    %p346 = por %p344, %p345
    %p347 = scmp.ne.s32.totalorder %s336, %s337
    %p348 = scmp.eq.s32.totalorder %s29, 0
    %p349 = por %p347, %p348
    %p350 = scmp.ne.s32.totalorder %s336, %s337
    %p351 = scmp.eq.s32.totalorder %s30, 1
    %p352 = por %p350, %p351
    %p354 = scmp.ne.s32.totalorder %s337, %s353
    %p355 = scmp.eq.s32.totalorder %s30, 0
    %p356 = por %p354, %p355
    %s357 = ssub.s32 %s24, %s31
    %p358 = scmp.eq.s32.totalorder %s357, 0
    %s360 = sadd.s32 %s359, 1
    %s361 = scalar_select %p358, %s359, %s360
    %p364 = pneg %p358
    %p365 = scmp.eq.s32.totalorder %s24, 1
    %p366 = por %p364, %p365
    %p367 = scmp.ne.s32.totalorder %s359, %s362
    %p368 = scmp.eq.s32.totalorder %s24, 0
    %p369 = por %p367, %p368
    %p370 = scmp.ne.s32.totalorder %s359, %s362
    %p371 = scmp.eq.s32.totalorder %s29, 1
    %p372 = por %p370, %p371
    %p373 = scmp.ne.s32.totalorder %s362, %s363
    %p374 = scmp.eq.s32.totalorder %s29, 0
    %p375 = por %p373, %p374
    %p376 = scmp.ne.s32.totalorder %s362, %s363
    %p377 = scmp.eq.s32.totalorder %s30, 1
    %p378 = por %p376, %p377
    %p380 = scmp.ne.s32.totalorder %s363, %s379
    %p381 = scmp.eq.s32.totalorder %s30, 0
    %p382 = por %p380, %p381
    %p383 = scmp.le.s32.totalorder 1, %s24
    %p384 = scmp.lt.s32.totalorder %s24, 3
    %p385 = pnand %p383, %p384
    %p386 = pneg %p385
    // Predicated region
    $region9: #{agent_forward.1} parent=5 // pred_check
      _
    $region10: #{agent_forward.1} parent=5 // pred_check_branch
      %388 = sbr.rel (%p385) target = $region12
    $region11: #{agent_forward.1} parent=5 // pred_region
      %s389 = ssub.s32 %s24, 1
      // Predicated region
      $region13: #{agent_forward.1} parent=11 // pred_check
        %p390 = pneg %p71
      $region14: #{agent_forward.1} parent=11 // pred_check_branch
        %392 = sbr.rel (%p390) target = $region16
      $region15: #{agent_forward.1} parent=11 // pred_region
        _
      $region16: #{agent_forward.1} parent=11 // pred_fallthru
        _
      // Predicated region
      $region17: #{agent_forward.1} parent=11 // pred_check
        %p393 = pneg %p92
      $region18: #{agent_forward.1} parent=11 // pred_check_branch
        %395 = sbr.rel (%p393) target = $region20
      $region19: #{agent_forward.1} parent=11 // pred_region
        _
      $region20: #{agent_forward.1} parent=11 // pred_fallthru
        _
      // Predicated region
      $region21: #{agent_forward.1} parent=11 // pred_check
        %p396 = pneg %p113
      $region22: #{agent_forward.1} parent=11 // pred_check_branch
        %398 = sbr.rel (%p396) target = $region24
      $region23: #{agent_forward.1} parent=11 // pred_region
        _
      $region24: #{agent_forward.1} parent=11 // pred_fallthru
        _
      // Predicated region
      $region25: #{agent_forward.1} parent=11 // pred_check
        %p399 = pneg %p134
      $region26: #{agent_forward.1} parent=11 // pred_check_branch
        %401 = sbr.rel (%p399) target = $region28
      $region27: #{agent_forward.1} parent=11 // pred_region
        _
      $region28: #{agent_forward.1} parent=11 // pred_fallthru
        _
      // Predicated region
      $region29: #{agent_forward.1} parent=11 // pred_check
        %p402 = pneg %p155
      $region30: #{agent_forward.1} parent=11 // pred_check_branch
        %404 = sbr.rel (%p402) target = $region32
      $region31: #{agent_forward.1} parent=11 // pred_region
        _
      $region32: #{agent_forward.1} parent=11 // pred_fallthru
        _
      // Predicated region
      $region33: #{agent_forward.1} parent=11 // pred_check
        %p405 = pneg %p176
      $region34: #{agent_forward.1} parent=11 // pred_check_branch
        %407 = sbr.rel (%p405) target = $region36
      $region35: #{agent_forward.1} parent=11 // pred_region
        _
      $region36: #{agent_forward.1} parent=11 // pred_fallthru
        _
      // Predicated region
      $region37: #{agent_forward.1} parent=11 // pred_check
        %p408 = pneg %p197
      $region38: #{agent_forward.1} parent=11 // pred_check_branch
        %410 = sbr.rel (%p408) target = $region40
      $region39: #{agent_forward.1} parent=11 // pred_region
        _
      $region40: #{agent_forward.1} parent=11 // pred_fallthru
        _
      // Predicated region
      $region41: #{agent_forward.1} parent=11 // pred_check
        %p411 = pneg %p218
      $region42: #{agent_forward.1} parent=11 // pred_check_branch
        %413 = sbr.rel (%p411) target = $region44
      $region43: #{agent_forward.1} parent=11 // pred_region
        _
      $region44: #{agent_forward.1} parent=11 // pred_fallthru
        _
      // Predicated region
      $region45: #{agent_forward.1} parent=11 // pred_check
        %p414 = pneg %p239
      $region46: #{agent_forward.1} parent=11 // pred_check_branch
        %416 = sbr.rel (%p414) target = $region48
      $region47: #{agent_forward.1} parent=11 // pred_region
        _
      $region48: #{agent_forward.1} parent=11 // pred_fallthru
        _
      // Predicated region
      $region49: #{agent_forward.1} parent=11 // pred_check
        %p417 = pneg %p260
      $region50: #{agent_forward.1} parent=11 // pred_check_branch
        %419 = sbr.rel (%p417) target = $region52
      $region51: #{agent_forward.1} parent=11 // pred_region
        _
      $region52: #{agent_forward.1} parent=11 // pred_fallthru
        _
      // Predicated region
      $region53: #{agent_forward.1} parent=11 // pred_check
        %p420 = pneg %p281
      $region54: #{agent_forward.1} parent=11 // pred_check_branch
        %422 = sbr.rel (%p420) target = $region56
      $region55: #{agent_forward.1} parent=11 // pred_region
        _
      $region56: #{agent_forward.1} parent=11 // pred_fallthru
        _
      // Predicated region
      $region57: #{agent_forward.1} parent=11 // pred_check
        %p423 = pneg %p302
      $region58: #{agent_forward.1} parent=11 // pred_check_branch
        %425 = sbr.rel (%p423) target = $region60
      $region59: #{agent_forward.1} parent=11 // pred_region
        _
      $region60: #{agent_forward.1} parent=11 // pred_fallthru
        _
      // Predicated region
      $region61: #{agent_forward.1} parent=11 // pred_check
        %p426 = pneg %p323
      $region62: #{agent_forward.1} parent=11 // pred_check_branch
        %428 = sbr.rel (%p426) target = $region64
      $region63: #{agent_forward.1} parent=11 // pred_region
        _
      $region64: #{agent_forward.1} parent=11 // pred_fallthru
        _
    $region12: #{agent_forward.1} parent=5 // pred_fallthru
      _
    %p429 = scmp.lt.s32.totalorder %s24, 2
    // Predicated region
    $region65: #{agent_forward.1} parent=5 // pred_check
      %p430 = pneg %p429
    $region66: #{agent_forward.1} parent=5 // pred_check_branch
      %432 = sbr.rel (%p430) target = $region68
    $region67: #{agent_forward.1} parent=5 // pred_region
      // Predicated region
      $region69: #{agent_forward.1} parent=67 // pred_check
        %p433 = pneg %p44
      $region70: #{agent_forward.1} parent=67 // pred_check_branch
        %435 = sbr.rel (%p433) target = $region72
      $region71: #{agent_forward.1} parent=67 // pred_region
        %p436 = scmp.lt.s32.totalorder %s24, 1
        %s437 = scalar_select %p436, %s24, 1
        %s438 = smul.addr %s437, 8
        %s439 = smul.addr %s438, 8
        %s440 = scalar_lea.vmem %s0, %s439
      $region72: #{agent_forward.1} parent=67 // pred_fallthru
        _
    $region68: #{agent_forward.1} parent=5 // pred_fallthru
      _
    %p441 = scmp.le.s32.totalorder 1, %s24
    %p442 = scmp.lt.s32.totalorder %s24, 3
    %p443 = pnand %p441, %p442
    %p444 = pneg %p443
    // Predicated region
    $region73: #{agent_forward.1} parent=5 // pred_check
      _
    $region74: #{agent_forward.1} parent=5 // pred_check_branch
      %446 = sbr.rel (%p443) target = $region76
    $region75: #{agent_forward.1} parent=5 // pred_region
      %s447 = ssub.s32 %s24, 1
      %p448 = scmp.lt.s32.totalorder %s29, 1
      %s449 = scalar_select %p448, %s29, 1
      %s450 = smul.addr %s449, 8
      %s451 = smul.addr %s450, 8
      %s452 = scalar_lea.vmem %s0, %s451
      %p453 = pneg %p50
      %p454 = pneg %p47
      %p455 = pneg %p71
      %p456 = pneg %p68
      %p457 = pneg %p92
      %p458 = pneg %p89
      %p459 = pneg %p113
      %p460 = pneg %p110
      %p461 = pneg %p134
      %p462 = pneg %p131
      %p463 = pneg %p155
      %p464 = pneg %p152
      %p465 = pneg %p176
      %p466 = pneg %p173
      %p467 = pneg %p197
      %p468 = pneg %p194
      %p469 = pneg %p218
      %p470 = pneg %p215
      %p471 = pneg %p239
      %p472 = pneg %p236
      %p473 = pneg %p260
      %p474 = pneg %p257
      %p475 = pneg %p281
      %p476 = pneg %p278
      %p477 = pneg %p302
      %p478 = pneg %p299
      %p479 = pneg %p323
      %p480 = pneg %p320
      %p481 = pneg %p349
      %p482 = pneg %p346
      %p483 = scmp.lt.s32.totalorder %s29, 1
      %s484 = scalar_select %p483, %s29, 1
      %s485 = smul.addr %s484, 4
      %s486 = smul.addr %s485, 8
      %s487 = scalar_lea.vmem %s14, %s486
      %p488 = pneg %p375
      %p489 = pneg %p372
      %p490 = scmp.lt.s32.totalorder %s29, 1
      %s491 = scalar_select %p490, %s29, 1
      %s492 = scalar_lea.vmem %s15, %s491
      %p493 = scmp.lt.s32.totalorder %s29, 1
      %s494 = scalar_select %p493, %s29, 1
      %s495 = smul.addr %s494, 8
      %s496 = smul.addr %s495, 8
      %s497 = scalar_lea.vmem %s0, %s496
      %p498 = scmp.lt.s32.totalorder %s29, 1
      %s499 = scalar_select %p498, %s29, 1
      %s500 = smul.addr %s499, 4
      %s501 = smul.addr %s500, 8
      %s502 = scalar_lea.vmem %s14, %s501
      %p503 = scmp.lt.s32.totalorder %s29, 1
      %s504 = scalar_select %p503, %s29, 1
      %s505 = scalar_lea.vmem %s15, %s504
      %v506 = vld [vmem:[%s1] sm:$0xff]
      %v507 = vld [vmem:[%s1 + $0x8] sm:$0xff]
      %v508 = vld [vmem:[%s1 + $0x10] sm:$0xff]
      %v509 = vld [vmem:[%s1 + $0x18] sm:$0xff]
      %v510 = vld [vmem:[%s1 + $0x20] sm:$0xff]
      %v511 = vld [vmem:[%s1 + $0x28] sm:$0xff]
      %v512 = vld [vmem:[%s1 + $0x30] sm:$0xff]
      %v513 = vld [vmem:[%s1 + $0x38] sm:$0xff]
      %v514 = vld [vmem:[%s1 + $0x40] sm:$0xff]
      %v515 = vld [vmem:[%s1 + $0x48] sm:$0xff]
      %v516 = vld [vmem:[%s1 + $0x50] sm:$0xff]
      %v517 = vld [vmem:[%s1 + $0x58] sm:$0xff]
      %v518 = vld [vmem:[%s1 + $0x60] sm:$0xf]
      %vm519 = vcmask 130048
      %520 = vst.msk [vmem:[#allocation3] sm:$0xff] %vm519, 0.0
      %521 = vst.msk [vmem:[#allocation3 + $0x8] sm:$0xff] %vm519, 0.0
      %522 = vst.msk [vmem:[#allocation3 + $0x10] sm:$0xff] %vm519, 0.0
      %523 = vst.msk [vmem:[#allocation3 + $0x18] sm:$0xff] %vm519, 0.0
      %524 = vst.msk [vmem:[#allocation3 + $0x20] sm:$0xff] %vm519, 0.0
      %525 = vst.msk [vmem:[#allocation3 + $0x28] sm:$0xff] %vm519, 0.0
      %526 = vst.msk [vmem:[#allocation3 + $0x30] sm:$0xff] %vm519, 0.0
      %527 = vst.msk [vmem:[#allocation3 + $0x38] sm:$0xff] %vm519, 0.0
      %528 = vst.msk [vmem:[#allocation3 + $0x40] sm:$0xff] %vm519, 0.0
      %529 = vst.msk [vmem:[#allocation3 + $0x48] sm:$0xff] %vm519, 0.0
      %530 = vst.msk [vmem:[#allocation3 + $0x50] sm:$0xff] %vm519, 0.0
      %531 = vst.msk [vmem:[#allocation3 + $0x58] sm:$0xff] %vm519, 0.0
      %532 = vst.msk [vmem:[#allocation3 + $0x60] sm:$0xff] %vm519, 0.0
      %533 = vst.msk [vmem:[#allocation3 + $0x68] sm:$0xff] %vm519, 0.0
      %534 = vst.msk [vmem:[#allocation3 + $0x70] sm:$0xff] %vm519, 0.0
      %535 = vst.msk [vmem:[#allocation3 + $0x78] sm:$0xff] %vm519, 0.0
      %536 = vst.msk [vmem:[#allocation3 + $0x80] sm:$0xff] %vm519, 0.0
      %v537 = vld [vmem:[%s497] sm:$0xff]
      %vm538 = vcmask 31744
      %539 = vst.msk [vmem:[#allocation3 + $0x1b] sm:$0xff] %vm538, %v537
      %s540 = scalar_lea.vmem %s497, 8
      %v541 = vld [vmem:[%s540] sm:$0xff]
      %542 = vst.msk [vmem:[#allocation3 + $0x25] sm:$0xff] %vm538, %v541
      %s543 = scalar_lea.vmem %s497, 16
      %v544 = vld [vmem:[%s543] sm:$0xff]
      %545 = vst.msk [vmem:[#allocation3 + $0x2f] sm:$0xff] %vm538, %v544
      %s546 = scalar_lea.vmem %s497, 24
      %v547 = vld [vmem:[%s546] sm:$0xff]
      %548 = vst.msk [vmem:[#allocation3 + $0x39] sm:$0xff] %vm538, %v547
      %s549 = scalar_lea.vmem %s497, 32
      %v550 = vld [vmem:[%s549] sm:$0xff]
      %551 = vst.msk [vmem:[#allocation3 + $0x43] sm:$0xff] %vm538, %v550
      %s552 = scalar_lea.vmem %s497, 40
      %v553 = vld [vmem:[%s552] sm:$0xff]
      %554 = vst.msk [vmem:[#allocation3 + $0x4d] sm:$0xff] %vm538, %v553
      %s555 = scalar_lea.vmem %s497, 48
      %v556 = vld [vmem:[%s555] sm:$0xff]
      %557 = vst.msk [vmem:[#allocation3 + $0x57] sm:$0xff] %vm538, %v556
      %s558 = scalar_lea.vmem %s497, 56
      %v559 = vld [vmem:[%s558] sm:$0xff]
      %560 = vst.msk [vmem:[#allocation3 + $0x61] sm:$0xff] %vm538, %v559
      %561 = vst.msk [vmem:[#allocation2] sm:$0xff] %vm519, 0.0
      %562 = vst.msk [vmem:[#allocation2 + $0x8] sm:$0xff] %vm519, 0.0
      %563 = vst.msk [vmem:[#allocation2 + $0x74] sm:$0xff] %vm519, 0.0
      %564 = vst.msk [vmem:[#allocation2 + $0x7c] sm:$0xff] %vm519, 0.0
      %vm565 = vcmask 125952
      %566 = vst.msk [vmem:[#allocation2 + $0x84] sm:$0xf] %vm565, 0.0
      %v567 = vld [vmem:[#allocation3 + $0x5] sm:$0xff]
      %v568 = vld [vmem:[#allocation3 + $0xd] sm:$0xff]
      %v569 = vld [vmem:[#allocation3 + $0x15] sm:$0xff]
      %v570 = vld [vmem:[#allocation3 + $0x1d] sm:$0xff]
      %v571 = vld [vmem:[#allocation3 + $0x25] sm:$0xff]
      %v572 = vld [vmem:[#allocation3 + $0x2d] sm:$0xff]
      %v573 = vld [vmem:[#allocation3 + $0x35] sm:$0xff]
      %v574 = vld [vmem:[#allocation3 + $0x3d] sm:$0xff]
      %v575 = vld [vmem:[#allocation3 + $0x45] sm:$0xff]
      %v576 = vld [vmem:[#allocation3 + $0x4d] sm:$0xff]
      %v577 = vld [vmem:[#allocation3 + $0x55] sm:$0xff]
      %v578 = vld [vmem:[#allocation3 + $0x5d] sm:$0xff]
      %v579 = vld [vmem:[#allocation3 + $0x65] sm:$0xf]
      %v580 = vld [vmem:[#allocation3 + $0x6] sm:$0xff]
      %v581 = vld [vmem:[#allocation3 + $0xe] sm:$0xff]
      %v582 = vld [vmem:[#allocation3 + $0x16] sm:$0xff]
      %v583 = vld [vmem:[#allocation3 + $0x1e] sm:$0xff]
      %v584 = vld [vmem:[#allocation3 + $0x26] sm:$0xff]
      %v585 = vld [vmem:[#allocation3 + $0x2e] sm:$0xff]
      %v586 = vld [vmem:[#allocation3 + $0x36] sm:$0xff]
      %v587 = vld [vmem:[#allocation3 + $0x3e] sm:$0xff]
      %v588 = vld [vmem:[#allocation3 + $0x46] sm:$0xff]
      %v589 = vld [vmem:[#allocation3 + $0x4e] sm:$0xff]
      %v590 = vld [vmem:[#allocation3 + $0x56] sm:$0xff]
      %v591 = vld [vmem:[#allocation3 + $0x5e] sm:$0xff]
      %v592 = vld [vmem:[#allocation3 + $0x66] sm:$0xf]
      %v593 = vld [vmem:[#allocation3 + $0x7] sm:$0xff]
      %v594 = vld [vmem:[#allocation3 + $0xf] sm:$0xff]
      %v595 = vld [vmem:[#allocation3 + $0x17] sm:$0xff]
      %v596 = vld [vmem:[#allocation3 + $0x1f] sm:$0xff]
      %v597 = vld [vmem:[#allocation3 + $0x27] sm:$0xff]
      %v598 = vld [vmem:[#allocation3 + $0x2f] sm:$0xff]
      %v599 = vld [vmem:[#allocation3 + $0x37] sm:$0xff]
      %v600 = vld [vmem:[#allocation3 + $0x3f] sm:$0xff]
      %v601 = vld [vmem:[#allocation3 + $0x47] sm:$0xff]
      %v602 = vld [vmem:[#allocation3 + $0x4f] sm:$0xff]
      %v603 = vld [vmem:[#allocation3 + $0x57] sm:$0xff]
      %v604 = vld [vmem:[#allocation3 + $0x5f] sm:$0xff]
      %v605 = vld [vmem:[#allocation3 + $0x67] sm:$0xf]
      %v606 = vld [vmem:[#allocation3 + $0x67] sm:$0xff]
      %v607 = vld [vmem:[#allocation3 + $0x6f] sm:$0xf]
      %v608 = vld [vmem:[#allocation3 + $0x10] sm:$0xff]
      %v609 = vld [vmem:[#allocation3 + $0x18] sm:$0xff]
      %v610 = vld [vmem:[#allocation3 + $0x20] sm:$0xff]
      %v611 = vld [vmem:[#allocation3 + $0x28] sm:$0xff]
      %v612 = vld [vmem:[#allocation3 + $0x30] sm:$0xff]
      %v613 = vld [vmem:[#allocation3 + $0x38] sm:$0xff]
      %v614 = vld [vmem:[#allocation3 + $0x40] sm:$0xff]
      %v615 = vld [vmem:[#allocation3 + $0x48] sm:$0xff]
      %v616 = vld [vmem:[#allocation3 + $0x50] sm:$0xff]
      %v617 = vld [vmem:[#allocation3 + $0x58] sm:$0xff]
      %v618 = vld [vmem:[#allocation3 + $0x60] sm:$0xff]
      %v619 = vld [vmem:[#allocation3 + $0x68] sm:$0xff]
      %v620 = vld [vmem:[#allocation3 + $0x70] sm:$0xf]
      %v621 = vld [vmem:[#allocation3 + $0x11] sm:$0xff]
      %v622 = vld [vmem:[#allocation3 + $0x19] sm:$0xff]
      %v623 = vld [vmem:[#allocation3 + $0x21] sm:$0xff]
      %v624 = vld [vmem:[#allocation3 + $0x29] sm:$0xff]
      %v625 = vld [vmem:[#allocation3 + $0x31] sm:$0xff]
      %v626 = vld [vmem:[#allocation3 + $0x39] sm:$0xff]
      %v627 = vld [vmem:[#allocation3 + $0x41] sm:$0xff]
      %v628 = vld [vmem:[#allocation3 + $0x49] sm:$0xff]
      %v629 = vld [vmem:[#allocation3 + $0x51] sm:$0xff]
      %v630 = vld [vmem:[#allocation3 + $0x59] sm:$0xff]
      %v631 = vld [vmem:[#allocation3 + $0x61] sm:$0xff]
      %v632 = vld [vmem:[#allocation3 + $0x69] sm:$0xff]
      %v633 = vld [vmem:[#allocation3 + $0x71] sm:$0xf]
      %v634 = vld [vmem:[#allocation3 + $0x71] sm:$0xff]
      %v635 = vld [vmem:[#allocation3 + $0x79] sm:$0xf]
      %v636 = vld [vmem:[#allocation3 + $0x1a] sm:$0xff]
      %v637 = vld [vmem:[#allocation3 + $0x22] sm:$0xff]
      %v638 = vld [vmem:[#allocation3 + $0x2a] sm:$0xff]
      %v639 = vld [vmem:[#allocation3 + $0x32] sm:$0xff]
      %v640 = vld [vmem:[#allocation3 + $0x3a] sm:$0xff]
      %v641 = vld [vmem:[#allocation3 + $0x42] sm:$0xff]
      %v642 = vld [vmem:[#allocation3 + $0x4a] sm:$0xff]
      %v643 = vld [vmem:[#allocation3 + $0x52] sm:$0xff]
      %v644 = vld [vmem:[#allocation3 + $0x5a] sm:$0xff]
      %v645 = vld [vmem:[#allocation3 + $0x62] sm:$0xff]
      %v646 = vld [vmem:[#allocation3 + $0x6a] sm:$0xff]
      %v647 = vld [vmem:[#allocation3 + $0x72] sm:$0xff]
      %v648 = vld [vmem:[#allocation3 + $0x7a] sm:$0xf]
      %v649 = vld [vmem:[#allocation3 + $0x1b] sm:$0xff]
      %v650 = vld [vmem:[#allocation3 + $0x23] sm:$0xff]
      %v651 = vld [vmem:[#allocation3 + $0x2b] sm:$0xff]
      %v652 = vld [vmem:[#allocation3 + $0x33] sm:$0xff]
      %v653 = vld [vmem:[#allocation3 + $0x3b] sm:$0xff]
      %v654 = vld [vmem:[#allocation3 + $0x43] sm:$0xff]
      %v655 = vld [vmem:[#allocation3 + $0x4b] sm:$0xff]
      %v656 = vld [vmem:[#allocation3 + $0x53] sm:$0xff]
      %v657 = vld [vmem:[#allocation3 + $0x5b] sm:$0xff]
      %v658 = vld [vmem:[#allocation3 + $0x63] sm:$0xff]
      %v659 = vld [vmem:[#allocation3 + $0x6b] sm:$0xff]
      %v660 = vld [vmem:[#allocation3 + $0x73] sm:$0xff]
      %v661 = vld [vmem:[#allocation3 + $0x7b] sm:$0xf]
      %675 = vrot.lane.b32.xlu0 %v580, 16
      %v676 = vpop.permute.xlu0 %675
      %677 = vrot.lane.b32.xlu0 %v581, 16
      %v678 = vpop.permute.xlu0 %677
      %679 = vrot.lane.b32.xlu0 %v582, 16
      %v680 = vpop.permute.xlu0 %679
      %681 = vrot.lane.b32.xlu0 %v583, 16
      %v682 = vpop.permute.xlu0 %681
      %683 = vrot.lane.b32.xlu0 %v584, 16
      %v684 = vpop.permute.xlu0 %683
      %685 = vrot.lane.b32.xlu0 %v585, 16
      %v686 = vpop.permute.xlu0 %685
      %687 = vrot.lane.b32.xlu0 %v586, 16
      %v688 = vpop.permute.xlu0 %687
      %689 = vrot.lane.b32.xlu0 %v587, 16
      %v690 = vpop.permute.xlu0 %689
      %691 = vrot.lane.b32.xlu0 %v588, 16
      %v692 = vpop.permute.xlu0 %691
      %693 = vrot.lane.b32.xlu0 %v589, 16
      %v694 = vpop.permute.xlu0 %693
      %695 = vrot.lane.b32.xlu0 %v590, 16
      %v696 = vpop.permute.xlu0 %695
      %697 = vrot.lane.b32.xlu0 %v591, 16
      %v698 = vpop.permute.xlu0 %697
      %699 = vrot.lane.b32.xlu0 %v592, 16
      %v700 = vpop.permute.xlu0 %699
      %727 = vrot.lane.b32.xlu0 %v593, 32
      %v728 = vpop.permute.xlu0 %727
      %729 = vrot.lane.b32.xlu0 %v594, 32
      %v730 = vpop.permute.xlu0 %729
      %731 = vrot.lane.b32.xlu0 %v595, 32
      %v732 = vpop.permute.xlu0 %731
      %733 = vrot.lane.b32.xlu0 %v596, 32
      %v734 = vpop.permute.xlu0 %733
      %735 = vrot.lane.b32.xlu0 %v597, 32
      %v736 = vpop.permute.xlu0 %735
      %737 = vrot.lane.b32.xlu0 %v598, 32
      %v738 = vpop.permute.xlu0 %737
      %739 = vrot.lane.b32.xlu0 %v599, 32
      %v740 = vpop.permute.xlu0 %739
      %741 = vrot.lane.b32.xlu0 %v600, 32
      %v742 = vpop.permute.xlu0 %741
      %743 = vrot.lane.b32.xlu0 %v601, 32
      %v744 = vpop.permute.xlu0 %743
      %745 = vrot.lane.b32.xlu0 %v602, 32
      %v746 = vpop.permute.xlu0 %745
      %747 = vrot.lane.b32.xlu0 %v603, 32
      %v748 = vpop.permute.xlu0 %747
      %749 = vrot.lane.b32.xlu0 %v604, 32
      %v750 = vpop.permute.xlu0 %749
      %751 = vrot.lane.b32.xlu0 %v605, 32
      %v752 = vpop.permute.xlu0 %751
      %768 = vrot.lane.b32.xlu0 %v594, 48
      %v769 = vpop.permute.xlu0 %768
      %770 = vrot.lane.b32.xlu0 %v595, 48
      %v771 = vpop.permute.xlu0 %770
      %772 = vrot.lane.b32.xlu0 %v596, 48
      %v773 = vpop.permute.xlu0 %772
      %774 = vrot.lane.b32.xlu0 %v597, 48
      %v775 = vpop.permute.xlu0 %774
      %776 = vrot.lane.b32.xlu0 %v598, 48
      %v777 = vpop.permute.xlu0 %776
      %778 = vrot.lane.b32.xlu0 %v599, 48
      %v779 = vpop.permute.xlu0 %778
      %780 = vrot.lane.b32.xlu0 %v600, 48
      %v781 = vpop.permute.xlu0 %780
      %782 = vrot.lane.b32.xlu0 %v601, 48
      %v783 = vpop.permute.xlu0 %782
      %784 = vrot.lane.b32.xlu0 %v602, 48
      %v785 = vpop.permute.xlu0 %784
      %786 = vrot.lane.b32.xlu0 %v603, 48
      %v787 = vpop.permute.xlu0 %786
      %788 = vrot.lane.b32.xlu0 %v604, 48
      %v789 = vpop.permute.xlu0 %788
      %790 = vrot.lane.b32.xlu0 %v606, 48
      %v791 = vpop.permute.xlu0 %790
      %792 = vrot.lane.b32.xlu0 %v607, 48
      %v793 = vpop.permute.xlu0 %792
      %820 = vrot.lane.b32.xlu0 %v608, 64
      %v821 = vpop.permute.xlu0 %820
      %822 = vrot.lane.b32.xlu0 %v609, 64
      %v823 = vpop.permute.xlu0 %822
      %824 = vrot.lane.b32.xlu0 %v610, 64
      %v825 = vpop.permute.xlu0 %824
      %826 = vrot.lane.b32.xlu0 %v611, 64
      %v827 = vpop.permute.xlu0 %826
      %828 = vrot.lane.b32.xlu0 %v612, 64
      %v829 = vpop.permute.xlu0 %828
      %830 = vrot.lane.b32.xlu0 %v613, 64
      %v831 = vpop.permute.xlu0 %830
      %832 = vrot.lane.b32.xlu0 %v614, 64
      %v833 = vpop.permute.xlu0 %832
      %834 = vrot.lane.b32.xlu0 %v615, 64
      %v835 = vpop.permute.xlu0 %834
      %836 = vrot.lane.b32.xlu0 %v616, 64
      %v837 = vpop.permute.xlu0 %836
      %838 = vrot.lane.b32.xlu0 %v617, 64
      %v839 = vpop.permute.xlu0 %838
      %840 = vrot.lane.b32.xlu0 %v618, 64
      %v841 = vpop.permute.xlu0 %840
      %842 = vrot.lane.b32.xlu0 %v619, 64
      %v843 = vpop.permute.xlu0 %842
      %844 = vrot.lane.b32.xlu0 %v620, 64
      %v845 = vpop.permute.xlu0 %844
      %872 = vrot.lane.b32.xlu0 %v621, 80
      %v873 = vpop.permute.xlu0 %872
      %874 = vrot.lane.b32.xlu0 %v622, 80
      %v875 = vpop.permute.xlu0 %874
      %876 = vrot.lane.b32.xlu0 %v623, 80
      %v877 = vpop.permute.xlu0 %876
      %878 = vrot.lane.b32.xlu0 %v624, 80
      %v879 = vpop.permute.xlu0 %878
      %880 = vrot.lane.b32.xlu0 %v625, 80
      %v881 = vpop.permute.xlu0 %880
      %882 = vrot.lane.b32.xlu0 %v626, 80
      %v883 = vpop.permute.xlu0 %882
      %884 = vrot.lane.b32.xlu0 %v627, 80
      %v885 = vpop.permute.xlu0 %884
      %886 = vrot.lane.b32.xlu0 %v628, 80
      %v887 = vpop.permute.xlu0 %886
      %888 = vrot.lane.b32.xlu0 %v629, 80
      %v889 = vpop.permute.xlu0 %888
      %890 = vrot.lane.b32.xlu0 %v630, 80
      %v891 = vpop.permute.xlu0 %890
      %892 = vrot.lane.b32.xlu0 %v631, 80
      %v893 = vpop.permute.xlu0 %892
      %894 = vrot.lane.b32.xlu0 %v632, 80
      %v895 = vpop.permute.xlu0 %894
      %896 = vrot.lane.b32.xlu0 %v633, 80
      %v897 = vpop.permute.xlu0 %896
      %913 = vrot.lane.b32.xlu0 %v622, 96
      %v914 = vpop.permute.xlu0 %913
      %915 = vrot.lane.b32.xlu0 %v623, 96
      %v916 = vpop.permute.xlu0 %915
      %917 = vrot.lane.b32.xlu0 %v624, 96
      %v918 = vpop.permute.xlu0 %917
      %919 = vrot.lane.b32.xlu0 %v625, 96
      %v920 = vpop.permute.xlu0 %919
      %921 = vrot.lane.b32.xlu0 %v626, 96
      %v922 = vpop.permute.xlu0 %921
      %923 = vrot.lane.b32.xlu0 %v627, 96
      %v924 = vpop.permute.xlu0 %923
      %925 = vrot.lane.b32.xlu0 %v628, 96
      %v926 = vpop.permute.xlu0 %925
      %927 = vrot.lane.b32.xlu0 %v629, 96
      %v928 = vpop.permute.xlu0 %927
      %929 = vrot.lane.b32.xlu0 %v630, 96
      %v930 = vpop.permute.xlu0 %929
      %931 = vrot.lane.b32.xlu0 %v631, 96
      %v932 = vpop.permute.xlu0 %931
      %933 = vrot.lane.b32.xlu0 %v632, 96
      %v934 = vpop.permute.xlu0 %933
      %935 = vrot.lane.b32.xlu0 %v634, 96
      %v936 = vpop.permute.xlu0 %935
      %937 = vrot.lane.b32.xlu0 %v635, 96
      %v938 = vpop.permute.xlu0 %937
      %965 = vrot.lane.b32.xlu0 %v636, 112
      %v966 = vpop.permute.xlu0 %965
      %967 = vrot.lane.b32.xlu0 %v637, 112
      %v968 = vpop.permute.xlu0 %967
      %969 = vrot.lane.b32.xlu0 %v638, 112
      %v970 = vpop.permute.xlu0 %969
      %971 = vrot.lane.b32.xlu0 %v639, 112
      %v972 = vpop.permute.xlu0 %971
      %973 = vrot.lane.b32.xlu0 %v640, 112
      %v974 = vpop.permute.xlu0 %973
      %975 = vrot.lane.b32.xlu0 %v641, 112
      %v976 = vpop.permute.xlu0 %975
      %977 = vrot.lane.b32.xlu0 %v642, 112
      %v978 = vpop.permute.xlu0 %977
      %979 = vrot.lane.b32.xlu0 %v643, 112
      %v980 = vpop.permute.xlu0 %979
      %981 = vrot.lane.b32.xlu0 %v644, 112
      %v982 = vpop.permute.xlu0 %981
      %983 = vrot.lane.b32.xlu0 %v645, 112
      %v984 = vpop.permute.xlu0 %983
      %985 = vrot.lane.b32.xlu0 %v646, 112
      %v986 = vpop.permute.xlu0 %985
      %987 = vrot.lane.b32.xlu0 %v647, 112
      %v988 = vpop.permute.xlu0 %987
      %989 = vrot.lane.b32.xlu0 %v648, 112
      %v990 = vpop.permute.xlu0 %989
      %v1004 = vsel %vm519, %v567, %v676
      %v1005 = vsel %vm519, %v568, %v678
      %v1006 = vsel %vm519, %v569, %v680
      %v1007 = vsel %vm519, %v570, %v682
      %v1008 = vsel %vm519, %v571, %v684
      %v1009 = vsel %vm519, %v572, %v686
      %v1010 = vsel %vm519, %v573, %v688
      %v1011 = vsel %vm519, %v574, %v690
      %v1012 = vsel %vm519, %v575, %v692
      %v1013 = vsel %vm519, %v576, %v694
      %v1014 = vsel %vm519, %v577, %v696
      %v1015 = vsel %vm519, %v578, %v698
      %v1016 = vsel %vm519, %v579, %v700
      %vm1017 = vcmask 261120
      %v1018 = vsel %vm1017, %v1004, %v728
      %v1019 = vsel %vm1017, %v1005, %v730
      %v1020 = vsel %vm1017, %v1006, %v732
      %v1021 = vsel %vm1017, %v1007, %v734
      %v1022 = vsel %vm1017, %v1008, %v736
      %v1023 = vsel %vm1017, %v1009, %v738
      %v1024 = vsel %vm1017, %v1010, %v740
      %v1025 = vsel %vm1017, %v1011, %v742
      %v1026 = vsel %vm1017, %v1012, %v744
      %v1027 = vsel %vm1017, %v1013, %v746
      %v1028 = vsel %vm1017, %v1014, %v748
      %v1029 = vsel %vm1017, %v1015, %v750
      %v1030 = vsel %vm1017, %v1016, %v752
      %vm1031 = vcmask 392192
      %v1032 = vsel %vm1031, %v1018, %v769
      %v1033 = vsel %vm1031, %v1019, %v771
      %v1034 = vsel %vm1031, %v1020, %v773
      %v1035 = vsel %vm1031, %v1021, %v775
      %v1036 = vsel %vm1031, %v1022, %v777
      %v1037 = vsel %vm1031, %v1023, %v779
      %v1038 = vsel %vm1031, %v1024, %v781
      %v1039 = vsel %vm1031, %v1025, %v783
      %v1040 = vsel %vm1031, %v1026, %v785
      %v1041 = vsel %vm1031, %v1027, %v787
      %v1042 = vsel %vm1031, %v1028, %v789
      %v1043 = vsel %vm1031, %v1029, %v791
      %v1044 = vsel %vm1031, %v1030, %v793
      %vm1045 = vcmask 523264
      %v1046 = vsel %vm1045, %v1032, %v821
      %v1047 = vsel %vm1045, %v1033, %v823
      %v1048 = vsel %vm1045, %v1034, %v825
      %v1049 = vsel %vm1045, %v1035, %v827
      %v1050 = vsel %vm1045, %v1036, %v829
      %v1051 = vsel %vm1045, %v1037, %v831
      %v1052 = vsel %vm1045, %v1038, %v833
      %v1053 = vsel %vm1045, %v1039, %v835
      %v1054 = vsel %vm1045, %v1040, %v837
      %v1055 = vsel %vm1045, %v1041, %v839
      %v1056 = vsel %vm1045, %v1042, %v841
      %v1057 = vsel %vm1045, %v1043, %v843
      %v1058 = vsel %vm1045, %v1044, %v845
      %vm1059 = vcmask 654336
      %v1060 = vsel %vm1059, %v1046, %v873
      %v1061 = vsel %vm1059, %v1047, %v875
      %v1062 = vsel %vm1059, %v1048, %v877
      %v1063 = vsel %vm1059, %v1049, %v879
      %v1064 = vsel %vm1059, %v1050, %v881
      %v1065 = vsel %vm1059, %v1051, %v883
      %v1066 = vsel %vm1059, %v1052, %v885
      %v1067 = vsel %vm1059, %v1053, %v887
      %v1068 = vsel %vm1059, %v1054, %v889
      %v1069 = vsel %vm1059, %v1055, %v891
      %v1070 = vsel %vm1059, %v1056, %v893
      %v1071 = vsel %vm1059, %v1057, %v895
      %v1072 = vsel %vm1059, %v1058, %v897
      %vm1073 = vcmask 785408
      %v1074 = vsel %vm1073, %v1060, %v914
      %v1075 = vsel %vm1073, %v1061, %v916
      %v1076 = vsel %vm1073, %v1062, %v918
      %v1077 = vsel %vm1073, %v1063, %v920
      %v1078 = vsel %vm1073, %v1064, %v922
      %v1079 = vsel %vm1073, %v1065, %v924
      %v1080 = vsel %vm1073, %v1066, %v926
      %v1081 = vsel %vm1073, %v1067, %v928
      %v1082 = vsel %vm1073, %v1068, %v930
      %v1083 = vsel %vm1073, %v1069, %v932
      %v1084 = vsel %vm1073, %v1070, %v934
      %v1085 = vsel %vm1073, %v1071, %v936
      %v1086 = vsel %vm1073, %v1072, %v938
      %vm1087 = vcmask 916480
      %v1088 = vsel %vm1087, %v1074, %v966
      %v1089 = vsel %vm1087, %v1075, %v968
      %v1090 = vsel %vm1087, %v1076, %v970
      %v1091 = vsel %vm1087, %v1077, %v972
      %v1092 = vsel %vm1087, %v1078, %v974
      %v1093 = vsel %vm1087, %v1079, %v976
      %v1094 = vsel %vm1087, %v1080, %v978
      %v1095 = vsel %vm1087, %v1081, %v980
      %v1096 = vsel %vm1087, %v1082, %v982
      %v1097 = vsel %vm1087, %v1083, %v984
      %v1098 = vsel %vm1087, %v1084, %v986
      %v1099 = vsel %vm1087, %v1085, %v988
      %v1100 = vsel %vm1087, %v1086, %v990
      %v1101 = vld [vmem:[%s2] sm:$0xff]
      %v1102 = vld [vmem:[%s2 + $0x8] sm:$0xff]
      %v1103 = vld [vmem:[%s2 + $0x10] sm:$0xff]
      %v1104 = vld [vmem:[%s2 + $0x18] sm:$0xff]
      %v1105 = vld [vmem:[%s2 + $0x20] sm:$0xff]
      %v1106 = vld [vmem:[%s2 + $0x28] sm:$0xff]
      %v1107 = vld [vmem:[%s2 + $0x30] sm:$0xff]
      %v1108 = vld [vmem:[%s2 + $0x38] sm:$0xff]
      %v1109 = vld [vmem:[%s2 + $0x40] sm:$0xff]
      %v1110 = vld [vmem:[%s2 + $0x48] sm:$0xff]
      %v1111 = vld [vmem:[%s2 + $0x50] sm:$0xff]
      %v1112 = vld [vmem:[%s2 + $0x58] sm:$0xff]
      %v1113 = vld [vmem:[%s2 + $0x60] sm:$0xff]
      %v1114 = vld [vmem:[%s2 + $0x68] sm:$0xff]
      %v1115 = vld [vmem:[%s2 + $0x70] sm:$0xff]
      %v1116 = vld [vmem:[%s2 + $0x78] sm:$0xff]
      %v1117 = vld [vmem:[%s3] sm:$0xff]
      %v1118 = vld [vmem:[%s3 + $0x8] sm:$0xff]
      %v1120 = vsel %vm519, %v649, 0
      %v1123 = vsel %vm519, %v650, 0
      %v1126 = vsel %vm519, %v651, 0
      %v1129 = vsel %vm519, %v652, 0
      %v1132 = vsel %vm519, %v653, 0
      %v1135 = vsel %vm519, %v654, 0
      %v1138 = vsel %vm519, %v655, 0
      %v1141 = vsel %vm519, %v656, 0
      %v1144 = vsel %vm519, %v657, 0
      %v1147 = vsel %vm519, %v658, 0
      %v1150 = vsel %vm519, %v659, 0
      %v1153 = vsel %vm519, %v660, 0
      %v1156 = vsel %vm519, %v661, 0
      %1158 = vmatprep.subr.mxu0 0.0
      %1159 = vmatpush1.msra.mxu0 0.0
      %1160 = vmatprep.subr.mxu0 0.0
      %1161 = vmatpush1.msra.mxu0 0.0
      %1162 = vmatprep.subr.mxu0 0.0
      %1163 = vmatpush1.msra.mxu0 0.0
      %1164 = vmatprep.subr.mxu0 0.0
      %1165 = vmatpush1.msra.mxu0 0.0
      %1166 = vmatprep.subr.mxu0 0.0
      %1167 = vmatpush1.msra.mxu0 0.0
      %1168 = vmatprep.subr.mxu0 0.0
      %1169 = vmatpush1.msra.mxu0 0.0
      %1170 = vmatprep.subr.mxu0 0.0
      %1171 = vmatpush1.msra.mxu0 0.0
      %1172 = vmatprep.subr.mxu0 0.0
      %1173 = vmatpush1.msra.mxu0 0.0
      %1174 = vmatprep.subr.mxu0 0.0
      %1175 = vmatpush1.msra.mxu0 0.0
      %1176 = vmatprep.subr.mxu0 0.0
      %1177 = vmatpush1.msra.mxu0 0.0
      %1178 = vmatprep.subr.mxu0 0.0
      %1179 = vmatpush1.msra.mxu0 0.0
      %1180 = vmatprep.subr.mxu0 0.0
      %1181 = vmatpush1.msra.mxu0 0.0
      %1182 = vmatprep.subr.mxu0 0.0
      %1183 = vmatpush1.msra.mxu0 0.0
      %1184 = vmatprep.subr.mxu0 0.0
      %1185 = vmatpush1.msra.mxu0 0.0
      %1186 = vmatprep.subr.mxu0 0.0
      %1187 = vmatpush1.msra.mxu0 %v1118
      %1188 = vmatprep.subr.mxu0 0.0
      %1189 = vmatpush1.msra.mxu0 %v1117
      %1190 = vmatprep.subr.mxu0 0.0
      %1191 = vmatpush2.msra.mxu0 0.0
      %1192 = vmatprep.subr.mxu0 0.0
      %1193 = vmatpush2.msra.mxu0 0.0
      %1194 = vmatprep.subr.mxu0 0.0
      %1195 = vmatpush2.msra.mxu0 0.0
      %1196 = vmatprep.subr.mxu0 0.0
      %1197 = vmatpush2.msra.mxu0 0.0
      %1198 = vmatprep.subr.mxu0 0.0
      %1199 = vmatpush2.msra.mxu0 0.0
      %1200 = vmatprep.subr.mxu0 0.0
      %1201 = vmatpush2.msra.mxu0 0.0
      %1202 = vmatprep.subr.mxu0 0.0
      %1203 = vmatpush2.msra.mxu0 0.0
      %1204 = vmatprep.subr.mxu0 0.0
      %1205 = vmatpush2.msra.mxu0 0.0
      %1206 = vmatprep.subr.mxu0 0.0
      %1207 = vmatpush2.msra.mxu0 0.0
      %1208 = vmatprep.subr.mxu0 0.0
      %1209 = vmatpush2.msra.mxu0 0.0
      %1210 = vmatprep.subr.mxu0 0.0
      %1211 = vmatpush2.msra.mxu0 0.0
      %1212 = vmatprep.subr.mxu0 0.0
      %1213 = vmatpush2.msra.mxu0 0.0
      %1214 = vmatprep.subr.mxu0 0.0
      %1215 = vmatpush2.msra.mxu0 0.0
      %1216 = vmatprep.subr.mxu0 0.0
      %1217 = vmatpush2.msra.mxu0 0.0
      %1218 = vmatprep.subr.mxu0 0.0
      %1219 = vmatpush2.msra.mxu0 0.0
      %1220 = vmatprep.subr.mxu0 0.0
      %1221 = vmatpush2.msra.mxu0 0.0
      %1222 = vmatprep.mubr.f32.mxu0 0.0
      %1223 = vmatmul.mubr.f32.gmra.mxu0 %v1120
      %v1224 = vpop.f32.mrf.mxu0
      %v1225 = vadd.f32 0.0, %v1224
      %v1226 = vpop.f32.mrf.mxu0
      %1227 = vmatprep.mubr.f32.mxu0 0.0
      %1228 = vmatmul.mubr.f32.gmra.mxu0 %v1123
      %v1229 = vpop.f32.mrf.mxu0
      %v1230 = vadd.f32 0.0, %v1229
      %v1231 = vpop.f32.mrf.mxu0
      %1232 = vmatprep.mubr.f32.mxu0 0.0
      %1233 = vmatmul.mubr.f32.gmra.mxu0 %v1126
      %v1234 = vpop.f32.mrf.mxu0
      %v1235 = vadd.f32 0.0, %v1234
      %v1236 = vpop.f32.mrf.mxu0
      %1237 = vmatprep.mubr.f32.mxu0 0.0
      %1238 = vmatmul.mubr.f32.gmra.mxu0 %v1129
      %v1239 = vpop.f32.mrf.mxu0
      %v1240 = vadd.f32 0.0, %v1239
      %v1241 = vpop.f32.mrf.mxu0
      %1242 = vmatprep.mubr.f32.mxu0 0.0
      %1243 = vmatmul.mubr.f32.gmra.mxu0 %v1132
      %v1244 = vpop.f32.mrf.mxu0
      %v1245 = vadd.f32 0.0, %v1244
      %v1246 = vpop.f32.mrf.mxu0
      %1247 = vmatprep.mubr.f32.mxu0 0.0
      %1248 = vmatmul.mubr.f32.gmra.mxu0 %v1135
      %v1249 = vpop.f32.mrf.mxu0
      %v1250 = vadd.f32 0.0, %v1249
      %v1251 = vpop.f32.mrf.mxu0
      %1252 = vmatprep.mubr.f32.mxu0 0.0
      %1253 = vmatmul.mubr.f32.gmra.mxu0 %v1138
      %v1254 = vpop.f32.mrf.mxu0
      %v1255 = vadd.f32 0.0, %v1254
      %v1256 = vpop.f32.mrf.mxu0
      %1257 = vmatprep.mubr.f32.mxu0 0.0
      %1258 = vmatmul.mubr.f32.gmra.mxu0 %v1141
      %v1259 = vpop.f32.mrf.mxu0
      %v1260 = vadd.f32 0.0, %v1259
      %v1261 = vpop.f32.mrf.mxu0
      %1262 = vmatprep.mubr.f32.mxu0 0.0
      %1263 = vmatmul.mubr.f32.gmra.mxu0 %v1144
      %v1264 = vpop.f32.mrf.mxu0
      %v1265 = vadd.f32 0.0, %v1264
      %v1266 = vpop.f32.mrf.mxu0
      %1267 = vmatprep.mubr.f32.mxu0 0.0
      %1268 = vmatmul.mubr.f32.gmra.mxu0 %v1147
      %v1269 = vpop.f32.mrf.mxu0
      %v1270 = vadd.f32 0.0, %v1269
      %v1271 = vpop.f32.mrf.mxu0
      %1272 = vmatprep.mubr.f32.mxu0 0.0
      %1273 = vmatmul.mubr.f32.gmra.mxu0 %v1150
      %v1274 = vpop.f32.mrf.mxu0
      %v1275 = vadd.f32 0.0, %v1274
      %v1276 = vpop.f32.mrf.mxu0
      %1277 = vmatprep.mubr.f32.mxu0 0.0
      %1278 = vmatmul.mubr.f32.gmra.mxu0 %v1153
      %v1279 = vpop.f32.mrf.mxu0
      %v1280 = vadd.f32 0.0, %v1279
      %v1281 = vpop.f32.mrf.mxu0
      %1282 = vmatprep.mubr.f32.mxu0 0.0
      %1283 = vmatmul.mubr.f32.gmra.mxu0 %v1156
      %v1284 = vpop.f32.mrf.mxu0
      %v1285 = vadd.f32 0.0, %v1284
      %v1286 = vpop.f32.mrf.mxu0
      %1287 = vdwg.mxu0
      %1288 = vmatprep.subr.mxu0 0.0
      %1289 = vmatpush1.msra.mxu0 %v1116
      %1290 = vmatprep.subr.mxu0 0.0
      %1291 = vmatpush1.msra.mxu0 %v1115
      %1292 = vmatprep.subr.mxu0 0.0
      %1293 = vmatpush1.msra.mxu0 %v1114
      %1294 = vmatprep.subr.mxu0 0.0
      %1295 = vmatpush1.msra.mxu0 %v1113
      %1296 = vmatprep.subr.mxu0 0.0
      %1297 = vmatpush1.msra.mxu0 %v1112
      %1298 = vmatprep.subr.mxu0 0.0
      %1299 = vmatpush1.msra.mxu0 %v1111
      %1300 = vmatprep.subr.mxu0 0.0
      %1301 = vmatpush1.msra.mxu0 %v1110
      %1302 = vmatprep.subr.mxu0 0.0
      %1303 = vmatpush1.msra.mxu0 %v1109
      %1304 = vmatprep.subr.mxu0 0.0
      %1305 = vmatpush1.msra.mxu0 %v1108
      %1306 = vmatprep.subr.mxu0 0.0
      %1307 = vmatpush1.msra.mxu0 %v1107
      %1308 = vmatprep.subr.mxu0 0.0
      %1309 = vmatpush1.msra.mxu0 %v1106
      %1310 = vmatprep.subr.mxu0 0.0
      %1311 = vmatpush1.msra.mxu0 %v1105
      %1312 = vmatprep.subr.mxu0 0.0
      %1313 = vmatpush1.msra.mxu0 %v1104
      %1314 = vmatprep.subr.mxu0 0.0
      %1315 = vmatpush1.msra.mxu0 %v1103
      %1316 = vmatprep.subr.mxu0 0.0
      %1317 = vmatpush1.msra.mxu0 %v1102
      %1318 = vmatprep.subr.mxu0 0.0
      %1319 = vmatpush1.msra.mxu0 %v1101
      %1320 = vmatprep.subr.mxu0 0.0
      %1321 = vmatpush2.msra.mxu0 0.0
      %1322 = vmatprep.subr.mxu0 0.0
      %1323 = vmatpush2.msra.mxu0 0.0
      %1324 = vmatprep.subr.mxu0 0.0
      %1325 = vmatpush2.msra.mxu0 0.0
      %1326 = vmatprep.subr.mxu0 0.0
      %1327 = vmatpush2.msra.mxu0 0.0
      %1328 = vmatprep.subr.mxu0 0.0
      %1329 = vmatpush2.msra.mxu0 0.0
      %1330 = vmatprep.subr.mxu0 0.0
      %1331 = vmatpush2.msra.mxu0 0.0
      %1332 = vmatprep.subr.mxu0 0.0
      %1333 = vmatpush2.msra.mxu0 0.0
      %1334 = vmatprep.subr.mxu0 0.0
      %1335 = vmatpush2.msra.mxu0 0.0
      %1336 = vmatprep.subr.mxu0 0.0
      %1337 = vmatpush2.msra.mxu0 0.0
      %1338 = vmatprep.subr.mxu0 0.0
      %1339 = vmatpush2.msra.mxu0 0.0
      %1340 = vmatprep.subr.mxu0 0.0
      %1341 = vmatpush2.msra.mxu0 0.0
      %1342 = vmatprep.subr.mxu0 0.0
      %1343 = vmatpush2.msra.mxu0 0.0
      %1344 = vmatprep.subr.mxu0 0.0
      %1345 = vmatpush2.msra.mxu0 0.0
      %1346 = vmatprep.subr.mxu0 0.0
      %1347 = vmatpush2.msra.mxu0 0.0
      %1348 = vmatprep.subr.mxu0 0.0
      %1349 = vmatpush2.msra.mxu0 0.0
      %1350 = vmatprep.subr.mxu0 0.0
      %1351 = vmatpush2.msra.mxu0 0.0
      %1352 = vmatprep.mubr.f32.mxu0 0.0
      %1353 = vmatmul.mubr.f32.gmra.mxu0 %v1088
      %v1354 = vpop.f32.mrf.mxu0
      %v1355 = vadd.f32 %v1225, %v1354
      %v1356 = vpop.f32.mrf.mxu0
      %1357 = vmatprep.mubr.f32.mxu0 0.0
      %1358 = vmatmul.mubr.f32.gmra.mxu0 %v1089
      %v1359 = vpop.f32.mrf.mxu0
      %v1360 = vadd.f32 %v1230, %v1359
      %v1361 = vpop.f32.mrf.mxu0
      %1362 = vmatprep.mubr.f32.mxu0 0.0
      %1363 = vmatmul.mubr.f32.gmra.mxu0 %v1090
      %v1364 = vpop.f32.mrf.mxu0
      %v1365 = vadd.f32 %v1235, %v1364
      %v1366 = vpop.f32.mrf.mxu0
      %1367 = vmatprep.mubr.f32.mxu0 0.0
      %1368 = vmatmul.mubr.f32.gmra.mxu0 %v1091
      %v1369 = vpop.f32.mrf.mxu0
      %v1370 = vadd.f32 %v1240, %v1369
      %v1371 = vpop.f32.mrf.mxu0
      %1372 = vmatprep.mubr.f32.mxu0 0.0
      %1373 = vmatmul.mubr.f32.gmra.mxu0 %v1092
      %v1374 = vpop.f32.mrf.mxu0
      %v1375 = vadd.f32 %v1245, %v1374
      %v1376 = vpop.f32.mrf.mxu0
      %1377 = vmatprep.mubr.f32.mxu0 0.0
      %1378 = vmatmul.mubr.f32.gmra.mxu0 %v1093
      %v1379 = vpop.f32.mrf.mxu0
      %v1380 = vadd.f32 %v1250, %v1379
      %v1381 = vpop.f32.mrf.mxu0
      %1382 = vmatprep.mubr.f32.mxu0 0.0
      %1383 = vmatmul.mubr.f32.gmra.mxu0 %v1094
      %v1384 = vpop.f32.mrf.mxu0
      %v1385 = vadd.f32 %v1255, %v1384
      %v1386 = vpop.f32.mrf.mxu0
      %1387 = vmatprep.mubr.f32.mxu0 0.0
      %1388 = vmatmul.mubr.f32.gmra.mxu0 %v1095
      %v1389 = vpop.f32.mrf.mxu0
      %v1390 = vadd.f32 %v1260, %v1389
      %v1391 = vpop.f32.mrf.mxu0
      %1392 = vmatprep.mubr.f32.mxu0 0.0
      %1393 = vmatmul.mubr.f32.gmra.mxu0 %v1096
      %v1394 = vpop.f32.mrf.mxu0
      %v1395 = vadd.f32 %v1265, %v1394
      %v1396 = vpop.f32.mrf.mxu0
      %1397 = vmatprep.mubr.f32.mxu0 0.0
      %1398 = vmatmul.mubr.f32.gmra.mxu0 %v1097
      %v1399 = vpop.f32.mrf.mxu0
      %v1400 = vadd.f32 %v1270, %v1399
      %v1401 = vpop.f32.mrf.mxu0
      %1402 = vmatprep.mubr.f32.mxu0 0.0
      %1403 = vmatmul.mubr.f32.gmra.mxu0 %v1098
      %v1404 = vpop.f32.mrf.mxu0
      %v1405 = vadd.f32 %v1275, %v1404
      %v1406 = vpop.f32.mrf.mxu0
      %1407 = vmatprep.mubr.f32.mxu0 0.0
      %1408 = vmatmul.mubr.f32.gmra.mxu0 %v1099
      %v1409 = vpop.f32.mrf.mxu0
      %v1410 = vadd.f32 %v1280, %v1409
      %v1411 = vpop.f32.mrf.mxu0
      %1412 = vmatprep.mubr.f32.mxu0 0.0
      %1413 = vmatmul.mubr.f32.gmra.mxu0 %v1100
      %v1414 = vpop.f32.mrf.mxu0
      %v1415 = vadd.f32 %v1285, %v1414
      %v1416 = vpop.f32.mrf.mxu0
      %1417 = vdwg.mxu0
      %v1418 = vld [vmem:[%s4] sm:$0x1]
      %v1419 = vlaneseq
      %v1420 = vshrl.u32 %v1419, 7
      %v1421 = vsub.s32 0, %v1420
      %v1422 = vrot.slane %v1418, %v1421
      %v1423 = vadd.f32 %v1355, %v1422
      %v1424 = vadd.f32 %v1360, %v1422
      %v1425 = vadd.f32 %v1365, %v1422
      %v1426 = vadd.f32 %v1370, %v1422
      %v1427 = vadd.f32 %v1375, %v1422
      %v1428 = vadd.f32 %v1380, %v1422
      %v1429 = vadd.f32 %v1385, %v1422
      %v1430 = vadd.f32 %v1390, %v1422
      %v1431 = vadd.f32 %v1395, %v1422
      %v1432 = vadd.f32 %v1400, %v1422
      %v1433 = vadd.f32 %v1405, %v1422
      %v1434 = vadd.f32 %v1410, %v1422
      %v1435 = vadd.f32 %v1415, %v1422
      %1437 = vset.pattern.permute.xlu0 0
      %1438 = vperm.xlu0 %1437, %v506
      %v1439 = vpop.permute.xlu0 %1438
      %1442 = vset.pattern.permute.xlu0 0
      %1443 = vperm.xlu0 %1442, %v507
      %v1444 = vpop.permute.xlu0 %1443
      %1447 = vset.pattern.permute.xlu0 0
      %1448 = vperm.xlu0 %1447, %v508
      %v1449 = vpop.permute.xlu0 %1448
      %1452 = vset.pattern.permute.xlu0 0
      %1453 = vperm.xlu0 %1452, %v509
      %v1454 = vpop.permute.xlu0 %1453
      %1457 = vset.pattern.permute.xlu0 0
      %1458 = vperm.xlu0 %1457, %v510
      %v1459 = vpop.permute.xlu0 %1458
      %1462 = vset.pattern.permute.xlu0 0
      %1463 = vperm.xlu0 %1462, %v511
      %v1464 = vpop.permute.xlu0 %1463
      %1467 = vset.pattern.permute.xlu0 0
      %1468 = vperm.xlu0 %1467, %v512
      %v1469 = vpop.permute.xlu0 %1468
      %1472 = vset.pattern.permute.xlu0 0
      %1473 = vperm.xlu0 %1472, %v513
      %v1474 = vpop.permute.xlu0 %1473
      %1477 = vset.pattern.permute.xlu0 0
      %1478 = vperm.xlu0 %1477, %v514
      %v1479 = vpop.permute.xlu0 %1478
      %1482 = vset.pattern.permute.xlu0 0
      %1483 = vperm.xlu0 %1482, %v515
      %v1484 = vpop.permute.xlu0 %1483
      %1487 = vset.pattern.permute.xlu0 0
      %1488 = vperm.xlu0 %1487, %v516
      %v1489 = vpop.permute.xlu0 %1488
      %1492 = vset.pattern.permute.xlu0 0
      %1493 = vperm.xlu0 %1492, %v517
      %v1494 = vpop.permute.xlu0 %1493
      %1497 = vset.pattern.permute.xlu0 0
      %1498 = vperm.xlu0 %1497, %v518
      %v1499 = vpop.permute.xlu0 %1498
      %v1501 = vmul.f32 %v1423, %v1439
      %v1502 = vmul.f32 %v1424, %v1444
      %v1503 = vmul.f32 %v1425, %v1449
      %v1504 = vmul.f32 %v1426, %v1454
      %v1505 = vmul.f32 %v1427, %v1459
      %v1506 = vmul.f32 %v1428, %v1464
      %v1507 = vmul.f32 %v1429, %v1469
      %v1508 = vmul.f32 %v1430, %v1474
      %v1509 = vmul.f32 %v1431, %v1479
      %v1510 = vmul.f32 %v1432, %v1484
      %v1511 = vmul.f32 %v1433, %v1489
      %v1512 = vmul.f32 %v1434, %v1494
      %v1513 = vmul.f32 %v1435, %v1499
      %v1514 = vmax.f32 %v1501, 0.0
      %v1515 = vmax.f32 %v1502, 0.0
      %v1516 = vmax.f32 %v1503, 0.0
      %v1517 = vmax.f32 %v1504, 0.0
      %v1518 = vmax.f32 %v1505, 0.0
      %v1519 = vmax.f32 %v1506, 0.0
      %v1520 = vmax.f32 %v1507, 0.0
      %v1521 = vmax.f32 %v1508, 0.0
      %v1522 = vmax.f32 %v1509, 0.0
      %v1523 = vmax.f32 %v1510, 0.0
      %v1524 = vmax.f32 %v1511, 0.0
      %v1525 = vmax.f32 %v1512, 0.0
      %v1526 = vmax.f32 %v1513, 0.0
      %1527 = vst.msk [vmem:[#allocation2 + $0x10] sm:$0xff] %vm519, %v1514
      %1528 = vst.msk [vmem:[#allocation2 + $0x18] sm:$0xff] %vm519, %v1515
      %1529 = vst.msk [vmem:[#allocation2 + $0x20] sm:$0xff] %vm519, %v1516
      %1530 = vst.msk [vmem:[#allocation2 + $0x28] sm:$0xff] %vm519, %v1517
      %1531 = vst.msk [vmem:[#allocation2 + $0x30] sm:$0xff] %vm519, %v1518
      %1532 = vst.msk [vmem:[#allocation2 + $0x38] sm:$0xff] %vm519, %v1519
      %1533 = vst.msk [vmem:[#allocation2 + $0x40] sm:$0xff] %vm519, %v1520
      %1534 = vst.msk [vmem:[#allocation2 + $0x48] sm:$0xff] %vm519, %v1521
      %1535 = vst.msk [vmem:[#allocation2 + $0x50] sm:$0xff] %vm519, %v1522
      %1536 = vst.msk [vmem:[#allocation2 + $0x58] sm:$0xff] %vm519, %v1523
      %1537 = vst.msk [vmem:[#allocation2 + $0x60] sm:$0xff] %vm519, %v1524
      %1538 = vst.msk [vmem:[#allocation2 + $0x68] sm:$0xff] %vm519, %v1525
      %1539 = vst.msk [vmem:[#allocation2 + $0x70] sm:$0xf] %vm565, %v1526
      %v1540 = vld [vmem:[#allocation2 + $0x5] sm:$0xff]
      %v1541 = vld [vmem:[#allocation2 + $0xd] sm:$0xff]
      %v1542 = vld [vmem:[#allocation2 + $0x15] sm:$0xff]
      %v1543 = vld [vmem:[#allocation2 + $0x1d] sm:$0xff]
      %v1544 = vld [vmem:[#allocation2 + $0x25] sm:$0xff]
      %v1545 = vld [vmem:[#allocation2 + $0x2d] sm:$0xff]
      %v1546 = vld [vmem:[#allocation2 + $0x35] sm:$0xff]
      %v1547 = vld [vmem:[#allocation2 + $0x3d] sm:$0xff]
      %v1548 = vld [vmem:[#allocation2 + $0x45] sm:$0xff]
      %v1549 = vld [vmem:[#allocation2 + $0x4d] sm:$0xff]
      %v1550 = vld [vmem:[#allocation2 + $0x55] sm:$0xff]
      %v1551 = vld [vmem:[#allocation2 + $0x5d] sm:$0xff]
      %v1552 = vld [vmem:[#allocation2 + $0x65] sm:$0xf]
      %v1553 = vld [vmem:[#allocation2 + $0x6] sm:$0xff]
      %v1554 = vld [vmem:[#allocation2 + $0xe] sm:$0xff]
      %v1555 = vld [vmem:[#allocation2 + $0x16] sm:$0xff]
      %v1556 = vld [vmem:[#allocation2 + $0x1e] sm:$0xff]
      %v1557 = vld [vmem:[#allocation2 + $0x26] sm:$0xff]
      %v1558 = vld [vmem:[#allocation2 + $0x2e] sm:$0xff]
      %v1559 = vld [vmem:[#allocation2 + $0x36] sm:$0xff]
      %v1560 = vld [vmem:[#allocation2 + $0x3e] sm:$0xff]
      %v1561 = vld [vmem:[#allocation2 + $0x46] sm:$0xff]
      %v1562 = vld [vmem:[#allocation2 + $0x4e] sm:$0xff]
      %v1563 = vld [vmem:[#allocation2 + $0x56] sm:$0xff]
      %v1564 = vld [vmem:[#allocation2 + $0x5e] sm:$0xff]
      %v1565 = vld [vmem:[#allocation2 + $0x66] sm:$0xf]
      %v1566 = vld [vmem:[#allocation2 + $0x7] sm:$0xff]
      %v1567 = vld [vmem:[#allocation2 + $0xf] sm:$0xff]
      %v1568 = vld [vmem:[#allocation2 + $0x17] sm:$0xff]
      %v1569 = vld [vmem:[#allocation2 + $0x1f] sm:$0xff]
      %v1570 = vld [vmem:[#allocation2 + $0x27] sm:$0xff]
      %v1571 = vld [vmem:[#allocation2 + $0x2f] sm:$0xff]
      %v1572 = vld [vmem:[#allocation2 + $0x37] sm:$0xff]
      %v1573 = vld [vmem:[#allocation2 + $0x3f] sm:$0xff]
      %v1574 = vld [vmem:[#allocation2 + $0x47] sm:$0xff]
      %v1575 = vld [vmem:[#allocation2 + $0x4f] sm:$0xff]
      %v1576 = vld [vmem:[#allocation2 + $0x57] sm:$0xff]
      %v1577 = vld [vmem:[#allocation2 + $0x5f] sm:$0xff]
      %v1578 = vld [vmem:[#allocation2 + $0x67] sm:$0xf]
      %v1579 = vld [vmem:[#allocation2 + $0x67] sm:$0xff]
      %v1580 = vld [vmem:[#allocation2 + $0x6f] sm:$0xf]
      %v1581 = vld [vmem:[#allocation2 + $0x10] sm:$0xff]
      %v1582 = vld [vmem:[#allocation2 + $0x18] sm:$0xff]
      %v1583 = vld [vmem:[#allocation2 + $0x20] sm:$0xff]
      %v1584 = vld [vmem:[#allocation2 + $0x28] sm:$0xff]
      %v1585 = vld [vmem:[#allocation2 + $0x30] sm:$0xff]
      %v1586 = vld [vmem:[#allocation2 + $0x38] sm:$0xff]
      %v1587 = vld [vmem:[#allocation2 + $0x40] sm:$0xff]
      %v1588 = vld [vmem:[#allocation2 + $0x48] sm:$0xff]
      %v1589 = vld [vmem:[#allocation2 + $0x50] sm:$0xff]
      %v1590 = vld [vmem:[#allocation2 + $0x58] sm:$0xff]
      %v1591 = vld [vmem:[#allocation2 + $0x60] sm:$0xff]
      %v1592 = vld [vmem:[#allocation2 + $0x68] sm:$0xff]
      %v1593 = vld [vmem:[#allocation2 + $0x70] sm:$0xf]
      %v1594 = vld [vmem:[#allocation2 + $0x11] sm:$0xff]
      %v1595 = vld [vmem:[#allocation2 + $0x19] sm:$0xff]
      %v1596 = vld [vmem:[#allocation2 + $0x21] sm:$0xff]
      %v1597 = vld [vmem:[#allocation2 + $0x29] sm:$0xff]
      %v1598 = vld [vmem:[#allocation2 + $0x31] sm:$0xff]
      %v1599 = vld [vmem:[#allocation2 + $0x39] sm:$0xff]
      %v1600 = vld [vmem:[#allocation2 + $0x41] sm:$0xff]
      %v1601 = vld [vmem:[#allocation2 + $0x49] sm:$0xff]
      %v1602 = vld [vmem:[#allocation2 + $0x51] sm:$0xff]
      %v1603 = vld [vmem:[#allocation2 + $0x59] sm:$0xff]
      %v1604 = vld [vmem:[#allocation2 + $0x61] sm:$0xff]
      %v1605 = vld [vmem:[#allocation2 + $0x69] sm:$0xff]
      %v1606 = vld [vmem:[#allocation2 + $0x71] sm:$0xf]
      %v1607 = vld [vmem:[#allocation2 + $0x71] sm:$0xff]
      %v1608 = vld [vmem:[#allocation2 + $0x79] sm:$0xf]
      %v1609 = vld [vmem:[#allocation2 + $0x1a] sm:$0xff]
      %v1610 = vld [vmem:[#allocation2 + $0x22] sm:$0xff]
      %v1611 = vld [vmem:[#allocation2 + $0x2a] sm:$0xff]
      %v1612 = vld [vmem:[#allocation2 + $0x32] sm:$0xff]
      %v1613 = vld [vmem:[#allocation2 + $0x3a] sm:$0xff]
      %v1614 = vld [vmem:[#allocation2 + $0x42] sm:$0xff]
      %v1615 = vld [vmem:[#allocation2 + $0x4a] sm:$0xff]
      %v1616 = vld [vmem:[#allocation2 + $0x52] sm:$0xff]
      %v1617 = vld [vmem:[#allocation2 + $0x5a] sm:$0xff]
      %v1618 = vld [vmem:[#allocation2 + $0x62] sm:$0xff]
      %v1619 = vld [vmem:[#allocation2 + $0x6a] sm:$0xff]
      %v1620 = vld [vmem:[#allocation2 + $0x72] sm:$0xff]
      %v1621 = vld [vmem:[#allocation2 + $0x7a] sm:$0xf]
      %v1622 = vld [vmem:[#allocation2 + $0x1b] sm:$0xff]
      %v1623 = vld [vmem:[#allocation2 + $0x23] sm:$0xff]
      %v1624 = vld [vmem:[#allocation2 + $0x2b] sm:$0xff]
      %v1625 = vld [vmem:[#allocation2 + $0x33] sm:$0xff]
      %v1626 = vld [vmem:[#allocation2 + $0x3b] sm:$0xff]
      %v1627 = vld [vmem:[#allocation2 + $0x43] sm:$0xff]
      %v1628 = vld [vmem:[#allocation2 + $0x4b] sm:$0xff]
      %v1629 = vld [vmem:[#allocation2 + $0x53] sm:$0xff]
      %v1630 = vld [vmem:[#allocation2 + $0x5b] sm:$0xff]
      %v1631 = vld [vmem:[#allocation2 + $0x63] sm:$0xff]
      %v1632 = vld [vmem:[#allocation2 + $0x6b] sm:$0xff]
      %v1633 = vld [vmem:[#allocation2 + $0x73] sm:$0xff]
      %v1634 = vld [vmem:[#allocation2 + $0x7b] sm:$0xf]
      %1648 = vrot.lane.b32.xlu0 %v1553, 16
      %v1649 = vpop.permute.xlu0 %1648
      %1650 = vrot.lane.b32.xlu0 %v1554, 16
      %v1651 = vpop.permute.xlu0 %1650
      %1652 = vrot.lane.b32.xlu0 %v1555, 16
      %v1653 = vpop.permute.xlu0 %1652
      %1654 = vrot.lane.b32.xlu0 %v1556, 16
      %v1655 = vpop.permute.xlu0 %1654
      %1656 = vrot.lane.b32.xlu0 %v1557, 16
      %v1657 = vpop.permute.xlu0 %1656
      %1658 = vrot.lane.b32.xlu0 %v1558, 16
      %v1659 = vpop.permute.xlu0 %1658
      %1660 = vrot.lane.b32.xlu0 %v1559, 16
      %v1661 = vpop.permute.xlu0 %1660
      %1662 = vrot.lane.b32.xlu0 %v1560, 16
      %v1663 = vpop.permute.xlu0 %1662
      %1664 = vrot.lane.b32.xlu0 %v1561, 16
      %v1665 = vpop.permute.xlu0 %1664
      %1666 = vrot.lane.b32.xlu0 %v1562, 16
      %v1667 = vpop.permute.xlu0 %1666
      %1668 = vrot.lane.b32.xlu0 %v1563, 16
      %v1669 = vpop.permute.xlu0 %1668
      %1670 = vrot.lane.b32.xlu0 %v1564, 16
      %v1671 = vpop.permute.xlu0 %1670
      %1672 = vrot.lane.b32.xlu0 %v1565, 16
      %v1673 = vpop.permute.xlu0 %1672
      %1700 = vrot.lane.b32.xlu0 %v1566, 32
      %v1701 = vpop.permute.xlu0 %1700
      %1702 = vrot.lane.b32.xlu0 %v1567, 32
      %v1703 = vpop.permute.xlu0 %1702
      %1704 = vrot.lane.b32.xlu0 %v1568, 32
      %v1705 = vpop.permute.xlu0 %1704
      %1706 = vrot.lane.b32.xlu0 %v1569, 32
      %v1707 = vpop.permute.xlu0 %1706
      %1708 = vrot.lane.b32.xlu0 %v1570, 32
      %v1709 = vpop.permute.xlu0 %1708
      %1710 = vrot.lane.b32.xlu0 %v1571, 32
      %v1711 = vpop.permute.xlu0 %1710
      %1712 = vrot.lane.b32.xlu0 %v1572, 32
      %v1713 = vpop.permute.xlu0 %1712
      %1714 = vrot.lane.b32.xlu0 %v1573, 32
      %v1715 = vpop.permute.xlu0 %1714
      %1716 = vrot.lane.b32.xlu0 %v1574, 32
      %v1717 = vpop.permute.xlu0 %1716
      %1718 = vrot.lane.b32.xlu0 %v1575, 32
      %v1719 = vpop.permute.xlu0 %1718
      %1720 = vrot.lane.b32.xlu0 %v1576, 32
      %v1721 = vpop.permute.xlu0 %1720
      %1722 = vrot.lane.b32.xlu0 %v1577, 32
      %v1723 = vpop.permute.xlu0 %1722
      %1724 = vrot.lane.b32.xlu0 %v1578, 32
      %v1725 = vpop.permute.xlu0 %1724
      %1741 = vrot.lane.b32.xlu0 %v1567, 48
      %v1742 = vpop.permute.xlu0 %1741
      %1743 = vrot.lane.b32.xlu0 %v1568, 48
      %v1744 = vpop.permute.xlu0 %1743
      %1745 = vrot.lane.b32.xlu0 %v1569, 48
      %v1746 = vpop.permute.xlu0 %1745
      %1747 = vrot.lane.b32.xlu0 %v1570, 48
      %v1748 = vpop.permute.xlu0 %1747
      %1749 = vrot.lane.b32.xlu0 %v1571, 48
      %v1750 = vpop.permute.xlu0 %1749
      %1751 = vrot.lane.b32.xlu0 %v1572, 48
      %v1752 = vpop.permute.xlu0 %1751
      %1753 = vrot.lane.b32.xlu0 %v1573, 48
      %v1754 = vpop.permute.xlu0 %1753
      %1755 = vrot.lane.b32.xlu0 %v1574, 48
      %v1756 = vpop.permute.xlu0 %1755
      %1757 = vrot.lane.b32.xlu0 %v1575, 48
      %v1758 = vpop.permute.xlu0 %1757
      %1759 = vrot.lane.b32.xlu0 %v1576, 48
      %v1760 = vpop.permute.xlu0 %1759
      %1761 = vrot.lane.b32.xlu0 %v1577, 48
      %v1762 = vpop.permute.xlu0 %1761
      %1763 = vrot.lane.b32.xlu0 %v1579, 48
      %v1764 = vpop.permute.xlu0 %1763
      %1765 = vrot.lane.b32.xlu0 %v1580, 48
      %v1766 = vpop.permute.xlu0 %1765
      %1793 = vrot.lane.b32.xlu0 %v1581, 64
      %v1794 = vpop.permute.xlu0 %1793
      %1795 = vrot.lane.b32.xlu0 %v1582, 64
      %v1796 = vpop.permute.xlu0 %1795
      %1797 = vrot.lane.b32.xlu0 %v1583, 64
      %v1798 = vpop.permute.xlu0 %1797
      %1799 = vrot.lane.b32.xlu0 %v1584, 64
      %v1800 = vpop.permute.xlu0 %1799
      %1801 = vrot.lane.b32.xlu0 %v1585, 64
      %v1802 = vpop.permute.xlu0 %1801
      %1803 = vrot.lane.b32.xlu0 %v1586, 64
      %v1804 = vpop.permute.xlu0 %1803
      %1805 = vrot.lane.b32.xlu0 %v1587, 64
      %v1806 = vpop.permute.xlu0 %1805
      %1807 = vrot.lane.b32.xlu0 %v1588, 64
      %v1808 = vpop.permute.xlu0 %1807
      %1809 = vrot.lane.b32.xlu0 %v1589, 64
      %v1810 = vpop.permute.xlu0 %1809
      %1811 = vrot.lane.b32.xlu0 %v1590, 64
      %v1812 = vpop.permute.xlu0 %1811
      %1813 = vrot.lane.b32.xlu0 %v1591, 64
      %v1814 = vpop.permute.xlu0 %1813
      %1815 = vrot.lane.b32.xlu0 %v1592, 64
      %v1816 = vpop.permute.xlu0 %1815
      %1817 = vrot.lane.b32.xlu0 %v1593, 64
      %v1818 = vpop.permute.xlu0 %1817
      %1845 = vrot.lane.b32.xlu0 %v1594, 80
      %v1846 = vpop.permute.xlu0 %1845
      %1847 = vrot.lane.b32.xlu0 %v1595, 80
      %v1848 = vpop.permute.xlu0 %1847
      %1849 = vrot.lane.b32.xlu0 %v1596, 80
      %v1850 = vpop.permute.xlu0 %1849
      %1851 = vrot.lane.b32.xlu0 %v1597, 80
      %v1852 = vpop.permute.xlu0 %1851
      %1853 = vrot.lane.b32.xlu0 %v1598, 80
      %v1854 = vpop.permute.xlu0 %1853
      %1855 = vrot.lane.b32.xlu0 %v1599, 80
      %v1856 = vpop.permute.xlu0 %1855
      %1857 = vrot.lane.b32.xlu0 %v1600, 80
      %v1858 = vpop.permute.xlu0 %1857
      %1859 = vrot.lane.b32.xlu0 %v1601, 80
      %v1860 = vpop.permute.xlu0 %1859
      %1861 = vrot.lane.b32.xlu0 %v1602, 80
      %v1862 = vpop.permute.xlu0 %1861
      %1863 = vrot.lane.b32.xlu0 %v1603, 80
      %v1864 = vpop.permute.xlu0 %1863
      %1865 = vrot.lane.b32.xlu0 %v1604, 80
      %v1866 = vpop.permute.xlu0 %1865
      %1867 = vrot.lane.b32.xlu0 %v1605, 80
      %v1868 = vpop.permute.xlu0 %1867
      %1869 = vrot.lane.b32.xlu0 %v1606, 80
      %v1870 = vpop.permute.xlu0 %1869
      %1886 = vrot.lane.b32.xlu0 %v1595, 96
      %v1887 = vpop.permute.xlu0 %1886
      %1888 = vrot.lane.b32.xlu0 %v1596, 96
      %v1889 = vpop.permute.xlu0 %1888
      %1890 = vrot.lane.b32.xlu0 %v1597, 96
      %v1891 = vpop.permute.xlu0 %1890
      %1892 = vrot.lane.b32.xlu0 %v1598, 96
      %v1893 = vpop.permute.xlu0 %1892
      %1894 = vrot.lane.b32.xlu0 %v1599, 96
      %v1895 = vpop.permute.xlu0 %1894
      %1896 = vrot.lane.b32.xlu0 %v1600, 96
      %v1897 = vpop.permute.xlu0 %1896
      %1898 = vrot.lane.b32.xlu0 %v1601, 96
      %v1899 = vpop.permute.xlu0 %1898
      %1900 = vrot.lane.b32.xlu0 %v1602, 96
      %v1901 = vpop.permute.xlu0 %1900
      %1902 = vrot.lane.b32.xlu0 %v1603, 96
      %v1903 = vpop.permute.xlu0 %1902
      %1904 = vrot.lane.b32.xlu0 %v1604, 96
      %v1905 = vpop.permute.xlu0 %1904
      %1906 = vrot.lane.b32.xlu0 %v1605, 96
      %v1907 = vpop.permute.xlu0 %1906
      %1908 = vrot.lane.b32.xlu0 %v1607, 96
      %v1909 = vpop.permute.xlu0 %1908
      %1910 = vrot.lane.b32.xlu0 %v1608, 96
      %v1911 = vpop.permute.xlu0 %1910
      %1938 = vrot.lane.b32.xlu0 %v1609, 112
      %v1939 = vpop.permute.xlu0 %1938
      %1940 = vrot.lane.b32.xlu0 %v1610, 112
      %v1941 = vpop.permute.xlu0 %1940
      %1942 = vrot.lane.b32.xlu0 %v1611, 112
      %v1943 = vpop.permute.xlu0 %1942
      %1944 = vrot.lane.b32.xlu0 %v1612, 112
      %v1945 = vpop.permute.xlu0 %1944
      %1946 = vrot.lane.b32.xlu0 %v1613, 112
      %v1947 = vpop.permute.xlu0 %1946
      %1948 = vrot.lane.b32.xlu0 %v1614, 112
      %v1949 = vpop.permute.xlu0 %1948
      %1950 = vrot.lane.b32.xlu0 %v1615, 112
      %v1951 = vpop.permute.xlu0 %1950
      %1952 = vrot.lane.b32.xlu0 %v1616, 112
      %v1953 = vpop.permute.xlu0 %1952
      %1954 = vrot.lane.b32.xlu0 %v1617, 112
      %v1955 = vpop.permute.xlu0 %1954
      %1956 = vrot.lane.b32.xlu0 %v1618, 112
      %v1957 = vpop.permute.xlu0 %1956
      %1958 = vrot.lane.b32.xlu0 %v1619, 112
      %v1959 = vpop.permute.xlu0 %1958
      %1960 = vrot.lane.b32.xlu0 %v1620, 112
      %v1961 = vpop.permute.xlu0 %1960
      %1962 = vrot.lane.b32.xlu0 %v1621, 112
      %v1963 = vpop.permute.xlu0 %1962
      %v1977 = vsel %vm519, %v1540, %v1649
      %v1978 = vsel %vm519, %v1541, %v1651
      %v1979 = vsel %vm519, %v1542, %v1653
      %v1980 = vsel %vm519, %v1543, %v1655
      %v1981 = vsel %vm519, %v1544, %v1657
      %v1982 = vsel %vm519, %v1545, %v1659
      %v1983 = vsel %vm519, %v1546, %v1661
      %v1984 = vsel %vm519, %v1547, %v1663
      %v1985 = vsel %vm519, %v1548, %v1665
      %v1986 = vsel %vm519, %v1549, %v1667
      %v1987 = vsel %vm519, %v1550, %v1669
      %v1988 = vsel %vm519, %v1551, %v1671
      %v1989 = vsel %vm519, %v1552, %v1673
      %v1990 = vsel %vm1017, %v1977, %v1701
      %v1991 = vsel %vm1017, %v1978, %v1703
      %v1992 = vsel %vm1017, %v1979, %v1705
      %v1993 = vsel %vm1017, %v1980, %v1707
      %v1994 = vsel %vm1017, %v1981, %v1709
      %v1995 = vsel %vm1017, %v1982, %v1711
      %v1996 = vsel %vm1017, %v1983, %v1713
      %v1997 = vsel %vm1017, %v1984, %v1715
      %v1998 = vsel %vm1017, %v1985, %v1717
      %v1999 = vsel %vm1017, %v1986, %v1719
      %v2000 = vsel %vm1017, %v1987, %v1721
      %v2001 = vsel %vm1017, %v1988, %v1723
      %v2002 = vsel %vm1017, %v1989, %v1725
      %v2003 = vsel %vm1031, %v1990, %v1742
      %v2004 = vsel %vm1031, %v1991, %v1744
      %v2005 = vsel %vm1031, %v1992, %v1746
      %v2006 = vsel %vm1031, %v1993, %v1748
      %v2007 = vsel %vm1031, %v1994, %v1750
      %v2008 = vsel %vm1031, %v1995, %v1752
      %v2009 = vsel %vm1031, %v1996, %v1754
      %v2010 = vsel %vm1031, %v1997, %v1756
      %v2011 = vsel %vm1031, %v1998, %v1758
      %v2012 = vsel %vm1031, %v1999, %v1760
      %v2013 = vsel %vm1031, %v2000, %v1762
      %v2014 = vsel %vm1031, %v2001, %v1764
      %v2015 = vsel %vm1031, %v2002, %v1766
      %v2016 = vsel %vm1045, %v2003, %v1794
      %v2017 = vsel %vm1045, %v2004, %v1796
      %v2018 = vsel %vm1045, %v2005, %v1798
      %v2019 = vsel %vm1045, %v2006, %v1800
      %v2020 = vsel %vm1045, %v2007, %v1802
      %v2021 = vsel %vm1045, %v2008, %v1804
      %v2022 = vsel %vm1045, %v2009, %v1806
      %v2023 = vsel %vm1045, %v2010, %v1808
      %v2024 = vsel %vm1045, %v2011, %v1810
      %v2025 = vsel %vm1045, %v2012, %v1812
      %v2026 = vsel %vm1045, %v2013, %v1814
      %v2027 = vsel %vm1045, %v2014, %v1816
      %v2028 = vsel %vm1045, %v2015, %v1818
      %v2029 = vsel %vm1059, %v2016, %v1846
      %v2030 = vsel %vm1059, %v2017, %v1848
      %v2031 = vsel %vm1059, %v2018, %v1850
      %v2032 = vsel %vm1059, %v2019, %v1852
      %v2033 = vsel %vm1059, %v2020, %v1854
      %v2034 = vsel %vm1059, %v2021, %v1856
      %v2035 = vsel %vm1059, %v2022, %v1858
      %v2036 = vsel %vm1059, %v2023, %v1860
      %v2037 = vsel %vm1059, %v2024, %v1862
      %v2038 = vsel %vm1059, %v2025, %v1864
      %v2039 = vsel %vm1059, %v2026, %v1866
      %v2040 = vsel %vm1059, %v2027, %v1868
      %v2041 = vsel %vm1059, %v2028, %v1870
      %v2042 = vsel %vm1073, %v2029, %v1887
      %v2043 = vsel %vm1073, %v2030, %v1889
      %v2044 = vsel %vm1073, %v2031, %v1891
      %v2045 = vsel %vm1073, %v2032, %v1893
      %v2046 = vsel %vm1073, %v2033, %v1895
      %v2047 = vsel %vm1073, %v2034, %v1897
      %v2048 = vsel %vm1073, %v2035, %v1899
      %v2049 = vsel %vm1073, %v2036, %v1901
      %v2050 = vsel %vm1073, %v2037, %v1903
      %v2051 = vsel %vm1073, %v2038, %v1905
      %v2052 = vsel %vm1073, %v2039, %v1907
      %v2053 = vsel %vm1073, %v2040, %v1909
      %v2054 = vsel %vm1073, %v2041, %v1911
      %v2055 = vsel %vm1087, %v2042, %v1939
      %v2056 = vsel %vm1087, %v2043, %v1941
      %v2057 = vsel %vm1087, %v2044, %v1943
      %v2058 = vsel %vm1087, %v2045, %v1945
      %v2059 = vsel %vm1087, %v2046, %v1947
      %v2060 = vsel %vm1087, %v2047, %v1949
      %v2061 = vsel %vm1087, %v2048, %v1951
      %v2062 = vsel %vm1087, %v2049, %v1953
      %v2063 = vsel %vm1087, %v2050, %v1955
      %v2064 = vsel %vm1087, %v2051, %v1957
      %v2065 = vsel %vm1087, %v2052, %v1959
      %v2066 = vsel %vm1087, %v2053, %v1961
      %v2067 = vsel %vm1087, %v2054, %v1963
      %s2068 = scalar_lea.vmem %s2, 128
      %v2069 = vld [vmem:[%s2068] sm:$0xff]
      %v2070 = vld [vmem:[%s2068 + $0x8] sm:$0xff]
      %v2071 = vld [vmem:[%s2068 + $0x10] sm:$0xff]
      %v2072 = vld [vmem:[%s2068 + $0x18] sm:$0xff]
      %v2073 = vld [vmem:[%s2068 + $0x20] sm:$0xff]
      %v2074 = vld [vmem:[%s2068 + $0x28] sm:$0xff]
      %v2075 = vld [vmem:[%s2068 + $0x30] sm:$0xff]
      %v2076 = vld [vmem:[%s2068 + $0x38] sm:$0xff]
      %v2077 = vld [vmem:[%s2068 + $0x40] sm:$0xff]
      %v2078 = vld [vmem:[%s2068 + $0x48] sm:$0xff]
      %v2079 = vld [vmem:[%s2068 + $0x50] sm:$0xff]
      %v2080 = vld [vmem:[%s2068 + $0x58] sm:$0xff]
      %v2081 = vld [vmem:[%s2068 + $0x60] sm:$0xff]
      %v2082 = vld [vmem:[%s2068 + $0x68] sm:$0xff]
      %v2083 = vld [vmem:[%s2068 + $0x70] sm:$0xff]
      %v2084 = vld [vmem:[%s2068 + $0x78] sm:$0xff]
      %s2085 = scalar_lea.vmem %s3, 16
      %v2086 = vld [vmem:[%s2085] sm:$0xff]
      %v2087 = vld [vmem:[%s2085 + $0x8] sm:$0xff]
      %v2089 = vsel %vm519, %v1622, 0
      %v2092 = vsel %vm519, %v1623, 0
      %v2095 = vsel %vm519, %v1624, 0
      %v2098 = vsel %vm519, %v1625, 0
      %v2101 = vsel %vm519, %v1626, 0
      %v2104 = vsel %vm519, %v1627, 0
      %v2107 = vsel %vm519, %v1628, 0
      %v2110 = vsel %vm519, %v1629, 0
      %v2113 = vsel %vm519, %v1630, 0
      %v2116 = vsel %vm519, %v1631, 0
      %v2119 = vsel %vm519, %v1632, 0
      %v2122 = vsel %vm519, %v1633, 0
      %v2125 = vsel %vm519, %v1634, 0
      %2127 = vmatprep.subr.mxu0 0.0
      %2128 = vmatpush1.msra.mxu0 0.0
      %2129 = vmatprep.subr.mxu0 0.0
      %2130 = vmatpush1.msra.mxu0 0.0
      %2131 = vmatprep.subr.mxu0 0.0
      %2132 = vmatpush1.msra.mxu0 0.0
      %2133 = vmatprep.subr.mxu0 0.0
      %2134 = vmatpush1.msra.mxu0 0.0
      %2135 = vmatprep.subr.mxu0 0.0
      %2136 = vmatpush1.msra.mxu0 0.0
      %2137 = vmatprep.subr.mxu0 0.0
      %2138 = vmatpush1.msra.mxu0 0.0
      %2139 = vmatprep.subr.mxu0 0.0
      %2140 = vmatpush1.msra.mxu0 0.0
      %2141 = vmatprep.subr.mxu0 0.0
      %2142 = vmatpush1.msra.mxu0 0.0
      %2143 = vmatprep.subr.mxu0 0.0
      %2144 = vmatpush1.msra.mxu0 0.0
      %2145 = vmatprep.subr.mxu0 0.0
      %2146 = vmatpush1.msra.mxu0 0.0
      %2147 = vmatprep.subr.mxu0 0.0
      %2148 = vmatpush1.msra.mxu0 0.0
      %2149 = vmatprep.subr.mxu0 0.0
      %2150 = vmatpush1.msra.mxu0 0.0
      %2151 = vmatprep.subr.mxu0 0.0
      %2152 = vmatpush1.msra.mxu0 0.0
      %2153 = vmatprep.subr.mxu0 0.0
      %2154 = vmatpush1.msra.mxu0 0.0
      %2155 = vmatprep.subr.mxu0 0.0
      %2156 = vmatpush1.msra.mxu0 %v2087
      %2157 = vmatprep.subr.mxu0 0.0
      %2158 = vmatpush1.msra.mxu0 %v2086
      %2159 = vmatprep.subr.mxu0 0.0
      %2160 = vmatpush2.msra.mxu0 0.0
      %2161 = vmatprep.subr.mxu0 0.0
      %2162 = vmatpush2.msra.mxu0 0.0
      %2163 = vmatprep.subr.mxu0 0.0
      %2164 = vmatpush2.msra.mxu0 0.0
      %2165 = vmatprep.subr.mxu0 0.0
      %2166 = vmatpush2.msra.mxu0 0.0
      %2167 = vmatprep.subr.mxu0 0.0
      %2168 = vmatpush2.msra.mxu0 0.0
      %2169 = vmatprep.subr.mxu0 0.0
      %2170 = vmatpush2.msra.mxu0 0.0
      %2171 = vmatprep.subr.mxu0 0.0
      %2172 = vmatpush2.msra.mxu0 0.0
      %2173 = vmatprep.subr.mxu0 0.0
      %2174 = vmatpush2.msra.mxu0 0.0
      %2175 = vmatprep.subr.mxu0 0.0
      %2176 = vmatpush2.msra.mxu0 0.0
      %2177 = vmatprep.subr.mxu0 0.0
      %2178 = vmatpush2.msra.mxu0 0.0
      %2179 = vmatprep.subr.mxu0 0.0
      %2180 = vmatpush2.msra.mxu0 0.0
      %2181 = vmatprep.subr.mxu0 0.0
      %2182 = vmatpush2.msra.mxu0 0.0
      %2183 = vmatprep.subr.mxu0 0.0
      %2184 = vmatpush2.msra.mxu0 0.0
      %2185 = vmatprep.subr.mxu0 0.0
      %2186 = vmatpush2.msra.mxu0 0.0
      %2187 = vmatprep.subr.mxu0 0.0
      %2188 = vmatpush2.msra.mxu0 0.0
      %2189 = vmatprep.subr.mxu0 0.0
      %2190 = vmatpush2.msra.mxu0 0.0
      %2191 = vmatprep.mubr.f32.mxu0 0.0
      %2192 = vmatmul.mubr.f32.gmra.mxu0 %v2089
      %v2193 = vpop.f32.mrf.mxu0
      %v2194 = vadd.f32 0.0, %v2193
      %v2195 = vpop.f32.mrf.mxu0
      %2196 = vmatprep.mubr.f32.mxu0 0.0
      %2197 = vmatmul.mubr.f32.gmra.mxu0 %v2092
      %v2198 = vpop.f32.mrf.mxu0
      %v2199 = vadd.f32 0.0, %v2198
      %v2200 = vpop.f32.mrf.mxu0
      %2201 = vmatprep.mubr.f32.mxu0 0.0
      %2202 = vmatmul.mubr.f32.gmra.mxu0 %v2095
      %v2203 = vpop.f32.mrf.mxu0
      %v2204 = vadd.f32 0.0, %v2203
      %v2205 = vpop.f32.mrf.mxu0
      %2206 = vmatprep.mubr.f32.mxu0 0.0
      %2207 = vmatmul.mubr.f32.gmra.mxu0 %v2098
      %v2208 = vpop.f32.mrf.mxu0
      %v2209 = vadd.f32 0.0, %v2208
      %v2210 = vpop.f32.mrf.mxu0
      %2211 = vmatprep.mubr.f32.mxu0 0.0
      %2212 = vmatmul.mubr.f32.gmra.mxu0 %v2101
      %v2213 = vpop.f32.mrf.mxu0
      %v2214 = vadd.f32 0.0, %v2213
      %v2215 = vpop.f32.mrf.mxu0
      %2216 = vmatprep.mubr.f32.mxu0 0.0
      %2217 = vmatmul.mubr.f32.gmra.mxu0 %v2104
      %v2218 = vpop.f32.mrf.mxu0
      %v2219 = vadd.f32 0.0, %v2218
      %v2220 = vpop.f32.mrf.mxu0
      %2221 = vmatprep.mubr.f32.mxu0 0.0
      %2222 = vmatmul.mubr.f32.gmra.mxu0 %v2107
      %v2223 = vpop.f32.mrf.mxu0
      %v2224 = vadd.f32 0.0, %v2223
      %v2225 = vpop.f32.mrf.mxu0
      %2226 = vmatprep.mubr.f32.mxu0 0.0
      %2227 = vmatmul.mubr.f32.gmra.mxu0 %v2110
      %v2228 = vpop.f32.mrf.mxu0
      %v2229 = vadd.f32 0.0, %v2228
      %v2230 = vpop.f32.mrf.mxu0
      %2231 = vmatprep.mubr.f32.mxu0 0.0
      %2232 = vmatmul.mubr.f32.gmra.mxu0 %v2113
      %v2233 = vpop.f32.mrf.mxu0
      %v2234 = vadd.f32 0.0, %v2233
      %v2235 = vpop.f32.mrf.mxu0
      %2236 = vmatprep.mubr.f32.mxu0 0.0
      %2237 = vmatmul.mubr.f32.gmra.mxu0 %v2116
      %v2238 = vpop.f32.mrf.mxu0
      %v2239 = vadd.f32 0.0, %v2238
      %v2240 = vpop.f32.mrf.mxu0
      %2241 = vmatprep.mubr.f32.mxu0 0.0
      %2242 = vmatmul.mubr.f32.gmra.mxu0 %v2119
      %v2243 = vpop.f32.mrf.mxu0
      %v2244 = vadd.f32 0.0, %v2243
      %v2245 = vpop.f32.mrf.mxu0
      %2246 = vmatprep.mubr.f32.mxu0 0.0
      %2247 = vmatmul.mubr.f32.gmra.mxu0 %v2122
      %v2248 = vpop.f32.mrf.mxu0
      %v2249 = vadd.f32 0.0, %v2248
      %v2250 = vpop.f32.mrf.mxu0
      %2251 = vmatprep.mubr.f32.mxu0 0.0
      %2252 = vmatmul.mubr.f32.gmra.mxu0 %v2125
      %v2253 = vpop.f32.mrf.mxu0
      %v2254 = vadd.f32 0.0, %v2253
      %v2255 = vpop.f32.mrf.mxu0
      %2256 = vdwg.mxu0
      %2257 = vmatprep.subr.mxu0 0.0
      %2258 = vmatpush1.msra.mxu0 %v2084
      %2259 = vmatprep.subr.mxu0 0.0
      %2260 = vmatpush1.msra.mxu0 %v2083
      %2261 = vmatprep.subr.mxu0 0.0
      %2262 = vmatpush1.msra.mxu0 %v2082
      %2263 = vmatprep.subr.mxu0 0.0
      %2264 = vmatpush1.msra.mxu0 %v2081
      %2265 = vmatprep.subr.mxu0 0.0
      %2266 = vmatpush1.msra.mxu0 %v2080
      %2267 = vmatprep.subr.mxu0 0.0
      %2268 = vmatpush1.msra.mxu0 %v2079
      %2269 = vmatprep.subr.mxu0 0.0
      %2270 = vmatpush1.msra.mxu0 %v2078
      %2271 = vmatprep.subr.mxu0 0.0
      %2272 = vmatpush1.msra.mxu0 %v2077
      %2273 = vmatprep.subr.mxu0 0.0
      %2274 = vmatpush1.msra.mxu0 %v2076
      %2275 = vmatprep.subr.mxu0 0.0
      %2276 = vmatpush1.msra.mxu0 %v2075
      %2277 = vmatprep.subr.mxu0 0.0
      %2278 = vmatpush1.msra.mxu0 %v2074
      %2279 = vmatprep.subr.mxu0 0.0
      %2280 = vmatpush1.msra.mxu0 %v2073
      %2281 = vmatprep.subr.mxu0 0.0
      %2282 = vmatpush1.msra.mxu0 %v2072
      %2283 = vmatprep.subr.mxu0 0.0
      %2284 = vmatpush1.msra.mxu0 %v2071
      %2285 = vmatprep.subr.mxu0 0.0
      %2286 = vmatpush1.msra.mxu0 %v2070
      %2287 = vmatprep.subr.mxu0 0.0
      %2288 = vmatpush1.msra.mxu0 %v2069
      %2289 = vmatprep.subr.mxu0 0.0
      %2290 = vmatpush2.msra.mxu0 0.0
      %2291 = vmatprep.subr.mxu0 0.0
      %2292 = vmatpush2.msra.mxu0 0.0
      %2293 = vmatprep.subr.mxu0 0.0
      %2294 = vmatpush2.msra.mxu0 0.0
      %2295 = vmatprep.subr.mxu0 0.0
      %2296 = vmatpush2.msra.mxu0 0.0
      %2297 = vmatprep.subr.mxu0 0.0
      %2298 = vmatpush2.msra.mxu0 0.0
      %2299 = vmatprep.subr.mxu0 0.0
      %2300 = vmatpush2.msra.mxu0 0.0
      %2301 = vmatprep.subr.mxu0 0.0
      %2302 = vmatpush2.msra.mxu0 0.0
      %2303 = vmatprep.subr.mxu0 0.0
      %2304 = vmatpush2.msra.mxu0 0.0
      %2305 = vmatprep.subr.mxu0 0.0
      %2306 = vmatpush2.msra.mxu0 0.0
      %2307 = vmatprep.subr.mxu0 0.0
      %2308 = vmatpush2.msra.mxu0 0.0
      %2309 = vmatprep.subr.mxu0 0.0
      %2310 = vmatpush2.msra.mxu0 0.0
      %2311 = vmatprep.subr.mxu0 0.0
      %2312 = vmatpush2.msra.mxu0 0.0
      %2313 = vmatprep.subr.mxu0 0.0
      %2314 = vmatpush2.msra.mxu0 0.0
      %2315 = vmatprep.subr.mxu0 0.0
      %2316 = vmatpush2.msra.mxu0 0.0
      %2317 = vmatprep.subr.mxu0 0.0
      %2318 = vmatpush2.msra.mxu0 0.0
      %2319 = vmatprep.subr.mxu0 0.0
      %2320 = vmatpush2.msra.mxu0 0.0
      %2321 = vmatprep.mubr.f32.mxu0 0.0
      %2322 = vmatmul.mubr.f32.gmra.mxu0 %v2055
      %v2323 = vpop.f32.mrf.mxu0
      %v2324 = vadd.f32 %v2194, %v2323
      %v2325 = vpop.f32.mrf.mxu0
      %2326 = vmatprep.mubr.f32.mxu0 0.0
      %2327 = vmatmul.mubr.f32.gmra.mxu0 %v2056
      %v2328 = vpop.f32.mrf.mxu0
      %v2329 = vadd.f32 %v2199, %v2328
      %v2330 = vpop.f32.mrf.mxu0
      %2331 = vmatprep.mubr.f32.mxu0 0.0
      %2332 = vmatmul.mubr.f32.gmra.mxu0 %v2057
      %v2333 = vpop.f32.mrf.mxu0
      %v2334 = vadd.f32 %v2204, %v2333
      %v2335 = vpop.f32.mrf.mxu0
      %2336 = vmatprep.mubr.f32.mxu0 0.0
      %2337 = vmatmul.mubr.f32.gmra.mxu0 %v2058
      %v2338 = vpop.f32.mrf.mxu0
      %v2339 = vadd.f32 %v2209, %v2338
      %v2340 = vpop.f32.mrf.mxu0
      %2341 = vmatprep.mubr.f32.mxu0 0.0
      %2342 = vmatmul.mubr.f32.gmra.mxu0 %v2059
      %v2343 = vpop.f32.mrf.mxu0
      %v2344 = vadd.f32 %v2214, %v2343
      %v2345 = vpop.f32.mrf.mxu0
      %2346 = vmatprep.mubr.f32.mxu0 0.0
      %2347 = vmatmul.mubr.f32.gmra.mxu0 %v2060
      %v2348 = vpop.f32.mrf.mxu0
      %v2349 = vadd.f32 %v2219, %v2348
      %v2350 = vpop.f32.mrf.mxu0
      %2351 = vmatprep.mubr.f32.mxu0 0.0
      %2352 = vmatmul.mubr.f32.gmra.mxu0 %v2061
      %v2353 = vpop.f32.mrf.mxu0
      %v2354 = vadd.f32 %v2224, %v2353
      %v2355 = vpop.f32.mrf.mxu0
      %2356 = vmatprep.mubr.f32.mxu0 0.0
      %2357 = vmatmul.mubr.f32.gmra.mxu0 %v2062
      %v2358 = vpop.f32.mrf.mxu0
      %v2359 = vadd.f32 %v2229, %v2358
      %v2360 = vpop.f32.mrf.mxu0
      %2361 = vmatprep.mubr.f32.mxu0 0.0
      %2362 = vmatmul.mubr.f32.gmra.mxu0 %v2063
      %v2363 = vpop.f32.mrf.mxu0
      %v2364 = vadd.f32 %v2234, %v2363
      %v2365 = vpop.f32.mrf.mxu0
      %2366 = vmatprep.mubr.f32.mxu0 0.0
      %2367 = vmatmul.mubr.f32.gmra.mxu0 %v2064
      %v2368 = vpop.f32.mrf.mxu0
      %v2369 = vadd.f32 %v2239, %v2368
      %v2370 = vpop.f32.mrf.mxu0
      %2371 = vmatprep.mubr.f32.mxu0 0.0
      %2372 = vmatmul.mubr.f32.gmra.mxu0 %v2065
      %v2373 = vpop.f32.mrf.mxu0
      %v2374 = vadd.f32 %v2244, %v2373
      %v2375 = vpop.f32.mrf.mxu0
      %2376 = vmatprep.mubr.f32.mxu0 0.0
      %2377 = vmatmul.mubr.f32.gmra.mxu0 %v2066
      %v2378 = vpop.f32.mrf.mxu0
      %v2379 = vadd.f32 %v2249, %v2378
      %v2380 = vpop.f32.mrf.mxu0
      %2381 = vmatprep.mubr.f32.mxu0 0.0
      %2382 = vmatmul.mubr.f32.gmra.mxu0 %v2067
      %v2383 = vpop.f32.mrf.mxu0
      %v2384 = vadd.f32 %v2254, %v2383
      %v2385 = vpop.f32.mrf.mxu0
      %2386 = vdwg.mxu0
      %v2387 = vld [vmem:[%s4 + $0x1] sm:$0x1]
      %v2388 = vlaneseq
      %v2389 = vshrl.u32 %v2388, 7
      %v2390 = vsub.s32 0, %v2389
      %v2391 = vrot.slane %v2387, %v2390
      %v2392 = vadd.f32 %v2324, %v2391
      %v2393 = vadd.f32 %v2329, %v2391
      %v2394 = vadd.f32 %v2334, %v2391
      %v2395 = vadd.f32 %v2339, %v2391
      %v2396 = vadd.f32 %v2344, %v2391
      %v2397 = vadd.f32 %v2349, %v2391
      %v2398 = vadd.f32 %v2354, %v2391
      %v2399 = vadd.f32 %v2359, %v2391
      %v2400 = vadd.f32 %v2364, %v2391
      %v2401 = vadd.f32 %v2369, %v2391
      %v2402 = vadd.f32 %v2374, %v2391
      %v2403 = vadd.f32 %v2379, %v2391
      %v2404 = vadd.f32 %v2384, %v2391
      %v2405 = vmul.f32 %v2392, %v1439
      %v2406 = vmul.f32 %v2393, %v1444
      %v2407 = vmul.f32 %v2394, %v1449
      %v2408 = vmul.f32 %v2395, %v1454
      %v2409 = vmul.f32 %v2396, %v1459
      %v2410 = vmul.f32 %v2397, %v1464
      %v2411 = vmul.f32 %v2398, %v1469
      %v2412 = vmul.f32 %v2399, %v1474
      %v2413 = vmul.f32 %v2400, %v1479
      %v2414 = vmul.f32 %v2401, %v1484
      %v2415 = vmul.f32 %v2402, %v1489
      %v2416 = vmul.f32 %v2403, %v1494
      %v2417 = vmul.f32 %v2404, %v1499
      %v2418 = vmax.f32 %v2405, 0.0
      %v2419 = vmax.f32 %v2406, 0.0
      %v2420 = vmax.f32 %v2407, 0.0
      %v2421 = vmax.f32 %v2408, 0.0
      %v2422 = vmax.f32 %v2409, 0.0
      %v2423 = vmax.f32 %v2410, 0.0
      %v2424 = vmax.f32 %v2411, 0.0
      %v2425 = vmax.f32 %v2412, 0.0
      %v2426 = vmax.f32 %v2413, 0.0
      %v2427 = vmax.f32 %v2414, 0.0
      %v2428 = vmax.f32 %v2415, 0.0
      %v2429 = vmax.f32 %v2416, 0.0
      %v2430 = vmax.f32 %v2417, 0.0
      %2431 = vst.msk [vmem:[#allocation3 + $0x10] sm:$0xff] %vm519, %v2418
      %2432 = vst.msk [vmem:[#allocation3 + $0x18] sm:$0xff] %vm519, %v2419
      %2433 = vst.msk [vmem:[#allocation3 + $0x20] sm:$0xff] %vm519, %v2420
      %2434 = vst.msk [vmem:[#allocation3 + $0x28] sm:$0xff] %vm519, %v2421
      %2435 = vst.msk [vmem:[#allocation3 + $0x30] sm:$0xff] %vm519, %v2422
      %2436 = vst.msk [vmem:[#allocation3 + $0x38] sm:$0xff] %vm519, %v2423
      %2437 = vst.msk [vmem:[#allocation3 + $0x40] sm:$0xff] %vm519, %v2424
      %2438 = vst.msk [vmem:[#allocation3 + $0x48] sm:$0xff] %vm519, %v2425
      %2439 = vst.msk [vmem:[#allocation3 + $0x50] sm:$0xff] %vm519, %v2426
      %2440 = vst.msk [vmem:[#allocation3 + $0x58] sm:$0xff] %vm519, %v2427
      %2441 = vst.msk [vmem:[#allocation3 + $0x60] sm:$0xff] %vm519, %v2428
      %2442 = vst.msk [vmem:[#allocation3 + $0x68] sm:$0xff] %vm519, %v2429
      %2443 = vst.msk [vmem:[#allocation3 + $0x70] sm:$0xf] %vm565, %v2430
      %v2444 = vld [vmem:[#allocation2 + $0x10] sm:$0xff]
      %v2445 = vld [vmem:[#allocation2 + $0x18] sm:$0xff]
      %v2446 = vld [vmem:[#allocation2 + $0x20] sm:$0xff]
      %v2447 = vld [vmem:[#allocation2 + $0x28] sm:$0xff]
      %v2448 = vld [vmem:[#allocation2 + $0x30] sm:$0xff]
      %v2449 = vld [vmem:[#allocation2 + $0x38] sm:$0xff]
      %v2450 = vld [vmem:[#allocation2 + $0x40] sm:$0xff]
      %v2451 = vld [vmem:[#allocation2 + $0x48] sm:$0xff]
      %v2452 = vld [vmem:[#allocation2 + $0x50] sm:$0xff]
      %v2453 = vld [vmem:[#allocation2 + $0x58] sm:$0xff]
      %v2454 = vld [vmem:[#allocation2 + $0x60] sm:$0xff]
      %v2455 = vld [vmem:[#allocation2 + $0x68] sm:$0xff]
      %v2456 = vld [vmem:[#allocation2 + $0x70] sm:$0xf]
      %v2457 = vld [vmem:[#allocation3 + $0x5] sm:$0xff]
      %v2458 = vld [vmem:[#allocation3 + $0xd] sm:$0xff]
      %v2459 = vld [vmem:[#allocation3 + $0x15] sm:$0xff]
      %v2460 = vld [vmem:[#allocation3 + $0x1d] sm:$0xff]
      %v2461 = vld [vmem:[#allocation3 + $0x25] sm:$0xff]
      %v2462 = vld [vmem:[#allocation3 + $0x2d] sm:$0xff]
      %v2463 = vld [vmem:[#allocation3 + $0x35] sm:$0xff]
      %v2464 = vld [vmem:[#allocation3 + $0x3d] sm:$0xff]
      %v2465 = vld [vmem:[#allocation3 + $0x45] sm:$0xff]
      %v2466 = vld [vmem:[#allocation3 + $0x4d] sm:$0xff]
      %v2467 = vld [vmem:[#allocation3 + $0x55] sm:$0xff]
      %v2468 = vld [vmem:[#allocation3 + $0x5d] sm:$0xff]
      %v2469 = vld [vmem:[#allocation3 + $0x65] sm:$0xf]
      %v2470 = vld [vmem:[#allocation3 + $0x6] sm:$0xff]
      %v2471 = vld [vmem:[#allocation3 + $0xe] sm:$0xff]
      %v2472 = vld [vmem:[#allocation3 + $0x16] sm:$0xff]
      %v2473 = vld [vmem:[#allocation3 + $0x1e] sm:$0xff]
      %v2474 = vld [vmem:[#allocation3 + $0x26] sm:$0xff]
      %v2475 = vld [vmem:[#allocation3 + $0x2e] sm:$0xff]
      %v2476 = vld [vmem:[#allocation3 + $0x36] sm:$0xff]
      %v2477 = vld [vmem:[#allocation3 + $0x3e] sm:$0xff]
      %v2478 = vld [vmem:[#allocation3 + $0x46] sm:$0xff]
      %v2479 = vld [vmem:[#allocation3 + $0x4e] sm:$0xff]
      %v2480 = vld [vmem:[#allocation3 + $0x56] sm:$0xff]
      %v2481 = vld [vmem:[#allocation3 + $0x5e] sm:$0xff]
      %v2482 = vld [vmem:[#allocation3 + $0x66] sm:$0xf]
      %v2483 = vld [vmem:[#allocation3 + $0x7] sm:$0xff]
      %v2484 = vld [vmem:[#allocation3 + $0xf] sm:$0xff]
      %v2485 = vld [vmem:[#allocation3 + $0x17] sm:$0xff]
      %v2486 = vld [vmem:[#allocation3 + $0x1f] sm:$0xff]
      %v2487 = vld [vmem:[#allocation3 + $0x27] sm:$0xff]
      %v2488 = vld [vmem:[#allocation3 + $0x2f] sm:$0xff]
      %v2489 = vld [vmem:[#allocation3 + $0x37] sm:$0xff]
      %v2490 = vld [vmem:[#allocation3 + $0x3f] sm:$0xff]
      %v2491 = vld [vmem:[#allocation3 + $0x47] sm:$0xff]
      %v2492 = vld [vmem:[#allocation3 + $0x4f] sm:$0xff]
      %v2493 = vld [vmem:[#allocation3 + $0x57] sm:$0xff]
      %v2494 = vld [vmem:[#allocation3 + $0x5f] sm:$0xff]
      %v2495 = vld [vmem:[#allocation3 + $0x67] sm:$0xf]
      %v2496 = vld [vmem:[#allocation3 + $0x67] sm:$0xff]
      %v2497 = vld [vmem:[#allocation3 + $0x6f] sm:$0xf]
      %v2498 = vld [vmem:[#allocation3 + $0x10] sm:$0xff]
      %v2499 = vld [vmem:[#allocation3 + $0x18] sm:$0xff]
      %v2500 = vld [vmem:[#allocation3 + $0x20] sm:$0xff]
      %v2501 = vld [vmem:[#allocation3 + $0x28] sm:$0xff]
      %v2502 = vld [vmem:[#allocation3 + $0x30] sm:$0xff]
      %v2503 = vld [vmem:[#allocation3 + $0x38] sm:$0xff]
      %v2504 = vld [vmem:[#allocation3 + $0x40] sm:$0xff]
      %v2505 = vld [vmem:[#allocation3 + $0x48] sm:$0xff]
      %v2506 = vld [vmem:[#allocation3 + $0x50] sm:$0xff]
      %v2507 = vld [vmem:[#allocation3 + $0x58] sm:$0xff]
      %v2508 = vld [vmem:[#allocation3 + $0x60] sm:$0xff]
      %v2509 = vld [vmem:[#allocation3 + $0x68] sm:$0xff]
      %v2510 = vld [vmem:[#allocation3 + $0x70] sm:$0xf]
      %v2511 = vld [vmem:[#allocation3 + $0x11] sm:$0xff]
      %v2512 = vld [vmem:[#allocation3 + $0x19] sm:$0xff]
      %v2513 = vld [vmem:[#allocation3 + $0x21] sm:$0xff]
      %v2514 = vld [vmem:[#allocation3 + $0x29] sm:$0xff]
      %v2515 = vld [vmem:[#allocation3 + $0x31] sm:$0xff]
      %v2516 = vld [vmem:[#allocation3 + $0x39] sm:$0xff]
      %v2517 = vld [vmem:[#allocation3 + $0x41] sm:$0xff]
      %v2518 = vld [vmem:[#allocation3 + $0x49] sm:$0xff]
      %v2519 = vld [vmem:[#allocation3 + $0x51] sm:$0xff]
      %v2520 = vld [vmem:[#allocation3 + $0x59] sm:$0xff]
      %v2521 = vld [vmem:[#allocation3 + $0x61] sm:$0xff]
      %v2522 = vld [vmem:[#allocation3 + $0x69] sm:$0xff]
      %v2523 = vld [vmem:[#allocation3 + $0x71] sm:$0xf]
      %v2524 = vld [vmem:[#allocation3 + $0x71] sm:$0xff]
      %v2525 = vld [vmem:[#allocation3 + $0x79] sm:$0xf]
      %v2526 = vld [vmem:[#allocation3 + $0x1a] sm:$0xff]
      %v2527 = vld [vmem:[#allocation3 + $0x22] sm:$0xff]
      %v2528 = vld [vmem:[#allocation3 + $0x2a] sm:$0xff]
      %v2529 = vld [vmem:[#allocation3 + $0x32] sm:$0xff]
      %v2530 = vld [vmem:[#allocation3 + $0x3a] sm:$0xff]
      %v2531 = vld [vmem:[#allocation3 + $0x42] sm:$0xff]
      %v2532 = vld [vmem:[#allocation3 + $0x4a] sm:$0xff]
      %v2533 = vld [vmem:[#allocation3 + $0x52] sm:$0xff]
      %v2534 = vld [vmem:[#allocation3 + $0x5a] sm:$0xff]
      %v2535 = vld [vmem:[#allocation3 + $0x62] sm:$0xff]
      %v2536 = vld [vmem:[#allocation3 + $0x6a] sm:$0xff]
      %v2537 = vld [vmem:[#allocation3 + $0x72] sm:$0xff]
      %v2538 = vld [vmem:[#allocation3 + $0x7a] sm:$0xf]
      %v2539 = vld [vmem:[#allocation3 + $0x1b] sm:$0xff]
      %v2540 = vld [vmem:[#allocation3 + $0x23] sm:$0xff]
      %v2541 = vld [vmem:[#allocation3 + $0x2b] sm:$0xff]
      %v2542 = vld [vmem:[#allocation3 + $0x33] sm:$0xff]
      %v2543 = vld [vmem:[#allocation3 + $0x3b] sm:$0xff]
      %v2544 = vld [vmem:[#allocation3 + $0x43] sm:$0xff]
      %v2545 = vld [vmem:[#allocation3 + $0x4b] sm:$0xff]
      %v2546 = vld [vmem:[#allocation3 + $0x53] sm:$0xff]
      %v2547 = vld [vmem:[#allocation3 + $0x5b] sm:$0xff]
      %v2548 = vld [vmem:[#allocation3 + $0x63] sm:$0xff]
      %v2549 = vld [vmem:[#allocation3 + $0x6b] sm:$0xff]
      %v2550 = vld [vmem:[#allocation3 + $0x73] sm:$0xff]
      %v2551 = vld [vmem:[#allocation3 + $0x7b] sm:$0xf]
      %2565 = vrot.lane.b32.xlu0 %v2470, 16
      %v2566 = vpop.permute.xlu0 %2565
      %2567 = vrot.lane.b32.xlu0 %v2471, 16
      %v2568 = vpop.permute.xlu0 %2567
      %2569 = vrot.lane.b32.xlu0 %v2472, 16
      %v2570 = vpop.permute.xlu0 %2569
      %2571 = vrot.lane.b32.xlu0 %v2473, 16
      %v2572 = vpop.permute.xlu0 %2571
      %2573 = vrot.lane.b32.xlu0 %v2474, 16
      %v2574 = vpop.permute.xlu0 %2573
      %2575 = vrot.lane.b32.xlu0 %v2475, 16
      %v2576 = vpop.permute.xlu0 %2575
      %2577 = vrot.lane.b32.xlu0 %v2476, 16
      %v2578 = vpop.permute.xlu0 %2577
      %2579 = vrot.lane.b32.xlu0 %v2477, 16
      %v2580 = vpop.permute.xlu0 %2579
      %2581 = vrot.lane.b32.xlu0 %v2478, 16
      %v2582 = vpop.permute.xlu0 %2581
      %2583 = vrot.lane.b32.xlu0 %v2479, 16
      %v2584 = vpop.permute.xlu0 %2583
      %2585 = vrot.lane.b32.xlu0 %v2480, 16
      %v2586 = vpop.permute.xlu0 %2585
      %2587 = vrot.lane.b32.xlu0 %v2481, 16
      %v2588 = vpop.permute.xlu0 %2587
      %2589 = vrot.lane.b32.xlu0 %v2482, 16
      %v2590 = vpop.permute.xlu0 %2589
      %2617 = vrot.lane.b32.xlu0 %v2483, 32
      %v2618 = vpop.permute.xlu0 %2617
      %2619 = vrot.lane.b32.xlu0 %v2484, 32
      %v2620 = vpop.permute.xlu0 %2619
      %2621 = vrot.lane.b32.xlu0 %v2485, 32
      %v2622 = vpop.permute.xlu0 %2621
      %2623 = vrot.lane.b32.xlu0 %v2486, 32
      %v2624 = vpop.permute.xlu0 %2623
      %2625 = vrot.lane.b32.xlu0 %v2487, 32
      %v2626 = vpop.permute.xlu0 %2625
      %2627 = vrot.lane.b32.xlu0 %v2488, 32
      %v2628 = vpop.permute.xlu0 %2627
      %2629 = vrot.lane.b32.xlu0 %v2489, 32
      %v2630 = vpop.permute.xlu0 %2629
      %2631 = vrot.lane.b32.xlu0 %v2490, 32
      %v2632 = vpop.permute.xlu0 %2631
      %2633 = vrot.lane.b32.xlu0 %v2491, 32
      %v2634 = vpop.permute.xlu0 %2633
      %2635 = vrot.lane.b32.xlu0 %v2492, 32
      %v2636 = vpop.permute.xlu0 %2635
      %2637 = vrot.lane.b32.xlu0 %v2493, 32
      %v2638 = vpop.permute.xlu0 %2637
      %2639 = vrot.lane.b32.xlu0 %v2494, 32
      %v2640 = vpop.permute.xlu0 %2639
      %2641 = vrot.lane.b32.xlu0 %v2495, 32
      %v2642 = vpop.permute.xlu0 %2641
      %2658 = vrot.lane.b32.xlu0 %v2484, 48
      %v2659 = vpop.permute.xlu0 %2658
      %2660 = vrot.lane.b32.xlu0 %v2485, 48
      %v2661 = vpop.permute.xlu0 %2660
      %2662 = vrot.lane.b32.xlu0 %v2486, 48
      %v2663 = vpop.permute.xlu0 %2662
      %2664 = vrot.lane.b32.xlu0 %v2487, 48
      %v2665 = vpop.permute.xlu0 %2664
      %2666 = vrot.lane.b32.xlu0 %v2488, 48
      %v2667 = vpop.permute.xlu0 %2666
      %2668 = vrot.lane.b32.xlu0 %v2489, 48
      %v2669 = vpop.permute.xlu0 %2668
      %2670 = vrot.lane.b32.xlu0 %v2490, 48
      %v2671 = vpop.permute.xlu0 %2670
      %2672 = vrot.lane.b32.xlu0 %v2491, 48
      %v2673 = vpop.permute.xlu0 %2672
      %2674 = vrot.lane.b32.xlu0 %v2492, 48
      %v2675 = vpop.permute.xlu0 %2674
      %2676 = vrot.lane.b32.xlu0 %v2493, 48
      %v2677 = vpop.permute.xlu0 %2676
      %2678 = vrot.lane.b32.xlu0 %v2494, 48
      %v2679 = vpop.permute.xlu0 %2678
      %2680 = vrot.lane.b32.xlu0 %v2496, 48
      %v2681 = vpop.permute.xlu0 %2680
      %2682 = vrot.lane.b32.xlu0 %v2497, 48
      %v2683 = vpop.permute.xlu0 %2682
      %2710 = vrot.lane.b32.xlu0 %v2498, 64
      %v2711 = vpop.permute.xlu0 %2710
      %2712 = vrot.lane.b32.xlu0 %v2499, 64
      %v2713 = vpop.permute.xlu0 %2712
      %2714 = vrot.lane.b32.xlu0 %v2500, 64
      %v2715 = vpop.permute.xlu0 %2714
      %2716 = vrot.lane.b32.xlu0 %v2501, 64
      %v2717 = vpop.permute.xlu0 %2716
      %2718 = vrot.lane.b32.xlu0 %v2502, 64
      %v2719 = vpop.permute.xlu0 %2718
      %2720 = vrot.lane.b32.xlu0 %v2503, 64
      %v2721 = vpop.permute.xlu0 %2720
      %2722 = vrot.lane.b32.xlu0 %v2504, 64
      %v2723 = vpop.permute.xlu0 %2722
      %2724 = vrot.lane.b32.xlu0 %v2505, 64
      %v2725 = vpop.permute.xlu0 %2724
      %2726 = vrot.lane.b32.xlu0 %v2506, 64
      %v2727 = vpop.permute.xlu0 %2726
      %2728 = vrot.lane.b32.xlu0 %v2507, 64
      %v2729 = vpop.permute.xlu0 %2728
      %2730 = vrot.lane.b32.xlu0 %v2508, 64
      %v2731 = vpop.permute.xlu0 %2730
      %2732 = vrot.lane.b32.xlu0 %v2509, 64
      %v2733 = vpop.permute.xlu0 %2732
      %2734 = vrot.lane.b32.xlu0 %v2510, 64
      %v2735 = vpop.permute.xlu0 %2734
      %2762 = vrot.lane.b32.xlu0 %v2511, 80
      %v2763 = vpop.permute.xlu0 %2762
      %2764 = vrot.lane.b32.xlu0 %v2512, 80
      %v2765 = vpop.permute.xlu0 %2764
      %2766 = vrot.lane.b32.xlu0 %v2513, 80
      %v2767 = vpop.permute.xlu0 %2766
      %2768 = vrot.lane.b32.xlu0 %v2514, 80
      %v2769 = vpop.permute.xlu0 %2768
      %2770 = vrot.lane.b32.xlu0 %v2515, 80
      %v2771 = vpop.permute.xlu0 %2770
      %2772 = vrot.lane.b32.xlu0 %v2516, 80
      %v2773 = vpop.permute.xlu0 %2772
      %2774 = vrot.lane.b32.xlu0 %v2517, 80
      %v2775 = vpop.permute.xlu0 %2774
      %2776 = vrot.lane.b32.xlu0 %v2518, 80
      %v2777 = vpop.permute.xlu0 %2776
      %2778 = vrot.lane.b32.xlu0 %v2519, 80
      %v2779 = vpop.permute.xlu0 %2778
      %2780 = vrot.lane.b32.xlu0 %v2520, 80
      %v2781 = vpop.permute.xlu0 %2780
      %2782 = vrot.lane.b32.xlu0 %v2521, 80
      %v2783 = vpop.permute.xlu0 %2782
      %2784 = vrot.lane.b32.xlu0 %v2522, 80
      %v2785 = vpop.permute.xlu0 %2784
      %2786 = vrot.lane.b32.xlu0 %v2523, 80
      %v2787 = vpop.permute.xlu0 %2786
      %2803 = vrot.lane.b32.xlu0 %v2512, 96
      %v2804 = vpop.permute.xlu0 %2803
      %2805 = vrot.lane.b32.xlu0 %v2513, 96
      %v2806 = vpop.permute.xlu0 %2805
      %2807 = vrot.lane.b32.xlu0 %v2514, 96
      %v2808 = vpop.permute.xlu0 %2807
      %2809 = vrot.lane.b32.xlu0 %v2515, 96
      %v2810 = vpop.permute.xlu0 %2809
      %2811 = vrot.lane.b32.xlu0 %v2516, 96
      %v2812 = vpop.permute.xlu0 %2811
      %2813 = vrot.lane.b32.xlu0 %v2517, 96
      %v2814 = vpop.permute.xlu0 %2813
      %2815 = vrot.lane.b32.xlu0 %v2518, 96
      %v2816 = vpop.permute.xlu0 %2815
      %2817 = vrot.lane.b32.xlu0 %v2519, 96
      %v2818 = vpop.permute.xlu0 %2817
      %2819 = vrot.lane.b32.xlu0 %v2520, 96
      %v2820 = vpop.permute.xlu0 %2819
      %2821 = vrot.lane.b32.xlu0 %v2521, 96
      %v2822 = vpop.permute.xlu0 %2821
      %2823 = vrot.lane.b32.xlu0 %v2522, 96
      %v2824 = vpop.permute.xlu0 %2823
      %2825 = vrot.lane.b32.xlu0 %v2524, 96
      %v2826 = vpop.permute.xlu0 %2825
      %2827 = vrot.lane.b32.xlu0 %v2525, 96
      %v2828 = vpop.permute.xlu0 %2827
      %2855 = vrot.lane.b32.xlu0 %v2526, 112
      %v2856 = vpop.permute.xlu0 %2855
      %2857 = vrot.lane.b32.xlu0 %v2527, 112
      %v2858 = vpop.permute.xlu0 %2857
      %2859 = vrot.lane.b32.xlu0 %v2528, 112
      %v2860 = vpop.permute.xlu0 %2859
      %2861 = vrot.lane.b32.xlu0 %v2529, 112
      %v2862 = vpop.permute.xlu0 %2861
      %2863 = vrot.lane.b32.xlu0 %v2530, 112
      %v2864 = vpop.permute.xlu0 %2863
      %2865 = vrot.lane.b32.xlu0 %v2531, 112
      %v2866 = vpop.permute.xlu0 %2865
      %2867 = vrot.lane.b32.xlu0 %v2532, 112
      %v2868 = vpop.permute.xlu0 %2867
      %2869 = vrot.lane.b32.xlu0 %v2533, 112
      %v2870 = vpop.permute.xlu0 %2869
      %2871 = vrot.lane.b32.xlu0 %v2534, 112
      %v2872 = vpop.permute.xlu0 %2871
      %2873 = vrot.lane.b32.xlu0 %v2535, 112
      %v2874 = vpop.permute.xlu0 %2873
      %2875 = vrot.lane.b32.xlu0 %v2536, 112
      %v2876 = vpop.permute.xlu0 %2875
      %2877 = vrot.lane.b32.xlu0 %v2537, 112
      %v2878 = vpop.permute.xlu0 %2877
      %2879 = vrot.lane.b32.xlu0 %v2538, 112
      %v2880 = vpop.permute.xlu0 %2879
      %v2894 = vsel %vm519, %v2457, %v2566
      %v2895 = vsel %vm519, %v2458, %v2568
      %v2896 = vsel %vm519, %v2459, %v2570
      %v2897 = vsel %vm519, %v2460, %v2572
      %v2898 = vsel %vm519, %v2461, %v2574
      %v2899 = vsel %vm519, %v2462, %v2576
      %v2900 = vsel %vm519, %v2463, %v2578
      %v2901 = vsel %vm519, %v2464, %v2580
      %v2902 = vsel %vm519, %v2465, %v2582
      %v2903 = vsel %vm519, %v2466, %v2584
      %v2904 = vsel %vm519, %v2467, %v2586
      %v2905 = vsel %vm519, %v2468, %v2588
      %v2906 = vsel %vm519, %v2469, %v2590
      %v2907 = vsel %vm1017, %v2894, %v2618
      %v2908 = vsel %vm1017, %v2895, %v2620
      %v2909 = vsel %vm1017, %v2896, %v2622
      %v2910 = vsel %vm1017, %v2897, %v2624
      %v2911 = vsel %vm1017, %v2898, %v2626
      %v2912 = vsel %vm1017, %v2899, %v2628
      %v2913 = vsel %vm1017, %v2900, %v2630
      %v2914 = vsel %vm1017, %v2901, %v2632
      %v2915 = vsel %vm1017, %v2902, %v2634
      %v2916 = vsel %vm1017, %v2903, %v2636
      %v2917 = vsel %vm1017, %v2904, %v2638
      %v2918 = vsel %vm1017, %v2905, %v2640
      %v2919 = vsel %vm1017, %v2906, %v2642
      %v2920 = vsel %vm1031, %v2907, %v2659
      %v2921 = vsel %vm1031, %v2908, %v2661
      %v2922 = vsel %vm1031, %v2909, %v2663
      %v2923 = vsel %vm1031, %v2910, %v2665
      %v2924 = vsel %vm1031, %v2911, %v2667
      %v2925 = vsel %vm1031, %v2912, %v2669
      %v2926 = vsel %vm1031, %v2913, %v2671
      %v2927 = vsel %vm1031, %v2914, %v2673
      %v2928 = vsel %vm1031, %v2915, %v2675
      %v2929 = vsel %vm1031, %v2916, %v2677
      %v2930 = vsel %vm1031, %v2917, %v2679
      %v2931 = vsel %vm1031, %v2918, %v2681
      %v2932 = vsel %vm1031, %v2919, %v2683
      %v2933 = vsel %vm1045, %v2920, %v2711
      %v2934 = vsel %vm1045, %v2921, %v2713
      %v2935 = vsel %vm1045, %v2922, %v2715
      %v2936 = vsel %vm1045, %v2923, %v2717
      %v2937 = vsel %vm1045, %v2924, %v2719
      %v2938 = vsel %vm1045, %v2925, %v2721
      %v2939 = vsel %vm1045, %v2926, %v2723
      %v2940 = vsel %vm1045, %v2927, %v2725
      %v2941 = vsel %vm1045, %v2928, %v2727
      %v2942 = vsel %vm1045, %v2929, %v2729
      %v2943 = vsel %vm1045, %v2930, %v2731
      %v2944 = vsel %vm1045, %v2931, %v2733
      %v2945 = vsel %vm1045, %v2932, %v2735
      %v2946 = vsel %vm1059, %v2933, %v2763
      %v2947 = vsel %vm1059, %v2934, %v2765
      %v2948 = vsel %vm1059, %v2935, %v2767
      %v2949 = vsel %vm1059, %v2936, %v2769
      %v2950 = vsel %vm1059, %v2937, %v2771
      %v2951 = vsel %vm1059, %v2938, %v2773
      %v2952 = vsel %vm1059, %v2939, %v2775
      %v2953 = vsel %vm1059, %v2940, %v2777
      %v2954 = vsel %vm1059, %v2941, %v2779
      %v2955 = vsel %vm1059, %v2942, %v2781
      %v2956 = vsel %vm1059, %v2943, %v2783
      %v2957 = vsel %vm1059, %v2944, %v2785
      %v2958 = vsel %vm1059, %v2945, %v2787
      %v2959 = vsel %vm1073, %v2946, %v2804
      %v2960 = vsel %vm1073, %v2947, %v2806
      %v2961 = vsel %vm1073, %v2948, %v2808
      %v2962 = vsel %vm1073, %v2949, %v2810
      %v2963 = vsel %vm1073, %v2950, %v2812
      %v2964 = vsel %vm1073, %v2951, %v2814
      %v2965 = vsel %vm1073, %v2952, %v2816
      %v2966 = vsel %vm1073, %v2953, %v2818
      %v2967 = vsel %vm1073, %v2954, %v2820
      %v2968 = vsel %vm1073, %v2955, %v2822
      %v2969 = vsel %vm1073, %v2956, %v2824
      %v2970 = vsel %vm1073, %v2957, %v2826
      %v2971 = vsel %vm1073, %v2958, %v2828
      %v2972 = vsel %vm1087, %v2959, %v2856
      %v2973 = vsel %vm1087, %v2960, %v2858
      %v2974 = vsel %vm1087, %v2961, %v2860
      %v2975 = vsel %vm1087, %v2962, %v2862
      %v2976 = vsel %vm1087, %v2963, %v2864
      %v2977 = vsel %vm1087, %v2964, %v2866
      %v2978 = vsel %vm1087, %v2965, %v2868
      %v2979 = vsel %vm1087, %v2966, %v2870
      %v2980 = vsel %vm1087, %v2967, %v2872
      %v2981 = vsel %vm1087, %v2968, %v2874
      %v2982 = vsel %vm1087, %v2969, %v2876
      %v2983 = vsel %vm1087, %v2970, %v2878
      %v2984 = vsel %vm1087, %v2971, %v2880
      %s2985 = scalar_lea.vmem %s2, 256
      %v2986 = vld [vmem:[%s2985] sm:$0xff]
      %v2987 = vld [vmem:[%s2985 + $0x8] sm:$0xff]
      %v2988 = vld [vmem:[%s2985 + $0x10] sm:$0xff]
      %v2989 = vld [vmem:[%s2985 + $0x18] sm:$0xff]
      %v2990 = vld [vmem:[%s2985 + $0x20] sm:$0xff]
      %v2991 = vld [vmem:[%s2985 + $0x28] sm:$0xff]
      %v2992 = vld [vmem:[%s2985 + $0x30] sm:$0xff]
      %v2993 = vld [vmem:[%s2985 + $0x38] sm:$0xff]
      %v2994 = vld [vmem:[%s2985 + $0x40] sm:$0xff]
      %v2995 = vld [vmem:[%s2985 + $0x48] sm:$0xff]
      %v2996 = vld [vmem:[%s2985 + $0x50] sm:$0xff]
      %v2997 = vld [vmem:[%s2985 + $0x58] sm:$0xff]
      %v2998 = vld [vmem:[%s2985 + $0x60] sm:$0xff]
      %v2999 = vld [vmem:[%s2985 + $0x68] sm:$0xff]
      %v3000 = vld [vmem:[%s2985 + $0x70] sm:$0xff]
      %v3001 = vld [vmem:[%s2985 + $0x78] sm:$0xff]
      %s3002 = scalar_lea.vmem %s3, 32
      %v3003 = vld [vmem:[%s3002] sm:$0xff]
      %v3004 = vld [vmem:[%s3002 + $0x8] sm:$0xff]
      %v3006 = vsel %vm519, %v2539, 0
      %v3009 = vsel %vm519, %v2540, 0
      %v3012 = vsel %vm519, %v2541, 0
      %v3015 = vsel %vm519, %v2542, 0
      %v3018 = vsel %vm519, %v2543, 0
      %v3021 = vsel %vm519, %v2544, 0
      %v3024 = vsel %vm519, %v2545, 0
      %v3027 = vsel %vm519, %v2546, 0
      %v3030 = vsel %vm519, %v2547, 0
      %v3033 = vsel %vm519, %v2548, 0
      %v3036 = vsel %vm519, %v2549, 0
      %v3039 = vsel %vm519, %v2550, 0
      %v3042 = vsel %vm519, %v2551, 0
      %3044 = vmatprep.subr.mxu0 0.0
      %3045 = vmatpush1.msra.mxu0 0.0
      %3046 = vmatprep.subr.mxu0 0.0
      %3047 = vmatpush1.msra.mxu0 0.0
      %3048 = vmatprep.subr.mxu0 0.0
      %3049 = vmatpush1.msra.mxu0 0.0
      %3050 = vmatprep.subr.mxu0 0.0
      %3051 = vmatpush1.msra.mxu0 0.0
      %3052 = vmatprep.subr.mxu0 0.0
      %3053 = vmatpush1.msra.mxu0 0.0
      %3054 = vmatprep.subr.mxu0 0.0
      %3055 = vmatpush1.msra.mxu0 0.0
      %3056 = vmatprep.subr.mxu0 0.0
      %3057 = vmatpush1.msra.mxu0 0.0
      %3058 = vmatprep.subr.mxu0 0.0
      %3059 = vmatpush1.msra.mxu0 0.0
      %3060 = vmatprep.subr.mxu0 0.0
      %3061 = vmatpush1.msra.mxu0 0.0
      %3062 = vmatprep.subr.mxu0 0.0
      %3063 = vmatpush1.msra.mxu0 0.0
      %3064 = vmatprep.subr.mxu0 0.0
      %3065 = vmatpush1.msra.mxu0 0.0
      %3066 = vmatprep.subr.mxu0 0.0
      %3067 = vmatpush1.msra.mxu0 0.0
      %3068 = vmatprep.subr.mxu0 0.0
      %3069 = vmatpush1.msra.mxu0 0.0
      %3070 = vmatprep.subr.mxu0 0.0
      %3071 = vmatpush1.msra.mxu0 0.0
      %3072 = vmatprep.subr.mxu0 0.0
      %3073 = vmatpush1.msra.mxu0 %v3004
      %3074 = vmatprep.subr.mxu0 0.0
      %3075 = vmatpush1.msra.mxu0 %v3003
      %3076 = vmatprep.subr.mxu0 0.0
      %3077 = vmatpush2.msra.mxu0 0.0
      %3078 = vmatprep.subr.mxu0 0.0
      %3079 = vmatpush2.msra.mxu0 0.0
      %3080 = vmatprep.subr.mxu0 0.0
      %3081 = vmatpush2.msra.mxu0 0.0
      %3082 = vmatprep.subr.mxu0 0.0
      %3083 = vmatpush2.msra.mxu0 0.0
      %3084 = vmatprep.subr.mxu0 0.0
      %3085 = vmatpush2.msra.mxu0 0.0
      %3086 = vmatprep.subr.mxu0 0.0
      %3087 = vmatpush2.msra.mxu0 0.0
      %3088 = vmatprep.subr.mxu0 0.0
      %3089 = vmatpush2.msra.mxu0 0.0
      %3090 = vmatprep.subr.mxu0 0.0
      %3091 = vmatpush2.msra.mxu0 0.0
      %3092 = vmatprep.subr.mxu0 0.0
      %3093 = vmatpush2.msra.mxu0 0.0
      %3094 = vmatprep.subr.mxu0 0.0
      %3095 = vmatpush2.msra.mxu0 0.0
      %3096 = vmatprep.subr.mxu0 0.0
      %3097 = vmatpush2.msra.mxu0 0.0
      %3098 = vmatprep.subr.mxu0 0.0
      %3099 = vmatpush2.msra.mxu0 0.0
      %3100 = vmatprep.subr.mxu0 0.0
      %3101 = vmatpush2.msra.mxu0 0.0
      %3102 = vmatprep.subr.mxu0 0.0
      %3103 = vmatpush2.msra.mxu0 0.0
      %3104 = vmatprep.subr.mxu0 0.0
      %3105 = vmatpush2.msra.mxu0 0.0
      %3106 = vmatprep.subr.mxu0 0.0
      %3107 = vmatpush2.msra.mxu0 0.0
      %3108 = vmatprep.mubr.f32.mxu0 0.0
      %3109 = vmatmul.mubr.f32.gmra.mxu0 %v3006
      %v3110 = vpop.f32.mrf.mxu0
      %v3111 = vadd.f32 0.0, %v3110
      %v3112 = vpop.f32.mrf.mxu0
      %3113 = vmatprep.mubr.f32.mxu0 0.0
      %3114 = vmatmul.mubr.f32.gmra.mxu0 %v3009
      %v3115 = vpop.f32.mrf.mxu0
      %v3116 = vadd.f32 0.0, %v3115
      %v3117 = vpop.f32.mrf.mxu0
      %3118 = vmatprep.mubr.f32.mxu0 0.0
      %3119 = vmatmul.mubr.f32.gmra.mxu0 %v3012
      %v3120 = vpop.f32.mrf.mxu0
      %v3121 = vadd.f32 0.0, %v3120
      %v3122 = vpop.f32.mrf.mxu0
      %3123 = vmatprep.mubr.f32.mxu0 0.0
      %3124 = vmatmul.mubr.f32.gmra.mxu0 %v3015
      %v3125 = vpop.f32.mrf.mxu0
      %v3126 = vadd.f32 0.0, %v3125
      %v3127 = vpop.f32.mrf.mxu0
      %3128 = vmatprep.mubr.f32.mxu0 0.0
      %3129 = vmatmul.mubr.f32.gmra.mxu0 %v3018
      %v3130 = vpop.f32.mrf.mxu0
      %v3131 = vadd.f32 0.0, %v3130
      %v3132 = vpop.f32.mrf.mxu0
      %3133 = vmatprep.mubr.f32.mxu0 0.0
      %3134 = vmatmul.mubr.f32.gmra.mxu0 %v3021
      %v3135 = vpop.f32.mrf.mxu0
      %v3136 = vadd.f32 0.0, %v3135
      %v3137 = vpop.f32.mrf.mxu0
      %3138 = vmatprep.mubr.f32.mxu0 0.0
      %3139 = vmatmul.mubr.f32.gmra.mxu0 %v3024
      %v3140 = vpop.f32.mrf.mxu0
      %v3141 = vadd.f32 0.0, %v3140
      %v3142 = vpop.f32.mrf.mxu0
      %3143 = vmatprep.mubr.f32.mxu0 0.0
      %3144 = vmatmul.mubr.f32.gmra.mxu0 %v3027
      %v3145 = vpop.f32.mrf.mxu0
      %v3146 = vadd.f32 0.0, %v3145
      %v3147 = vpop.f32.mrf.mxu0
      %3148 = vmatprep.mubr.f32.mxu0 0.0
      %3149 = vmatmul.mubr.f32.gmra.mxu0 %v3030
      %v3150 = vpop.f32.mrf.mxu0
      %v3151 = vadd.f32 0.0, %v3150
      %v3152 = vpop.f32.mrf.mxu0
      %3153 = vmatprep.mubr.f32.mxu0 0.0
      %3154 = vmatmul.mubr.f32.gmra.mxu0 %v3033
      %v3155 = vpop.f32.mrf.mxu0
      %v3156 = vadd.f32 0.0, %v3155
      %v3157 = vpop.f32.mrf.mxu0
      %3158 = vmatprep.mubr.f32.mxu0 0.0
      %3159 = vmatmul.mubr.f32.gmra.mxu0 %v3036
      %v3160 = vpop.f32.mrf.mxu0
      %v3161 = vadd.f32 0.0, %v3160
      %v3162 = vpop.f32.mrf.mxu0
      %3163 = vmatprep.mubr.f32.mxu0 0.0
      %3164 = vmatmul.mubr.f32.gmra.mxu0 %v3039
      %v3165 = vpop.f32.mrf.mxu0
      %v3166 = vadd.f32 0.0, %v3165
      %v3167 = vpop.f32.mrf.mxu0
      %3168 = vmatprep.mubr.f32.mxu0 0.0
      %3169 = vmatmul.mubr.f32.gmra.mxu0 %v3042
      %v3170 = vpop.f32.mrf.mxu0
      %v3171 = vadd.f32 0.0, %v3170
      %v3172 = vpop.f32.mrf.mxu0
      %3173 = vdwg.mxu0
      %3174 = vmatprep.subr.mxu0 0.0
      %3175 = vmatpush1.msra.mxu0 %v3001
      %3176 = vmatprep.subr.mxu0 0.0
      %3177 = vmatpush1.msra.mxu0 %v3000
      %3178 = vmatprep.subr.mxu0 0.0
      %3179 = vmatpush1.msra.mxu0 %v2999
      %3180 = vmatprep.subr.mxu0 0.0
      %3181 = vmatpush1.msra.mxu0 %v2998
      %3182 = vmatprep.subr.mxu0 0.0
      %3183 = vmatpush1.msra.mxu0 %v2997
      %3184 = vmatprep.subr.mxu0 0.0
      %3185 = vmatpush1.msra.mxu0 %v2996
      %3186 = vmatprep.subr.mxu0 0.0
      %3187 = vmatpush1.msra.mxu0 %v2995
      %3188 = vmatprep.subr.mxu0 0.0
      %3189 = vmatpush1.msra.mxu0 %v2994
      %3190 = vmatprep.subr.mxu0 0.0
      %3191 = vmatpush1.msra.mxu0 %v2993
      %3192 = vmatprep.subr.mxu0 0.0
      %3193 = vmatpush1.msra.mxu0 %v2992
      %3194 = vmatprep.subr.mxu0 0.0
      %3195 = vmatpush1.msra.mxu0 %v2991
      %3196 = vmatprep.subr.mxu0 0.0
      %3197 = vmatpush1.msra.mxu0 %v2990
      %3198 = vmatprep.subr.mxu0 0.0
      %3199 = vmatpush1.msra.mxu0 %v2989
      %3200 = vmatprep.subr.mxu0 0.0
      %3201 = vmatpush1.msra.mxu0 %v2988
      %3202 = vmatprep.subr.mxu0 0.0
      %3203 = vmatpush1.msra.mxu0 %v2987
      %3204 = vmatprep.subr.mxu0 0.0
      %3205 = vmatpush1.msra.mxu0 %v2986
      %3206 = vmatprep.subr.mxu0 0.0
      %3207 = vmatpush2.msra.mxu0 0.0
      %3208 = vmatprep.subr.mxu0 0.0
      %3209 = vmatpush2.msra.mxu0 0.0
      %3210 = vmatprep.subr.mxu0 0.0
      %3211 = vmatpush2.msra.mxu0 0.0
      %3212 = vmatprep.subr.mxu0 0.0
      %3213 = vmatpush2.msra.mxu0 0.0
      %3214 = vmatprep.subr.mxu0 0.0
      %3215 = vmatpush2.msra.mxu0 0.0
      %3216 = vmatprep.subr.mxu0 0.0
      %3217 = vmatpush2.msra.mxu0 0.0
      %3218 = vmatprep.subr.mxu0 0.0
      %3219 = vmatpush2.msra.mxu0 0.0
      %3220 = vmatprep.subr.mxu0 0.0
      %3221 = vmatpush2.msra.mxu0 0.0
      %3222 = vmatprep.subr.mxu0 0.0
      %3223 = vmatpush2.msra.mxu0 0.0
      %3224 = vmatprep.subr.mxu0 0.0
      %3225 = vmatpush2.msra.mxu0 0.0
      %3226 = vmatprep.subr.mxu0 0.0
      %3227 = vmatpush2.msra.mxu0 0.0
      %3228 = vmatprep.subr.mxu0 0.0
      %3229 = vmatpush2.msra.mxu0 0.0
      %3230 = vmatprep.subr.mxu0 0.0
      %3231 = vmatpush2.msra.mxu0 0.0
      %3232 = vmatprep.subr.mxu0 0.0
      %3233 = vmatpush2.msra.mxu0 0.0
      %3234 = vmatprep.subr.mxu0 0.0
      %3235 = vmatpush2.msra.mxu0 0.0
      %3236 = vmatprep.subr.mxu0 0.0
      %3237 = vmatpush2.msra.mxu0 0.0
      %3238 = vmatprep.mubr.f32.mxu0 0.0
      %3239 = vmatmul.mubr.f32.gmra.mxu0 %v2972
      %v3240 = vpop.f32.mrf.mxu0
      %v3241 = vadd.f32 %v3111, %v3240
      %v3242 = vpop.f32.mrf.mxu0
      %3243 = vmatprep.mubr.f32.mxu0 0.0
      %3244 = vmatmul.mubr.f32.gmra.mxu0 %v2973
      %v3245 = vpop.f32.mrf.mxu0
      %v3246 = vadd.f32 %v3116, %v3245
      %v3247 = vpop.f32.mrf.mxu0
      %3248 = vmatprep.mubr.f32.mxu0 0.0
      %3249 = vmatmul.mubr.f32.gmra.mxu0 %v2974
      %v3250 = vpop.f32.mrf.mxu0
      %v3251 = vadd.f32 %v3121, %v3250
      %v3252 = vpop.f32.mrf.mxu0
      %3253 = vmatprep.mubr.f32.mxu0 0.0
      %3254 = vmatmul.mubr.f32.gmra.mxu0 %v2975
      %v3255 = vpop.f32.mrf.mxu0
      %v3256 = vadd.f32 %v3126, %v3255
      %v3257 = vpop.f32.mrf.mxu0
      %3258 = vmatprep.mubr.f32.mxu0 0.0
      %3259 = vmatmul.mubr.f32.gmra.mxu0 %v2976
      %v3260 = vpop.f32.mrf.mxu0
      %v3261 = vadd.f32 %v3131, %v3260
      %v3262 = vpop.f32.mrf.mxu0
      %3263 = vmatprep.mubr.f32.mxu0 0.0
      %3264 = vmatmul.mubr.f32.gmra.mxu0 %v2977
      %v3265 = vpop.f32.mrf.mxu0
      %v3266 = vadd.f32 %v3136, %v3265
      %v3267 = vpop.f32.mrf.mxu0
      %3268 = vmatprep.mubr.f32.mxu0 0.0
      %3269 = vmatmul.mubr.f32.gmra.mxu0 %v2978
      %v3270 = vpop.f32.mrf.mxu0
      %v3271 = vadd.f32 %v3141, %v3270
      %v3272 = vpop.f32.mrf.mxu0
      %3273 = vmatprep.mubr.f32.mxu0 0.0
      %3274 = vmatmul.mubr.f32.gmra.mxu0 %v2979
      %v3275 = vpop.f32.mrf.mxu0
      %v3276 = vadd.f32 %v3146, %v3275
      %v3277 = vpop.f32.mrf.mxu0
      %3278 = vmatprep.mubr.f32.mxu0 0.0
      %3279 = vmatmul.mubr.f32.gmra.mxu0 %v2980
      %v3280 = vpop.f32.mrf.mxu0
      %v3281 = vadd.f32 %v3151, %v3280
      %v3282 = vpop.f32.mrf.mxu0
      %3283 = vmatprep.mubr.f32.mxu0 0.0
      %3284 = vmatmul.mubr.f32.gmra.mxu0 %v2981
      %v3285 = vpop.f32.mrf.mxu0
      %v3286 = vadd.f32 %v3156, %v3285
      %v3287 = vpop.f32.mrf.mxu0
      %3288 = vmatprep.mubr.f32.mxu0 0.0
      %3289 = vmatmul.mubr.f32.gmra.mxu0 %v2982
      %v3290 = vpop.f32.mrf.mxu0
      %v3291 = vadd.f32 %v3161, %v3290
      %v3292 = vpop.f32.mrf.mxu0
      %3293 = vmatprep.mubr.f32.mxu0 0.0
      %3294 = vmatmul.mubr.f32.gmra.mxu0 %v2983
      %v3295 = vpop.f32.mrf.mxu0
      %v3296 = vadd.f32 %v3166, %v3295
      %v3297 = vpop.f32.mrf.mxu0
      %3298 = vmatprep.mubr.f32.mxu0 0.0
      %3299 = vmatmul.mubr.f32.gmra.mxu0 %v2984
      %v3300 = vpop.f32.mrf.mxu0
      %v3301 = vadd.f32 %v3171, %v3300
      %v3302 = vpop.f32.mrf.mxu0
      %3303 = vdwg.mxu0
      %v3304 = vld [vmem:[%s4 + $0x2] sm:$0x1]
      %v3305 = vlaneseq
      %v3306 = vshrl.u32 %v3305, 7
      %v3307 = vsub.s32 0, %v3306
      %v3308 = vrot.slane %v3304, %v3307
      %v3309 = vadd.f32 %v3241, %v3308
      %v3310 = vadd.f32 %v3246, %v3308
      %v3311 = vadd.f32 %v3251, %v3308
      %v3312 = vadd.f32 %v3256, %v3308
      %v3313 = vadd.f32 %v3261, %v3308
      %v3314 = vadd.f32 %v3266, %v3308
      %v3315 = vadd.f32 %v3271, %v3308
      %v3316 = vadd.f32 %v3276, %v3308
      %v3317 = vadd.f32 %v3281, %v3308
      %v3318 = vadd.f32 %v3286, %v3308
      %v3319 = vadd.f32 %v3291, %v3308
      %v3320 = vadd.f32 %v3296, %v3308
      %v3321 = vadd.f32 %v3301, %v3308
      %v3322 = vmul.f32 %v3309, %v1439
      %v3323 = vmul.f32 %v3310, %v1444
      %v3324 = vmul.f32 %v3311, %v1449
      %v3325 = vmul.f32 %v3312, %v1454
      %v3326 = vmul.f32 %v3313, %v1459
      %v3327 = vmul.f32 %v3314, %v1464
      %v3328 = vmul.f32 %v3315, %v1469
      %v3329 = vmul.f32 %v3316, %v1474
      %v3330 = vmul.f32 %v3317, %v1479
      %v3331 = vmul.f32 %v3318, %v1484
      %v3332 = vmul.f32 %v3319, %v1489
      %v3333 = vmul.f32 %v3320, %v1494
      %v3334 = vmul.f32 %v3321, %v1499
      %v3335 = vadd.f32 %v3322, %v2444
      %v3336 = vadd.f32 %v3323, %v2445
      %v3337 = vadd.f32 %v3324, %v2446
      %v3338 = vadd.f32 %v3325, %v2447
      %v3339 = vadd.f32 %v3326, %v2448
      %v3340 = vadd.f32 %v3327, %v2449
      %v3341 = vadd.f32 %v3328, %v2450
      %v3342 = vadd.f32 %v3329, %v2451
      %v3343 = vadd.f32 %v3330, %v2452
      %v3344 = vadd.f32 %v3331, %v2453
      %v3345 = vadd.f32 %v3332, %v2454
      %v3346 = vadd.f32 %v3333, %v2455
      %v3347 = vadd.f32 %v3334, %v2456
      %v3348 = vmax.f32 %v3335, 0.0
      %v3349 = vmax.f32 %v3336, 0.0
      %v3350 = vmax.f32 %v3337, 0.0
      %v3351 = vmax.f32 %v3338, 0.0
      %v3352 = vmax.f32 %v3339, 0.0
      %v3353 = vmax.f32 %v3340, 0.0
      %v3354 = vmax.f32 %v3341, 0.0
      %v3355 = vmax.f32 %v3342, 0.0
      %v3356 = vmax.f32 %v3343, 0.0
      %v3357 = vmax.f32 %v3344, 0.0
      %v3358 = vmax.f32 %v3345, 0.0
      %v3359 = vmax.f32 %v3346, 0.0
      %v3360 = vmax.f32 %v3347, 0.0
      %3361 = vst.msk [vmem:[#allocation2 + $0x10] sm:$0xff] %vm519, %v3348
      %3362 = vst.msk [vmem:[#allocation2 + $0x18] sm:$0xff] %vm519, %v3349
      %3363 = vst.msk [vmem:[#allocation2 + $0x20] sm:$0xff] %vm519, %v3350
      %3364 = vst.msk [vmem:[#allocation2 + $0x28] sm:$0xff] %vm519, %v3351
      %3365 = vst.msk [vmem:[#allocation2 + $0x30] sm:$0xff] %vm519, %v3352
      %3366 = vst.msk [vmem:[#allocation2 + $0x38] sm:$0xff] %vm519, %v3353
      %3367 = vst.msk [vmem:[#allocation2 + $0x40] sm:$0xff] %vm519, %v3354
      %3368 = vst.msk [vmem:[#allocation2 + $0x48] sm:$0xff] %vm519, %v3355
      %3369 = vst.msk [vmem:[#allocation2 + $0x50] sm:$0xff] %vm519, %v3356
      %3370 = vst.msk [vmem:[#allocation2 + $0x58] sm:$0xff] %vm519, %v3357
      %3371 = vst.msk [vmem:[#allocation2 + $0x60] sm:$0xff] %vm519, %v3358
      %3372 = vst.msk [vmem:[#allocation2 + $0x68] sm:$0xff] %vm519, %v3359
      %3373 = vst.msk [vmem:[#allocation2 + $0x70] sm:$0xf] %vm565, %v3360
      %v3374 = vld [vmem:[#allocation2 + $0x5] sm:$0xff]
      %v3375 = vld [vmem:[#allocation2 + $0xd] sm:$0xff]
      %v3376 = vld [vmem:[#allocation2 + $0x15] sm:$0xff]
      %v3377 = vld [vmem:[#allocation2 + $0x1d] sm:$0xff]
      %v3378 = vld [vmem:[#allocation2 + $0x25] sm:$0xff]
      %v3379 = vld [vmem:[#allocation2 + $0x2d] sm:$0xff]
      %v3380 = vld [vmem:[#allocation2 + $0x35] sm:$0xff]
      %v3381 = vld [vmem:[#allocation2 + $0x3d] sm:$0xff]
      %v3382 = vld [vmem:[#allocation2 + $0x45] sm:$0xff]
      %v3383 = vld [vmem:[#allocation2 + $0x4d] sm:$0xff]
      %v3384 = vld [vmem:[#allocation2 + $0x55] sm:$0xff]
      %v3385 = vld [vmem:[#allocation2 + $0x5d] sm:$0xff]
      %v3386 = vld [vmem:[#allocation2 + $0x65] sm:$0xf]
      %v3387 = vld [vmem:[#allocation2 + $0x6] sm:$0xff]
      %v3388 = vld [vmem:[#allocation2 + $0xe] sm:$0xff]
      %v3389 = vld [vmem:[#allocation2 + $0x16] sm:$0xff]
      %v3390 = vld [vmem:[#allocation2 + $0x1e] sm:$0xff]
      %v3391 = vld [vmem:[#allocation2 + $0x26] sm:$0xff]
      %v3392 = vld [vmem:[#allocation2 + $0x2e] sm:$0xff]
      %v3393 = vld [vmem:[#allocation2 + $0x36] sm:$0xff]
      %v3394 = vld [vmem:[#allocation2 + $0x3e] sm:$0xff]
      %v3395 = vld [vmem:[#allocation2 + $0x46] sm:$0xff]
      %v3396 = vld [vmem:[#allocation2 + $0x4e] sm:$0xff]
      %v3397 = vld [vmem:[#allocation2 + $0x56] sm:$0xff]
      %v3398 = vld [vmem:[#allocation2 + $0x5e] sm:$0xff]
      %v3399 = vld [vmem:[#allocation2 + $0x66] sm:$0xf]
      %v3400 = vld [vmem:[#allocation2 + $0x7] sm:$0xff]
      %v3401 = vld [vmem:[#allocation2 + $0xf] sm:$0xff]
      %v3402 = vld [vmem:[#allocation2 + $0x17] sm:$0xff]
      %v3403 = vld [vmem:[#allocation2 + $0x1f] sm:$0xff]
      %v3404 = vld [vmem:[#allocation2 + $0x27] sm:$0xff]
      %v3405 = vld [vmem:[#allocation2 + $0x2f] sm:$0xff]
      %v3406 = vld [vmem:[#allocation2 + $0x37] sm:$0xff]
      %v3407 = vld [vmem:[#allocation2 + $0x3f] sm:$0xff]
      %v3408 = vld [vmem:[#allocation2 + $0x47] sm:$0xff]
      %v3409 = vld [vmem:[#allocation2 + $0x4f] sm:$0xff]
      %v3410 = vld [vmem:[#allocation2 + $0x57] sm:$0xff]
      %v3411 = vld [vmem:[#allocation2 + $0x5f] sm:$0xff]
      %v3412 = vld [vmem:[#allocation2 + $0x67] sm:$0xf]
      %v3413 = vld [vmem:[#allocation2 + $0x67] sm:$0xff]
      %v3414 = vld [vmem:[#allocation2 + $0x6f] sm:$0xf]
      %v3415 = vld [vmem:[#allocation2 + $0x10] sm:$0xff]
      %v3416 = vld [vmem:[#allocation2 + $0x18] sm:$0xff]
      %v3417 = vld [vmem:[#allocation2 + $0x20] sm:$0xff]
      %v3418 = vld [vmem:[#allocation2 + $0x28] sm:$0xff]
      %v3419 = vld [vmem:[#allocation2 + $0x30] sm:$0xff]
      %v3420 = vld [vmem:[#allocation2 + $0x38] sm:$0xff]
      %v3421 = vld [vmem:[#allocation2 + $0x40] sm:$0xff]
      %v3422 = vld [vmem:[#allocation2 + $0x48] sm:$0xff]
      %v3423 = vld [vmem:[#allocation2 + $0x50] sm:$0xff]
      %v3424 = vld [vmem:[#allocation2 + $0x58] sm:$0xff]
      %v3425 = vld [vmem:[#allocation2 + $0x60] sm:$0xff]
      %v3426 = vld [vmem:[#allocation2 + $0x68] sm:$0xff]
      %v3427 = vld [vmem:[#allocation2 + $0x70] sm:$0xf]
      %v3428 = vld [vmem:[#allocation2 + $0x11] sm:$0xff]
      %v3429 = vld [vmem:[#allocation2 + $0x19] sm:$0xff]
      %v3430 = vld [vmem:[#allocation2 + $0x21] sm:$0xff]
      %v3431 = vld [vmem:[#allocation2 + $0x29] sm:$0xff]
      %v3432 = vld [vmem:[#allocation2 + $0x31] sm:$0xff]
      %v3433 = vld [vmem:[#allocation2 + $0x39] sm:$0xff]
      %v3434 = vld [vmem:[#allocation2 + $0x41] sm:$0xff]
      %v3435 = vld [vmem:[#allocation2 + $0x49] sm:$0xff]
      %v3436 = vld [vmem:[#allocation2 + $0x51] sm:$0xff]
      %v3437 = vld [vmem:[#allocation2 + $0x59] sm:$0xff]
      %v3438 = vld [vmem:[#allocation2 + $0x61] sm:$0xff]
      %v3439 = vld [vmem:[#allocation2 + $0x69] sm:$0xff]
      %v3440 = vld [vmem:[#allocation2 + $0x71] sm:$0xf]
      %v3441 = vld [vmem:[#allocation2 + $0x71] sm:$0xff]
      %v3442 = vld [vmem:[#allocation2 + $0x79] sm:$0xf]
      %v3443 = vld [vmem:[#allocation2 + $0x1a] sm:$0xff]
      %v3444 = vld [vmem:[#allocation2 + $0x22] sm:$0xff]
      %v3445 = vld [vmem:[#allocation2 + $0x2a] sm:$0xff]
      %v3446 = vld [vmem:[#allocation2 + $0x32] sm:$0xff]
      %v3447 = vld [vmem:[#allocation2 + $0x3a] sm:$0xff]
      %v3448 = vld [vmem:[#allocation2 + $0x42] sm:$0xff]
      %v3449 = vld [vmem:[#allocation2 + $0x4a] sm:$0xff]
      %v3450 = vld [vmem:[#allocation2 + $0x52] sm:$0xff]
      %v3451 = vld [vmem:[#allocation2 + $0x5a] sm:$0xff]
      %v3452 = vld [vmem:[#allocation2 + $0x62] sm:$0xff]
      %v3453 = vld [vmem:[#allocation2 + $0x6a] sm:$0xff]
      %v3454 = vld [vmem:[#allocation2 + $0x72] sm:$0xff]
      %v3455 = vld [vmem:[#allocation2 + $0x7a] sm:$0xf]
      %v3456 = vld [vmem:[#allocation2 + $0x1b] sm:$0xff]
      %v3457 = vld [vmem:[#allocation2 + $0x23] sm:$0xff]
      %v3458 = vld [vmem:[#allocation2 + $0x2b] sm:$0xff]
      %v3459 = vld [vmem:[#allocation2 + $0x33] sm:$0xff]
      %v3460 = vld [vmem:[#allocation2 + $0x3b] sm:$0xff]
      %v3461 = vld [vmem:[#allocation2 + $0x43] sm:$0xff]
      %v3462 = vld [vmem:[#allocation2 + $0x4b] sm:$0xff]
      %v3463 = vld [vmem:[#allocation2 + $0x53] sm:$0xff]
      %v3464 = vld [vmem:[#allocation2 + $0x5b] sm:$0xff]
      %v3465 = vld [vmem:[#allocation2 + $0x63] sm:$0xff]
      %v3466 = vld [vmem:[#allocation2 + $0x6b] sm:$0xff]
      %v3467 = vld [vmem:[#allocation2 + $0x73] sm:$0xff]
      %v3468 = vld [vmem:[#allocation2 + $0x7b] sm:$0xf]
      %3482 = vrot.lane.b32.xlu0 %v3387, 16
      %v3483 = vpop.permute.xlu0 %3482
      %3484 = vrot.lane.b32.xlu0 %v3388, 16
      %v3485 = vpop.permute.xlu0 %3484
      %3486 = vrot.lane.b32.xlu0 %v3389, 16
      %v3487 = vpop.permute.xlu0 %3486
      %3488 = vrot.lane.b32.xlu0 %v3390, 16
      %v3489 = vpop.permute.xlu0 %3488
      %3490 = vrot.lane.b32.xlu0 %v3391, 16
      %v3491 = vpop.permute.xlu0 %3490
      %3492 = vrot.lane.b32.xlu0 %v3392, 16
      %v3493 = vpop.permute.xlu0 %3492
      %3494 = vrot.lane.b32.xlu0 %v3393, 16
      %v3495 = vpop.permute.xlu0 %3494
      %3496 = vrot.lane.b32.xlu0 %v3394, 16
      %v3497 = vpop.permute.xlu0 %3496
      %3498 = vrot.lane.b32.xlu0 %v3395, 16
      %v3499 = vpop.permute.xlu0 %3498
      %3500 = vrot.lane.b32.xlu0 %v3396, 16
      %v3501 = vpop.permute.xlu0 %3500
      %3502 = vrot.lane.b32.xlu0 %v3397, 16
      %v3503 = vpop.permute.xlu0 %3502
      %3504 = vrot.lane.b32.xlu0 %v3398, 16
      %v3505 = vpop.permute.xlu0 %3504
      %3506 = vrot.lane.b32.xlu0 %v3399, 16
      %v3507 = vpop.permute.xlu0 %3506
      %3534 = vrot.lane.b32.xlu0 %v3400, 32
      %v3535 = vpop.permute.xlu0 %3534
      %3536 = vrot.lane.b32.xlu0 %v3401, 32
      %v3537 = vpop.permute.xlu0 %3536
      %3538 = vrot.lane.b32.xlu0 %v3402, 32
      %v3539 = vpop.permute.xlu0 %3538
      %3540 = vrot.lane.b32.xlu0 %v3403, 32
      %v3541 = vpop.permute.xlu0 %3540
      %3542 = vrot.lane.b32.xlu0 %v3404, 32
      %v3543 = vpop.permute.xlu0 %3542
      %3544 = vrot.lane.b32.xlu0 %v3405, 32
      %v3545 = vpop.permute.xlu0 %3544
      %3546 = vrot.lane.b32.xlu0 %v3406, 32
      %v3547 = vpop.permute.xlu0 %3546
      %3548 = vrot.lane.b32.xlu0 %v3407, 32
      %v3549 = vpop.permute.xlu0 %3548
      %3550 = vrot.lane.b32.xlu0 %v3408, 32
      %v3551 = vpop.permute.xlu0 %3550
      %3552 = vrot.lane.b32.xlu0 %v3409, 32
      %v3553 = vpop.permute.xlu0 %3552
      %3554 = vrot.lane.b32.xlu0 %v3410, 32
      %v3555 = vpop.permute.xlu0 %3554
      %3556 = vrot.lane.b32.xlu0 %v3411, 32
      %v3557 = vpop.permute.xlu0 %3556
      %3558 = vrot.lane.b32.xlu0 %v3412, 32
      %v3559 = vpop.permute.xlu0 %3558
      %3575 = vrot.lane.b32.xlu0 %v3401, 48
      %v3576 = vpop.permute.xlu0 %3575
      %3577 = vrot.lane.b32.xlu0 %v3402, 48
      %v3578 = vpop.permute.xlu0 %3577
      %3579 = vrot.lane.b32.xlu0 %v3403, 48
      %v3580 = vpop.permute.xlu0 %3579
      %3581 = vrot.lane.b32.xlu0 %v3404, 48
      %v3582 = vpop.permute.xlu0 %3581
      %3583 = vrot.lane.b32.xlu0 %v3405, 48
      %v3584 = vpop.permute.xlu0 %3583
      %3585 = vrot.lane.b32.xlu0 %v3406, 48
      %v3586 = vpop.permute.xlu0 %3585
      %3587 = vrot.lane.b32.xlu0 %v3407, 48
      %v3588 = vpop.permute.xlu0 %3587
      %3589 = vrot.lane.b32.xlu0 %v3408, 48
      %v3590 = vpop.permute.xlu0 %3589
      %3591 = vrot.lane.b32.xlu0 %v3409, 48
      %v3592 = vpop.permute.xlu0 %3591
      %3593 = vrot.lane.b32.xlu0 %v3410, 48
      %v3594 = vpop.permute.xlu0 %3593
      %3595 = vrot.lane.b32.xlu0 %v3411, 48
      %v3596 = vpop.permute.xlu0 %3595
      %3597 = vrot.lane.b32.xlu0 %v3413, 48
      %v3598 = vpop.permute.xlu0 %3597
      %3599 = vrot.lane.b32.xlu0 %v3414, 48
      %v3600 = vpop.permute.xlu0 %3599
      %3627 = vrot.lane.b32.xlu0 %v3415, 64
      %v3628 = vpop.permute.xlu0 %3627
      %3629 = vrot.lane.b32.xlu0 %v3416, 64
      %v3630 = vpop.permute.xlu0 %3629
      %3631 = vrot.lane.b32.xlu0 %v3417, 64
      %v3632 = vpop.permute.xlu0 %3631
      %3633 = vrot.lane.b32.xlu0 %v3418, 64
      %v3634 = vpop.permute.xlu0 %3633
      %3635 = vrot.lane.b32.xlu0 %v3419, 64
      %v3636 = vpop.permute.xlu0 %3635
      %3637 = vrot.lane.b32.xlu0 %v3420, 64
      %v3638 = vpop.permute.xlu0 %3637
      %3639 = vrot.lane.b32.xlu0 %v3421, 64
      %v3640 = vpop.permute.xlu0 %3639
      %3641 = vrot.lane.b32.xlu0 %v3422, 64
      %v3642 = vpop.permute.xlu0 %3641
      %3643 = vrot.lane.b32.xlu0 %v3423, 64
      %v3644 = vpop.permute.xlu0 %3643
      %3645 = vrot.lane.b32.xlu0 %v3424, 64
      %v3646 = vpop.permute.xlu0 %3645
      %3647 = vrot.lane.b32.xlu0 %v3425, 64
      %v3648 = vpop.permute.xlu0 %3647
      %3649 = vrot.lane.b32.xlu0 %v3426, 64
      %v3650 = vpop.permute.xlu0 %3649
      %3651 = vrot.lane.b32.xlu0 %v3427, 64
      %v3652 = vpop.permute.xlu0 %3651
      %3679 = vrot.lane.b32.xlu0 %v3428, 80
      %v3680 = vpop.permute.xlu0 %3679
      %3681 = vrot.lane.b32.xlu0 %v3429, 80
      %v3682 = vpop.permute.xlu0 %3681
      %3683 = vrot.lane.b32.xlu0 %v3430, 80
      %v3684 = vpop.permute.xlu0 %3683
      %3685 = vrot.lane.b32.xlu0 %v3431, 80
      %v3686 = vpop.permute.xlu0 %3685
      %3687 = vrot.lane.b32.xlu0 %v3432, 80
      %v3688 = vpop.permute.xlu0 %3687
      %3689 = vrot.lane.b32.xlu0 %v3433, 80
      %v3690 = vpop.permute.xlu0 %3689
      %3691 = vrot.lane.b32.xlu0 %v3434, 80
      %v3692 = vpop.permute.xlu0 %3691
      %3693 = vrot.lane.b32.xlu0 %v3435, 80
      %v3694 = vpop.permute.xlu0 %3693
      %3695 = vrot.lane.b32.xlu0 %v3436, 80
      %v3696 = vpop.permute.xlu0 %3695
      %3697 = vrot.lane.b32.xlu0 %v3437, 80
      %v3698 = vpop.permute.xlu0 %3697
      %3699 = vrot.lane.b32.xlu0 %v3438, 80
      %v3700 = vpop.permute.xlu0 %3699
      %3701 = vrot.lane.b32.xlu0 %v3439, 80
      %v3702 = vpop.permute.xlu0 %3701
      %3703 = vrot.lane.b32.xlu0 %v3440, 80
      %v3704 = vpop.permute.xlu0 %3703
      %3720 = vrot.lane.b32.xlu0 %v3429, 96
      %v3721 = vpop.permute.xlu0 %3720
      %3722 = vrot.lane.b32.xlu0 %v3430, 96
      %v3723 = vpop.permute.xlu0 %3722
      %3724 = vrot.lane.b32.xlu0 %v3431, 96
      %v3725 = vpop.permute.xlu0 %3724
      %3726 = vrot.lane.b32.xlu0 %v3432, 96
      %v3727 = vpop.permute.xlu0 %3726
      %3728 = vrot.lane.b32.xlu0 %v3433, 96
      %v3729 = vpop.permute.xlu0 %3728
      %3730 = vrot.lane.b32.xlu0 %v3434, 96
      %v3731 = vpop.permute.xlu0 %3730
      %3732 = vrot.lane.b32.xlu0 %v3435, 96
      %v3733 = vpop.permute.xlu0 %3732
      %3734 = vrot.lane.b32.xlu0 %v3436, 96
      %v3735 = vpop.permute.xlu0 %3734
      %3736 = vrot.lane.b32.xlu0 %v3437, 96
      %v3737 = vpop.permute.xlu0 %3736
      %3738 = vrot.lane.b32.xlu0 %v3438, 96
      %v3739 = vpop.permute.xlu0 %3738
      %3740 = vrot.lane.b32.xlu0 %v3439, 96
      %v3741 = vpop.permute.xlu0 %3740
      %3742 = vrot.lane.b32.xlu0 %v3441, 96
      %v3743 = vpop.permute.xlu0 %3742
      %3744 = vrot.lane.b32.xlu0 %v3442, 96
      %v3745 = vpop.permute.xlu0 %3744
      %3772 = vrot.lane.b32.xlu0 %v3443, 112
      %v3773 = vpop.permute.xlu0 %3772
      %3774 = vrot.lane.b32.xlu0 %v3444, 112
      %v3775 = vpop.permute.xlu0 %3774
      %3776 = vrot.lane.b32.xlu0 %v3445, 112
      %v3777 = vpop.permute.xlu0 %3776
      %3778 = vrot.lane.b32.xlu0 %v3446, 112
      %v3779 = vpop.permute.xlu0 %3778
      %3780 = vrot.lane.b32.xlu0 %v3447, 112
      %v3781 = vpop.permute.xlu0 %3780
      %3782 = vrot.lane.b32.xlu0 %v3448, 112
      %v3783 = vpop.permute.xlu0 %3782
      %3784 = vrot.lane.b32.xlu0 %v3449, 112
      %v3785 = vpop.permute.xlu0 %3784
      %3786 = vrot.lane.b32.xlu0 %v3450, 112
      %v3787 = vpop.permute.xlu0 %3786
      %3788 = vrot.lane.b32.xlu0 %v3451, 112
      %v3789 = vpop.permute.xlu0 %3788
      %3790 = vrot.lane.b32.xlu0 %v3452, 112
      %v3791 = vpop.permute.xlu0 %3790
      %3792 = vrot.lane.b32.xlu0 %v3453, 112
      %v3793 = vpop.permute.xlu0 %3792
      %3794 = vrot.lane.b32.xlu0 %v3454, 112
      %v3795 = vpop.permute.xlu0 %3794
      %3796 = vrot.lane.b32.xlu0 %v3455, 112
      %v3797 = vpop.permute.xlu0 %3796
      %v3811 = vsel %vm519, %v3374, %v3483
      %v3812 = vsel %vm519, %v3375, %v3485
      %v3813 = vsel %vm519, %v3376, %v3487
      %v3814 = vsel %vm519, %v3377, %v3489
      %v3815 = vsel %vm519, %v3378, %v3491
      %v3816 = vsel %vm519, %v3379, %v3493
      %v3817 = vsel %vm519, %v3380, %v3495
      %v3818 = vsel %vm519, %v3381, %v3497
      %v3819 = vsel %vm519, %v3382, %v3499
      %v3820 = vsel %vm519, %v3383, %v3501
      %v3821 = vsel %vm519, %v3384, %v3503
      %v3822 = vsel %vm519, %v3385, %v3505
      %v3823 = vsel %vm519, %v3386, %v3507
      %v3824 = vsel %vm1017, %v3811, %v3535
      %v3825 = vsel %vm1017, %v3812, %v3537
      %v3826 = vsel %vm1017, %v3813, %v3539
      %v3827 = vsel %vm1017, %v3814, %v3541
      %v3828 = vsel %vm1017, %v3815, %v3543
      %v3829 = vsel %vm1017, %v3816, %v3545
      %v3830 = vsel %vm1017, %v3817, %v3547
      %v3831 = vsel %vm1017, %v3818, %v3549
      %v3832 = vsel %vm1017, %v3819, %v3551
      %v3833 = vsel %vm1017, %v3820, %v3553
      %v3834 = vsel %vm1017, %v3821, %v3555
      %v3835 = vsel %vm1017, %v3822, %v3557
      %v3836 = vsel %vm1017, %v3823, %v3559
      %v3837 = vsel %vm1031, %v3824, %v3576
      %v3838 = vsel %vm1031, %v3825, %v3578
      %v3839 = vsel %vm1031, %v3826, %v3580
      %v3840 = vsel %vm1031, %v3827, %v3582
      %v3841 = vsel %vm1031, %v3828, %v3584
      %v3842 = vsel %vm1031, %v3829, %v3586
      %v3843 = vsel %vm1031, %v3830, %v3588
      %v3844 = vsel %vm1031, %v3831, %v3590
      %v3845 = vsel %vm1031, %v3832, %v3592
      %v3846 = vsel %vm1031, %v3833, %v3594
      %v3847 = vsel %vm1031, %v3834, %v3596
      %v3848 = vsel %vm1031, %v3835, %v3598
      %v3849 = vsel %vm1031, %v3836, %v3600
      %v3850 = vsel %vm1045, %v3837, %v3628
      %v3851 = vsel %vm1045, %v3838, %v3630
      %v3852 = vsel %vm1045, %v3839, %v3632
      %v3853 = vsel %vm1045, %v3840, %v3634
      %v3854 = vsel %vm1045, %v3841, %v3636
      %v3855 = vsel %vm1045, %v3842, %v3638
      %v3856 = vsel %vm1045, %v3843, %v3640
      %v3857 = vsel %vm1045, %v3844, %v3642
      %v3858 = vsel %vm1045, %v3845, %v3644
      %v3859 = vsel %vm1045, %v3846, %v3646
      %v3860 = vsel %vm1045, %v3847, %v3648
      %v3861 = vsel %vm1045, %v3848, %v3650
      %v3862 = vsel %vm1045, %v3849, %v3652
      %v3863 = vsel %vm1059, %v3850, %v3680
      %v3864 = vsel %vm1059, %v3851, %v3682
      %v3865 = vsel %vm1059, %v3852, %v3684
      %v3866 = vsel %vm1059, %v3853, %v3686
      %v3867 = vsel %vm1059, %v3854, %v3688
      %v3868 = vsel %vm1059, %v3855, %v3690
      %v3869 = vsel %vm1059, %v3856, %v3692
      %v3870 = vsel %vm1059, %v3857, %v3694
      %v3871 = vsel %vm1059, %v3858, %v3696
      %v3872 = vsel %vm1059, %v3859, %v3698
      %v3873 = vsel %vm1059, %v3860, %v3700
      %v3874 = vsel %vm1059, %v3861, %v3702
      %v3875 = vsel %vm1059, %v3862, %v3704
      %v3876 = vsel %vm1073, %v3863, %v3721
      %v3877 = vsel %vm1073, %v3864, %v3723
      %v3878 = vsel %vm1073, %v3865, %v3725
      %v3879 = vsel %vm1073, %v3866, %v3727
      %v3880 = vsel %vm1073, %v3867, %v3729
      %v3881 = vsel %vm1073, %v3868, %v3731
      %v3882 = vsel %vm1073, %v3869, %v3733
      %v3883 = vsel %vm1073, %v3870, %v3735
      %v3884 = vsel %vm1073, %v3871, %v3737
      %v3885 = vsel %vm1073, %v3872, %v3739
      %v3886 = vsel %vm1073, %v3873, %v3741
      %v3887 = vsel %vm1073, %v3874, %v3743
      %v3888 = vsel %vm1073, %v3875, %v3745
      %v3889 = vsel %vm1087, %v3876, %v3773
      %v3890 = vsel %vm1087, %v3877, %v3775
      %v3891 = vsel %vm1087, %v3878, %v3777
      %v3892 = vsel %vm1087, %v3879, %v3779
      %v3893 = vsel %vm1087, %v3880, %v3781
      %v3894 = vsel %vm1087, %v3881, %v3783
      %v3895 = vsel %vm1087, %v3882, %v3785
      %v3896 = vsel %vm1087, %v3883, %v3787
      %v3897 = vsel %vm1087, %v3884, %v3789
      %v3898 = vsel %vm1087, %v3885, %v3791
      %v3899 = vsel %vm1087, %v3886, %v3793
      %v3900 = vsel %vm1087, %v3887, %v3795
      %v3901 = vsel %vm1087, %v3888, %v3797
      %s3902 = scalar_lea.vmem %s2, 384
      %v3903 = vld [vmem:[%s3902] sm:$0xff]
      %v3904 = vld [vmem:[%s3902 + $0x8] sm:$0xff]
      %v3905 = vld [vmem:[%s3902 + $0x10] sm:$0xff]
      %v3906 = vld [vmem:[%s3902 + $0x18] sm:$0xff]
      %v3907 = vld [vmem:[%s3902 + $0x20] sm:$0xff]
      %v3908 = vld [vmem:[%s3902 + $0x28] sm:$0xff]
      %v3909 = vld [vmem:[%s3902 + $0x30] sm:$0xff]
      %v3910 = vld [vmem:[%s3902 + $0x38] sm:$0xff]
      %v3911 = vld [vmem:[%s3902 + $0x40] sm:$0xff]
      %v3912 = vld [vmem:[%s3902 + $0x48] sm:$0xff]
      %v3913 = vld [vmem:[%s3902 + $0x50] sm:$0xff]
      %v3914 = vld [vmem:[%s3902 + $0x58] sm:$0xff]
      %v3915 = vld [vmem:[%s3902 + $0x60] sm:$0xff]
      %v3916 = vld [vmem:[%s3902 + $0x68] sm:$0xff]
      %v3917 = vld [vmem:[%s3902 + $0x70] sm:$0xff]
      %v3918 = vld [vmem:[%s3902 + $0x78] sm:$0xff]
      %s3919 = scalar_lea.vmem %s3, 48
      %v3920 = vld [vmem:[%s3919] sm:$0xff]
      %v3921 = vld [vmem:[%s3919 + $0x8] sm:$0xff]
      %v3923 = vsel %vm519, %v3456, 0
      %v3926 = vsel %vm519, %v3457, 0
      %v3929 = vsel %vm519, %v3458, 0
      %v3932 = vsel %vm519, %v3459, 0
      %v3935 = vsel %vm519, %v3460, 0
      %v3938 = vsel %vm519, %v3461, 0
      %v3941 = vsel %vm519, %v3462, 0
      %v3944 = vsel %vm519, %v3463, 0
      %v3947 = vsel %vm519, %v3464, 0
      %v3950 = vsel %vm519, %v3465, 0
      %v3953 = vsel %vm519, %v3466, 0
      %v3956 = vsel %vm519, %v3467, 0
      %v3959 = vsel %vm519, %v3468, 0
      %3961 = vmatprep.subr.mxu0 0.0
      %3962 = vmatpush1.msra.mxu0 0.0
      %3963 = vmatprep.subr.mxu0 0.0
      %3964 = vmatpush1.msra.mxu0 0.0
      %3965 = vmatprep.subr.mxu0 0.0
      %3966 = vmatpush1.msra.mxu0 0.0
      %3967 = vmatprep.subr.mxu0 0.0
      %3968 = vmatpush1.msra.mxu0 0.0
      %3969 = vmatprep.subr.mxu0 0.0
      %3970 = vmatpush1.msra.mxu0 0.0
      %3971 = vmatprep.subr.mxu0 0.0
      %3972 = vmatpush1.msra.mxu0 0.0
      %3973 = vmatprep.subr.mxu0 0.0
      %3974 = vmatpush1.msra.mxu0 0.0
      %3975 = vmatprep.subr.mxu0 0.0
      %3976 = vmatpush1.msra.mxu0 0.0
      %3977 = vmatprep.subr.mxu0 0.0
      %3978 = vmatpush1.msra.mxu0 0.0
      %3979 = vmatprep.subr.mxu0 0.0
      %3980 = vmatpush1.msra.mxu0 0.0
      %3981 = vmatprep.subr.mxu0 0.0
      %3982 = vmatpush1.msra.mxu0 0.0
      %3983 = vmatprep.subr.mxu0 0.0
      %3984 = vmatpush1.msra.mxu0 0.0
      %3985 = vmatprep.subr.mxu0 0.0
      %3986 = vmatpush1.msra.mxu0 0.0
      %3987 = vmatprep.subr.mxu0 0.0
      %3988 = vmatpush1.msra.mxu0 0.0
      %3989 = vmatprep.subr.mxu0 0.0
      %3990 = vmatpush1.msra.mxu0 %v3921
      %3991 = vmatprep.subr.mxu0 0.0
      %3992 = vmatpush1.msra.mxu0 %v3920
      %3993 = vmatprep.subr.mxu0 0.0
      %3994 = vmatpush2.msra.mxu0 0.0
      %3995 = vmatprep.subr.mxu0 0.0
      %3996 = vmatpush2.msra.mxu0 0.0
      %3997 = vmatprep.subr.mxu0 0.0
      %3998 = vmatpush2.msra.mxu0 0.0
      %3999 = vmatprep.subr.mxu0 0.0
      %4000 = vmatpush2.msra.mxu0 0.0
      %4001 = vmatprep.subr.mxu0 0.0
      %4002 = vmatpush2.msra.mxu0 0.0
      %4003 = vmatprep.subr.mxu0 0.0
      %4004 = vmatpush2.msra.mxu0 0.0
      %4005 = vmatprep.subr.mxu0 0.0
      %4006 = vmatpush2.msra.mxu0 0.0
      %4007 = vmatprep.subr.mxu0 0.0
      %4008 = vmatpush2.msra.mxu0 0.0
      %4009 = vmatprep.subr.mxu0 0.0
      %4010 = vmatpush2.msra.mxu0 0.0
      %4011 = vmatprep.subr.mxu0 0.0
      %4012 = vmatpush2.msra.mxu0 0.0
      %4013 = vmatprep.subr.mxu0 0.0
      %4014 = vmatpush2.msra.mxu0 0.0
      %4015 = vmatprep.subr.mxu0 0.0
      %4016 = vmatpush2.msra.mxu0 0.0
      %4017 = vmatprep.subr.mxu0 0.0
      %4018 = vmatpush2.msra.mxu0 0.0
      %4019 = vmatprep.subr.mxu0 0.0
      %4020 = vmatpush2.msra.mxu0 0.0
      %4021 = vmatprep.subr.mxu0 0.0
      %4022 = vmatpush2.msra.mxu0 0.0
      %4023 = vmatprep.subr.mxu0 0.0
      %4024 = vmatpush2.msra.mxu0 0.0
      %4025 = vmatprep.mubr.f32.mxu0 0.0
      %4026 = vmatmul.mubr.f32.gmra.mxu0 %v3923
      %v4027 = vpop.f32.mrf.mxu0
      %v4028 = vadd.f32 0.0, %v4027
      %v4029 = vpop.f32.mrf.mxu0
      %4030 = vmatprep.mubr.f32.mxu0 0.0
      %4031 = vmatmul.mubr.f32.gmra.mxu0 %v3926
      %v4032 = vpop.f32.mrf.mxu0
      %v4033 = vadd.f32 0.0, %v4032
      %v4034 = vpop.f32.mrf.mxu0
      %4035 = vmatprep.mubr.f32.mxu0 0.0
      %4036 = vmatmul.mubr.f32.gmra.mxu0 %v3929
      %v4037 = vpop.f32.mrf.mxu0
      %v4038 = vadd.f32 0.0, %v4037
      %v4039 = vpop.f32.mrf.mxu0
      %4040 = vmatprep.mubr.f32.mxu0 0.0
      %4041 = vmatmul.mubr.f32.gmra.mxu0 %v3932
      %v4042 = vpop.f32.mrf.mxu0
      %v4043 = vadd.f32 0.0, %v4042
      %v4044 = vpop.f32.mrf.mxu0
      %4045 = vmatprep.mubr.f32.mxu0 0.0
      %4046 = vmatmul.mubr.f32.gmra.mxu0 %v3935
      %v4047 = vpop.f32.mrf.mxu0
      %v4048 = vadd.f32 0.0, %v4047
      %v4049 = vpop.f32.mrf.mxu0
      %4050 = vmatprep.mubr.f32.mxu0 0.0
      %4051 = vmatmul.mubr.f32.gmra.mxu0 %v3938
      %v4052 = vpop.f32.mrf.mxu0
      %v4053 = vadd.f32 0.0, %v4052
      %v4054 = vpop.f32.mrf.mxu0
      %4055 = vmatprep.mubr.f32.mxu0 0.0
      %4056 = vmatmul.mubr.f32.gmra.mxu0 %v3941
      %v4057 = vpop.f32.mrf.mxu0
      %v4058 = vadd.f32 0.0, %v4057
      %v4059 = vpop.f32.mrf.mxu0
      %4060 = vmatprep.mubr.f32.mxu0 0.0
      %4061 = vmatmul.mubr.f32.gmra.mxu0 %v3944
      %v4062 = vpop.f32.mrf.mxu0
      %v4063 = vadd.f32 0.0, %v4062
      %v4064 = vpop.f32.mrf.mxu0
      %4065 = vmatprep.mubr.f32.mxu0 0.0
      %4066 = vmatmul.mubr.f32.gmra.mxu0 %v3947
      %v4067 = vpop.f32.mrf.mxu0
      %v4068 = vadd.f32 0.0, %v4067
      %v4069 = vpop.f32.mrf.mxu0
      %4070 = vmatprep.mubr.f32.mxu0 0.0
      %4071 = vmatmul.mubr.f32.gmra.mxu0 %v3950
      %v4072 = vpop.f32.mrf.mxu0
      %v4073 = vadd.f32 0.0, %v4072
      %v4074 = vpop.f32.mrf.mxu0
      %4075 = vmatprep.mubr.f32.mxu0 0.0
      %4076 = vmatmul.mubr.f32.gmra.mxu0 %v3953
      %v4077 = vpop.f32.mrf.mxu0
      %v4078 = vadd.f32 0.0, %v4077
      %v4079 = vpop.f32.mrf.mxu0
      %4080 = vmatprep.mubr.f32.mxu0 0.0
      %4081 = vmatmul.mubr.f32.gmra.mxu0 %v3956
      %v4082 = vpop.f32.mrf.mxu0
      %v4083 = vadd.f32 0.0, %v4082
      %v4084 = vpop.f32.mrf.mxu0
      %4085 = vmatprep.mubr.f32.mxu0 0.0
      %4086 = vmatmul.mubr.f32.gmra.mxu0 %v3959
      %v4087 = vpop.f32.mrf.mxu0
      %v4088 = vadd.f32 0.0, %v4087
      %v4089 = vpop.f32.mrf.mxu0
      %4090 = vdwg.mxu0
      %4091 = vmatprep.subr.mxu0 0.0
      %4092 = vmatpush1.msra.mxu0 %v3918
      %4093 = vmatprep.subr.mxu0 0.0
      %4094 = vmatpush1.msra.mxu0 %v3917
      %4095 = vmatprep.subr.mxu0 0.0
      %4096 = vmatpush1.msra.mxu0 %v3916
      %4097 = vmatprep.subr.mxu0 0.0
      %4098 = vmatpush1.msra.mxu0 %v3915
      %4099 = vmatprep.subr.mxu0 0.0
      %4100 = vmatpush1.msra.mxu0 %v3914
      %4101 = vmatprep.subr.mxu0 0.0
      %4102 = vmatpush1.msra.mxu0 %v3913
      %4103 = vmatprep.subr.mxu0 0.0
      %4104 = vmatpush1.msra.mxu0 %v3912
      %4105 = vmatprep.subr.mxu0 0.0
      %4106 = vmatpush1.msra.mxu0 %v3911
      %4107 = vmatprep.subr.mxu0 0.0
      %4108 = vmatpush1.msra.mxu0 %v3910
      %4109 = vmatprep.subr.mxu0 0.0
      %4110 = vmatpush1.msra.mxu0 %v3909
      %4111 = vmatprep.subr.mxu0 0.0
      %4112 = vmatpush1.msra.mxu0 %v3908
      %4113 = vmatprep.subr.mxu0 0.0
      %4114 = vmatpush1.msra.mxu0 %v3907
      %4115 = vmatprep.subr.mxu0 0.0
      %4116 = vmatpush1.msra.mxu0 %v3906
      %4117 = vmatprep.subr.mxu0 0.0
      %4118 = vmatpush1.msra.mxu0 %v3905
      %4119 = vmatprep.subr.mxu0 0.0
      %4120 = vmatpush1.msra.mxu0 %v3904
      %4121 = vmatprep.subr.mxu0 0.0
      %4122 = vmatpush1.msra.mxu0 %v3903
      %4123 = vmatprep.subr.mxu0 0.0
      %4124 = vmatpush2.msra.mxu0 0.0
      %4125 = vmatprep.subr.mxu0 0.0
      %4126 = vmatpush2.msra.mxu0 0.0
      %4127 = vmatprep.subr.mxu0 0.0
      %4128 = vmatpush2.msra.mxu0 0.0
      %4129 = vmatprep.subr.mxu0 0.0
      %4130 = vmatpush2.msra.mxu0 0.0
      %4131 = vmatprep.subr.mxu0 0.0
      %4132 = vmatpush2.msra.mxu0 0.0
      %4133 = vmatprep.subr.mxu0 0.0
      %4134 = vmatpush2.msra.mxu0 0.0
      %4135 = vmatprep.subr.mxu0 0.0
      %4136 = vmatpush2.msra.mxu0 0.0
      %4137 = vmatprep.subr.mxu0 0.0
      %4138 = vmatpush2.msra.mxu0 0.0
      %4139 = vmatprep.subr.mxu0 0.0
      %4140 = vmatpush2.msra.mxu0 0.0
      %4141 = vmatprep.subr.mxu0 0.0
      %4142 = vmatpush2.msra.mxu0 0.0
      %4143 = vmatprep.subr.mxu0 0.0
      %4144 = vmatpush2.msra.mxu0 0.0
      %4145 = vmatprep.subr.mxu0 0.0
      %4146 = vmatpush2.msra.mxu0 0.0
      %4147 = vmatprep.subr.mxu0 0.0
      %4148 = vmatpush2.msra.mxu0 0.0
      %4149 = vmatprep.subr.mxu0 0.0
      %4150 = vmatpush2.msra.mxu0 0.0
      %4151 = vmatprep.subr.mxu0 0.0
      %4152 = vmatpush2.msra.mxu0 0.0
      %4153 = vmatprep.subr.mxu0 0.0
      %4154 = vmatpush2.msra.mxu0 0.0
      %4155 = vmatprep.mubr.f32.mxu0 0.0
      %4156 = vmatmul.mubr.f32.gmra.mxu0 %v3889
      %v4157 = vpop.f32.mrf.mxu0
      %v4158 = vadd.f32 %v4028, %v4157
      %v4159 = vpop.f32.mrf.mxu0
      %4160 = vmatprep.mubr.f32.mxu0 0.0
      %4161 = vmatmul.mubr.f32.gmra.mxu0 %v3890
      %v4162 = vpop.f32.mrf.mxu0
      %v4163 = vadd.f32 %v4033, %v4162
      %v4164 = vpop.f32.mrf.mxu0
      %4165 = vmatprep.mubr.f32.mxu0 0.0
      %4166 = vmatmul.mubr.f32.gmra.mxu0 %v3891
      %v4167 = vpop.f32.mrf.mxu0
      %v4168 = vadd.f32 %v4038, %v4167
      %v4169 = vpop.f32.mrf.mxu0
      %4170 = vmatprep.mubr.f32.mxu0 0.0
      %4171 = vmatmul.mubr.f32.gmra.mxu0 %v3892
      %v4172 = vpop.f32.mrf.mxu0
      %v4173 = vadd.f32 %v4043, %v4172
      %v4174 = vpop.f32.mrf.mxu0
      %4175 = vmatprep.mubr.f32.mxu0 0.0
      %4176 = vmatmul.mubr.f32.gmra.mxu0 %v3893
      %v4177 = vpop.f32.mrf.mxu0
      %v4178 = vadd.f32 %v4048, %v4177
      %v4179 = vpop.f32.mrf.mxu0
      %4180 = vmatprep.mubr.f32.mxu0 0.0
      %4181 = vmatmul.mubr.f32.gmra.mxu0 %v3894
      %v4182 = vpop.f32.mrf.mxu0
      %v4183 = vadd.f32 %v4053, %v4182
      %v4184 = vpop.f32.mrf.mxu0
      %4185 = vmatprep.mubr.f32.mxu0 0.0
      %4186 = vmatmul.mubr.f32.gmra.mxu0 %v3895
      %v4187 = vpop.f32.mrf.mxu0
      %v4188 = vadd.f32 %v4058, %v4187
      %v4189 = vpop.f32.mrf.mxu0
      %4190 = vmatprep.mubr.f32.mxu0 0.0
      %4191 = vmatmul.mubr.f32.gmra.mxu0 %v3896
      %v4192 = vpop.f32.mrf.mxu0
      %v4193 = vadd.f32 %v4063, %v4192
      %v4194 = vpop.f32.mrf.mxu0
      %4195 = vmatprep.mubr.f32.mxu0 0.0
      %4196 = vmatmul.mubr.f32.gmra.mxu0 %v3897
      %v4197 = vpop.f32.mrf.mxu0
      %v4198 = vadd.f32 %v4068, %v4197
      %v4199 = vpop.f32.mrf.mxu0
      %4200 = vmatprep.mubr.f32.mxu0 0.0
      %4201 = vmatmul.mubr.f32.gmra.mxu0 %v3898
      %v4202 = vpop.f32.mrf.mxu0
      %v4203 = vadd.f32 %v4073, %v4202
      %v4204 = vpop.f32.mrf.mxu0
      %4205 = vmatprep.mubr.f32.mxu0 0.0
      %4206 = vmatmul.mubr.f32.gmra.mxu0 %v3899
      %v4207 = vpop.f32.mrf.mxu0
      %v4208 = vadd.f32 %v4078, %v4207
      %v4209 = vpop.f32.mrf.mxu0
      %4210 = vmatprep.mubr.f32.mxu0 0.0
      %4211 = vmatmul.mubr.f32.gmra.mxu0 %v3900
      %v4212 = vpop.f32.mrf.mxu0
      %v4213 = vadd.f32 %v4083, %v4212
      %v4214 = vpop.f32.mrf.mxu0
      %4215 = vmatprep.mubr.f32.mxu0 0.0
      %4216 = vmatmul.mubr.f32.gmra.mxu0 %v3901
      %v4217 = vpop.f32.mrf.mxu0
      %v4218 = vadd.f32 %v4088, %v4217
      %v4219 = vpop.f32.mrf.mxu0
      %4220 = vdwg.mxu0
      %v4221 = vld [vmem:[%s4 + $0x3] sm:$0x1]
      %v4222 = vlaneseq
      %v4223 = vshrl.u32 %v4222, 7
      %v4224 = vsub.s32 0, %v4223
      %v4225 = vrot.slane %v4221, %v4224
      %v4226 = vadd.f32 %v4158, %v4225
      %v4227 = vadd.f32 %v4163, %v4225
      %v4228 = vadd.f32 %v4168, %v4225
      %v4229 = vadd.f32 %v4173, %v4225
      %v4230 = vadd.f32 %v4178, %v4225
      %v4231 = vadd.f32 %v4183, %v4225
      %v4232 = vadd.f32 %v4188, %v4225
      %v4233 = vadd.f32 %v4193, %v4225
      %v4234 = vadd.f32 %v4198, %v4225
      %v4235 = vadd.f32 %v4203, %v4225
      %v4236 = vadd.f32 %v4208, %v4225
      %v4237 = vadd.f32 %v4213, %v4225
      %v4238 = vadd.f32 %v4218, %v4225
      %v4239 = vmul.f32 %v4226, %v1439
      %v4240 = vmul.f32 %v4227, %v1444
      %v4241 = vmul.f32 %v4228, %v1449
      %v4242 = vmul.f32 %v4229, %v1454
      %v4243 = vmul.f32 %v4230, %v1459
      %v4244 = vmul.f32 %v4231, %v1464
      %v4245 = vmul.f32 %v4232, %v1469
      %v4246 = vmul.f32 %v4233, %v1474
      %v4247 = vmul.f32 %v4234, %v1479
      %v4248 = vmul.f32 %v4235, %v1484
      %v4249 = vmul.f32 %v4236, %v1489
      %v4250 = vmul.f32 %v4237, %v1494
      %v4251 = vmul.f32 %v4238, %v1499
      %v4252 = vmax.f32 %v4239, 0.0
      %v4253 = vmax.f32 %v4240, 0.0
      %v4254 = vmax.f32 %v4241, 0.0
      %v4255 = vmax.f32 %v4242, 0.0
      %v4256 = vmax.f32 %v4243, 0.0
      %v4257 = vmax.f32 %v4244, 0.0
      %v4258 = vmax.f32 %v4245, 0.0
      %v4259 = vmax.f32 %v4246, 0.0
      %v4260 = vmax.f32 %v4247, 0.0
      %v4261 = vmax.f32 %v4248, 0.0
      %v4262 = vmax.f32 %v4249, 0.0
      %v4263 = vmax.f32 %v4250, 0.0
      %v4264 = vmax.f32 %v4251, 0.0
      %4265 = vst.msk [vmem:[#allocation3 + $0x10] sm:$0xff] %vm519, %v4252
      %4266 = vst.msk [vmem:[#allocation3 + $0x18] sm:$0xff] %vm519, %v4253
      %4267 = vst.msk [vmem:[#allocation3 + $0x20] sm:$0xff] %vm519, %v4254
      %4268 = vst.msk [vmem:[#allocation3 + $0x28] sm:$0xff] %vm519, %v4255
      %4269 = vst.msk [vmem:[#allocation3 + $0x30] sm:$0xff] %vm519, %v4256
      %4270 = vst.msk [vmem:[#allocation3 + $0x38] sm:$0xff] %vm519, %v4257
      %4271 = vst.msk [vmem:[#allocation3 + $0x40] sm:$0xff] %vm519, %v4258
      %4272 = vst.msk [vmem:[#allocation3 + $0x48] sm:$0xff] %vm519, %v4259
      %4273 = vst.msk [vmem:[#allocation3 + $0x50] sm:$0xff] %vm519, %v4260
      %4274 = vst.msk [vmem:[#allocation3 + $0x58] sm:$0xff] %vm519, %v4261
      %4275 = vst.msk [vmem:[#allocation3 + $0x60] sm:$0xff] %vm519, %v4262
      %4276 = vst.msk [vmem:[#allocation3 + $0x68] sm:$0xff] %vm519, %v4263
      %4277 = vst.msk [vmem:[#allocation3 + $0x70] sm:$0xf] %vm565, %v4264
      %v4278 = vld [vmem:[#allocation2 + $0x10] sm:$0xff]
      %v4279 = vld [vmem:[#allocation2 + $0x18] sm:$0xff]
      %v4280 = vld [vmem:[#allocation2 + $0x20] sm:$0xff]
      %v4281 = vld [vmem:[#allocation2 + $0x28] sm:$0xff]
      %v4282 = vld [vmem:[#allocation2 + $0x30] sm:$0xff]
      %v4283 = vld [vmem:[#allocation2 + $0x38] sm:$0xff]
      %v4284 = vld [vmem:[#allocation2 + $0x40] sm:$0xff]
      %v4285 = vld [vmem:[#allocation2 + $0x48] sm:$0xff]
      %v4286 = vld [vmem:[#allocation2 + $0x50] sm:$0xff]
      %v4287 = vld [vmem:[#allocation2 + $0x58] sm:$0xff]
      %v4288 = vld [vmem:[#allocation2 + $0x60] sm:$0xff]
      %v4289 = vld [vmem:[#allocation2 + $0x68] sm:$0xff]
      %v4290 = vld [vmem:[#allocation2 + $0x70] sm:$0xf]
      %v4291 = vld [vmem:[#allocation3 + $0x5] sm:$0xff]
      %v4292 = vld [vmem:[#allocation3 + $0xd] sm:$0xff]
      %v4293 = vld [vmem:[#allocation3 + $0x15] sm:$0xff]
      %v4294 = vld [vmem:[#allocation3 + $0x1d] sm:$0xff]
      %v4295 = vld [vmem:[#allocation3 + $0x25] sm:$0xff]
      %v4296 = vld [vmem:[#allocation3 + $0x2d] sm:$0xff]
      %v4297 = vld [vmem:[#allocation3 + $0x35] sm:$0xff]
      %v4298 = vld [vmem:[#allocation3 + $0x3d] sm:$0xff]
      %v4299 = vld [vmem:[#allocation3 + $0x45] sm:$0xff]
      %v4300 = vld [vmem:[#allocation3 + $0x4d] sm:$0xff]
      %v4301 = vld [vmem:[#allocation3 + $0x55] sm:$0xff]
      %v4302 = vld [vmem:[#allocation3 + $0x5d] sm:$0xff]
      %v4303 = vld [vmem:[#allocation3 + $0x65] sm:$0xf]
      %v4304 = vld [vmem:[#allocation3 + $0x6] sm:$0xff]
      %v4305 = vld [vmem:[#allocation3 + $0xe] sm:$0xff]
      %v4306 = vld [vmem:[#allocation3 + $0x16] sm:$0xff]
      %v4307 = vld [vmem:[#allocation3 + $0x1e] sm:$0xff]
      %v4308 = vld [vmem:[#allocation3 + $0x26] sm:$0xff]
      %v4309 = vld [vmem:[#allocation3 + $0x2e] sm:$0xff]
      %v4310 = vld [vmem:[#allocation3 + $0x36] sm:$0xff]
      %v4311 = vld [vmem:[#allocation3 + $0x3e] sm:$0xff]
      %v4312 = vld [vmem:[#allocation3 + $0x46] sm:$0xff]
      %v4313 = vld [vmem:[#allocation3 + $0x4e] sm:$0xff]
      %v4314 = vld [vmem:[#allocation3 + $0x56] sm:$0xff]
      %v4315 = vld [vmem:[#allocation3 + $0x5e] sm:$0xff]
      %v4316 = vld [vmem:[#allocation3 + $0x66] sm:$0xf]
      %v4317 = vld [vmem:[#allocation3 + $0x7] sm:$0xff]
      %v4318 = vld [vmem:[#allocation3 + $0xf] sm:$0xff]
      %v4319 = vld [vmem:[#allocation3 + $0x17] sm:$0xff]
      %v4320 = vld [vmem:[#allocation3 + $0x1f] sm:$0xff]
      %v4321 = vld [vmem:[#allocation3 + $0x27] sm:$0xff]
      %v4322 = vld [vmem:[#allocation3 + $0x2f] sm:$0xff]
      %v4323 = vld [vmem:[#allocation3 + $0x37] sm:$0xff]
      %v4324 = vld [vmem:[#allocation3 + $0x3f] sm:$0xff]
      %v4325 = vld [vmem:[#allocation3 + $0x47] sm:$0xff]
      %v4326 = vld [vmem:[#allocation3 + $0x4f] sm:$0xff]
      %v4327 = vld [vmem:[#allocation3 + $0x57] sm:$0xff]
      %v4328 = vld [vmem:[#allocation3 + $0x5f] sm:$0xff]
      %v4329 = vld [vmem:[#allocation3 + $0x67] sm:$0xf]
      %v4330 = vld [vmem:[#allocation3 + $0x67] sm:$0xff]
      %v4331 = vld [vmem:[#allocation3 + $0x6f] sm:$0xf]
      %v4332 = vld [vmem:[#allocation3 + $0x10] sm:$0xff]
      %v4333 = vld [vmem:[#allocation3 + $0x18] sm:$0xff]
      %v4334 = vld [vmem:[#allocation3 + $0x20] sm:$0xff]
      %v4335 = vld [vmem:[#allocation3 + $0x28] sm:$0xff]
      %v4336 = vld [vmem:[#allocation3 + $0x30] sm:$0xff]
      %v4337 = vld [vmem:[#allocation3 + $0x38] sm:$0xff]
      %v4338 = vld [vmem:[#allocation3 + $0x40] sm:$0xff]
      %v4339 = vld [vmem:[#allocation3 + $0x48] sm:$0xff]
      %v4340 = vld [vmem:[#allocation3 + $0x50] sm:$0xff]
      %v4341 = vld [vmem:[#allocation3 + $0x58] sm:$0xff]
      %v4342 = vld [vmem:[#allocation3 + $0x60] sm:$0xff]
      %v4343 = vld [vmem:[#allocation3 + $0x68] sm:$0xff]
      %v4344 = vld [vmem:[#allocation3 + $0x70] sm:$0xf]
      %v4345 = vld [vmem:[#allocation3 + $0x11] sm:$0xff]
      %v4346 = vld [vmem:[#allocation3 + $0x19] sm:$0xff]
      %v4347 = vld [vmem:[#allocation3 + $0x21] sm:$0xff]
      %v4348 = vld [vmem:[#allocation3 + $0x29] sm:$0xff]
      %v4349 = vld [vmem:[#allocation3 + $0x31] sm:$0xff]
      %v4350 = vld [vmem:[#allocation3 + $0x39] sm:$0xff]
      %v4351 = vld [vmem:[#allocation3 + $0x41] sm:$0xff]
      %v4352 = vld [vmem:[#allocation3 + $0x49] sm:$0xff]
      %v4353 = vld [vmem:[#allocation3 + $0x51] sm:$0xff]
      %v4354 = vld [vmem:[#allocation3 + $0x59] sm:$0xff]
      %v4355 = vld [vmem:[#allocation3 + $0x61] sm:$0xff]
      %v4356 = vld [vmem:[#allocation3 + $0x69] sm:$0xff]
      %v4357 = vld [vmem:[#allocation3 + $0x71] sm:$0xf]
      %v4358 = vld [vmem:[#allocation3 + $0x71] sm:$0xff]
      %v4359 = vld [vmem:[#allocation3 + $0x79] sm:$0xf]
      %v4360 = vld [vmem:[#allocation3 + $0x1a] sm:$0xff]
      %v4361 = vld [vmem:[#allocation3 + $0x22] sm:$0xff]
      %v4362 = vld [vmem:[#allocation3 + $0x2a] sm:$0xff]
      %v4363 = vld [vmem:[#allocation3 + $0x32] sm:$0xff]
      %v4364 = vld [vmem:[#allocation3 + $0x3a] sm:$0xff]
      %v4365 = vld [vmem:[#allocation3 + $0x42] sm:$0xff]
      %v4366 = vld [vmem:[#allocation3 + $0x4a] sm:$0xff]
      %v4367 = vld [vmem:[#allocation3 + $0x52] sm:$0xff]
      %v4368 = vld [vmem:[#allocation3 + $0x5a] sm:$0xff]
      %v4369 = vld [vmem:[#allocation3 + $0x62] sm:$0xff]
      %v4370 = vld [vmem:[#allocation3 + $0x6a] sm:$0xff]
      %v4371 = vld [vmem:[#allocation3 + $0x72] sm:$0xff]
      %v4372 = vld [vmem:[#allocation3 + $0x7a] sm:$0xf]
      %v4373 = vld [vmem:[#allocation3 + $0x1b] sm:$0xff]
      %v4374 = vld [vmem:[#allocation3 + $0x23] sm:$0xff]
      %v4375 = vld [vmem:[#allocation3 + $0x2b] sm:$0xff]
      %v4376 = vld [vmem:[#allocation3 + $0x33] sm:$0xff]
      %v4377 = vld [vmem:[#allocation3 + $0x3b] sm:$0xff]
      %v4378 = vld [vmem:[#allocation3 + $0x43] sm:$0xff]
      %v4379 = vld [vmem:[#allocation3 + $0x4b] sm:$0xff]
      %v4380 = vld [vmem:[#allocation3 + $0x53] sm:$0xff]
      %v4381 = vld [vmem:[#allocation3 + $0x5b] sm:$0xff]
      %v4382 = vld [vmem:[#allocation3 + $0x63] sm:$0xff]
      %v4383 = vld [vmem:[#allocation3 + $0x6b] sm:$0xff]
      %v4384 = vld [vmem:[#allocation3 + $0x73] sm:$0xff]
      %v4385 = vld [vmem:[#allocation3 + $0x7b] sm:$0xf]
      %4399 = vrot.lane.b32.xlu0 %v4304, 16
      %v4400 = vpop.permute.xlu0 %4399
      %4401 = vrot.lane.b32.xlu0 %v4305, 16
      %v4402 = vpop.permute.xlu0 %4401
      %4403 = vrot.lane.b32.xlu0 %v4306, 16
      %v4404 = vpop.permute.xlu0 %4403
      %4405 = vrot.lane.b32.xlu0 %v4307, 16
      %v4406 = vpop.permute.xlu0 %4405
      %4407 = vrot.lane.b32.xlu0 %v4308, 16
      %v4408 = vpop.permute.xlu0 %4407
      %4409 = vrot.lane.b32.xlu0 %v4309, 16
      %v4410 = vpop.permute.xlu0 %4409
      %4411 = vrot.lane.b32.xlu0 %v4310, 16
      %v4412 = vpop.permute.xlu0 %4411
      %4413 = vrot.lane.b32.xlu0 %v4311, 16
      %v4414 = vpop.permute.xlu0 %4413
      %4415 = vrot.lane.b32.xlu0 %v4312, 16
      %v4416 = vpop.permute.xlu0 %4415
      %4417 = vrot.lane.b32.xlu0 %v4313, 16
      %v4418 = vpop.permute.xlu0 %4417
      %4419 = vrot.lane.b32.xlu0 %v4314, 16
      %v4420 = vpop.permute.xlu0 %4419
      %4421 = vrot.lane.b32.xlu0 %v4315, 16
      %v4422 = vpop.permute.xlu0 %4421
      %4423 = vrot.lane.b32.xlu0 %v4316, 16
      %v4424 = vpop.permute.xlu0 %4423
      %4451 = vrot.lane.b32.xlu0 %v4317, 32
      %v4452 = vpop.permute.xlu0 %4451
      %4453 = vrot.lane.b32.xlu0 %v4318, 32
      %v4454 = vpop.permute.xlu0 %4453
      %4455 = vrot.lane.b32.xlu0 %v4319, 32
      %v4456 = vpop.permute.xlu0 %4455
      %4457 = vrot.lane.b32.xlu0 %v4320, 32
      %v4458 = vpop.permute.xlu0 %4457
      %4459 = vrot.lane.b32.xlu0 %v4321, 32
      %v4460 = vpop.permute.xlu0 %4459
      %4461 = vrot.lane.b32.xlu0 %v4322, 32
      %v4462 = vpop.permute.xlu0 %4461
      %4463 = vrot.lane.b32.xlu0 %v4323, 32
      %v4464 = vpop.permute.xlu0 %4463
      %4465 = vrot.lane.b32.xlu0 %v4324, 32
      %v4466 = vpop.permute.xlu0 %4465
      %4467 = vrot.lane.b32.xlu0 %v4325, 32
      %v4468 = vpop.permute.xlu0 %4467
      %4469 = vrot.lane.b32.xlu0 %v4326, 32
      %v4470 = vpop.permute.xlu0 %4469
      %4471 = vrot.lane.b32.xlu0 %v4327, 32
      %v4472 = vpop.permute.xlu0 %4471
      %4473 = vrot.lane.b32.xlu0 %v4328, 32
      %v4474 = vpop.permute.xlu0 %4473
      %4475 = vrot.lane.b32.xlu0 %v4329, 32
      %v4476 = vpop.permute.xlu0 %4475
      %4492 = vrot.lane.b32.xlu0 %v4318, 48
      %v4493 = vpop.permute.xlu0 %4492
      %4494 = vrot.lane.b32.xlu0 %v4319, 48
      %v4495 = vpop.permute.xlu0 %4494
      %4496 = vrot.lane.b32.xlu0 %v4320, 48
      %v4497 = vpop.permute.xlu0 %4496
      %4498 = vrot.lane.b32.xlu0 %v4321, 48
      %v4499 = vpop.permute.xlu0 %4498
      %4500 = vrot.lane.b32.xlu0 %v4322, 48
      %v4501 = vpop.permute.xlu0 %4500
      %4502 = vrot.lane.b32.xlu0 %v4323, 48
      %v4503 = vpop.permute.xlu0 %4502
      %4504 = vrot.lane.b32.xlu0 %v4324, 48
      %v4505 = vpop.permute.xlu0 %4504
      %4506 = vrot.lane.b32.xlu0 %v4325, 48
      %v4507 = vpop.permute.xlu0 %4506
      %4508 = vrot.lane.b32.xlu0 %v4326, 48
      %v4509 = vpop.permute.xlu0 %4508
      %4510 = vrot.lane.b32.xlu0 %v4327, 48
      %v4511 = vpop.permute.xlu0 %4510
      %4512 = vrot.lane.b32.xlu0 %v4328, 48
      %v4513 = vpop.permute.xlu0 %4512
      %4514 = vrot.lane.b32.xlu0 %v4330, 48
      %v4515 = vpop.permute.xlu0 %4514
      %4516 = vrot.lane.b32.xlu0 %v4331, 48
      %v4517 = vpop.permute.xlu0 %4516
      %4544 = vrot.lane.b32.xlu0 %v4332, 64
      %v4545 = vpop.permute.xlu0 %4544
      %4546 = vrot.lane.b32.xlu0 %v4333, 64
      %v4547 = vpop.permute.xlu0 %4546
      %4548 = vrot.lane.b32.xlu0 %v4334, 64
      %v4549 = vpop.permute.xlu0 %4548
      %4550 = vrot.lane.b32.xlu0 %v4335, 64
      %v4551 = vpop.permute.xlu0 %4550
      %4552 = vrot.lane.b32.xlu0 %v4336, 64
      %v4553 = vpop.permute.xlu0 %4552
      %4554 = vrot.lane.b32.xlu0 %v4337, 64
      %v4555 = vpop.permute.xlu0 %4554
      %4556 = vrot.lane.b32.xlu0 %v4338, 64
      %v4557 = vpop.permute.xlu0 %4556
      %4558 = vrot.lane.b32.xlu0 %v4339, 64
      %v4559 = vpop.permute.xlu0 %4558
      %4560 = vrot.lane.b32.xlu0 %v4340, 64
      %v4561 = vpop.permute.xlu0 %4560
      %4562 = vrot.lane.b32.xlu0 %v4341, 64
      %v4563 = vpop.permute.xlu0 %4562
      %4564 = vrot.lane.b32.xlu0 %v4342, 64
      %v4565 = vpop.permute.xlu0 %4564
      %4566 = vrot.lane.b32.xlu0 %v4343, 64
      %v4567 = vpop.permute.xlu0 %4566
      %4568 = vrot.lane.b32.xlu0 %v4344, 64
      %v4569 = vpop.permute.xlu0 %4568
      %4596 = vrot.lane.b32.xlu0 %v4345, 80
      %v4597 = vpop.permute.xlu0 %4596
      %4598 = vrot.lane.b32.xlu0 %v4346, 80
      %v4599 = vpop.permute.xlu0 %4598
      %4600 = vrot.lane.b32.xlu0 %v4347, 80
      %v4601 = vpop.permute.xlu0 %4600
      %4602 = vrot.lane.b32.xlu0 %v4348, 80
      %v4603 = vpop.permute.xlu0 %4602
      %4604 = vrot.lane.b32.xlu0 %v4349, 80
      %v4605 = vpop.permute.xlu0 %4604
      %4606 = vrot.lane.b32.xlu0 %v4350, 80
      %v4607 = vpop.permute.xlu0 %4606
      %4608 = vrot.lane.b32.xlu0 %v4351, 80
      %v4609 = vpop.permute.xlu0 %4608
      %4610 = vrot.lane.b32.xlu0 %v4352, 80
      %v4611 = vpop.permute.xlu0 %4610
      %4612 = vrot.lane.b32.xlu0 %v4353, 80
      %v4613 = vpop.permute.xlu0 %4612
      %4614 = vrot.lane.b32.xlu0 %v4354, 80
      %v4615 = vpop.permute.xlu0 %4614
      %4616 = vrot.lane.b32.xlu0 %v4355, 80
      %v4617 = vpop.permute.xlu0 %4616
      %4618 = vrot.lane.b32.xlu0 %v4356, 80
      %v4619 = vpop.permute.xlu0 %4618
      %4620 = vrot.lane.b32.xlu0 %v4357, 80
      %v4621 = vpop.permute.xlu0 %4620
      %4637 = vrot.lane.b32.xlu0 %v4346, 96
      %v4638 = vpop.permute.xlu0 %4637
      %4639 = vrot.lane.b32.xlu0 %v4347, 96
      %v4640 = vpop.permute.xlu0 %4639
      %4641 = vrot.lane.b32.xlu0 %v4348, 96
      %v4642 = vpop.permute.xlu0 %4641
      %4643 = vrot.lane.b32.xlu0 %v4349, 96
      %v4644 = vpop.permute.xlu0 %4643
      %4645 = vrot.lane.b32.xlu0 %v4350, 96
      %v4646 = vpop.permute.xlu0 %4645
      %4647 = vrot.lane.b32.xlu0 %v4351, 96
      %v4648 = vpop.permute.xlu0 %4647
      %4649 = vrot.lane.b32.xlu0 %v4352, 96
      %v4650 = vpop.permute.xlu0 %4649
      %4651 = vrot.lane.b32.xlu0 %v4353, 96
      %v4652 = vpop.permute.xlu0 %4651
      %4653 = vrot.lane.b32.xlu0 %v4354, 96
      %v4654 = vpop.permute.xlu0 %4653
      %4655 = vrot.lane.b32.xlu0 %v4355, 96
      %v4656 = vpop.permute.xlu0 %4655
      %4657 = vrot.lane.b32.xlu0 %v4356, 96
      %v4658 = vpop.permute.xlu0 %4657
      %4659 = vrot.lane.b32.xlu0 %v4358, 96
      %v4660 = vpop.permute.xlu0 %4659
      %4661 = vrot.lane.b32.xlu0 %v4359, 96
      %v4662 = vpop.permute.xlu0 %4661
      %4689 = vrot.lane.b32.xlu0 %v4360, 112
      %v4690 = vpop.permute.xlu0 %4689
      %4691 = vrot.lane.b32.xlu0 %v4361, 112
      %v4692 = vpop.permute.xlu0 %4691
      %4693 = vrot.lane.b32.xlu0 %v4362, 112
      %v4694 = vpop.permute.xlu0 %4693
      %4695 = vrot.lane.b32.xlu0 %v4363, 112
      %v4696 = vpop.permute.xlu0 %4695
      %4697 = vrot.lane.b32.xlu0 %v4364, 112
      %v4698 = vpop.permute.xlu0 %4697
      %4699 = vrot.lane.b32.xlu0 %v4365, 112
      %v4700 = vpop.permute.xlu0 %4699
      %4701 = vrot.lane.b32.xlu0 %v4366, 112
      %v4702 = vpop.permute.xlu0 %4701
      %4703 = vrot.lane.b32.xlu0 %v4367, 112
      %v4704 = vpop.permute.xlu0 %4703
      %4705 = vrot.lane.b32.xlu0 %v4368, 112
      %v4706 = vpop.permute.xlu0 %4705
      %4707 = vrot.lane.b32.xlu0 %v4369, 112
      %v4708 = vpop.permute.xlu0 %4707
      %4709 = vrot.lane.b32.xlu0 %v4370, 112
      %v4710 = vpop.permute.xlu0 %4709
      %4711 = vrot.lane.b32.xlu0 %v4371, 112
      %v4712 = vpop.permute.xlu0 %4711
      %4713 = vrot.lane.b32.xlu0 %v4372, 112
      %v4714 = vpop.permute.xlu0 %4713
      %v4728 = vsel %vm519, %v4291, %v4400
      %v4729 = vsel %vm519, %v4292, %v4402
      %v4730 = vsel %vm519, %v4293, %v4404
      %v4731 = vsel %vm519, %v4294, %v4406
      %v4732 = vsel %vm519, %v4295, %v4408
      %v4733 = vsel %vm519, %v4296, %v4410
      %v4734 = vsel %vm519, %v4297, %v4412
      %v4735 = vsel %vm519, %v4298, %v4414
      %v4736 = vsel %vm519, %v4299, %v4416
      %v4737 = vsel %vm519, %v4300, %v4418
      %v4738 = vsel %vm519, %v4301, %v4420
      %v4739 = vsel %vm519, %v4302, %v4422
      %v4740 = vsel %vm519, %v4303, %v4424
      %v4741 = vsel %vm1017, %v4728, %v4452
      %v4742 = vsel %vm1017, %v4729, %v4454
      %v4743 = vsel %vm1017, %v4730, %v4456
      %v4744 = vsel %vm1017, %v4731, %v4458
      %v4745 = vsel %vm1017, %v4732, %v4460
      %v4746 = vsel %vm1017, %v4733, %v4462
      %v4747 = vsel %vm1017, %v4734, %v4464
      %v4748 = vsel %vm1017, %v4735, %v4466
      %v4749 = vsel %vm1017, %v4736, %v4468
      %v4750 = vsel %vm1017, %v4737, %v4470
      %v4751 = vsel %vm1017, %v4738, %v4472
      %v4752 = vsel %vm1017, %v4739, %v4474
      %v4753 = vsel %vm1017, %v4740, %v4476
      %v4754 = vsel %vm1031, %v4741, %v4493
      %v4755 = vsel %vm1031, %v4742, %v4495
      %v4756 = vsel %vm1031, %v4743, %v4497
      %v4757 = vsel %vm1031, %v4744, %v4499
      %v4758 = vsel %vm1031, %v4745, %v4501
      %v4759 = vsel %vm1031, %v4746, %v4503
      %v4760 = vsel %vm1031, %v4747, %v4505
      %v4761 = vsel %vm1031, %v4748, %v4507
      %v4762 = vsel %vm1031, %v4749, %v4509
      %v4763 = vsel %vm1031, %v4750, %v4511
      %v4764 = vsel %vm1031, %v4751, %v4513
      %v4765 = vsel %vm1031, %v4752, %v4515
      %v4766 = vsel %vm1031, %v4753, %v4517
      %v4767 = vsel %vm1045, %v4754, %v4545
      %v4768 = vsel %vm1045, %v4755, %v4547
      %v4769 = vsel %vm1045, %v4756, %v4549
      %v4770 = vsel %vm1045, %v4757, %v4551
      %v4771 = vsel %vm1045, %v4758, %v4553
      %v4772 = vsel %vm1045, %v4759, %v4555
      %v4773 = vsel %vm1045, %v4760, %v4557
      %v4774 = vsel %vm1045, %v4761, %v4559
      %v4775 = vsel %vm1045, %v4762, %v4561
      %v4776 = vsel %vm1045, %v4763, %v4563
      %v4777 = vsel %vm1045, %v4764, %v4565
      %v4778 = vsel %vm1045, %v4765, %v4567
      %v4779 = vsel %vm1045, %v4766, %v4569
      %v4780 = vsel %vm1059, %v4767, %v4597
      %v4781 = vsel %vm1059, %v4768, %v4599
      %v4782 = vsel %vm1059, %v4769, %v4601
      %v4783 = vsel %vm1059, %v4770, %v4603
      %v4784 = vsel %vm1059, %v4771, %v4605
      %v4785 = vsel %vm1059, %v4772, %v4607
      %v4786 = vsel %vm1059, %v4773, %v4609
      %v4787 = vsel %vm1059, %v4774, %v4611
      %v4788 = vsel %vm1059, %v4775, %v4613
      %v4789 = vsel %vm1059, %v4776, %v4615
      %v4790 = vsel %vm1059, %v4777, %v4617
      %v4791 = vsel %vm1059, %v4778, %v4619
      %v4792 = vsel %vm1059, %v4779, %v4621
      %v4793 = vsel %vm1073, %v4780, %v4638
      %v4794 = vsel %vm1073, %v4781, %v4640
      %v4795 = vsel %vm1073, %v4782, %v4642
      %v4796 = vsel %vm1073, %v4783, %v4644
      %v4797 = vsel %vm1073, %v4784, %v4646
      %v4798 = vsel %vm1073, %v4785, %v4648
      %v4799 = vsel %vm1073, %v4786, %v4650
      %v4800 = vsel %vm1073, %v4787, %v4652
      %v4801 = vsel %vm1073, %v4788, %v4654
      %v4802 = vsel %vm1073, %v4789, %v4656
      %v4803 = vsel %vm1073, %v4790, %v4658
      %v4804 = vsel %vm1073, %v4791, %v4660
      %v4805 = vsel %vm1073, %v4792, %v4662
      %v4806 = vsel %vm1087, %v4793, %v4690
      %v4807 = vsel %vm1087, %v4794, %v4692
      %v4808 = vsel %vm1087, %v4795, %v4694
      %v4809 = vsel %vm1087, %v4796, %v4696
      %v4810 = vsel %vm1087, %v4797, %v4698
      %v4811 = vsel %vm1087, %v4798, %v4700
      %v4812 = vsel %vm1087, %v4799, %v4702
      %v4813 = vsel %vm1087, %v4800, %v4704
      %v4814 = vsel %vm1087, %v4801, %v4706
      %v4815 = vsel %vm1087, %v4802, %v4708
      %v4816 = vsel %vm1087, %v4803, %v4710
      %v4817 = vsel %vm1087, %v4804, %v4712
      %v4818 = vsel %vm1087, %v4805, %v4714
      %s4819 = scalar_lea.vmem %s2, 512
      %v4820 = vld [vmem:[%s4819] sm:$0xff]
      %v4821 = vld [vmem:[%s4819 + $0x8] sm:$0xff]
      %v4822 = vld [vmem:[%s4819 + $0x10] sm:$0xff]
      %v4823 = vld [vmem:[%s4819 + $0x18] sm:$0xff]
      %v4824 = vld [vmem:[%s4819 + $0x20] sm:$0xff]
      %v4825 = vld [vmem:[%s4819 + $0x28] sm:$0xff]
      %v4826 = vld [vmem:[%s4819 + $0x30] sm:$0xff]
      %v4827 = vld [vmem:[%s4819 + $0x38] sm:$0xff]
      %v4828 = vld [vmem:[%s4819 + $0x40] sm:$0xff]
      %v4829 = vld [vmem:[%s4819 + $0x48] sm:$0xff]
      %v4830 = vld [vmem:[%s4819 + $0x50] sm:$0xff]
      %v4831 = vld [vmem:[%s4819 + $0x58] sm:$0xff]
      %v4832 = vld [vmem:[%s4819 + $0x60] sm:$0xff]
      %v4833 = vld [vmem:[%s4819 + $0x68] sm:$0xff]
      %v4834 = vld [vmem:[%s4819 + $0x70] sm:$0xff]
      %v4835 = vld [vmem:[%s4819 + $0x78] sm:$0xff]
      %s4836 = scalar_lea.vmem %s3, 64
      %v4837 = vld [vmem:[%s4836] sm:$0xff]
      %v4838 = vld [vmem:[%s4836 + $0x8] sm:$0xff]
      %v4840 = vsel %vm519, %v4373, 0
      %v4843 = vsel %vm519, %v4374, 0
      %v4846 = vsel %vm519, %v4375, 0
      %v4849 = vsel %vm519, %v4376, 0
      %v4852 = vsel %vm519, %v4377, 0
      %v4855 = vsel %vm519, %v4378, 0
      %v4858 = vsel %vm519, %v4379, 0
      %v4861 = vsel %vm519, %v4380, 0
      %v4864 = vsel %vm519, %v4381, 0
      %v4867 = vsel %vm519, %v4382, 0
      %v4870 = vsel %vm519, %v4383, 0
      %v4873 = vsel %vm519, %v4384, 0
      %v4876 = vsel %vm519, %v4385, 0
      %4878 = vmatprep.subr.mxu0 0.0
      %4879 = vmatpush1.msra.mxu0 0.0
      %4880 = vmatprep.subr.mxu0 0.0
      %4881 = vmatpush1.msra.mxu0 0.0
      %4882 = vmatprep.subr.mxu0 0.0
      %4883 = vmatpush1.msra.mxu0 0.0
      %4884 = vmatprep.subr.mxu0 0.0
      %4885 = vmatpush1.msra.mxu0 0.0
      %4886 = vmatprep.subr.mxu0 0.0
      %4887 = vmatpush1.msra.mxu0 0.0
      %4888 = vmatprep.subr.mxu0 0.0
      %4889 = vmatpush1.msra.mxu0 0.0
      %4890 = vmatprep.subr.mxu0 0.0
      %4891 = vmatpush1.msra.mxu0 0.0
      %4892 = vmatprep.subr.mxu0 0.0
      %4893 = vmatpush1.msra.mxu0 0.0
      %4894 = vmatprep.subr.mxu0 0.0
      %4895 = vmatpush1.msra.mxu0 0.0
      %4896 = vmatprep.subr.mxu0 0.0
      %4897 = vmatpush1.msra.mxu0 0.0
      %4898 = vmatprep.subr.mxu0 0.0
      %4899 = vmatpush1.msra.mxu0 0.0
      %4900 = vmatprep.subr.mxu0 0.0
      %4901 = vmatpush1.msra.mxu0 0.0
      %4902 = vmatprep.subr.mxu0 0.0
      %4903 = vmatpush1.msra.mxu0 0.0
      %4904 = vmatprep.subr.mxu0 0.0
      %4905 = vmatpush1.msra.mxu0 0.0
      %4906 = vmatprep.subr.mxu0 0.0
      %4907 = vmatpush1.msra.mxu0 %v4838
      %4908 = vmatprep.subr.mxu0 0.0
      %4909 = vmatpush1.msra.mxu0 %v4837
      %4910 = vmatprep.subr.mxu0 0.0
      %4911 = vmatpush2.msra.mxu0 0.0
      %4912 = vmatprep.subr.mxu0 0.0
      %4913 = vmatpush2.msra.mxu0 0.0
      %4914 = vmatprep.subr.mxu0 0.0
      %4915 = vmatpush2.msra.mxu0 0.0
      %4916 = vmatprep.subr.mxu0 0.0
      %4917 = vmatpush2.msra.mxu0 0.0
      %4918 = vmatprep.subr.mxu0 0.0
      %4919 = vmatpush2.msra.mxu0 0.0
      %4920 = vmatprep.subr.mxu0 0.0
      %4921 = vmatpush2.msra.mxu0 0.0
      %4922 = vmatprep.subr.mxu0 0.0
      %4923 = vmatpush2.msra.mxu0 0.0
      %4924 = vmatprep.subr.mxu0 0.0
      %4925 = vmatpush2.msra.mxu0 0.0
      %4926 = vmatprep.subr.mxu0 0.0
      %4927 = vmatpush2.msra.mxu0 0.0
      %4928 = vmatprep.subr.mxu0 0.0
      %4929 = vmatpush2.msra.mxu0 0.0
      %4930 = vmatprep.subr.mxu0 0.0
      %4931 = vmatpush2.msra.mxu0 0.0
      %4932 = vmatprep.subr.mxu0 0.0
      %4933 = vmatpush2.msra.mxu0 0.0
      %4934 = vmatprep.subr.mxu0 0.0
      %4935 = vmatpush2.msra.mxu0 0.0
      %4936 = vmatprep.subr.mxu0 0.0
      %4937 = vmatpush2.msra.mxu0 0.0
      %4938 = vmatprep.subr.mxu0 0.0
      %4939 = vmatpush2.msra.mxu0 0.0
      %4940 = vmatprep.subr.mxu0 0.0
      %4941 = vmatpush2.msra.mxu0 0.0
      %4942 = vmatprep.mubr.f32.mxu0 0.0
      %4943 = vmatmul.mubr.f32.gmra.mxu0 %v4840
      %v4944 = vpop.f32.mrf.mxu0
      %v4945 = vadd.f32 0.0, %v4944
      %v4946 = vpop.f32.mrf.mxu0
      %4947 = vmatprep.mubr.f32.mxu0 0.0
      %4948 = vmatmul.mubr.f32.gmra.mxu0 %v4843
      %v4949 = vpop.f32.mrf.mxu0
      %v4950 = vadd.f32 0.0, %v4949
      %v4951 = vpop.f32.mrf.mxu0
      %4952 = vmatprep.mubr.f32.mxu0 0.0
      %4953 = vmatmul.mubr.f32.gmra.mxu0 %v4846
      %v4954 = vpop.f32.mrf.mxu0
      %v4955 = vadd.f32 0.0, %v4954
      %v4956 = vpop.f32.mrf.mxu0
      %4957 = vmatprep.mubr.f32.mxu0 0.0
      %4958 = vmatmul.mubr.f32.gmra.mxu0 %v4849
      %v4959 = vpop.f32.mrf.mxu0
      %v4960 = vadd.f32 0.0, %v4959
      %v4961 = vpop.f32.mrf.mxu0
      %4962 = vmatprep.mubr.f32.mxu0 0.0
      %4963 = vmatmul.mubr.f32.gmra.mxu0 %v4852
      %v4964 = vpop.f32.mrf.mxu0
      %v4965 = vadd.f32 0.0, %v4964
      %v4966 = vpop.f32.mrf.mxu0
      %4967 = vmatprep.mubr.f32.mxu0 0.0
      %4968 = vmatmul.mubr.f32.gmra.mxu0 %v4855
      %v4969 = vpop.f32.mrf.mxu0
      %v4970 = vadd.f32 0.0, %v4969
      %v4971 = vpop.f32.mrf.mxu0
      %4972 = vmatprep.mubr.f32.mxu0 0.0
      %4973 = vmatmul.mubr.f32.gmra.mxu0 %v4858
      %v4974 = vpop.f32.mrf.mxu0
      %v4975 = vadd.f32 0.0, %v4974
      %v4976 = vpop.f32.mrf.mxu0
      %4977 = vmatprep.mubr.f32.mxu0 0.0
      %4978 = vmatmul.mubr.f32.gmra.mxu0 %v4861
      %v4979 = vpop.f32.mrf.mxu0
      %v4980 = vadd.f32 0.0, %v4979
      %v4981 = vpop.f32.mrf.mxu0
      %4982 = vmatprep.mubr.f32.mxu0 0.0
      %4983 = vmatmul.mubr.f32.gmra.mxu0 %v4864
      %v4984 = vpop.f32.mrf.mxu0
      %v4985 = vadd.f32 0.0, %v4984
      %v4986 = vpop.f32.mrf.mxu0
      %4987 = vmatprep.mubr.f32.mxu0 0.0
      %4988 = vmatmul.mubr.f32.gmra.mxu0 %v4867
      %v4989 = vpop.f32.mrf.mxu0
      %v4990 = vadd.f32 0.0, %v4989
      %v4991 = vpop.f32.mrf.mxu0
      %4992 = vmatprep.mubr.f32.mxu0 0.0
      %4993 = vmatmul.mubr.f32.gmra.mxu0 %v4870
      %v4994 = vpop.f32.mrf.mxu0
      %v4995 = vadd.f32 0.0, %v4994
      %v4996 = vpop.f32.mrf.mxu0
      %4997 = vmatprep.mubr.f32.mxu0 0.0
      %4998 = vmatmul.mubr.f32.gmra.mxu0 %v4873
      %v4999 = vpop.f32.mrf.mxu0
      %v5000 = vadd.f32 0.0, %v4999
      %v5001 = vpop.f32.mrf.mxu0
      %5002 = vmatprep.mubr.f32.mxu0 0.0
      %5003 = vmatmul.mubr.f32.gmra.mxu0 %v4876
      %v5004 = vpop.f32.mrf.mxu0
      %v5005 = vadd.f32 0.0, %v5004
      %v5006 = vpop.f32.mrf.mxu0
      %5007 = vdwg.mxu0
      %5008 = vmatprep.subr.mxu0 0.0
      %5009 = vmatpush1.msra.mxu0 %v4835
      %5010 = vmatprep.subr.mxu0 0.0
      %5011 = vmatpush1.msra.mxu0 %v4834
      %5012 = vmatprep.subr.mxu0 0.0
      %5013 = vmatpush1.msra.mxu0 %v4833
      %5014 = vmatprep.subr.mxu0 0.0
      %5015 = vmatpush1.msra.mxu0 %v4832
      %5016 = vmatprep.subr.mxu0 0.0
      %5017 = vmatpush1.msra.mxu0 %v4831
      %5018 = vmatprep.subr.mxu0 0.0
      %5019 = vmatpush1.msra.mxu0 %v4830
      %5020 = vmatprep.subr.mxu0 0.0
      %5021 = vmatpush1.msra.mxu0 %v4829
      %5022 = vmatprep.subr.mxu0 0.0
      %5023 = vmatpush1.msra.mxu0 %v4828
      %5024 = vmatprep.subr.mxu0 0.0
      %5025 = vmatpush1.msra.mxu0 %v4827
      %5026 = vmatprep.subr.mxu0 0.0
      %5027 = vmatpush1.msra.mxu0 %v4826
      %5028 = vmatprep.subr.mxu0 0.0
      %5029 = vmatpush1.msra.mxu0 %v4825
      %5030 = vmatprep.subr.mxu0 0.0
      %5031 = vmatpush1.msra.mxu0 %v4824
      %5032 = vmatprep.subr.mxu0 0.0
      %5033 = vmatpush1.msra.mxu0 %v4823
      %5034 = vmatprep.subr.mxu0 0.0
      %5035 = vmatpush1.msra.mxu0 %v4822
      %5036 = vmatprep.subr.mxu0 0.0
      %5037 = vmatpush1.msra.mxu0 %v4821
      %5038 = vmatprep.subr.mxu0 0.0
      %5039 = vmatpush1.msra.mxu0 %v4820
      %5040 = vmatprep.subr.mxu0 0.0
      %5041 = vmatpush2.msra.mxu0 0.0
      %5042 = vmatprep.subr.mxu0 0.0
      %5043 = vmatpush2.msra.mxu0 0.0
      %5044 = vmatprep.subr.mxu0 0.0
      %5045 = vmatpush2.msra.mxu0 0.0
      %5046 = vmatprep.subr.mxu0 0.0
      %5047 = vmatpush2.msra.mxu0 0.0
      %5048 = vmatprep.subr.mxu0 0.0
      %5049 = vmatpush2.msra.mxu0 0.0
      %5050 = vmatprep.subr.mxu0 0.0
      %5051 = vmatpush2.msra.mxu0 0.0
      %5052 = vmatprep.subr.mxu0 0.0
      %5053 = vmatpush2.msra.mxu0 0.0
      %5054 = vmatprep.subr.mxu0 0.0
      %5055 = vmatpush2.msra.mxu0 0.0
      %5056 = vmatprep.subr.mxu0 0.0
      %5057 = vmatpush2.msra.mxu0 0.0
      %5058 = vmatprep.subr.mxu0 0.0
      %5059 = vmatpush2.msra.mxu0 0.0
      %5060 = vmatprep.subr.mxu0 0.0
      %5061 = vmatpush2.msra.mxu0 0.0
      %5062 = vmatprep.subr.mxu0 0.0
      %5063 = vmatpush2.msra.mxu0 0.0
      %5064 = vmatprep.subr.mxu0 0.0
      %5065 = vmatpush2.msra.mxu0 0.0
      %5066 = vmatprep.subr.mxu0 0.0
      %5067 = vmatpush2.msra.mxu0 0.0
      %5068 = vmatprep.subr.mxu0 0.0
      %5069 = vmatpush2.msra.mxu0 0.0
      %5070 = vmatprep.subr.mxu0 0.0
      %5071 = vmatpush2.msra.mxu0 0.0
      %5072 = vmatprep.mubr.f32.mxu0 0.0
      %5073 = vmatmul.mubr.f32.gmra.mxu0 %v4806
      %v5074 = vpop.f32.mrf.mxu0
      %v5075 = vadd.f32 %v4945, %v5074
      %v5076 = vpop.f32.mrf.mxu0
      %5077 = vmatprep.mubr.f32.mxu0 0.0
      %5078 = vmatmul.mubr.f32.gmra.mxu0 %v4807
      %v5079 = vpop.f32.mrf.mxu0
      %v5080 = vadd.f32 %v4950, %v5079
      %v5081 = vpop.f32.mrf.mxu0
      %5082 = vmatprep.mubr.f32.mxu0 0.0
      %5083 = vmatmul.mubr.f32.gmra.mxu0 %v4808
      %v5084 = vpop.f32.mrf.mxu0
      %v5085 = vadd.f32 %v4955, %v5084
      %v5086 = vpop.f32.mrf.mxu0
      %5087 = vmatprep.mubr.f32.mxu0 0.0
      %5088 = vmatmul.mubr.f32.gmra.mxu0 %v4809
      %v5089 = vpop.f32.mrf.mxu0
      %v5090 = vadd.f32 %v4960, %v5089
      %v5091 = vpop.f32.mrf.mxu0
      %5092 = vmatprep.mubr.f32.mxu0 0.0
      %5093 = vmatmul.mubr.f32.gmra.mxu0 %v4810
      %v5094 = vpop.f32.mrf.mxu0
      %v5095 = vadd.f32 %v4965, %v5094
      %v5096 = vpop.f32.mrf.mxu0
      %5097 = vmatprep.mubr.f32.mxu0 0.0
      %5098 = vmatmul.mubr.f32.gmra.mxu0 %v4811
      %v5099 = vpop.f32.mrf.mxu0
      %v5100 = vadd.f32 %v4970, %v5099
      %v5101 = vpop.f32.mrf.mxu0
      %5102 = vmatprep.mubr.f32.mxu0 0.0
      %5103 = vmatmul.mubr.f32.gmra.mxu0 %v4812
      %v5104 = vpop.f32.mrf.mxu0
      %v5105 = vadd.f32 %v4975, %v5104
      %v5106 = vpop.f32.mrf.mxu0
      %5107 = vmatprep.mubr.f32.mxu0 0.0
      %5108 = vmatmul.mubr.f32.gmra.mxu0 %v4813
      %v5109 = vpop.f32.mrf.mxu0
      %v5110 = vadd.f32 %v4980, %v5109
      %v5111 = vpop.f32.mrf.mxu0
      %5112 = vmatprep.mubr.f32.mxu0 0.0
      %5113 = vmatmul.mubr.f32.gmra.mxu0 %v4814
      %v5114 = vpop.f32.mrf.mxu0
      %v5115 = vadd.f32 %v4985, %v5114
      %v5116 = vpop.f32.mrf.mxu0
      %5117 = vmatprep.mubr.f32.mxu0 0.0
      %5118 = vmatmul.mubr.f32.gmra.mxu0 %v4815
      %v5119 = vpop.f32.mrf.mxu0
      %v5120 = vadd.f32 %v4990, %v5119
      %v5121 = vpop.f32.mrf.mxu0
      %5122 = vmatprep.mubr.f32.mxu0 0.0
      %5123 = vmatmul.mubr.f32.gmra.mxu0 %v4816
      %v5124 = vpop.f32.mrf.mxu0
      %v5125 = vadd.f32 %v4995, %v5124
      %v5126 = vpop.f32.mrf.mxu0
      %5127 = vmatprep.mubr.f32.mxu0 0.0
      %5128 = vmatmul.mubr.f32.gmra.mxu0 %v4817
      %v5129 = vpop.f32.mrf.mxu0
      %v5130 = vadd.f32 %v5000, %v5129
      %v5131 = vpop.f32.mrf.mxu0
      %5132 = vmatprep.mubr.f32.mxu0 0.0
      %5133 = vmatmul.mubr.f32.gmra.mxu0 %v4818
      %v5134 = vpop.f32.mrf.mxu0
      %v5135 = vadd.f32 %v5005, %v5134
      %v5136 = vpop.f32.mrf.mxu0
      %5137 = vdwg.mxu0
      %v5138 = vld [vmem:[%s4 + $0x4] sm:$0x1]
      %v5139 = vlaneseq
      %v5140 = vshrl.u32 %v5139, 7
      %v5141 = vsub.s32 0, %v5140
      %v5142 = vrot.slane %v5138, %v5141
      %v5143 = vadd.f32 %v5075, %v5142
      %v5144 = vadd.f32 %v5080, %v5142
      %v5145 = vadd.f32 %v5085, %v5142
      %v5146 = vadd.f32 %v5090, %v5142
      %v5147 = vadd.f32 %v5095, %v5142
      %v5148 = vadd.f32 %v5100, %v5142
      %v5149 = vadd.f32 %v5105, %v5142
      %v5150 = vadd.f32 %v5110, %v5142
      %v5151 = vadd.f32 %v5115, %v5142
      %v5152 = vadd.f32 %v5120, %v5142
      %v5153 = vadd.f32 %v5125, %v5142
      %v5154 = vadd.f32 %v5130, %v5142
      %v5155 = vadd.f32 %v5135, %v5142
      %v5156 = vmul.f32 %v5143, %v1439
      %v5157 = vmul.f32 %v5144, %v1444
      %v5158 = vmul.f32 %v5145, %v1449
      %v5159 = vmul.f32 %v5146, %v1454
      %v5160 = vmul.f32 %v5147, %v1459
      %v5161 = vmul.f32 %v5148, %v1464
      %v5162 = vmul.f32 %v5149, %v1469
      %v5163 = vmul.f32 %v5150, %v1474
      %v5164 = vmul.f32 %v5151, %v1479
      %v5165 = vmul.f32 %v5152, %v1484
      %v5166 = vmul.f32 %v5153, %v1489
      %v5167 = vmul.f32 %v5154, %v1494
      %v5168 = vmul.f32 %v5155, %v1499
      %v5169 = vadd.f32 %v5156, %v4278
      %v5170 = vadd.f32 %v5157, %v4279
      %v5171 = vadd.f32 %v5158, %v4280
      %v5172 = vadd.f32 %v5159, %v4281
      %v5173 = vadd.f32 %v5160, %v4282
      %v5174 = vadd.f32 %v5161, %v4283
      %v5175 = vadd.f32 %v5162, %v4284
      %v5176 = vadd.f32 %v5163, %v4285
      %v5177 = vadd.f32 %v5164, %v4286
      %v5178 = vadd.f32 %v5165, %v4287
      %v5179 = vadd.f32 %v5166, %v4288
      %v5180 = vadd.f32 %v5167, %v4289
      %v5181 = vadd.f32 %v5168, %v4290
      %v5182 = vmax.f32 %v5169, 0.0
      %v5183 = vmax.f32 %v5170, 0.0
      %v5184 = vmax.f32 %v5171, 0.0
      %v5185 = vmax.f32 %v5172, 0.0
      %v5186 = vmax.f32 %v5173, 0.0
      %v5187 = vmax.f32 %v5174, 0.0
      %v5188 = vmax.f32 %v5175, 0.0
      %v5189 = vmax.f32 %v5176, 0.0
      %v5190 = vmax.f32 %v5177, 0.0
      %v5191 = vmax.f32 %v5178, 0.0
      %v5192 = vmax.f32 %v5179, 0.0
      %v5193 = vmax.f32 %v5180, 0.0
      %v5194 = vmax.f32 %v5181, 0.0
      %5195 = vst.msk [vmem:[#allocation2 + $0x10] sm:$0xff] %vm519, %v5182
      %5196 = vst.msk [vmem:[#allocation2 + $0x18] sm:$0xff] %vm519, %v5183
      %5197 = vst.msk [vmem:[#allocation2 + $0x20] sm:$0xff] %vm519, %v5184
      %5198 = vst.msk [vmem:[#allocation2 + $0x28] sm:$0xff] %vm519, %v5185
      %5199 = vst.msk [vmem:[#allocation2 + $0x30] sm:$0xff] %vm519, %v5186
      %5200 = vst.msk [vmem:[#allocation2 + $0x38] sm:$0xff] %vm519, %v5187
      %5201 = vst.msk [vmem:[#allocation2 + $0x40] sm:$0xff] %vm519, %v5188
      %5202 = vst.msk [vmem:[#allocation2 + $0x48] sm:$0xff] %vm519, %v5189
      %5203 = vst.msk [vmem:[#allocation2 + $0x50] sm:$0xff] %vm519, %v5190
      %5204 = vst.msk [vmem:[#allocation2 + $0x58] sm:$0xff] %vm519, %v5191
      %5205 = vst.msk [vmem:[#allocation2 + $0x60] sm:$0xff] %vm519, %v5192
      %5206 = vst.msk [vmem:[#allocation2 + $0x68] sm:$0xff] %vm519, %v5193
      %5207 = vst.msk [vmem:[#allocation2 + $0x70] sm:$0xf] %vm565, %v5194
      %v5208 = vld [vmem:[#allocation2 + $0x10] sm:$0xff]
      %v5209 = vld [vmem:[#allocation2 + $0x18] sm:$0xff]
      %v5210 = vld [vmem:[#allocation2 + $0x20] sm:$0xff]
      %v5211 = vld [vmem:[#allocation2 + $0x28] sm:$0xff]
      %v5212 = vld [vmem:[#allocation2 + $0x30] sm:$0xff]
      %v5213 = vld [vmem:[#allocation2 + $0x38] sm:$0xff]
      %v5214 = vld [vmem:[#allocation2 + $0x40] sm:$0xff]
      %v5215 = vld [vmem:[#allocation2 + $0x48] sm:$0xff]
      %v5216 = vld [vmem:[#allocation2 + $0x50] sm:$0xff]
      %v5217 = vld [vmem:[#allocation2 + $0x58] sm:$0xff]
      %v5218 = vld [vmem:[#allocation2 + $0x60] sm:$0xff]
      %v5219 = vld [vmem:[#allocation2 + $0x68] sm:$0xff]
      %v5220 = vld [vmem:[#allocation2 + $0x70] sm:$0xf]
      %v5221 = vld [vmem:[%s5] sm:$0xff]
      %v5222 = vld [vmem:[%s5 + $0x8] sm:$0xff]
      %v5223 = vld [vmem:[%s6] sm:$0x1]
      %v5225 = vlaneseq
      %v5226 = vshrl.u32 %v5225, 7
      %v5227 = vsub.s32 0, %v5226
      %v5228 = vrot.slane %v5223, %v5227
      %v5231 = vsel %vm519, %v5208, 0
      %v5234 = vsel %vm519, %v5209, 0
      %v5237 = vsel %vm519, %v5210, 0
      %v5240 = vsel %vm519, %v5211, 0
      %v5243 = vsel %vm519, %v5212, 0
      %v5246 = vsel %vm519, %v5213, 0
      %v5249 = vsel %vm519, %v5214, 0
      %v5252 = vsel %vm519, %v5215, 0
      %v5255 = vsel %vm519, %v5216, 0
      %v5258 = vsel %vm519, %v5217, 0
      %v5261 = vsel %vm519, %v5218, 0
      %v5264 = vsel %vm519, %v5219, 0
      %v5267 = vsel %vm519, %v5220, 0
      %5269 = vmatprep.subr.mxu0 0.0
      %5270 = vmatpush1.msra.mxu0 0.0
      %5271 = vmatprep.subr.mxu0 0.0
      %5272 = vmatpush1.msra.mxu0 0.0
      %5273 = vmatprep.subr.mxu0 0.0
      %5274 = vmatpush1.msra.mxu0 0.0
      %5275 = vmatprep.subr.mxu0 0.0
      %5276 = vmatpush1.msra.mxu0 0.0
      %5277 = vmatprep.subr.mxu0 0.0
      %5278 = vmatpush1.msra.mxu0 0.0
      %5279 = vmatprep.subr.mxu0 0.0
      %5280 = vmatpush1.msra.mxu0 0.0
      %5281 = vmatprep.subr.mxu0 0.0
      %5282 = vmatpush1.msra.mxu0 0.0
      %5283 = vmatprep.subr.mxu0 0.0
      %5284 = vmatpush1.msra.mxu0 0.0
      %5285 = vmatprep.subr.mxu0 0.0
      %5286 = vmatpush1.msra.mxu0 0.0
      %5287 = vmatprep.subr.mxu0 0.0
      %5288 = vmatpush1.msra.mxu0 0.0
      %5289 = vmatprep.subr.mxu0 0.0
      %5290 = vmatpush1.msra.mxu0 0.0
      %5291 = vmatprep.subr.mxu0 0.0
      %5292 = vmatpush1.msra.mxu0 0.0
      %5293 = vmatprep.subr.mxu0 0.0
      %5294 = vmatpush1.msra.mxu0 0.0
      %5295 = vmatprep.subr.mxu0 0.0
      %5296 = vmatpush1.msra.mxu0 0.0
      %5297 = vmatprep.subr.mxu0 0.0
      %5298 = vmatpush1.msra.mxu0 %v5222
      %5299 = vmatprep.subr.mxu0 0.0
      %5300 = vmatpush1.msra.mxu0 %v5221
      %5301 = vmatprep.subr.mxu0 0.0
      %5302 = vmatpush2.msra.mxu0 0.0
      %5303 = vmatprep.subr.mxu0 0.0
      %5304 = vmatpush2.msra.mxu0 0.0
      %5305 = vmatprep.subr.mxu0 0.0
      %5306 = vmatpush2.msra.mxu0 0.0
      %5307 = vmatprep.subr.mxu0 0.0
      %5308 = vmatpush2.msra.mxu0 0.0
      %5309 = vmatprep.subr.mxu0 0.0
      %5310 = vmatpush2.msra.mxu0 0.0
      %5311 = vmatprep.subr.mxu0 0.0
      %5312 = vmatpush2.msra.mxu0 0.0
      %5313 = vmatprep.subr.mxu0 0.0
      %5314 = vmatpush2.msra.mxu0 0.0
      %5315 = vmatprep.subr.mxu0 0.0
      %5316 = vmatpush2.msra.mxu0 0.0
      %5317 = vmatprep.subr.mxu0 0.0
      %5318 = vmatpush2.msra.mxu0 0.0
      %5319 = vmatprep.subr.mxu0 0.0
      %5320 = vmatpush2.msra.mxu0 0.0
      %5321 = vmatprep.subr.mxu0 0.0
      %5322 = vmatpush2.msra.mxu0 0.0
      %5323 = vmatprep.subr.mxu0 0.0
      %5324 = vmatpush2.msra.mxu0 0.0
      %5325 = vmatprep.subr.mxu0 0.0
      %5326 = vmatpush2.msra.mxu0 0.0
      %5327 = vmatprep.subr.mxu0 0.0
      %5328 = vmatpush2.msra.mxu0 0.0
      %5329 = vmatprep.subr.mxu0 0.0
      %5330 = vmatpush2.msra.mxu0 0.0
      %5331 = vmatprep.subr.mxu0 0.0
      %5332 = vmatpush2.msra.mxu0 0.0
      %5333 = vmatprep.mubr.f32.mxu0 0.0
      %5334 = vmatmul.mubr.f32.gmra.mxu0 %v5231
      %v5335 = vpop.f32.mrf.mxu0
      %v5336 = vadd.f32 %v5228, %v5335
      %v5337 = vpop.f32.mrf.mxu0
      %5338 = vmatprep.mubr.f32.mxu0 0.0
      %5339 = vmatmul.mubr.f32.gmra.mxu0 %v5234
      %v5340 = vpop.f32.mrf.mxu0
      %v5341 = vadd.f32 %v5228, %v5340
      %v5342 = vpop.f32.mrf.mxu0
      %5343 = vmatprep.mubr.f32.mxu0 0.0
      %5344 = vmatmul.mubr.f32.gmra.mxu0 %v5237
      %v5345 = vpop.f32.mrf.mxu0
      %v5346 = vadd.f32 %v5228, %v5345
      %v5347 = vpop.f32.mrf.mxu0
      %5348 = vmatprep.mubr.f32.mxu0 0.0
      %5349 = vmatmul.mubr.f32.gmra.mxu0 %v5240
      %v5350 = vpop.f32.mrf.mxu0
      %v5351 = vadd.f32 %v5228, %v5350
      %v5352 = vpop.f32.mrf.mxu0
      %5353 = vmatprep.mubr.f32.mxu0 0.0
      %5354 = vmatmul.mubr.f32.gmra.mxu0 %v5243
      %v5355 = vpop.f32.mrf.mxu0
      %v5356 = vadd.f32 %v5228, %v5355
      %v5357 = vpop.f32.mrf.mxu0
      %5358 = vmatprep.mubr.f32.mxu0 0.0
      %5359 = vmatmul.mubr.f32.gmra.mxu0 %v5246
      %v5360 = vpop.f32.mrf.mxu0
      %v5361 = vadd.f32 %v5228, %v5360
      %v5362 = vpop.f32.mrf.mxu0
      %5363 = vmatprep.mubr.f32.mxu0 0.0
      %5364 = vmatmul.mubr.f32.gmra.mxu0 %v5249
      %v5365 = vpop.f32.mrf.mxu0
      %v5366 = vadd.f32 %v5228, %v5365
      %v5367 = vpop.f32.mrf.mxu0
      %5368 = vmatprep.mubr.f32.mxu0 0.0
      %5369 = vmatmul.mubr.f32.gmra.mxu0 %v5252
      %v5370 = vpop.f32.mrf.mxu0
      %v5371 = vadd.f32 %v5228, %v5370
      %v5372 = vpop.f32.mrf.mxu0
      %5373 = vmatprep.mubr.f32.mxu0 0.0
      %5374 = vmatmul.mubr.f32.gmra.mxu0 %v5255
      %v5375 = vpop.f32.mrf.mxu0
      %v5376 = vadd.f32 %v5228, %v5375
      %v5377 = vpop.f32.mrf.mxu0
      %5378 = vmatprep.mubr.f32.mxu0 0.0
      %5379 = vmatmul.mubr.f32.gmra.mxu0 %v5258
      %v5380 = vpop.f32.mrf.mxu0
      %v5381 = vadd.f32 %v5228, %v5380
      %v5382 = vpop.f32.mrf.mxu0
      %5383 = vmatprep.mubr.f32.mxu0 0.0
      %5384 = vmatmul.mubr.f32.gmra.mxu0 %v5261
      %v5385 = vpop.f32.mrf.mxu0
      %v5386 = vadd.f32 %v5228, %v5385
      %v5387 = vpop.f32.mrf.mxu0
      %5388 = vmatprep.mubr.f32.mxu0 0.0
      %5389 = vmatmul.mubr.f32.gmra.mxu0 %v5264
      %v5390 = vpop.f32.mrf.mxu0
      %v5391 = vadd.f32 %v5228, %v5390
      %v5392 = vpop.f32.mrf.mxu0
      %5393 = vmatprep.mubr.f32.mxu0 0.0
      %5394 = vmatmul.mubr.f32.gmra.mxu0 %v5267
      %v5395 = vpop.f32.mrf.mxu0
      %v5396 = vadd.f32 %v5228, %v5395
      %v5397 = vpop.f32.mrf.mxu0
      %5398 = vdwg.mxu0
      %v5399 = vmax.f32 %v5336, 0.0
      %v5400 = vmax.f32 %v5341, 0.0
      %v5401 = vmax.f32 %v5346, 0.0
      %v5402 = vmax.f32 %v5351, 0.0
      %v5403 = vmax.f32 %v5356, 0.0
      %v5404 = vmax.f32 %v5361, 0.0
      %v5405 = vmax.f32 %v5366, 0.0
      %v5406 = vmax.f32 %v5371, 0.0
      %v5407 = vmax.f32 %v5376, 0.0
      %v5408 = vmax.f32 %v5381, 0.0
      %v5409 = vmax.f32 %v5386, 0.0
      %v5410 = vmax.f32 %v5391, 0.0
      %v5411 = vmax.f32 %v5396, 0.0
      %v5412 = vmul.f32 %v5399, %v1439
      %v5413 = vmul.f32 %v5400, %v1444
      %v5414 = vmul.f32 %v5401, %v1449
      %v5415 = vmul.f32 %v5402, %v1454
      %v5416 = vmul.f32 %v5403, %v1459
      %v5417 = vmul.f32 %v5404, %v1464
      %v5418 = vmul.f32 %v5405, %v1469
      %v5419 = vmul.f32 %v5406, %v1474
      %v5420 = vmul.f32 %v5407, %v1479
      %v5421 = vmul.f32 %v5408, %v1484
      %v5422 = vmul.f32 %v5409, %v1489
      %v5423 = vmul.f32 %v5410, %v1494
      %v5424 = vmul.f32 %v5411, %v1499
      %v5425 = vld [vmem:[%s7] sm:$0xff]
      %v5426 = vld [vmem:[%s7 + $0x8] sm:$0xff]
      %v5427 = vld [vmem:[%s7 + $0x10] sm:$0xff]
      %v5428 = vld [vmem:[%s7 + $0x18] sm:$0xff]
      %v5429 = vld [vmem:[%s7 + $0x20] sm:$0xff]
      %v5430 = vld [vmem:[%s7 + $0x28] sm:$0xff]
      %v5431 = vld [vmem:[%s7 + $0x30] sm:$0xff]
      %v5432 = vld [vmem:[%s7 + $0x38] sm:$0xff]
      %v5433 = vld [vmem:[%s7 + $0x40] sm:$0xff]
      %v5434 = vld [vmem:[%s7 + $0x48] sm:$0xff]
      %v5435 = vld [vmem:[%s7 + $0x50] sm:$0xff]
      %v5436 = vld [vmem:[%s7 + $0x58] sm:$0xff]
      %v5437 = vld [vmem:[%s7 + $0x60] sm:$0xff]
      %v5438 = vld [vmem:[%s7 + $0x68] sm:$0xff]
      %v5439 = vld [vmem:[%s7 + $0x70] sm:$0xff]
      %v5440 = vld [vmem:[%s7 + $0x78] sm:$0xff]
      %v5441 = vld [vmem:[%s7 + $0x80] sm:$0xff]
      %v5442 = vld [vmem:[%s7 + $0x88] sm:$0xff]
      %v5443 = vld [vmem:[%s7 + $0x90] sm:$0xff]
      %v5444 = vld [vmem:[%s7 + $0x98] sm:$0xff]
      %v5445 = vld [vmem:[%s7 + $0xa0] sm:$0xff]
      %v5446 = vld [vmem:[%s7 + $0xa8] sm:$0xff]
      %v5447 = vld [vmem:[%s7 + $0xb0] sm:$0xff]
      %v5448 = vld [vmem:[%s7 + $0xb8] sm:$0xff]
      %v5449 = vld [vmem:[%s7 + $0xc0] sm:$0xff]
      %v5450 = vld [vmem:[%s7 + $0xc8] sm:$0xff]
      %v5451 = vld [vmem:[%s7 + $0xd0] sm:$0xff]
      %v5452 = vld [vmem:[%s7 + $0xd8] sm:$0xff]
      %v5453 = vld [vmem:[%s7 + $0xe0] sm:$0xff]
      %v5454 = vld [vmem:[%s7 + $0xe8] sm:$0xff]
      %v5455 = vld [vmem:[%s7 + $0xf0] sm:$0xff]
      %v5456 = vld [vmem:[%s7 + $0xf8] sm:$0xff]
      %v5457 = vld [vmem:[%s8] sm:$0xff]
      %v5458 = vld [vmem:[%s8 + $0x8] sm:$0xff]
      %v5459 = vld [vmem:[%s8 + $0x10] sm:$0xff]
      %v5460 = vld [vmem:[%s8 + $0x18] sm:$0xff]
      %v5461 = vld [vmem:[%s8 + $0x20] sm:$0xff]
      %v5462 = vld [vmem:[%s8 + $0x28] sm:$0xff]
      %v5463 = vld [vmem:[%s8 + $0x30] sm:$0xff]
      %v5464 = vld [vmem:[%s8 + $0x38] sm:$0xff]
      %v5465 = vld [vmem:[%s8 + $0x40] sm:$0xff]
      %v5466 = vld [vmem:[%s8 + $0x48] sm:$0xff]
      %v5467 = vld [vmem:[%s8 + $0x50] sm:$0xff]
      %v5468 = vld [vmem:[%s8 + $0x58] sm:$0xff]
      %v5469 = vld [vmem:[%s8 + $0x60] sm:$0xff]
      %v5470 = vld [vmem:[%s8 + $0x68] sm:$0xff]
      %v5471 = vld [vmem:[%s8 + $0x70] sm:$0xff]
      %v5472 = vld [vmem:[%s8 + $0x78] sm:$0xff]
      %v5473 = vld [vmem:[%s8 + $0x80] sm:$0xff]
      %v5474 = vld [vmem:[%s8 + $0x88] sm:$0xff]
      %v5475 = vld [vmem:[%s8 + $0x90] sm:$0xff]
      %v5476 = vld [vmem:[%s8 + $0x98] sm:$0xff]
      %v5477 = vld [vmem:[%s8 + $0xa0] sm:$0xff]
      %v5478 = vld [vmem:[%s8 + $0xa8] sm:$0xff]
      %v5479 = vld [vmem:[%s8 + $0xb0] sm:$0xff]
      %v5480 = vld [vmem:[%s8 + $0xb8] sm:$0xff]
      %v5481 = vld [vmem:[%s8 + $0xc0] sm:$0xff]
      %v5482 = vld [vmem:[%s8 + $0xc8] sm:$0xff]
      %v5483 = vld [vmem:[%s8 + $0xd0] sm:$0xff]
      %v5484 = vld [vmem:[%s8 + $0xd8] sm:$0xff]
      %v5485 = vld [vmem:[%s8 + $0xe0] sm:$0xff]
      %v5486 = vld [vmem:[%s8 + $0xe8] sm:$0xff]
      %v5487 = vld [vmem:[%s8 + $0xf0] sm:$0xff]
      %v5488 = vld [vmem:[%s8 + $0xf8] sm:$0xff]
      %vm5489 = vcmask 818176
      %v5491 = vsel %vm5489, %v5425, 0
      %v5494 = vsel %vm5489, %v5426, 0
      %v5497 = vsel %vm5489, %v5427, 0
      %v5500 = vsel %vm5489, %v5428, 0
      %v5503 = vsel %vm5489, %v5429, 0
      %v5506 = vsel %vm5489, %v5430, 0
      %v5509 = vsel %vm5489, %v5431, 0
      %v5512 = vsel %vm5489, %v5432, 0
      %v5515 = vsel %vm5489, %v5433, 0
      %v5518 = vsel %vm5489, %v5434, 0
      %v5521 = vsel %vm5489, %v5435, 0
      %v5524 = vsel %vm5489, %v5436, 0
      %v5527 = vsel %vm5489, %v5437, 0
      %v5530 = vsel %vm5489, %v5438, 0
      %v5533 = vsel %vm5489, %v5439, 0
      %v5536 = vsel %vm5489, %v5440, 0
      %v5539 = vsel %vm5489, %v5441, 0
      %v5542 = vsel %vm5489, %v5442, 0
      %v5545 = vsel %vm5489, %v5443, 0
      %v5548 = vsel %vm5489, %v5444, 0
      %v5551 = vsel %vm5489, %v5445, 0
      %v5554 = vsel %vm5489, %v5446, 0
      %v5557 = vsel %vm5489, %v5447, 0
      %v5560 = vsel %vm5489, %v5448, 0
      %v5563 = vsel %vm5489, %v5449, 0
      %v5566 = vsel %vm5489, %v5450, 0
      %v5569 = vsel %vm5489, %v5451, 0
      %v5572 = vsel %vm5489, %v5452, 0
      %v5575 = vsel %vm5489, %v5453, 0
      %v5578 = vsel %vm5489, %v5454, 0
      %v5581 = vsel %vm5489, %v5455, 0
      %v5584 = vsel %vm5489, %v5456, 0
      %vm5586 = vcmask 1043456
      %v5588 = vsel %vm5586, %v5424, 0
      %5590 = vmatprep.subr.mxu0 0.0
      %5591 = vmatpush1.msra.mxu0 0.0
      %5592 = vmatprep.subr.mxu0 0.0
      %5593 = vmatpush1.msra.mxu0 0.0
      %5594 = vmatprep.subr.mxu0 0.0
      %5595 = vmatpush1.msra.mxu0 0.0
      %5596 = vmatprep.subr.mxu0 0.0
      %5597 = vmatpush1.msra.mxu0 %v5588
      %5598 = vmatprep.subr.mxu0 0.0
      %5599 = vmatpush1.msra.mxu0 %v5423
      %5600 = vmatprep.subr.mxu0 0.0
      %5601 = vmatpush1.msra.mxu0 %v5422
      %5602 = vmatprep.subr.mxu0 0.0
      %5603 = vmatpush1.msra.mxu0 %v5421
      %5604 = vmatprep.subr.mxu0 0.0
      %5605 = vmatpush1.msra.mxu0 %v5420
      %5606 = vmatprep.subr.mxu0 0.0
      %5607 = vmatpush1.msra.mxu0 %v5419
      %5608 = vmatprep.subr.mxu0 0.0
      %5609 = vmatpush1.msra.mxu0 %v5418
      %5610 = vmatprep.subr.mxu0 0.0
      %5611 = vmatpush1.msra.mxu0 %v5417
      %5612 = vmatprep.subr.mxu0 0.0
      %5613 = vmatpush1.msra.mxu0 %v5416
      %5614 = vmatprep.subr.mxu0 0.0
      %5615 = vmatpush1.msra.mxu0 %v5415
      %5616 = vmatprep.subr.mxu0 0.0
      %5617 = vmatpush1.msra.mxu0 %v5414
      %5618 = vmatprep.subr.mxu0 0.0
      %5619 = vmatpush1.msra.mxu0 %v5413
      %5620 = vmatprep.subr.mxu0 0.0
      %5621 = vmatpush1.msra.mxu0 %v5412
      %5622 = vmatprep.subr.mxu0 0.0
      %5623 = vmatpush2.msra.mxu0 0.0
      %5624 = vmatprep.subr.mxu0 0.0
      %5625 = vmatpush2.msra.mxu0 0.0
      %5626 = vmatprep.subr.mxu0 0.0
      %5627 = vmatpush2.msra.mxu0 0.0
      %5628 = vmatprep.subr.mxu0 0.0
      %5629 = vmatpush2.msra.mxu0 0.0
      %5630 = vmatprep.subr.mxu0 0.0
      %5631 = vmatpush2.msra.mxu0 0.0
      %5632 = vmatprep.subr.mxu0 0.0
      %5633 = vmatpush2.msra.mxu0 0.0
      %5634 = vmatprep.subr.mxu0 0.0
      %5635 = vmatpush2.msra.mxu0 0.0
      %5636 = vmatprep.subr.mxu0 0.0
      %5637 = vmatpush2.msra.mxu0 0.0
      %5638 = vmatprep.subr.mxu0 0.0
      %5639 = vmatpush2.msra.mxu0 0.0
      %5640 = vmatprep.subr.mxu0 0.0
      %5641 = vmatpush2.msra.mxu0 0.0
      %5642 = vmatprep.subr.mxu0 0.0
      %5643 = vmatpush2.msra.mxu0 0.0
      %5644 = vmatprep.subr.mxu0 0.0
      %5645 = vmatpush2.msra.mxu0 0.0
      %5646 = vmatprep.subr.mxu0 0.0
      %5647 = vmatpush2.msra.mxu0 0.0
      %5648 = vmatprep.subr.mxu0 0.0
      %5649 = vmatpush2.msra.mxu0 0.0
      %5650 = vmatprep.subr.mxu0 0.0
      %5651 = vmatpush2.msra.mxu0 0.0
      %5652 = vmatprep.subr.mxu0 0.0
      %5653 = vmatpush2.msra.mxu0 0.0
      %5654 = vmatprep.mubr.f32.mxu0 0.0
      %5655 = vmatmul.mubr.f32.gmra.mxu0 %v5491
      %v5656 = vpop.f32.mrf.mxu0
      %v5657 = vadd.f32 %v5457, %v5656
      %v5658 = vpop.f32.mrf.mxu0
      %5659 = vmatprep.mubr.f32.mxu0 0.0
      %5660 = vmatmul.mubr.f32.gmra.mxu0 %v5494
      %v5661 = vpop.f32.mrf.mxu0
      %v5662 = vadd.f32 %v5458, %v5661
      %v5663 = vpop.f32.mrf.mxu0
      %5664 = vmatprep.mubr.f32.mxu0 0.0
      %5665 = vmatmul.mubr.f32.gmra.mxu0 %v5497
      %v5666 = vpop.f32.mrf.mxu0
      %v5667 = vadd.f32 %v5459, %v5666
      %v5668 = vpop.f32.mrf.mxu0
      %5669 = vmatprep.mubr.f32.mxu0 0.0
      %5670 = vmatmul.mubr.f32.gmra.mxu0 %v5500
      %v5671 = vpop.f32.mrf.mxu0
      %v5672 = vadd.f32 %v5460, %v5671
      %v5673 = vpop.f32.mrf.mxu0
      %5674 = vmatprep.mubr.f32.mxu0 0.0
      %5675 = vmatmul.mubr.f32.gmra.mxu0 %v5503
      %v5676 = vpop.f32.mrf.mxu0
      %v5677 = vadd.f32 %v5461, %v5676
      %v5678 = vpop.f32.mrf.mxu0
      %5679 = vmatprep.mubr.f32.mxu0 0.0
      %5680 = vmatmul.mubr.f32.gmra.mxu0 %v5506
      %v5681 = vpop.f32.mrf.mxu0
      %v5682 = vadd.f32 %v5462, %v5681
      %v5683 = vpop.f32.mrf.mxu0
      %5684 = vmatprep.mubr.f32.mxu0 0.0
      %5685 = vmatmul.mubr.f32.gmra.mxu0 %v5509
      %v5686 = vpop.f32.mrf.mxu0
      %v5687 = vadd.f32 %v5463, %v5686
      %v5688 = vpop.f32.mrf.mxu0
      %5689 = vmatprep.mubr.f32.mxu0 0.0
      %5690 = vmatmul.mubr.f32.gmra.mxu0 %v5512
      %v5691 = vpop.f32.mrf.mxu0
      %v5692 = vadd.f32 %v5464, %v5691
      %v5693 = vpop.f32.mrf.mxu0
      %5694 = vmatprep.mubr.f32.mxu0 0.0
      %5695 = vmatmul.mubr.f32.gmra.mxu0 %v5515
      %v5696 = vpop.f32.mrf.mxu0
      %v5697 = vadd.f32 %v5465, %v5696
      %v5698 = vpop.f32.mrf.mxu0
      %5699 = vmatprep.mubr.f32.mxu0 0.0
      %5700 = vmatmul.mubr.f32.gmra.mxu0 %v5518
      %v5701 = vpop.f32.mrf.mxu0
      %v5702 = vadd.f32 %v5466, %v5701
      %v5703 = vpop.f32.mrf.mxu0
      %5704 = vmatprep.mubr.f32.mxu0 0.0
      %5705 = vmatmul.mubr.f32.gmra.mxu0 %v5521
      %v5706 = vpop.f32.mrf.mxu0
      %v5707 = vadd.f32 %v5467, %v5706
      %v5708 = vpop.f32.mrf.mxu0
      %5709 = vmatprep.mubr.f32.mxu0 0.0
      %5710 = vmatmul.mubr.f32.gmra.mxu0 %v5524
      %v5711 = vpop.f32.mrf.mxu0
      %v5712 = vadd.f32 %v5468, %v5711
      %v5713 = vpop.f32.mrf.mxu0
      %5714 = vmatprep.mubr.f32.mxu0 0.0
      %5715 = vmatmul.mubr.f32.gmra.mxu0 %v5527
      %v5716 = vpop.f32.mrf.mxu0
      %v5717 = vadd.f32 %v5469, %v5716
      %v5718 = vpop.f32.mrf.mxu0
      %5719 = vmatprep.mubr.f32.mxu0 0.0
      %5720 = vmatmul.mubr.f32.gmra.mxu0 %v5530
      %v5721 = vpop.f32.mrf.mxu0
      %v5722 = vadd.f32 %v5470, %v5721
      %v5723 = vpop.f32.mrf.mxu0
      %5724 = vmatprep.mubr.f32.mxu0 0.0
      %5725 = vmatmul.mubr.f32.gmra.mxu0 %v5533
      %v5726 = vpop.f32.mrf.mxu0
      %v5727 = vadd.f32 %v5471, %v5726
      %v5728 = vpop.f32.mrf.mxu0
      %5729 = vmatprep.mubr.f32.mxu0 0.0
      %5730 = vmatmul.mubr.f32.gmra.mxu0 %v5536
      %v5731 = vpop.f32.mrf.mxu0
      %v5732 = vadd.f32 %v5472, %v5731
      %v5733 = vpop.f32.mrf.mxu0
      %5734 = vmatprep.mubr.f32.mxu0 0.0
      %5735 = vmatmul.mubr.f32.gmra.mxu0 %v5539
      %v5736 = vpop.f32.mrf.mxu0
      %v5737 = vadd.f32 %v5473, %v5736
      %v5738 = vpop.f32.mrf.mxu0
      %5739 = vmatprep.mubr.f32.mxu0 0.0
      %5740 = vmatmul.mubr.f32.gmra.mxu0 %v5542
      %v5741 = vpop.f32.mrf.mxu0
      %v5742 = vadd.f32 %v5474, %v5741
      %v5743 = vpop.f32.mrf.mxu0
      %5744 = vmatprep.mubr.f32.mxu0 0.0
      %5745 = vmatmul.mubr.f32.gmra.mxu0 %v5545
      %v5746 = vpop.f32.mrf.mxu0
      %v5747 = vadd.f32 %v5475, %v5746
      %v5748 = vpop.f32.mrf.mxu0
      %5749 = vmatprep.mubr.f32.mxu0 0.0
      %5750 = vmatmul.mubr.f32.gmra.mxu0 %v5548
      %v5751 = vpop.f32.mrf.mxu0
      %v5752 = vadd.f32 %v5476, %v5751
      %v5753 = vpop.f32.mrf.mxu0
      %5754 = vmatprep.mubr.f32.mxu0 0.0
      %5755 = vmatmul.mubr.f32.gmra.mxu0 %v5551
      %v5756 = vpop.f32.mrf.mxu0
      %v5757 = vadd.f32 %v5477, %v5756
      %v5758 = vpop.f32.mrf.mxu0
      %5759 = vmatprep.mubr.f32.mxu0 0.0
      %5760 = vmatmul.mubr.f32.gmra.mxu0 %v5554
      %v5761 = vpop.f32.mrf.mxu0
      %v5762 = vadd.f32 %v5478, %v5761
      %v5763 = vpop.f32.mrf.mxu0
      %5764 = vmatprep.mubr.f32.mxu0 0.0
      %5765 = vmatmul.mubr.f32.gmra.mxu0 %v5557
      %v5766 = vpop.f32.mrf.mxu0
      %v5767 = vadd.f32 %v5479, %v5766
      %v5768 = vpop.f32.mrf.mxu0
      %5769 = vmatprep.mubr.f32.mxu0 0.0
      %5770 = vmatmul.mubr.f32.gmra.mxu0 %v5560
      %v5771 = vpop.f32.mrf.mxu0
      %v5772 = vadd.f32 %v5480, %v5771
      %v5773 = vpop.f32.mrf.mxu0
      %5774 = vmatprep.mubr.f32.mxu0 0.0
      %5775 = vmatmul.mubr.f32.gmra.mxu0 %v5563
      %v5776 = vpop.f32.mrf.mxu0
      %v5777 = vadd.f32 %v5481, %v5776
      %v5778 = vpop.f32.mrf.mxu0
      %5779 = vmatprep.mubr.f32.mxu0 0.0
      %5780 = vmatmul.mubr.f32.gmra.mxu0 %v5566
      %v5781 = vpop.f32.mrf.mxu0
      %v5782 = vadd.f32 %v5482, %v5781
      %v5783 = vpop.f32.mrf.mxu0
      %5784 = vmatprep.mubr.f32.mxu0 0.0
      %5785 = vmatmul.mubr.f32.gmra.mxu0 %v5569
      %v5786 = vpop.f32.mrf.mxu0
      %v5787 = vadd.f32 %v5483, %v5786
      %v5788 = vpop.f32.mrf.mxu0
      %5789 = vmatprep.mubr.f32.mxu0 0.0
      %5790 = vmatmul.mubr.f32.gmra.mxu0 %v5572
      %v5791 = vpop.f32.mrf.mxu0
      %v5792 = vadd.f32 %v5484, %v5791
      %v5793 = vpop.f32.mrf.mxu0
      %5794 = vmatprep.mubr.f32.mxu0 0.0
      %5795 = vmatmul.mubr.f32.gmra.mxu0 %v5575
      %v5796 = vpop.f32.mrf.mxu0
      %v5797 = vadd.f32 %v5485, %v5796
      %v5798 = vpop.f32.mrf.mxu0
      %5799 = vmatprep.mubr.f32.mxu0 0.0
      %5800 = vmatmul.mubr.f32.gmra.mxu0 %v5578
      %v5801 = vpop.f32.mrf.mxu0
      %v5802 = vadd.f32 %v5486, %v5801
      %v5803 = vpop.f32.mrf.mxu0
      %5804 = vmatprep.mubr.f32.mxu0 0.0
      %5805 = vmatmul.mubr.f32.gmra.mxu0 %v5581
      %v5806 = vpop.f32.mrf.mxu0
      %v5807 = vadd.f32 %v5487, %v5806
      %v5808 = vpop.f32.mrf.mxu0
      %5809 = vmatprep.mubr.f32.mxu0 0.0
      %5810 = vmatmul.mubr.f32.gmra.mxu0 %v5584
      %v5811 = vpop.f32.mrf.mxu0
      %v5812 = vadd.f32 %v5488, %v5811
      %v5813 = vpop.f32.mrf.mxu0
      %5814 = vdwg.mxu0
      %v5815 = vmax.f32 %v5657, 0.0
      %v5816 = vmax.f32 %v5662, 0.0
      %v5817 = vmax.f32 %v5667, 0.0
      %v5818 = vmax.f32 %v5672, 0.0
      %v5819 = vmax.f32 %v5677, 0.0
      %v5820 = vmax.f32 %v5682, 0.0
      %v5821 = vmax.f32 %v5687, 0.0
      %v5822 = vmax.f32 %v5692, 0.0
      %v5823 = vmax.f32 %v5697, 0.0
      %v5824 = vmax.f32 %v5702, 0.0
      %v5825 = vmax.f32 %v5707, 0.0
      %v5826 = vmax.f32 %v5712, 0.0
      %v5827 = vmax.f32 %v5717, 0.0
      %v5828 = vmax.f32 %v5722, 0.0
      %v5829 = vmax.f32 %v5727, 0.0
      %v5830 = vmax.f32 %v5732, 0.0
      %v5831 = vmax.f32 %v5737, 0.0
      %v5832 = vmax.f32 %v5742, 0.0
      %v5833 = vmax.f32 %v5747, 0.0
      %v5834 = vmax.f32 %v5752, 0.0
      %v5835 = vmax.f32 %v5757, 0.0
      %v5836 = vmax.f32 %v5762, 0.0
      %v5837 = vmax.f32 %v5767, 0.0
      %v5838 = vmax.f32 %v5772, 0.0
      %v5839 = vmax.f32 %v5777, 0.0
      %v5840 = vmax.f32 %v5782, 0.0
      %v5841 = vmax.f32 %v5787, 0.0
      %v5842 = vmax.f32 %v5792, 0.0
      %v5843 = vmax.f32 %v5797, 0.0
      %v5844 = vmax.f32 %v5802, 0.0
      %v5845 = vmax.f32 %v5807, 0.0
      %v5846 = vmax.f32 %v5812, 0.0
      %v5847 = vld [vmem:[%s9] sm:$0xff]
      %v5848 = vld [vmem:[%s9 + $0x8] sm:$0xff]
      %v5849 = vld [vmem:[%s9 + $0x10] sm:$0xff]
      %v5850 = vld [vmem:[%s9 + $0x18] sm:$0xff]
      %v5851 = vld [vmem:[%s9 + $0x20] sm:$0xff]
      %v5852 = vld [vmem:[%s9 + $0x28] sm:$0xff]
      %v5853 = vld [vmem:[%s9 + $0x30] sm:$0xff]
      %v5854 = vld [vmem:[%s9 + $0x38] sm:$0xff]
      %v5855 = vld [vmem:[%s9 + $0x40] sm:$0xff]
      %v5856 = vld [vmem:[%s9 + $0x48] sm:$0xff]
      %v5857 = vld [vmem:[%s9 + $0x50] sm:$0xff]
      %v5858 = vld [vmem:[%s9 + $0x58] sm:$0xff]
      %v5859 = vld [vmem:[%s9 + $0x60] sm:$0xff]
      %v5860 = vld [vmem:[%s9 + $0x68] sm:$0xff]
      %v5861 = vld [vmem:[%s9 + $0x70] sm:$0xff]
      %v5862 = vld [vmem:[%s9 + $0x78] sm:$0xff]
      %v5863 = vld [vmem:[%s9 + $0x80] sm:$0xff]
      %v5864 = vld [vmem:[%s9 + $0x88] sm:$0xff]
      %v5865 = vld [vmem:[%s9 + $0x90] sm:$0xff]
      %v5866 = vld [vmem:[%s9 + $0x98] sm:$0xff]
      %v5867 = vld [vmem:[%s9 + $0xa0] sm:$0xff]
      %v5868 = vld [vmem:[%s9 + $0xa8] sm:$0xff]
      %v5869 = vld [vmem:[%s9 + $0xb0] sm:$0xff]
      %v5870 = vld [vmem:[%s9 + $0xb8] sm:$0xff]
      %v5871 = vld [vmem:[%s9 + $0xc0] sm:$0xff]
      %v5872 = vld [vmem:[%s9 + $0xc8] sm:$0xff]
      %v5873 = vld [vmem:[%s9 + $0xd0] sm:$0xff]
      %v5874 = vld [vmem:[%s9 + $0xd8] sm:$0xff]
      %v5875 = vld [vmem:[%s9 + $0xe0] sm:$0xff]
      %v5876 = vld [vmem:[%s9 + $0xe8] sm:$0xff]
      %v5877 = vld [vmem:[%s9 + $0xf0] sm:$0xff]
      %v5878 = vld [vmem:[%s9 + $0xf8] sm:$0xff]
      %v5879 = vmul.f32 %v5815, %v5847
      %v5880 = vmul.f32 %v5816, %v5848
      %v5881 = vmul.f32 %v5817, %v5849
      %v5882 = vmul.f32 %v5818, %v5850
      %v5883 = vmul.f32 %v5819, %v5851
      %v5884 = vmul.f32 %v5820, %v5852
      %v5885 = vmul.f32 %v5821, %v5853
      %v5886 = vmul.f32 %v5822, %v5854
      %v5887 = vmul.f32 %v5823, %v5855
      %v5888 = vmul.f32 %v5824, %v5856
      %v5889 = vmul.f32 %v5825, %v5857
      %v5890 = vmul.f32 %v5826, %v5858
      %v5891 = vmul.f32 %v5827, %v5859
      %v5892 = vmul.f32 %v5828, %v5860
      %v5893 = vmul.f32 %v5829, %v5861
      %v5894 = vmul.f32 %v5830, %v5862
      %v5895 = vmul.f32 %v5831, %v5863
      %v5896 = vmul.f32 %v5832, %v5864
      %v5897 = vmul.f32 %v5833, %v5865
      %v5898 = vmul.f32 %v5834, %v5866
      %v5899 = vmul.f32 %v5835, %v5867
      %v5900 = vmul.f32 %v5836, %v5868
      %v5901 = vmul.f32 %v5837, %v5869
      %v5902 = vmul.f32 %v5838, %v5870
      %v5903 = vmul.f32 %v5839, %v5871
      %v5904 = vmul.f32 %v5840, %v5872
      %v5905 = vmul.f32 %v5841, %v5873
      %v5906 = vmul.f32 %v5842, %v5874
      %v5907 = vmul.f32 %v5843, %v5875
      %v5908 = vmul.f32 %v5844, %v5876
      %v5909 = vmul.f32 %v5845, %v5877
      %v5910 = vmul.f32 %v5846, %v5878
      %vm5911 = vcmask 7168
      %v5912 = vsel %vm5911, %v5879, 0.0
      %v5913 = vsel %vm5911, %v5880, 0.0
      %v5914 = vadd.f32 %v5912, %v5913
      %v5915 = vsel %vm5911, %v5881, 0.0
      %v5916 = vadd.f32 %v5914, %v5915
      %v5917 = vsel %vm5911, %v5882, 0.0
      %v5918 = vadd.f32 %v5916, %v5917
      %v5919 = vsel %vm5911, %v5883, 0.0
      %v5920 = vadd.f32 %v5918, %v5919
      %v5921 = vsel %vm5911, %v5884, 0.0
      %v5922 = vadd.f32 %v5920, %v5921
      %v5923 = vsel %vm5911, %v5885, 0.0
      %v5924 = vadd.f32 %v5922, %v5923
      %v5925 = vsel %vm5911, %v5886, 0.0
      %v5926 = vadd.f32 %v5924, %v5925
      %v5927 = vsel %vm5911, %v5887, 0.0
      %v5928 = vadd.f32 %v5926, %v5927
      %v5929 = vsel %vm5911, %v5888, 0.0
      %v5930 = vadd.f32 %v5928, %v5929
      %v5931 = vsel %vm5911, %v5889, 0.0
      %v5932 = vadd.f32 %v5930, %v5931
      %v5933 = vsel %vm5911, %v5890, 0.0
      %v5934 = vadd.f32 %v5932, %v5933
      %v5935 = vsel %vm5911, %v5891, 0.0
      %v5936 = vadd.f32 %v5934, %v5935
      %v5937 = vsel %vm5911, %v5892, 0.0
      %v5938 = vadd.f32 %v5936, %v5937
      %v5939 = vsel %vm5911, %v5893, 0.0
      %v5940 = vadd.f32 %v5938, %v5939
      %v5941 = vsel %vm5911, %v5894, 0.0
      %v5942 = vadd.f32 %v5940, %v5941
      %v5943 = vsel %vm5911, %v5895, 0.0
      %v5944 = vadd.f32 %v5942, %v5943
      %v5945 = vsel %vm5911, %v5896, 0.0
      %v5946 = vadd.f32 %v5944, %v5945
      %v5947 = vsel %vm5911, %v5897, 0.0
      %v5948 = vadd.f32 %v5946, %v5947
      %v5949 = vsel %vm5911, %v5898, 0.0
      %v5950 = vadd.f32 %v5948, %v5949
      %v5951 = vsel %vm5911, %v5899, 0.0
      %v5952 = vadd.f32 %v5950, %v5951
      %v5953 = vsel %vm5911, %v5900, 0.0
      %v5954 = vadd.f32 %v5952, %v5953
      %v5955 = vsel %vm5911, %v5901, 0.0
      %v5956 = vadd.f32 %v5954, %v5955
      %v5957 = vsel %vm5911, %v5902, 0.0
      %v5958 = vadd.f32 %v5956, %v5957
      %v5959 = vsel %vm5911, %v5903, 0.0
      %v5960 = vadd.f32 %v5958, %v5959
      %v5961 = vsel %vm5911, %v5904, 0.0
      %v5962 = vadd.f32 %v5960, %v5961
      %v5963 = vsel %vm5911, %v5905, 0.0
      %v5964 = vadd.f32 %v5962, %v5963
      %v5965 = vsel %vm5911, %v5906, 0.0
      %v5966 = vadd.f32 %v5964, %v5965
      %v5967 = vsel %vm5911, %v5907, 0.0
      %v5968 = vadd.f32 %v5966, %v5967
      %v5969 = vsel %vm5911, %v5908, 0.0
      %v5970 = vadd.f32 %v5968, %v5969
      %v5971 = vsel %vm5911, %v5909, 0.0
      %v5972 = vadd.f32 %v5970, %v5971
      %v5973 = vsel %vm5911, %v5910, 0.0
      %v5974 = vadd.f32 %v5972, %v5973
      %v5975 = vrot.slane %v5974, 4
      %v5976 = vadd.f32 %v5974, %v5975
      %v5977 = vrot.slane %v5976, 2
      %v5978 = vadd.f32 %v5976, %v5977
      %v5979 = vrot.slane %v5978, 1
      %v5980 = vadd.f32 %v5978, %v5979
      %v5981 = vld [vmem:[#allocation4] sm:$0x1]
      %v5982 = vadd.f32 %v5980, %v5981
      %v5983 = vtanh.pop %v5982
      %v5984 = vld [vmem:[%s11] sm:$0xff]
      %v5985 = vld [vmem:[%s11 + $0x8] sm:$0xff]
      %v5986 = vld [vmem:[%s11 + $0x10] sm:$0xff]
      %v5987 = vld [vmem:[%s11 + $0x18] sm:$0xff]
      %v5988 = vld [vmem:[%s12] sm:$0xff]
      %v5989 = vld [vmem:[%s12 + $0x8] sm:$0xff]
      %v5990 = vld [vmem:[%s12 + $0x10] sm:$0xff]
      %v5991 = vld [vmem:[%s12 + $0x18] sm:$0xff]
      %6004 = vrot.lane.b32.xlu0 %v5412, 126
      %v6005 = vpop.permute.xlu0 %6004
      %6006 = vrot.lane.b32.xlu0 %v5413, 126
      %v6007 = vpop.permute.xlu0 %6006
      %6008 = vrot.lane.b32.xlu0 %v5414, 126
      %v6009 = vpop.permute.xlu0 %6008
      %6010 = vrot.lane.b32.xlu0 %v5415, 126
      %v6011 = vpop.permute.xlu0 %6010
      %6012 = vrot.lane.b32.xlu0 %v5416, 126
      %v6013 = vpop.permute.xlu0 %6012
      %6014 = vrot.lane.b32.xlu0 %v5417, 126
      %v6015 = vpop.permute.xlu0 %6014
      %6016 = vrot.lane.b32.xlu0 %v5418, 126
      %v6017 = vpop.permute.xlu0 %6016
      %6018 = vrot.lane.b32.xlu0 %v5419, 126
      %v6019 = vpop.permute.xlu0 %6018
      %6020 = vrot.lane.b32.xlu0 %v5420, 126
      %v6021 = vpop.permute.xlu0 %6020
      %6022 = vrot.lane.b32.xlu0 %v5421, 126
      %v6023 = vpop.permute.xlu0 %6022
      %6024 = vrot.lane.b32.xlu0 %v5422, 126
      %v6025 = vpop.permute.xlu0 %6024
      %6026 = vrot.lane.b32.xlu0 %v5423, 126
      %v6027 = vpop.permute.xlu0 %6026
      %6028 = vrot.lane.b32.xlu0 %v5424, 126
      %v6029 = vpop.permute.xlu0 %6028
      %v6043 = vsel %vm5489, %v5988, 0
      %v6046 = vsel %vm5489, %v5989, 0
      %v6049 = vsel %vm5489, %v5990, 0
      %v6052 = vsel %vm5489, %v5991, 0
      %v6054 = vsel %vm5586, %v6029, 0
      %6056 = vmatprep.subr.mxu0 0.0
      %6057 = vmatpush1.msra.mxu0 0.0
      %6058 = vmatprep.subr.mxu0 0.0
      %6059 = vmatpush1.msra.mxu0 0.0
      %6060 = vmatprep.subr.mxu0 0.0
      %6061 = vmatpush1.msra.mxu0 0.0
      %6062 = vmatprep.subr.mxu0 0.0
      %6063 = vmatpush1.msra.mxu0 %v6054
      %6064 = vmatprep.subr.mxu0 0.0
      %6065 = vmatpush1.msra.mxu0 %v6027
      %6066 = vmatprep.subr.mxu0 0.0
      %6067 = vmatpush1.msra.mxu0 %v6025
      %6068 = vmatprep.subr.mxu0 0.0
      %6069 = vmatpush1.msra.mxu0 %v6023
      %6070 = vmatprep.subr.mxu0 0.0
      %6071 = vmatpush1.msra.mxu0 %v6021
      %6072 = vmatprep.subr.mxu0 0.0
      %6073 = vmatpush1.msra.mxu0 %v6019
      %6074 = vmatprep.subr.mxu0 0.0
      %6075 = vmatpush1.msra.mxu0 %v6017
      %6076 = vmatprep.subr.mxu0 0.0
      %6077 = vmatpush1.msra.mxu0 %v6015
      %6078 = vmatprep.subr.mxu0 0.0
      %6079 = vmatpush1.msra.mxu0 %v6013
      %6080 = vmatprep.subr.mxu0 0.0
      %6081 = vmatpush1.msra.mxu0 %v6011
      %6082 = vmatprep.subr.mxu0 0.0
      %6083 = vmatpush1.msra.mxu0 %v6009
      %6084 = vmatprep.subr.mxu0 0.0
      %6085 = vmatpush1.msra.mxu0 %v6007
      %6086 = vmatprep.subr.mxu0 0.0
      %6087 = vmatpush1.msra.mxu0 %v6005
      %6088 = vmatprep.subr.mxu0 0.0
      %6089 = vmatpush2.msra.mxu0 0.0
      %6090 = vmatprep.subr.mxu0 0.0
      %6091 = vmatpush2.msra.mxu0 0.0
      %6092 = vmatprep.subr.mxu0 0.0
      %6093 = vmatpush2.msra.mxu0 0.0
      %6094 = vmatprep.subr.mxu0 0.0
      %6095 = vmatpush2.msra.mxu0 0.0
      %6096 = vmatprep.subr.mxu0 0.0
      %6097 = vmatpush2.msra.mxu0 0.0
      %6098 = vmatprep.subr.mxu0 0.0
      %6099 = vmatpush2.msra.mxu0 0.0
      %6100 = vmatprep.subr.mxu0 0.0
      %6101 = vmatpush2.msra.mxu0 0.0
      %6102 = vmatprep.subr.mxu0 0.0
      %6103 = vmatpush2.msra.mxu0 0.0
      %6104 = vmatprep.subr.mxu0 0.0
      %6105 = vmatpush2.msra.mxu0 0.0
      %6106 = vmatprep.subr.mxu0 0.0
      %6107 = vmatpush2.msra.mxu0 0.0
      %6108 = vmatprep.subr.mxu0 0.0
      %6109 = vmatpush2.msra.mxu0 0.0
      %6110 = vmatprep.subr.mxu0 0.0
      %6111 = vmatpush2.msra.mxu0 0.0
      %6112 = vmatprep.subr.mxu0 0.0
      %6113 = vmatpush2.msra.mxu0 0.0
      %6114 = vmatprep.subr.mxu0 0.0
      %6115 = vmatpush2.msra.mxu0 0.0
      %6116 = vmatprep.subr.mxu0 0.0
      %6117 = vmatpush2.msra.mxu0 0.0
      %6118 = vmatprep.subr.mxu0 0.0
      %6119 = vmatpush2.msra.mxu0 0.0
      %6120 = vmatprep.mubr.f32.mxu0 0.0
      %6121 = vmatmul.mubr.f32.gmra.mxu0 %v6043
      %v6122 = vpop.f32.mrf.mxu0
      %v6123 = vadd.f32 0.0, %v6122
      %v6124 = vpop.f32.mrf.mxu0
      %6125 = vmatprep.mubr.f32.mxu0 0.0
      %6126 = vmatmul.mubr.f32.gmra.mxu0 %v6046
      %v6127 = vpop.f32.mrf.mxu0
      %v6128 = vadd.f32 0.0, %v6127
      %v6129 = vpop.f32.mrf.mxu0
      %6130 = vmatprep.mubr.f32.mxu0 0.0
      %6131 = vmatmul.mubr.f32.gmra.mxu0 %v6049
      %v6132 = vpop.f32.mrf.mxu0
      %v6133 = vadd.f32 0.0, %v6132
      %v6134 = vpop.f32.mrf.mxu0
      %6135 = vmatprep.mubr.f32.mxu0 0.0
      %6136 = vmatmul.mubr.f32.gmra.mxu0 %v6052
      %v6137 = vpop.f32.mrf.mxu0
      %v6138 = vadd.f32 0.0, %v6137
      %v6139 = vpop.f32.mrf.mxu0
      %6140 = vdwg.mxu0
      %6141 = vrot.lane.b32.xlu0 %v5412, 127
      %v6142 = vpop.permute.xlu0 %6141
      %6143 = vrot.lane.b32.xlu0 %v5413, 127
      %v6144 = vpop.permute.xlu0 %6143
      %6145 = vrot.lane.b32.xlu0 %v5414, 127
      %v6146 = vpop.permute.xlu0 %6145
      %6147 = vrot.lane.b32.xlu0 %v5415, 127
      %v6148 = vpop.permute.xlu0 %6147
      %6149 = vrot.lane.b32.xlu0 %v5416, 127
      %v6150 = vpop.permute.xlu0 %6149
      %6151 = vrot.lane.b32.xlu0 %v5417, 127
      %v6152 = vpop.permute.xlu0 %6151
      %6153 = vrot.lane.b32.xlu0 %v5418, 127
      %v6154 = vpop.permute.xlu0 %6153
      %6155 = vrot.lane.b32.xlu0 %v5419, 127
      %v6156 = vpop.permute.xlu0 %6155
      %6157 = vrot.lane.b32.xlu0 %v5420, 127
      %v6158 = vpop.permute.xlu0 %6157
      %6159 = vrot.lane.b32.xlu0 %v5421, 127
      %v6160 = vpop.permute.xlu0 %6159
      %6161 = vrot.lane.b32.xlu0 %v5422, 127
      %v6162 = vpop.permute.xlu0 %6161
      %6163 = vrot.lane.b32.xlu0 %v5423, 127
      %v6164 = vpop.permute.xlu0 %6163
      %6165 = vrot.lane.b32.xlu0 %v5424, 127
      %v6166 = vpop.permute.xlu0 %6165
      %v6180 = vsel %vm5489, %v5984, 0
      %v6183 = vsel %vm5489, %v5985, 0
      %v6186 = vsel %vm5489, %v5986, 0
      %v6189 = vsel %vm5489, %v5987, 0
      %v6191 = vsel %vm5586, %v6166, 0
      %6193 = vmatprep.subr.mxu0 0.0
      %6194 = vmatpush1.msra.mxu0 0.0
      %6195 = vmatprep.subr.mxu0 0.0
      %6196 = vmatpush1.msra.mxu0 0.0
      %6197 = vmatprep.subr.mxu0 0.0
      %6198 = vmatpush1.msra.mxu0 0.0
      %6199 = vmatprep.subr.mxu0 0.0
      %6200 = vmatpush1.msra.mxu0 %v6191
      %6201 = vmatprep.subr.mxu0 0.0
      %6202 = vmatpush1.msra.mxu0 %v6164
      %6203 = vmatprep.subr.mxu0 0.0
      %6204 = vmatpush1.msra.mxu0 %v6162
      %6205 = vmatprep.subr.mxu0 0.0
      %6206 = vmatpush1.msra.mxu0 %v6160
      %6207 = vmatprep.subr.mxu0 0.0
      %6208 = vmatpush1.msra.mxu0 %v6158
      %6209 = vmatprep.subr.mxu0 0.0
      %6210 = vmatpush1.msra.mxu0 %v6156
      %6211 = vmatprep.subr.mxu0 0.0
      %6212 = vmatpush1.msra.mxu0 %v6154
      %6213 = vmatprep.subr.mxu0 0.0
      %6214 = vmatpush1.msra.mxu0 %v6152
      %6215 = vmatprep.subr.mxu0 0.0
      %6216 = vmatpush1.msra.mxu0 %v6150
      %6217 = vmatprep.subr.mxu0 0.0
      %6218 = vmatpush1.msra.mxu0 %v6148
      %6219 = vmatprep.subr.mxu0 0.0
      %6220 = vmatpush1.msra.mxu0 %v6146
      %6221 = vmatprep.subr.mxu0 0.0
      %6222 = vmatpush1.msra.mxu0 %v6144
      %6223 = vmatprep.subr.mxu0 0.0
      %6224 = vmatpush1.msra.mxu0 %v6142
      %6225 = vmatprep.subr.mxu0 0.0
      %6226 = vmatpush2.msra.mxu0 0.0
      %6227 = vmatprep.subr.mxu0 0.0
      %6228 = vmatpush2.msra.mxu0 0.0
      %6229 = vmatprep.subr.mxu0 0.0
      %6230 = vmatpush2.msra.mxu0 0.0
      %6231 = vmatprep.subr.mxu0 0.0
      %6232 = vmatpush2.msra.mxu0 0.0
      %6233 = vmatprep.subr.mxu0 0.0
      %6234 = vmatpush2.msra.mxu0 0.0
      %6235 = vmatprep.subr.mxu0 0.0
      %6236 = vmatpush2.msra.mxu0 0.0
      %6237 = vmatprep.subr.mxu0 0.0
      %6238 = vmatpush2.msra.mxu0 0.0
      %6239 = vmatprep.subr.mxu0 0.0
      %6240 = vmatpush2.msra.mxu0 0.0
      %6241 = vmatprep.subr.mxu0 0.0
      %6242 = vmatpush2.msra.mxu0 0.0
      %6243 = vmatprep.subr.mxu0 0.0
      %6244 = vmatpush2.msra.mxu0 0.0
      %6245 = vmatprep.subr.mxu0 0.0
      %6246 = vmatpush2.msra.mxu0 0.0
      %6247 = vmatprep.subr.mxu0 0.0
      %6248 = vmatpush2.msra.mxu0 0.0
      %6249 = vmatprep.subr.mxu0 0.0
      %6250 = vmatpush2.msra.mxu0 0.0
      %6251 = vmatprep.subr.mxu0 0.0
      %6252 = vmatpush2.msra.mxu0 0.0
      %6253 = vmatprep.subr.mxu0 0.0
      %6254 = vmatpush2.msra.mxu0 0.0
      %6255 = vmatprep.subr.mxu0 0.0
      %6256 = vmatpush2.msra.mxu0 0.0
      %6257 = vmatprep.mubr.f32.mxu0 0.0
      %6258 = vmatmul.mubr.f32.gmra.mxu0 %v6180
      %v6259 = vpop.f32.mrf.mxu0
      %v6260 = vadd.f32 %v6123, %v6259
      %v6261 = vpop.f32.mrf.mxu0
      %6262 = vmatprep.mubr.f32.mxu0 0.0
      %6263 = vmatmul.mubr.f32.gmra.mxu0 %v6183
      %v6264 = vpop.f32.mrf.mxu0
      %v6265 = vadd.f32 %v6128, %v6264
      %v6266 = vpop.f32.mrf.mxu0
      %6267 = vmatprep.mubr.f32.mxu0 0.0
      %6268 = vmatmul.mubr.f32.gmra.mxu0 %v6186
      %v6269 = vpop.f32.mrf.mxu0
      %v6270 = vadd.f32 %v6133, %v6269
      %v6271 = vpop.f32.mrf.mxu0
      %6272 = vmatprep.mubr.f32.mxu0 0.0
      %6273 = vmatmul.mubr.f32.gmra.mxu0 %v6189
      %v6274 = vpop.f32.mrf.mxu0
      %v6275 = vadd.f32 %v6138, %v6274
      %v6276 = vpop.f32.mrf.mxu0
      %6277 = vdwg.mxu0
      %v6278 = vld [vmem:[%s13] sm:$0xff]
      %v6279 = vld [vmem:[%s13 + $0x8] sm:$0xff]
      %v6280 = vld [vmem:[%s13 + $0x10] sm:$0xff]
      %v6281 = vld [vmem:[%s13 + $0x18] sm:$0xff]
      %v6282 = vadd.f32 %v6260, %v6278
      %v6283 = vadd.f32 %v6265, %v6279
      %v6284 = vadd.f32 %v6270, %v6280
      %v6285 = vadd.f32 %v6275, %v6281
      %v6286 = vsel %vm5911, %v6282, -inf
      %v6287 = vsel %vm5911, %v6283, -inf
      %v6288 = vsel %vm5911, %v6284, -inf
      %v6289 = vsel %vm5911, %v6285, -inf
      %v6290 = vmax.f32 %v6286, %v6287
      %v6291 = vmax.f32 %v6288, %v6289
      %v6292 = vmax.f32 %v6290, %v6291
      %v6293 = vrot.slane %v6292, 4
      %v6294 = vmax.f32 %v6292, %v6293
      %v6295 = vrot.slane %v6294, 2
      %v6296 = vmax.f32 %v6294, %v6295
      %v6297 = vrot.slane %v6296, 1
      %v6298 = vmax.f32 %v6296, %v6297
      %v6299 = vsub.f32 %v6282, %v6298
      %v6300 = vsub.f32 %v6283, %v6298
      %v6301 = vsub.f32 %v6284, %v6298
      %v6302 = vsub.f32 %v6285, %v6298
      %v6303 = vmul.f32 %v6299, 1.442695
      %v6304 = vpow.pop %v6303
      %v6305 = vmul.f32 %v6300, 1.442695
      %v6306 = vpow.pop %v6305
      %v6307 = vmul.f32 %v6301, 1.442695
      %v6308 = vpow.pop %v6307
      %v6309 = vmul.f32 %v6302, 1.442695
      %v6310 = vpow.pop %v6309
      %v6311 = vsel %vm5911, %v6304, 0.0
      %v6312 = vsel %vm5911, %v6306, 0.0
      %v6313 = vadd.f32 %v6311, %v6312
      %v6314 = vsel %vm5911, %v6308, 0.0
      %v6315 = vadd.f32 %v6313, %v6314
      %v6316 = vsel %vm5911, %v6310, 0.0
      %v6317 = vadd.f32 %v6315, %v6316
      %v6318 = vrot.slane %v6317, 4
      %v6319 = vadd.f32 %v6317, %v6318
      %v6320 = vrot.slane %v6319, 2
      %v6321 = vadd.f32 %v6319, %v6320
      %v6322 = vrot.slane %v6321, 1
      %v6323 = vadd.f32 %v6321, %v6322
      %v6324 = vrcp.pop %v6323
      %v6325 = vmul.f32 %v6304, %v6324
      %v6326 = vmul.f32 %v6306, %v6324
      %v6327 = vmul.f32 %v6308, %v6324
      %v6328 = vmul.f32 %v6310, %v6324
      %6329 = vst.msk [vmem:[%s502] sm:$0xff] %vm5911, %v6325
      %6330 = vst.msk [vmem:[%s502 + $0x8] sm:$0xff] %vm5911, %v6326
      %6331 = vst.msk [vmem:[%s502 + $0x10] sm:$0xff] %vm5911, %v6327
      %6332 = vst.msk [vmem:[%s502 + $0x18] sm:$0xff] %vm5911, %v6328
      %vm6333 = vcmask 0
      %6334 = vst.msk [vmem:[%s505] sm:$0x1] %vm6333, %v5983
      %p6335 = scmp.lt.s32.totalorder %s29, 1
      %s6336 = scalar_select %p6335, %s29, 1
      %s6337 = smul.addr %s6336, 4
      %s6338 = smul.addr %s6337, 8
      %s6339 = scalar_lea.vmem %s14, %s6338
      %p6340 = scmp.lt.s32.totalorder %s29, 1
      %s6341 = scalar_select %p6340, %s29, 1
      %s6342 = scalar_lea.vmem %s15, %s6341
      // Predicated region
      $region77: #{agent_forward.1} parent=75 // pred_check
        %p6343 = pneg %p346
      $region78: #{agent_forward.1} parent=75 // pred_check_branch
        %6345 = sbr.rel (%p6343) target = $region80
      $region79: #{agent_forward.1} parent=75 // pred_region
        _
      $region80: #{agent_forward.1} parent=75 // pred_fallthru
        _
      // Predicated region
      $region81: #{agent_forward.1} parent=75 // pred_check
        %p6346 = pneg %p372
      $region82: #{agent_forward.1} parent=75 // pred_check_branch
        %6348 = sbr.rel (%p6346) target = $region84
      $region83: #{agent_forward.1} parent=75 // pred_region
        _
      $region84: #{agent_forward.1} parent=75 // pred_fallthru
        _
    $region76: #{agent_forward.1} parent=5 // pred_fallthru
      _
    %p6349 = scmp.le.s32.totalorder 2, %s24
    // Predicated region
    $region85: #{agent_forward.1} parent=5 // pred_check
      %p6350 = pneg %p6349
    $region86: #{agent_forward.1} parent=5 // pred_check_branch
      %6352 = sbr.rel (%p6350) target = $region88
    $region87: #{agent_forward.1} parent=5 // pred_region
      %s6353 = ssub.s32 %s24, 2
      // Predicated region
      $region89: #{agent_forward.1} parent=87 // pred_check
        %p6354 = pneg %p352
      $region90: #{agent_forward.1} parent=87 // pred_check_branch
        %6356 = sbr.rel (%p6354) target = $region92
      $region91: #{agent_forward.1} parent=87 // pred_region
        %p6357 = scmp.lt.s32.totalorder %s30, 1
        %s6358 = scalar_select %p6357, %s30, 1
        %s6359 = smul.addr %s6358, 4
        %s6360 = smul.addr %s6359, 8
        %s6361 = scalar_lea.vmem %s14, %s6360
      $region92: #{agent_forward.1} parent=87 // pred_fallthru
        _
      // Predicated region
      $region93: #{agent_forward.1} parent=87 // pred_check
        %p6362 = pneg %p378
      $region94: #{agent_forward.1} parent=87 // pred_check_branch
        %6364 = sbr.rel (%p6362) target = $region96
      $region95: #{agent_forward.1} parent=87 // pred_region
        %p6365 = scmp.lt.s32.totalorder %s30, 1
        %s6366 = scalar_select %p6365, %s30, 1
        %s6367 = scalar_lea.vmem %s15, %s6366
      $region96: #{agent_forward.1} parent=87 // pred_fallthru
        _
    $region88: #{agent_forward.1} parent=5 // pred_fallthru
      _
  $region6: #{agent_forward.1} parent=0 // loop_footer
    %s28 = sadd.s32 1, %s24
  $region7: #{agent_forward.1} parent=0 // loop_footer_branch
    %23 = sbr.rel target = $region3
  $region8: #{agent_forward.1} parent=0 // loop_exit
    _

</llo_original>
